<compile_context>
chip_gen: v7x
topology: tpu7x:2x2x1
jax: 0.10.0
libtpu: 0.0.40
codegen_flags: <defaults>
</compile_context>

<pallas_src>
from itertools import product

import jax
import jax.numpy as jnp
from jax.experimental import pallas as pl
from jax.experimental.pallas import tpu as pltpu


def _round_up(x, m):
    return ((x + m - 1) // m) * m


def _conv_gemm_kernel(feats_ref, w_ref, out_ref):
    # One MXU GEMM per (voxel-tile i, cout-tile j). The 27 kernel offsets are
    # already folded into the contraction dim, so there is no reduction grid
    # axis and no accumulator scratch; bf16 operands, f32 accumulate/store.
    out_ref[...] = jnp.dot(
        feats_ref[...], w_ref[...], preferred_element_type=jnp.float32
    ).astype(out_ref.dtype)


def sparse_conv3d(x, w, *, stride=2, tm=512):
    """x: [B, D, H, W, Cin] dense voxel grid (f32); w: [27, Cin, Cout].

    Dense-grid equivalent of spnn.Conv3d(Cin, Cout, kernel_size=3, stride=2),
    no bias; padding=1 so out spatial = in // 2 for even input sizes.
    """
    B, D, H, W, Cin = x.shape
    K, _, Cout = w.shape
    Do, Ho, Wo = D // stride, H // stride, W // stride
    N = B * Do * Ho * Wo

    # im2col gather (plain-JAX glue): fold the 27 offsets directly into the
    # GEMM contraction dimension -> feats [N, 27*Cin].
    # TODO(synk): at large grids, do this gather in-kernel off the padded grid
    # (memory_space=pl.ANY + strided DMA) instead of materializing it in HBM.
    xp = jnp.pad(x, ((0, 0), (1, 1), (1, 1), (1, 1), (0, 0)))
    patches = []
    for kd, kh, kw in product(range(3), range(3), range(3)):
        sl = xp[:, kd:kd + stride * Do:stride,
                   kh:kh + stride * Ho:stride,
                   kw:kw + stride * Wo:stride, :]
        patches.append(sl.reshape(N, Cin))
    feats = jnp.concatenate(patches, axis=-1)          # [N, 27*Cin]
    wk = w.reshape(K * Cin, Cout)                      # [27*Cin, Cout]

    # MXU / lane-friendly padding: contraction and Cout up to multiples of 128
    # (lane-dense loads + unmasked vector stores), voxel rows up to the tile.
    Kdim = K * Cin
    Kpad = _round_up(Kdim, 128)
    Cpad = _round_up(Cout, 128)
    tm = min(tm, _round_up(N, 16))
    Npad = _round_up(N, tm)
    tn = min(256, Cpad)

    feats = jnp.pad(feats, ((0, Npad - N), (0, Kpad - Kdim))).astype(jnp.bfloat16)
    wk = jnp.pad(wk, ((0, Kpad - Kdim), (0, Cpad - Cout))).astype(jnp.bfloat16)

    out = pl.pallas_call(
        _conv_gemm_kernel,
        out_shape=jax.ShapeDtypeStruct((Npad, Cpad), jnp.float32),
        grid_spec=pltpu.PrefetchScalarGridSpec(
            num_scalar_prefetch=0,
            grid=(Npad // tm, Cpad // tn),
            in_specs=[
                # feats tile changes with i only.
                pl.BlockSpec((tm, Kpad), lambda i, j: (i, 0)),
                # weight tile is grid-invariant along i -> fetched once per
                # cout-tile (once per layer when Cpad == tn).
                pl.BlockSpec((Kpad, tn), lambda i, j: (0, j)),
            ],
            out_specs=pl.BlockSpec((tm, tn), lambda i, j: (i, j)),
        ),
        compiler_params=pltpu.CompilerParams(
            dimension_semantics=("parallel", "parallel"),
        ),
    )(feats, wk)

    return out[:N, :Cout].reshape(B, Do, Ho, Wo, Cout)


def init_encoder_weights(key):
    """conv1..conv5 weights: [27, Cin, Cout], Kaiming-style deterministic init."""
    dims = [1, 16, 32, 64, 128, 512]
    ws = []
    for i in range(5):
        key, sub = jax.random.split(key)
        cin, cout = dims[i], dims[i + 1]
        std = (2.0 / (27 * cin)) ** 0.5
        ws.append(jax.random.normal(sub, (27, cin, cout), jnp.float32) * std)
    return ws


def sparse_resnet_encoder(x, weights):
    """Forward pass of SparseResNetEncoder: 5 stacked stride-2 sparse convs."""
    # TODO(synk): at this problem size the whole encoder (weights ~4 MB bf16,
    # activations <1 MB) would fit in VMEM and could be fused into a single
    # pallas_call; kept as one GEMM kernel per layer here.
    for w in weights:
        x = sparse_conv3d(x, w)
    return x


if __name__ == "__main__":
    key = jax.random.PRNGKey(0)
    k_x, k_w = jax.random.split(key)

    # Small dense voxel grid: batch=2, 32^3 spatial, 1 input channel.
    # Spatial path: 32 -> 16 -> 8 -> 4 -> 2 -> 1; channels 1 -> ... -> 512.
    x = jax.random.normal(k_x, (2, 32, 32, 32, 1), dtype=jnp.float32)
    weights = init_encoder_weights(k_w)

    encoder = jax.jit(sparse_resnet_encoder)
    out = encoder(x, weights)
    out = jax.block_until_ready(out)

    assert out.shape == (2, 1, 1, 1, 512), out.shape
    print("KERNEL_OK")
</pallas_src>

<mosaic_0001>
module attributes {stable_mosaic.version = 11 : i64} {
  func.func @_conv_gemm_kernel(%arg0: i32, %arg1: i32, %arg2: memref<512x128xbf16, #tpu.memory_space<vmem>>, %arg3: memref<128x128xbf16, #tpu.memory_space<vmem>>, %arg4: memref<512x128xf32, #tpu.memory_space<vmem>>) attributes {dimension_semantics = [#tpu.dimension_semantics<parallel>, #tpu.dimension_semantics<parallel>], iteration_bounds = array<i64: 16, 1>, scalar_prefetch = 0 : i64, scratch_operands = 0 : i64, tpu.core_type = #tpu.core_type<tc>, window_params = [{transform_indices = @transform_0, window_bounds = array<i64: 512, 128>}, {transform_indices = @transform_1, window_bounds = array<i64: 128, 128>}, {transform_indices = @transform_2, window_bounds = array<i64: 512, 128>}]} {
    %c0 = arith.constant 0 : index
    %c0_0 = arith.constant 0 : index
    %0 = vector.load %arg2[%c0, %c0_0] : memref<512x128xbf16, #tpu.memory_space<vmem>>, vector<512x128xbf16>
    %c0_1 = arith.constant 0 : index
    %c0_2 = arith.constant 0 : index
    %1 = vector.load %arg3[%c0_1, %c0_2] : memref<128x128xbf16, #tpu.memory_space<vmem>>, vector<128x128xbf16>
    %cst = arith.constant dense<0.000000e+00> : vector<512x128xf32>
    %2 = tpu.matmul %0, %1, %cst {dimension_numbers = #tpu.dot_dimension_numbers<[1], [0], [0], [1], [0, 0, 1, 1], [], []>} : vector<512x128xbf16>, vector<128x128xbf16>, vector<512x128xf32> -> vector<512x128xf32>
    %c0_3 = arith.constant 0 : index
    %c0_4 = arith.constant 0 : index
    %3 = vector.load %arg4[%c0_3, %c0_4] : memref<512x128xf32, #tpu.memory_space<vmem>>, vector<512x128xf32>
    tpu.vector_store %arg4[%c0_3, %c0_4], %2 {strides = array<i32>} : memref<512x128xf32, #tpu.memory_space<vmem>>, vector<512x128xf32>,
    return
  }
  func.func @transform_0(%arg0: i32, %arg1: i32) -> (i32, i32) {
    %c0_i32 = arith.constant 0 : i32
    %c0_i32_0 = arith.constant 0 : i32
    return %arg0, %c0_i32 : i32, i32
  }
  func.func @transform_1(%arg0: i32, %arg1: i32) -> (i32, i32) {
    %c0_i32 = arith.constant 0 : i32
    %c0_i32_0 = arith.constant 0 : i32
    return %c0_i32, %arg1 : i32, i32
  }
  func.func @transform_2(%arg0: i32, %arg1: i32) -> (i32, i32) {
    %c0_i32 = arith.constant 0 : i32
    return %arg0, %arg1 : i32, i32
  }
}

module attributes {stable_mosaic.version = 11 : i64} {
  func.func @_conv_gemm_kernel(%arg0: i32, %arg1: i32, %arg2: memref<512x512xbf16, #tpu.memory_space<vmem>>, %arg3: memref<512x128xbf16, #tpu.memory_space<vmem>>, %arg4: memref<512x128xf32, #tpu.memory_space<vmem>>) attributes {dimension_semantics = [#tpu.dimension_semantics<parallel>, #tpu.dimension_semantics<parallel>], iteration_bounds = array<i64: 2, 1>, scalar_prefetch = 0 : i64, scratch_operands = 0 : i64, tpu.core_type = #tpu.core_type<tc>, window_params = [{transform_indices = @transform_0, window_bounds = array<i64: 512, 512>}, {transform_indices = @transform_1, window_bounds = array<i64: 512, 128>}, {transform_indices = @transform_2, window_bounds = array<i64: 512, 128>}]} {
    %c0 = arith.constant 0 : index
    %c0_0 = arith.constant 0 : index
    %0 = vector.load %arg2[%c0, %c0_0] : memref<512x512xbf16, #tpu.memory_space<vmem>>, vector<512x512xbf16>
    %c0_1 = arith.constant 0 : index
    %c0_2 = arith.constant 0 : index
    %1 = vector.load %arg3[%c0_1, %c0_2] : memref<512x128xbf16, #tpu.memory_space<vmem>>, vector<512x128xbf16>
    %cst = arith.constant dense<0.000000e+00> : vector<512x128xf32>
    %2 = tpu.matmul %0, %1, %cst {dimension_numbers = #tpu.dot_dimension_numbers<[1], [0], [0], [1], [0, 0, 1, 1], [], []>} : vector<512x512xbf16>, vector<512x128xbf16>, vector<512x128xf32> -> vector<512x128xf32>
    %c0_3 = arith.constant 0 : index
    %c0_4 = arith.constant 0 : index
    %3 = vector.load %arg4[%c0_3, %c0_4] : memref<512x128xf32, #tpu.memory_space<vmem>>, vector<512x128xf32>
    tpu.vector_store %arg4[%c0_3, %c0_4], %2 {strides = array<i32>} : memref<512x128xf32, #tpu.memory_space<vmem>>, vector<512x128xf32>,
    return
  }
  func.func @transform_0(%arg0: i32, %arg1: i32) -> (i32, i32) {
    %c0_i32 = arith.constant 0 : i32
    %c0_i32_0 = arith.constant 0 : i32
    return %arg0, %c0_i32 : i32, i32
  }
  func.func @transform_1(%arg0: i32, %arg1: i32) -> (i32, i32) {
    %c0_i32 = arith.constant 0 : i32
    %c0_i32_0 = arith.constant 0 : i32
    return %c0_i32, %arg1 : i32, i32
  }
  func.func @transform_2(%arg0: i32, %arg1: i32) -> (i32, i32) {
    %c0_i32 = arith.constant 0 : i32
    return %arg0, %arg1 : i32, i32
  }
}

module attributes {stable_mosaic.version = 11 : i64} {
  func.func @_conv_gemm_kernel(%arg0: i32, %arg1: i32, %arg2: memref<128x896xbf16, #tpu.memory_space<vmem>>, %arg3: memref<896x128xbf16, #tpu.memory_space<vmem>>, %arg4: memref<128x128xf32, #tpu.memory_space<vmem>>) attributes {dimension_semantics = [#tpu.dimension_semantics<parallel>, #tpu.dimension_semantics<parallel>], iteration_bounds = array<i64: 1, 1>, scalar_prefetch = 0 : i64, scratch_operands = 0 : i64, tpu.core_type = #tpu.core_type<tc>, window_params = [{transform_indices = @transform_0, window_bounds = array<i64: 128, 896>}, {transform_indices = @transform_1, window_bounds = array<i64: 896, 128>}, {transform_indices = @transform_2, window_bounds = array<i64: 128, 128>}]} {
    %c0 = arith.constant 0 : index
    %c0_0 = arith.constant 0 : index
    %0 = vector.load %arg2[%c0, %c0_0] : memref<128x896xbf16, #tpu.memory_space<vmem>>, vector<128x896xbf16>
    %c0_1 = arith.constant 0 : index
    %c0_2 = arith.constant 0 : index
    %1 = vector.load %arg3[%c0_1, %c0_2] : memref<896x128xbf16, #tpu.memory_space<vmem>>, vector<896x128xbf16>
    %cst = arith.constant dense<0.000000e+00> : vector<128x128xf32>
    %2 = tpu.matmul %0, %1, %cst {dimension_numbers = #tpu.dot_dimension_numbers<[1], [0], [0], [1], [0, 0, 1, 1], [], []>} : vector<128x896xbf16>, vector<896x128xbf16>, vector<128x128xf32> -> vector<128x128xf32>
    %c0_3 = arith.constant 0 : index
    %c0_4 = arith.constant 0 : index
    %3 = vector.load %arg4[%c0_3, %c0_4] : memref<128x128xf32, #tpu.memory_space<vmem>>, vector<128x128xf32>
    tpu.vector_store %arg4[%c0_3, %c0_4], %2 {strides = array<i32>} : memref<128x128xf32, #tpu.memory_space<vmem>>, vector<128x128xf32>,
    return
  }
  func.func @transform_0(%arg0: i32, %arg1: i32) -> (i32, i32) {
    %c0_i32 = arith.constant 0 : i32
    %c0_i32_0 = arith.constant 0 : i32
    return %arg0, %c0_i32 : i32, i32
  }
  func.func @transform_1(%arg0: i32, %arg1: i32) -> (i32, i32) {
    %c0_i32 = arith.constant 0 : i32
    %c0_i32_0 = arith.constant 0 : i32
    return %c0_i32, %arg1 : i32, i32
  }
  func.func @transform_2(%arg0: i32, %arg1: i32) -> (i32, i32) {
    %c0_i32 = arith.constant 0 : i32
    return %arg0, %arg1 : i32, i32
  }
}

module attributes {stable_mosaic.version = 11 : i64} {
  func.func @_conv_gemm_kernel(%arg0: i32, %arg1: i32, %arg2: memref<16x1792xbf16, #tpu.memory_space<vmem>>, %arg3: memref<1792x128xbf16, #tpu.memory_space<vmem>>, %arg4: memref<16x128xf32, #tpu.memory_space<vmem>>) attributes {dimension_semantics = [#tpu.dimension_semantics<parallel>, #tpu.dimension_semantics<parallel>], iteration_bounds = array<i64: 1, 1>, scalar_prefetch = 0 : i64, scratch_operands = 0 : i64, tpu.core_type = #tpu.core_type<tc>, window_params = [{transform_indices = @transform_0, window_bounds = array<i64: 16, 1792>}, {transform_indices = @transform_1, window_bounds = array<i64: 1792, 128>}, {transform_indices = @transform_2, window_bounds = array<i64: 16, 128>}]} {
    %c0 = arith.constant 0 : index
    %c0_0 = arith.constant 0 : index
    %0 = vector.load %arg2[%c0, %c0_0] : memref<16x1792xbf16, #tpu.memory_space<vmem>>, vector<16x1792xbf16>
    %c0_1 = arith.constant 0 : index
    %c0_2 = arith.constant 0 : index
    %1 = vector.load %arg3[%c0_1, %c0_2] : memref<1792x128xbf16, #tpu.memory_space<vmem>>, vector<1792x128xbf16>
    %cst = arith.constant dense<0.000000e+00> : vector<16x128xf32>
    %2 = tpu.matmul %0, %1, %cst {dimension_numbers = #tpu.dot_dimension_numbers<[1], [0], [0], [1], [0, 0, 1, 1], [], []>} : vector<16x1792xbf16>, vector<1792x128xbf16>, vector<16x128xf32> -> vector<16x128xf32>
    %c0_3 = arith.constant 0 : index
    %c0_4 = arith.constant 0 : index
    %3 = vector.load %arg4[%c0_3, %c0_4] : memref<16x128xf32, #tpu.memory_space<vmem>>, vector<16x128xf32>
    tpu.vector_store %arg4[%c0_3, %c0_4], %2 {strides = array<i32>} : memref<16x128xf32, #tpu.memory_space<vmem>>, vector<16x128xf32>,
    return
  }
  func.func @transform_0(%arg0: i32, %arg1: i32) -> (i32, i32) {
    %c0_i32 = arith.constant 0 : i32
    %c0_i32_0 = arith.constant 0 : i32
    return %arg0, %c0_i32 : i32, i32
  }
  func.func @transform_1(%arg0: i32, %arg1: i32) -> (i32, i32) {
    %c0_i32 = arith.constant 0 : i32
    %c0_i32_0 = arith.constant 0 : i32
    return %c0_i32, %arg1 : i32, i32
  }
  func.func @transform_2(%arg0: i32, %arg1: i32) -> (i32, i32) {
    %c0_i32 = arith.constant 0 : i32
    return %arg0, %arg1 : i32, i32
  }
}

module attributes {stable_mosaic.version = 11 : i64} {
  func.func @_conv_gemm_kernel(%arg0: i32, %arg1: i32, %arg2: memref<16x3456xbf16, #tpu.memory_space<vmem>>, %arg3: memref<3456x256xbf16, #tpu.memory_space<vmem>>, %arg4: memref<16x256xf32, #tpu.memory_space<vmem>>) attributes {dimension_semantics = [#tpu.dimension_semantics<parallel>, #tpu.dimension_semantics<parallel>], iteration_bounds = array<i64: 1, 2>, scalar_prefetch = 0 : i64, scratch_operands = 0 : i64, tpu.core_type = #tpu.core_type<tc>, window_params = [{transform_indices = @transform_0, window_bounds = array<i64: 16, 3456>}, {transform_indices = @transform_1, window_bounds = array<i64: 3456, 256>}, {transform_indices = @transform_2, window_bounds = array<i64: 16, 256>}]} {
    %c0 = arith.constant 0 : index
    %c0_0 = arith.constant 0 : index
    %0 = vector.load %arg2[%c0, %c0_0] : memref<16x3456xbf16, #tpu.memory_space<vmem>>, vector<16x3456xbf16>
    %c0_1 = arith.constant 0 : index
    %c0_2 = arith.constant 0 : index
    %1 = vector.load %arg3[%c0_1, %c0_2] : memref<3456x256xbf16, #tpu.memory_space<vmem>>, vector<3456x256xbf16>
    %cst = arith.constant dense<0.000000e+00> : vector<16x256xf32>
    %2 = tpu.matmul %0, %1, %cst {dimension_numbers = #tpu.dot_dimension_numbers<[1], [0], [0], [1], [0, 0, 1, 1], [], []>} : vector<16x3456xbf16>, vector<3456x256xbf16>, vector<16x256xf32> -> vector<16x256xf32>
    %c0_3 = arith.constant 0 : index
    %c0_4 = arith.constant 0 : index
    %3 = vector.load %arg4[%c0_3, %c0_4] : memref<16x256xf32, #tpu.memory_space<vmem>>, vector<16x256xf32>
    tpu.vector_store %arg4[%c0_3, %c0_4], %2 {strides = array<i32>} : memref<16x256xf32, #tpu.memory_space<vmem>>, vector<16x256xf32>,
    return
  }
  func.func @transform_0(%arg0: i32, %arg1: i32) -> (i32, i32) {
    %c0_i32 = arith.constant 0 : i32
    %c0_i32_0 = arith.constant 0 : i32
    return %arg0, %c0_i32 : i32, i32
  }
  func.func @transform_1(%arg0: i32, %arg1: i32) -> (i32, i32) {
    %c0_i32 = arith.constant 0 : i32
    %c0_i32_0 = arith.constant 0 : i32
    return %c0_i32, %arg1 : i32, i32
  }
  func.func @transform_2(%arg0: i32, %arg1: i32) -> (i32, i32) {
    %c0_i32 = arith.constant 0 : i32
    return %arg0, %arg1 : i32, i32
  }
}

</mosaic_0001>

<llo_original>
// kernel: sparse_resnet_encoder.5
$region0: #{sparse_resnet_encoder.5}
  #allocation0 [shape = 'u32[]', space=smem, size = 0x4, offset = 0x4, fixed_abs, tag = 'smem constant byte address 0x4 - core index']
  #allocation1 [shape = 'u32[144,128]{1,0:T(1,128)}', space=vmem, size = 0x12000, scoped, tag = 'internal scratch']
  %s0 = inlined_call_operand.vmem [shape: bf16[8192,128], index: 0, kind: input, shape index: {}]
  %s1 = inlined_call_operand.vmem [shape: bf16[128,128], index: 1, kind: input, shape index: {}]
  %s2 = inlined_call_operand.vmem [shape: f32[8192,128], index: 2, kind: output, shape index: {}]
  %s3 = sld [smem:[#allocation0]]
  $region41: #{sparse_resnet_encoder.5} parent=0
    _
  %s5 = ssub.s32 1, %s3
  %s6 = scalar_select 0, %s5, %s3
  loop: start=0, step=1, limit=18
  $region2: #{sparse_resnet_encoder.5} parent=0 // loop_pre_header
    _
  $region3: #{sparse_resnet_encoder.5} parent=0 // loop_header
    %s8 = sphi 0, %s12
    %p9 = scmp.ge.s32.totalorder %s8, 18
    %s15 = sphi 0, %s27
    %s16 = sphi 0, %s23
    %s17 = sphi 0, %s15
    %s18 = sphi 0, %s16
    %s19 = sphi 0, %s17
    %s20 = sphi 0, %s18
    %s30 = sphi 0, %s32
    %s33 = sphi 0, %s30
    %s34 = sphi 0, %s33
    %s50 = sphi 0, %s34
    %s56 = sphi 0, %s58
    %s59 = sphi 0, %s56
    %s60 = sphi 0, %s59
    %s76 = sphi 0, %s60
    %s84 = sphi 0, %s86
    %s87 = sphi 0, %s84
    %s88 = sphi 0, %s87
    %s104 = sphi 0, %s88
  $region4: #{sparse_resnet_encoder.5} parent=0 // loop_header_branch
    %11 = sbr.rel (%p9) target = $region8
  $region5: #{sparse_resnet_encoder.5} parent=0 // loop_body
    %s13 = ssub.s32 %s8, 1
    %s14 = ssub.s32 %s8, 2
    %s21 = sadd.s32 1, %s16
    %p22 = scmp.ge.s32.totalorder %s21, 1
    %s23 = scalar_select %p22, 0, %s21
    %s24 = sadd.s32 1, %s15
    %s25 = scalar_select %p22, %s24, %s15
    %p26 = scmp.ge.s32.totalorder %s25, 16
    %s27 = scalar_select %p26, 0, %s25
    %s28 = ssub.s32 %s15, %s27
    %p29 = scmp.eq.s32.totalorder %s28, 0
    %s31 = sadd.s32 %s30, 1
    %s32 = scalar_select %p29, %s30, %s31
    %p35 = pneg %p29
    %p36 = scmp.eq.s32.totalorder %s8, 15
    %p37 = por %p35, %p36
    %p38 = scmp.ne.s32.totalorder %s30, %s33
    %p39 = scmp.eq.s32.totalorder %s8, 0
    %p40 = por %p38, %p39
    %p41 = scmp.ne.s32.totalorder %s30, %s33
    %p42 = scmp.eq.s32.totalorder %s13, 15
    %p43 = por %p41, %p42
    %p44 = scmp.ne.s32.totalorder %s33, %s34
    %p45 = scmp.eq.s32.totalorder %s13, 0
    %p46 = por %p44, %p45
    %p47 = scmp.ne.s32.totalorder %s33, %s34
    %p48 = scmp.eq.s32.totalorder %s14, 15
    %p49 = por %p47, %p48
    %p51 = scmp.ne.s32.totalorder %s34, %s50
    %p52 = scmp.eq.s32.totalorder %s14, 0
    %p53 = por %p51, %p52
    %s54 = ssub.s32 %s16, %s23
    %p55 = scmp.eq.s32.totalorder %s54, 0
    %s57 = sadd.s32 %s56, 1
    %s58 = scalar_select %p55, %s56, %s57
    %p61 = pneg %p55
    %p62 = scmp.eq.s32.totalorder %s8, 15
    %p63 = por %p61, %p62
    %p64 = scmp.ne.s32.totalorder %s56, %s59
    %p65 = scmp.eq.s32.totalorder %s8, 0
    %p66 = por %p64, %p65
    %p67 = scmp.ne.s32.totalorder %s56, %s59
    %p68 = scmp.eq.s32.totalorder %s13, 15
    %p69 = por %p67, %p68
    %p70 = scmp.ne.s32.totalorder %s59, %s60
    %p71 = scmp.eq.s32.totalorder %s13, 0
    %p72 = por %p70, %p71
    %p73 = scmp.ne.s32.totalorder %s59, %s60
    %p74 = scmp.eq.s32.totalorder %s14, 15
    %p75 = por %p73, %p74
    %p77 = scmp.ne.s32.totalorder %s60, %s76
    %p78 = scmp.eq.s32.totalorder %s14, 0
    %p79 = por %p77, %p78
    %s80 = ssub.s32 %s15, %s27
    %s81 = ssub.s32 %s16, %s23
    %s82 = sor.u32 %s80, %s81
    %p83 = scmp.eq.s32.totalorder %s82, 0
    %s85 = sadd.s32 %s84, 1
    %s86 = scalar_select %p83, %s84, %s85
    %p89 = pneg %p83
    %p90 = scmp.eq.s32.totalorder %s8, 15
    %p91 = por %p89, %p90
    %p92 = scmp.ne.s32.totalorder %s84, %s87
    %p93 = scmp.eq.s32.totalorder %s8, 0
    %p94 = por %p92, %p93
    %p95 = scmp.ne.s32.totalorder %s84, %s87
    %p96 = scmp.eq.s32.totalorder %s13, 15
    %p97 = por %p95, %p96
    %p98 = scmp.ne.s32.totalorder %s87, %s88
    %p99 = scmp.eq.s32.totalorder %s13, 0
    %p100 = por %p98, %p99
    %p101 = scmp.ne.s32.totalorder %s87, %s88
    %p102 = scmp.eq.s32.totalorder %s14, 15
    %p103 = por %p101, %p102
    %p105 = scmp.ne.s32.totalorder %s88, %s104
    %p106 = scmp.eq.s32.totalorder %s14, 0
    %p107 = por %p105, %p106
    %p108 = scmp.le.s32.totalorder 1, %s8
    %p109 = scmp.lt.s32.totalorder %s8, 17
    %p110 = pnand %p108, %p109
    %p111 = pneg %p110
    // Predicated region
    $region9: #{sparse_resnet_encoder.5} parent=5 // pred_check
      _
    $region10: #{sparse_resnet_encoder.5} parent=5 // pred_check_branch
      %113 = sbr.rel (%p110) target = $region12
    $region11: #{sparse_resnet_encoder.5} parent=5 // pred_region
      %s114 = ssub.s32 %s8, 1
      // Predicated region
      $region13: #{sparse_resnet_encoder.5} parent=11 // pred_check
        %p115 = pneg %p72
      $region14: #{sparse_resnet_encoder.5} parent=11 // pred_check_branch
        %117 = sbr.rel (%p115) target = $region16
      $region15: #{sparse_resnet_encoder.5} parent=11 // pred_region
        %p118 = scmp.lt.s32.totalorder %s18, 0
        %s119 = scalar_select %p118, %s18, 0
        %s120 = smul.addr %s119, 4
        %s121 = scalar_lea.vmem %s1, %s120
      $region16: #{sparse_resnet_encoder.5} parent=11 // pred_fallthru
        _
    $region12: #{sparse_resnet_encoder.5} parent=5 // pred_fallthru
      _
    %p122 = scmp.lt.s32.totalorder %s8, 16
    // Predicated region
    $region17: #{sparse_resnet_encoder.5} parent=5 // pred_check
      %p123 = pneg %p122
    $region18: #{sparse_resnet_encoder.5} parent=5 // pred_check_branch
      %125 = sbr.rel (%p123) target = $region20
    $region19: #{sparse_resnet_encoder.5} parent=5 // pred_region
      // Predicated region
      $region21: #{sparse_resnet_encoder.5} parent=19 // pred_check
        %p126 = pneg %p40
      $region22: #{sparse_resnet_encoder.5} parent=19 // pred_check_branch
        %128 = sbr.rel (%p126) target = $region24
      $region23: #{sparse_resnet_encoder.5} parent=19 // pred_region
        %s129 = smul.u32 64, %s15
        %p130 = scmp.lt.s32.totalorder %s129, 1023
        %s131 = scalar_select %p130, %s129, 1023
        %s132 = smul.addr %s131, 4
        %s133 = scalar_lea.vmem %s0, %s132
        %s134 = smul.u32 64, %s15
      $region24: #{sparse_resnet_encoder.5} parent=19 // pred_fallthru
        _
    $region20: #{sparse_resnet_encoder.5} parent=5 // pred_fallthru
      _
    %p135 = scmp.le.s32.totalorder 1, %s8
    %p136 = scmp.lt.s32.totalorder %s8, 17
    %p137 = pnand %p135, %p136
    %p138 = pneg %p137
    // Predicated region
    $region25: #{sparse_resnet_encoder.5} parent=5 // pred_check
      _
    $region26: #{sparse_resnet_encoder.5} parent=5 // pred_check_branch
      %140 = sbr.rel (%p137) target = $region28
    $region27: #{sparse_resnet_encoder.5} parent=5 // pred_region
      %s141 = ssub.s32 %s8, 1
      %s142 = smul.u32 64, %s17
      %p143 = scmp.lt.s32.totalorder %s142, 1023
      %s144 = scalar_select %p143, %s142, 1023
      %s145 = smul.addr %s144, 4
      %s146 = scalar_lea.vmem %s0, %s145
      %p147 = pneg %p46
      %p148 = pneg %p43
      %p149 = scmp.lt.s32.totalorder %s18, 0
      %s150 = scalar_select %p149, %s18, 0
      %s151 = smul.addr %s150, 4
      %s152 = scalar_lea.vmem %s1, %s151
      %p153 = pneg %p72
      %p154 = pneg %p69
      %p155 = pneg %p100
      %p156 = pneg %p97
      %s157 = smul.u32 64, %s17
      %p158 = scmp.lt.s32.totalorder %s157, 1023
      %s159 = scalar_select %p158, %s157, 1023
      %p160 = scmp.lt.s32.totalorder %s18, 0
      %s161 = scalar_select %p160, %s18, 0
      %s162 = sadd.s32 %s161, %s159
      %s163 = smul.addr %s162, 8
      %s164 = scalar_lea.vmem %s2, %s163
      %s165 = smul.u32 64, %s17
      %p166 = scmp.lt.s32.totalorder %s165, 1023
      %s167 = scalar_select %p166, %s165, 1023
      %s168 = smul.addr %s167, 4
      %s169 = scalar_lea.vmem %s0, %s168
      %s170 = smul.u32 64, %s17
      %p171 = scmp.lt.s32.totalorder %s18, 0
      %s172 = scalar_select %p171, %s18, 0
      %s173 = smul.addr %s172, 4
      %s174 = scalar_lea.vmem %s1, %s173
      %s175 = smul.u32 64, %s17
      %p176 = scmp.lt.s32.totalorder %s175, 1023
      %s177 = scalar_select %p176, %s175, 1023
      %p178 = scmp.lt.s32.totalorder %s18, 0
      %s179 = scalar_select %p178, %s18, 0
      %s180 = sadd.s32 %s179, %s177
      %s181 = smul.addr %s180, 8
      %s182 = scalar_lea.vmem %s2, %s181
      %s183 = smul.u32 64, %s17
      %v185 = vld [vmem:[%s169] sm:$0xf]
      %v186 = vld [vmem:[%s169 + $0x4] sm:$0xf]
      %v187 = vld [vmem:[%s169 + $0x8] sm:$0xf]
      %v188 = vld [vmem:[%s169 + $0xc] sm:$0xf]
      %v189 = vld [vmem:[%s169 + $0x10] sm:$0xf]
      %v190 = vld [vmem:[%s169 + $0x14] sm:$0xf]
      %v191 = vld [vmem:[%s169 + $0x18] sm:$0xf]
      %v192 = vld [vmem:[%s169 + $0x1c] sm:$0xf]
      %v193 = vld [vmem:[%s169 + $0x20] sm:$0xf]
      %v194 = vld [vmem:[%s169 + $0x24] sm:$0xf]
      %v195 = vld [vmem:[%s169 + $0x28] sm:$0xf]
      %v196 = vld [vmem:[%s169 + $0x2c] sm:$0xf]
      %v197 = vld [vmem:[%s169 + $0x30] sm:$0xf]
      %v198 = vld [vmem:[%s169 + $0x34] sm:$0xf]
      %v199 = vld [vmem:[%s169 + $0x38] sm:$0xf]
      %v200 = vld [vmem:[%s169 + $0x3c] sm:$0xf]
      %v201 = vld [vmem:[%s169 + $0x40] sm:$0xf]
      %v202 = vld [vmem:[%s169 + $0x44] sm:$0xf]
      %v203 = vld [vmem:[%s169 + $0x48] sm:$0xf]
      %v204 = vld [vmem:[%s169 + $0x4c] sm:$0xf]
      %v205 = vld [vmem:[%s169 + $0x50] sm:$0xf]
      %v206 = vld [vmem:[%s169 + $0x54] sm:$0xf]
      %v207 = vld [vmem:[%s169 + $0x58] sm:$0xf]
      %v208 = vld [vmem:[%s169 + $0x5c] sm:$0xf]
      %v209 = vld [vmem:[%s169 + $0x60] sm:$0xf]
      %v210 = vld [vmem:[%s169 + $0x64] sm:$0xf]
      %v211 = vld [vmem:[%s169 + $0x68] sm:$0xf]
      %v212 = vld [vmem:[%s169 + $0x6c] sm:$0xf]
      %v213 = vld [vmem:[%s169 + $0x70] sm:$0xf]
      %v214 = vld [vmem:[%s169 + $0x74] sm:$0xf]
      %v215 = vld [vmem:[%s169 + $0x78] sm:$0xf]
      %v216 = vld [vmem:[%s169 + $0x7c] sm:$0xf]
      %v217 = vld [vmem:[%s169 + $0x80] sm:$0xf]
      %v218 = vld [vmem:[%s169 + $0x84] sm:$0xf]
      %v219 = vld [vmem:[%s169 + $0x88] sm:$0xf]
      %v220 = vld [vmem:[%s169 + $0x8c] sm:$0xf]
      %v221 = vld [vmem:[%s169 + $0x90] sm:$0xf]
      %v222 = vld [vmem:[%s169 + $0x94] sm:$0xf]
      %v223 = vld [vmem:[%s169 + $0x98] sm:$0xf]
      %v224 = vld [vmem:[%s169 + $0x9c] sm:$0xf]
      %v225 = vld [vmem:[%s169 + $0xa0] sm:$0xf]
      %v226 = vld [vmem:[%s169 + $0xa4] sm:$0xf]
      %v227 = vld [vmem:[%s169 + $0xa8] sm:$0xf]
      %v228 = vld [vmem:[%s169 + $0xac] sm:$0xf]
      %v229 = vld [vmem:[%s169 + $0xb0] sm:$0xf]
      %v230 = vld [vmem:[%s169 + $0xb4] sm:$0xf]
      %v231 = vld [vmem:[%s169 + $0xb8] sm:$0xf]
      %v232 = vld [vmem:[%s169 + $0xbc] sm:$0xf]
      %v233 = vld [vmem:[%s169 + $0xc0] sm:$0xf]
      %v234 = vld [vmem:[%s169 + $0xc4] sm:$0xf]
      %v235 = vld [vmem:[%s169 + $0xc8] sm:$0xf]
      %v236 = vld [vmem:[%s169 + $0xcc] sm:$0xf]
      %v237 = vld [vmem:[%s169 + $0xd0] sm:$0xf]
      %v238 = vld [vmem:[%s169 + $0xd4] sm:$0xf]
      %v239 = vld [vmem:[%s169 + $0xd8] sm:$0xf]
      %v240 = vld [vmem:[%s169 + $0xdc] sm:$0xf]
      %v241 = vld [vmem:[%s169 + $0xe0] sm:$0xf]
      %v242 = vld [vmem:[%s169 + $0xe4] sm:$0xf]
      %v243 = vld [vmem:[%s169 + $0xe8] sm:$0xf]
      %v244 = vld [vmem:[%s169 + $0xec] sm:$0xf]
      %v245 = vld [vmem:[%s169 + $0xf0] sm:$0xf]
      %v246 = vld [vmem:[%s169 + $0xf4] sm:$0xf]
      %v247 = vld [vmem:[%s169 + $0xf8] sm:$0xf]
      %v248 = vld [vmem:[%s169 + $0xfc] sm:$0xf]
      %v249 = vld [vmem:[%s174] sm:$0xf]
      %v250 = vld [vmem:[%s174 + $0x4] sm:$0xf]
      %v251 = vld [vmem:[%s174 + $0x8] sm:$0xf]
      %v252 = vld [vmem:[%s174 + $0xc] sm:$0xf]
      %v253 = vld [vmem:[%s174 + $0x10] sm:$0xf]
      %v254 = vld [vmem:[%s174 + $0x14] sm:$0xf]
      %v255 = vld [vmem:[%s174 + $0x18] sm:$0xf]
      %v256 = vld [vmem:[%s174 + $0x1c] sm:$0xf]
      %v257 = vld [vmem:[%s174 + $0x20] sm:$0xf]
      %v258 = vld [vmem:[%s174 + $0x24] sm:$0xf]
      %v259 = vld [vmem:[%s174 + $0x28] sm:$0xf]
      %v260 = vld [vmem:[%s174 + $0x2c] sm:$0xf]
      %v261 = vld [vmem:[%s174 + $0x30] sm:$0xf]
      %v262 = vld [vmem:[%s174 + $0x34] sm:$0xf]
      %v263 = vld [vmem:[%s174 + $0x38] sm:$0xf]
      %v264 = vld [vmem:[%s174 + $0x3c] sm:$0xf]
      %v329 = vunpack.c.l.b16 %v185
      %v330 = vunpack.c.l.b16 %v186
      %v331 = vunpack.c.l.b16 %v187
      %v332 = vunpack.c.l.b16 %v188
      %v333 = vunpack.c.l.b16 %v189
      %v334 = vunpack.c.l.b16 %v190
      %v335 = vunpack.c.l.b16 %v191
      %v336 = vunpack.c.l.b16 %v192
      %v337 = vunpack.c.l.b16 %v193
      %v338 = vunpack.c.l.b16 %v194
      %v339 = vunpack.c.l.b16 %v195
      %v340 = vunpack.c.l.b16 %v196
      %v341 = vunpack.c.l.b16 %v197
      %v342 = vunpack.c.l.b16 %v198
      %v343 = vunpack.c.l.b16 %v199
      %v344 = vunpack.c.l.b16 %v200
      %v345 = vunpack.c.l.b16 %v201
      %v346 = vunpack.c.l.b16 %v202
      %v347 = vunpack.c.l.b16 %v203
      %v348 = vunpack.c.l.b16 %v204
      %v349 = vunpack.c.l.b16 %v205
      %v350 = vunpack.c.l.b16 %v206
      %v351 = vunpack.c.l.b16 %v207
      %v352 = vunpack.c.l.b16 %v208
      %v353 = vunpack.c.l.b16 %v209
      %v354 = vunpack.c.l.b16 %v210
      %v355 = vunpack.c.l.b16 %v211
      %v356 = vunpack.c.l.b16 %v212
      %v357 = vunpack.c.l.b16 %v213
      %v358 = vunpack.c.l.b16 %v214
      %v359 = vunpack.c.l.b16 %v215
      %v360 = vunpack.c.l.b16 %v216
      %v361 = vunpack.c.l.b16 %v217
      %v362 = vunpack.c.l.b16 %v218
      %v363 = vunpack.c.l.b16 %v219
      %v364 = vunpack.c.l.b16 %v220
      %v365 = vunpack.c.l.b16 %v221
      %v366 = vunpack.c.l.b16 %v222
      %v367 = vunpack.c.l.b16 %v223
      %v368 = vunpack.c.l.b16 %v224
      %v369 = vunpack.c.l.b16 %v225
      %v370 = vunpack.c.l.b16 %v226
      %v371 = vunpack.c.l.b16 %v227
      %v372 = vunpack.c.l.b16 %v228
      %v373 = vunpack.c.l.b16 %v229
      %v374 = vunpack.c.l.b16 %v230
      %v375 = vunpack.c.l.b16 %v231
      %v376 = vunpack.c.l.b16 %v232
      %v377 = vunpack.c.l.b16 %v233
      %v378 = vunpack.c.l.b16 %v234
      %v379 = vunpack.c.l.b16 %v235
      %v380 = vunpack.c.l.b16 %v236
      %v381 = vunpack.c.l.b16 %v237
      %v382 = vunpack.c.l.b16 %v238
      %v383 = vunpack.c.l.b16 %v239
      %v384 = vunpack.c.l.b16 %v240
      %v385 = vunpack.c.l.b16 %v241
      %v386 = vunpack.c.l.b16 %v242
      %v387 = vunpack.c.l.b16 %v243
      %v388 = vunpack.c.l.b16 %v244
      %v389 = vunpack.c.l.b16 %v245
      %v390 = vunpack.c.l.b16 %v246
      %v391 = vunpack.c.l.b16 %v247
      %v392 = vunpack.c.l.b16 %v248
      %v393 = vpack.c.b16 %v330, %v329
      %v394 = vpack.c.b16 %v332, %v331
      %v395 = vpack.c.b16 %v334, %v333
      %v396 = vpack.c.b16 %v336, %v335
      %v397 = vpack.c.b16 %v338, %v337
      %v398 = vpack.c.b16 %v340, %v339
      %v399 = vpack.c.b16 %v342, %v341
      %v400 = vpack.c.b16 %v344, %v343
      %v401 = vpack.c.b16 %v346, %v345
      %v402 = vpack.c.b16 %v348, %v347
      %v403 = vpack.c.b16 %v350, %v349
      %v404 = vpack.c.b16 %v352, %v351
      %v405 = vpack.c.b16 %v354, %v353
      %v406 = vpack.c.b16 %v356, %v355
      %v407 = vpack.c.b16 %v358, %v357
      %v408 = vpack.c.b16 %v360, %v359
      %v409 = vpack.c.b16 %v362, %v361
      %v410 = vpack.c.b16 %v364, %v363
      %v411 = vpack.c.b16 %v366, %v365
      %v412 = vpack.c.b16 %v368, %v367
      %v413 = vpack.c.b16 %v370, %v369
      %v414 = vpack.c.b16 %v372, %v371
      %v415 = vpack.c.b16 %v374, %v373
      %v416 = vpack.c.b16 %v376, %v375
      %v417 = vpack.c.b16 %v378, %v377
      %v418 = vpack.c.b16 %v380, %v379
      %v419 = vpack.c.b16 %v382, %v381
      %v420 = vpack.c.b16 %v384, %v383
      %v421 = vpack.c.b16 %v386, %v385
      %v422 = vpack.c.b16 %v388, %v387
      %v423 = vpack.c.b16 %v390, %v389
      %v424 = vpack.c.b16 %v392, %v391
      %v473 = vunpack.c.l.b16 %v249
      %v474 = vunpack.c.l.b16 %v250
      %v475 = vunpack.c.l.b16 %v251
      %v476 = vunpack.c.l.b16 %v252
      %v477 = vunpack.c.l.b16 %v253
      %v478 = vunpack.c.l.b16 %v254
      %v479 = vunpack.c.l.b16 %v255
      %v480 = vunpack.c.l.b16 %v256
      %v481 = vunpack.c.l.b16 %v257
      %v482 = vunpack.c.l.b16 %v258
      %v483 = vunpack.c.l.b16 %v259
      %v484 = vunpack.c.l.b16 %v260
      %v485 = vunpack.c.l.b16 %v261
      %v486 = vunpack.c.l.b16 %v262
      %v487 = vunpack.c.l.b16 %v263
      %v488 = vunpack.c.l.b16 %v264
      %v489 = vpack.c.b16 %v474, %v473
      %v490 = vpack.c.b16 %v476, %v475
      %v491 = vpack.c.b16 %v478, %v477
      %v492 = vpack.c.b16 %v480, %v479
      %v493 = vpack.c.b16 %v482, %v481
      %v494 = vpack.c.b16 %v484, %v483
      %v495 = vpack.c.b16 %v486, %v485
      %v496 = vpack.c.b16 %v488, %v487
      %505 = vmatprep.subr.bf16.mxu0 0
      %506 = vmatpush1.bf16.msra.mxu0 %v489
      %507 = vmatprep.subr.bf16.mxu0 0
      %508 = vmatpush1.bf16.msra.mxu0 %v490
      %509 = vmatprep.subr.bf16.mxu0 0
      %510 = vmatpush1.bf16.msra.mxu0 %v491
      %511 = vmatprep.subr.bf16.mxu0 0
      %512 = vmatpush1.bf16.msra.mxu0 %v492
      %513 = vmatprep.subr.bf16.mxu0 0
      %514 = vmatpush1.bf16.msra.mxu0 %v493
      %515 = vmatprep.subr.bf16.mxu0 0
      %516 = vmatpush1.bf16.msra.mxu0 %v494
      %517 = vmatprep.subr.bf16.mxu0 0
      %518 = vmatpush1.bf16.msra.mxu0 %v495
      %519 = vmatprep.subr.bf16.mxu0 0
      %520 = vmatpush1.bf16.msra.mxu0 %v496
      %521 = vmatprep.subr.bf16.mxu0 0
      %522 = vmatpush1.bf16.msra.mxu0 0
      %523 = vmatprep.subr.bf16.mxu0 0
      %524 = vmatpush1.bf16.msra.mxu0 0
      %525 = vmatprep.subr.bf16.mxu0 0
      %526 = vmatpush1.bf16.msra.mxu0 0
      %527 = vmatprep.subr.bf16.mxu0 0
      %528 = vmatpush1.bf16.msra.mxu0 0
      %529 = vmatprep.subr.bf16.mxu0 0
      %530 = vmatpush1.bf16.msra.mxu0 0
      %531 = vmatprep.subr.bf16.mxu0 0
      %532 = vmatpush1.bf16.msra.mxu0 0
      %533 = vmatprep.subr.bf16.mxu0 0
      %534 = vmatpush1.bf16.msra.mxu0 0
      %535 = vmatprep.subr.bf16.mxu0 0
      %536 = vmatpush1.bf16.msra.mxu0 0
      %537 = vmatprep.mubr.bf16.mxu0 0
      %538 = vmatmul.mubr.bf16.gmra.mrb[0].mxu0 %v393
      %v539 = vpop.f32.mrb[0].mxu0
      %v540 = vadd.f32 0.0, %v539
      %v541 = vpop.f32.mrb[0].mxu0
      %v542 = vpop.f32.mrb[0].mxu0
      %v543 = vadd.f32 0.0, %v542
      %v544 = vpop.f32.mrb[0].mxu0
      %545 = vmatprep.mubr.bf16.mxu0 0
      %546 = vmatmul.mubr.bf16.gmra.mrb[0].mxu0 %v394
      %v547 = vpop.f32.mrb[0].mxu0
      %v548 = vadd.f32 0.0, %v547
      %v549 = vpop.f32.mrb[0].mxu0
      %v550 = vpop.f32.mrb[0].mxu0
      %v551 = vadd.f32 0.0, %v550
      %v552 = vpop.f32.mrb[0].mxu0
      %553 = vmatprep.mubr.bf16.mxu0 0
      %554 = vmatmul.mubr.bf16.gmra.mrb[0].mxu0 %v395
      %v555 = vpop.f32.mrb[0].mxu0
      %v556 = vadd.f32 0.0, %v555
      %v557 = vpop.f32.mrb[0].mxu0
      %v558 = vpop.f32.mrb[0].mxu0
      %v559 = vadd.f32 0.0, %v558
      %v560 = vpop.f32.mrb[0].mxu0
      %561 = vmatprep.mubr.bf16.mxu0 0
      %562 = vmatmul.mubr.bf16.gmra.mrb[0].mxu0 %v396
      %v563 = vpop.f32.mrb[0].mxu0
      %v564 = vadd.f32 0.0, %v563
      %v565 = vpop.f32.mrb[0].mxu0
      %v566 = vpop.f32.mrb[0].mxu0
      %v567 = vadd.f32 0.0, %v566
      %v568 = vpop.f32.mrb[0].mxu0
      %569 = vmatprep.mubr.bf16.mxu0 0
      %570 = vmatmul.mubr.bf16.gmra.mrb[0].mxu0 %v397
      %v571 = vpop.f32.mrb[0].mxu0
      %v572 = vadd.f32 0.0, %v571
      %v573 = vpop.f32.mrb[0].mxu0
      %v574 = vpop.f32.mrb[0].mxu0
      %v575 = vadd.f32 0.0, %v574
      %v576 = vpop.f32.mrb[0].mxu0
      %577 = vmatprep.mubr.bf16.mxu0 0
      %578 = vmatmul.mubr.bf16.gmra.mrb[0].mxu0 %v398
      %v579 = vpop.f32.mrb[0].mxu0
      %v580 = vadd.f32 0.0, %v579
      %v581 = vpop.f32.mrb[0].mxu0
      %v582 = vpop.f32.mrb[0].mxu0
      %v583 = vadd.f32 0.0, %v582
      %v584 = vpop.f32.mrb[0].mxu0
      %585 = vmatprep.mubr.bf16.mxu0 0
      %586 = vmatmul.mubr.bf16.gmra.mrb[0].mxu0 %v399
      %v587 = vpop.f32.mrb[0].mxu0
      %v588 = vadd.f32 0.0, %v587
      %v589 = vpop.f32.mrb[0].mxu0
      %v590 = vpop.f32.mrb[0].mxu0
      %v591 = vadd.f32 0.0, %v590
      %v592 = vpop.f32.mrb[0].mxu0
      %593 = vmatprep.mubr.bf16.mxu0 0
      %594 = vmatmul.mubr.bf16.gmra.mrb[0].mxu0 %v400
      %v595 = vpop.f32.mrb[0].mxu0
      %v596 = vadd.f32 0.0, %v595
      %v597 = vpop.f32.mrb[0].mxu0
      %v598 = vpop.f32.mrb[0].mxu0
      %v599 = vadd.f32 0.0, %v598
      %v600 = vpop.f32.mrb[0].mxu0
      %601 = vmatprep.mubr.bf16.mxu0 0
      %602 = vmatmul.mubr.bf16.gmra.mrb[0].mxu0 %v401
      %v603 = vpop.f32.mrb[0].mxu0
      %v604 = vadd.f32 0.0, %v603
      %v605 = vpop.f32.mrb[0].mxu0
      %v606 = vpop.f32.mrb[0].mxu0
      %v607 = vadd.f32 0.0, %v606
      %v608 = vpop.f32.mrb[0].mxu0
      %609 = vmatprep.mubr.bf16.mxu0 0
      %610 = vmatmul.mubr.bf16.gmra.mrb[0].mxu0 %v402
      %v611 = vpop.f32.mrb[0].mxu0
      %v612 = vadd.f32 0.0, %v611
      %v613 = vpop.f32.mrb[0].mxu0
      %v614 = vpop.f32.mrb[0].mxu0
      %v615 = vadd.f32 0.0, %v614
      %v616 = vpop.f32.mrb[0].mxu0
      %617 = vmatprep.mubr.bf16.mxu0 0
      %618 = vmatmul.mubr.bf16.gmra.mrb[0].mxu0 %v403
      %v619 = vpop.f32.mrb[0].mxu0
      %v620 = vadd.f32 0.0, %v619
      %v621 = vpop.f32.mrb[0].mxu0
      %v622 = vpop.f32.mrb[0].mxu0
      %v623 = vadd.f32 0.0, %v622
      %v624 = vpop.f32.mrb[0].mxu0
      %625 = vmatprep.mubr.bf16.mxu0 0
      %626 = vmatmul.mubr.bf16.gmra.mrb[0].mxu0 %v404
      %v627 = vpop.f32.mrb[0].mxu0
      %v628 = vadd.f32 0.0, %v627
      %v629 = vpop.f32.mrb[0].mxu0
      %v630 = vpop.f32.mrb[0].mxu0
      %v631 = vadd.f32 0.0, %v630
      %v632 = vpop.f32.mrb[0].mxu0
      %633 = vmatprep.mubr.bf16.mxu0 0
      %634 = vmatmul.mubr.bf16.gmra.mrb[0].mxu0 %v405
      %v635 = vpop.f32.mrb[0].mxu0
      %v636 = vadd.f32 0.0, %v635
      %v637 = vpop.f32.mrb[0].mxu0
      %v638 = vpop.f32.mrb[0].mxu0
      %v639 = vadd.f32 0.0, %v638
      %v640 = vpop.f32.mrb[0].mxu0
      %641 = vmatprep.mubr.bf16.mxu0 0
      %642 = vmatmul.mubr.bf16.gmra.mrb[0].mxu0 %v406
      %v643 = vpop.f32.mrb[0].mxu0
      %v644 = vadd.f32 0.0, %v643
      %v645 = vpop.f32.mrb[0].mxu0
      %v646 = vpop.f32.mrb[0].mxu0
      %v647 = vadd.f32 0.0, %v646
      %v648 = vpop.f32.mrb[0].mxu0
      %649 = vmatprep.mubr.bf16.mxu0 0
      %650 = vmatmul.mubr.bf16.gmra.mrb[0].mxu0 %v407
      %v651 = vpop.f32.mrb[0].mxu0
      %v652 = vadd.f32 0.0, %v651
      %v653 = vpop.f32.mrb[0].mxu0
      %v654 = vpop.f32.mrb[0].mxu0
      %v655 = vadd.f32 0.0, %v654
      %v656 = vpop.f32.mrb[0].mxu0
      %657 = vmatprep.mubr.bf16.mxu0 0
      %658 = vmatmul.mubr.bf16.gmra.mrb[0].mxu0 %v408
      %v659 = vpop.f32.mrb[0].mxu0
      %v660 = vadd.f32 0.0, %v659
      %v661 = vpop.f32.mrb[0].mxu0
      %v662 = vpop.f32.mrb[0].mxu0
      %v663 = vadd.f32 0.0, %v662
      %v664 = vpop.f32.mrb[0].mxu0
      %665 = vmatprep.mubr.bf16.mxu0 0
      %666 = vmatmul.mubr.bf16.gmra.mrb[0].mxu0 %v409
      %v667 = vpop.f32.mrb[0].mxu0
      %v668 = vadd.f32 0.0, %v667
      %v669 = vpop.f32.mrb[0].mxu0
      %v670 = vpop.f32.mrb[0].mxu0
      %v671 = vadd.f32 0.0, %v670
      %v672 = vpop.f32.mrb[0].mxu0
      %673 = vmatprep.mubr.bf16.mxu0 0
      %674 = vmatmul.mubr.bf16.gmra.mrb[0].mxu0 %v410
      %v675 = vpop.f32.mrb[0].mxu0
      %v676 = vadd.f32 0.0, %v675
      %v677 = vpop.f32.mrb[0].mxu0
      %v678 = vpop.f32.mrb[0].mxu0
      %v679 = vadd.f32 0.0, %v678
      %v680 = vpop.f32.mrb[0].mxu0
      %681 = vmatprep.mubr.bf16.mxu0 0
      %682 = vmatmul.mubr.bf16.gmra.mrb[0].mxu0 %v411
      %v683 = vpop.f32.mrb[0].mxu0
      %v684 = vadd.f32 0.0, %v683
      %v685 = vpop.f32.mrb[0].mxu0
      %v686 = vpop.f32.mrb[0].mxu0
      %v687 = vadd.f32 0.0, %v686
      %v688 = vpop.f32.mrb[0].mxu0
      %689 = vmatprep.mubr.bf16.mxu0 0
      %690 = vmatmul.mubr.bf16.gmra.mrb[0].mxu0 %v412
      %v691 = vpop.f32.mrb[0].mxu0
      %v692 = vadd.f32 0.0, %v691
      %v693 = vpop.f32.mrb[0].mxu0
      %v694 = vpop.f32.mrb[0].mxu0
      %v695 = vadd.f32 0.0, %v694
      %v696 = vpop.f32.mrb[0].mxu0
      %697 = vmatprep.mubr.bf16.mxu0 0
      %698 = vmatmul.mubr.bf16.gmra.mrb[0].mxu0 %v413
      %v699 = vpop.f32.mrb[0].mxu0
      %v700 = vadd.f32 0.0, %v699
      %v701 = vpop.f32.mrb[0].mxu0
      %v702 = vpop.f32.mrb[0].mxu0
      %v703 = vadd.f32 0.0, %v702
      %v704 = vpop.f32.mrb[0].mxu0
      %705 = vmatprep.mubr.bf16.mxu0 0
      %706 = vmatmul.mubr.bf16.gmra.mrb[0].mxu0 %v414
      %v707 = vpop.f32.mrb[0].mxu0
      %v708 = vadd.f32 0.0, %v707
      %v709 = vpop.f32.mrb[0].mxu0
      %v710 = vpop.f32.mrb[0].mxu0
      %v711 = vadd.f32 0.0, %v710
      %v712 = vpop.f32.mrb[0].mxu0
      %713 = vmatprep.mubr.bf16.mxu0 0
      %714 = vmatmul.mubr.bf16.gmra.mrb[0].mxu0 %v415
      %v715 = vpop.f32.mrb[0].mxu0
      %v716 = vadd.f32 0.0, %v715
      %v717 = vpop.f32.mrb[0].mxu0
      %v718 = vpop.f32.mrb[0].mxu0
      %v719 = vadd.f32 0.0, %v718
      %v720 = vpop.f32.mrb[0].mxu0
      %721 = vmatprep.mubr.bf16.mxu0 0
      %722 = vmatmul.mubr.bf16.gmra.mrb[0].mxu0 %v416
      %v723 = vpop.f32.mrb[0].mxu0
      %v724 = vadd.f32 0.0, %v723
      %v725 = vpop.f32.mrb[0].mxu0
      %v726 = vpop.f32.mrb[0].mxu0
      %v727 = vadd.f32 0.0, %v726
      %v728 = vpop.f32.mrb[0].mxu0
      %729 = vmatprep.mubr.bf16.mxu0 0
      %730 = vmatmul.mubr.bf16.gmra.mrb[0].mxu0 %v417
      %v731 = vpop.f32.mrb[0].mxu0
      %v732 = vadd.f32 0.0, %v731
      %v733 = vpop.f32.mrb[0].mxu0
      %v734 = vpop.f32.mrb[0].mxu0
      %v735 = vadd.f32 0.0, %v734
      %v736 = vpop.f32.mrb[0].mxu0
      %737 = vmatprep.mubr.bf16.mxu0 0
      %738 = vmatmul.mubr.bf16.gmra.mrb[0].mxu0 %v418
      %v739 = vpop.f32.mrb[0].mxu0
      %v740 = vadd.f32 0.0, %v739
      %v741 = vpop.f32.mrb[0].mxu0
      %v742 = vpop.f32.mrb[0].mxu0
      %v743 = vadd.f32 0.0, %v742
      %v744 = vpop.f32.mrb[0].mxu0
      %745 = vmatprep.mubr.bf16.mxu0 0
      %746 = vmatmul.mubr.bf16.gmra.mrb[0].mxu0 %v419
      %v747 = vpop.f32.mrb[0].mxu0
      %v748 = vadd.f32 0.0, %v747
      %v749 = vpop.f32.mrb[0].mxu0
      %v750 = vpop.f32.mrb[0].mxu0
      %v751 = vadd.f32 0.0, %v750
      %v752 = vpop.f32.mrb[0].mxu0
      %753 = vmatprep.mubr.bf16.mxu0 0
      %754 = vmatmul.mubr.bf16.gmra.mrb[0].mxu0 %v420
      %v755 = vpop.f32.mrb[0].mxu0
      %v756 = vadd.f32 0.0, %v755
      %v757 = vpop.f32.mrb[0].mxu0
      %v758 = vpop.f32.mrb[0].mxu0
      %v759 = vadd.f32 0.0, %v758
      %v760 = vpop.f32.mrb[0].mxu0
      %761 = vmatprep.mubr.bf16.mxu0 0
      %762 = vmatmul.mubr.bf16.gmra.mrb[0].mxu0 %v421
      %v763 = vpop.f32.mrb[0].mxu0
      %v764 = vadd.f32 0.0, %v763
      %v765 = vpop.f32.mrb[0].mxu0
      %v766 = vpop.f32.mrb[0].mxu0
      %v767 = vadd.f32 0.0, %v766
      %v768 = vpop.f32.mrb[0].mxu0
      %769 = vmatprep.mubr.bf16.mxu0 0
      %770 = vmatmul.mubr.bf16.gmra.mrb[0].mxu0 %v422
      %v771 = vpop.f32.mrb[0].mxu0
      %v772 = vadd.f32 0.0, %v771
      %v773 = vpop.f32.mrb[0].mxu0
      %v774 = vpop.f32.mrb[0].mxu0
      %v775 = vadd.f32 0.0, %v774
      %v776 = vpop.f32.mrb[0].mxu0
      %777 = vmatprep.mubr.bf16.mxu0 0
      %778 = vmatmul.mubr.bf16.gmra.mrb[0].mxu0 %v423
      %v779 = vpop.f32.mrb[0].mxu0
      %v780 = vadd.f32 0.0, %v779
      %v781 = vpop.f32.mrb[0].mxu0
      %v782 = vpop.f32.mrb[0].mxu0
      %v783 = vadd.f32 0.0, %v782
      %v784 = vpop.f32.mrb[0].mxu0
      %785 = vmatprep.mubr.bf16.mxu0 0
      %786 = vmatmul.mubr.bf16.gmra.mrb[0].mxu0 %v424
      %v787 = vpop.f32.mrb[0].mxu0
      %v788 = vadd.f32 0.0, %v787
      %v789 = vpop.f32.mrb[0].mxu0
      %v790 = vpop.f32.mrb[0].mxu0
      %v791 = vadd.f32 0.0, %v790
      %v792 = vpop.f32.mrb[0].mxu0
      %793 = vdwg.mxu0
      %794 = vst [vmem:[%s182] sm:$0xff] %v540
      %795 = vst [vmem:[%s182 + $0x8] sm:$0xff] %v543
      %796 = vst [vmem:[%s182 + $0x10] sm:$0xff] %v548
      %797 = vst [vmem:[%s182 + $0x18] sm:$0xff] %v551
      %798 = vst [vmem:[%s182 + $0x20] sm:$0xff] %v556
      %799 = vst [vmem:[%s182 + $0x28] sm:$0xff] %v559
      %800 = vst [vmem:[%s182 + $0x30] sm:$0xff] %v564
      %801 = vst [vmem:[%s182 + $0x38] sm:$0xff] %v567
      %802 = vst [vmem:[%s182 + $0x40] sm:$0xff] %v572
      %803 = vst [vmem:[%s182 + $0x48] sm:$0xff] %v575
      %804 = vst [vmem:[%s182 + $0x50] sm:$0xff] %v580
      %805 = vst [vmem:[%s182 + $0x58] sm:$0xff] %v583
      %806 = vst [vmem:[%s182 + $0x60] sm:$0xff] %v588
      %807 = vst [vmem:[%s182 + $0x68] sm:$0xff] %v591
      %808 = vst [vmem:[%s182 + $0x70] sm:$0xff] %v596
      %809 = vst [vmem:[%s182 + $0x78] sm:$0xff] %v599
      %810 = vst [vmem:[%s182 + $0x80] sm:$0xff] %v604
      %811 = vst [vmem:[%s182 + $0x88] sm:$0xff] %v607
      %812 = vst [vmem:[%s182 + $0x90] sm:$0xff] %v612
      %813 = vst [vmem:[%s182 + $0x98] sm:$0xff] %v615
      %814 = vst [vmem:[%s182 + $0xa0] sm:$0xff] %v620
      %815 = vst [vmem:[%s182 + $0xa8] sm:$0xff] %v623
      %816 = vst [vmem:[%s182 + $0xb0] sm:$0xff] %v628
      %817 = vst [vmem:[%s182 + $0xb8] sm:$0xff] %v631
      %818 = vst [vmem:[%s182 + $0xc0] sm:$0xff] %v636
      %819 = vst [vmem:[%s182 + $0xc8] sm:$0xff] %v639
      %820 = vst [vmem:[%s182 + $0xd0] sm:$0xff] %v644
      %821 = vst [vmem:[%s182 + $0xd8] sm:$0xff] %v647
      %822 = vst [vmem:[%s182 + $0xe0] sm:$0xff] %v652
      %823 = vst [vmem:[%s182 + $0xe8] sm:$0xff] %v655
      %824 = vst [vmem:[%s182 + $0xf0] sm:$0xff] %v660
      %825 = vst [vmem:[%s182 + $0xf8] sm:$0xff] %v663
      %826 = vst [vmem:[%s182 + $0x100] sm:$0xff] %v668
      %827 = vst [vmem:[%s182 + $0x108] sm:$0xff] %v671
      %828 = vst [vmem:[%s182 + $0x110] sm:$0xff] %v676
      %829 = vst [vmem:[%s182 + $0x118] sm:$0xff] %v679
      %830 = vst [vmem:[%s182 + $0x120] sm:$0xff] %v684
      %831 = vst [vmem:[%s182 + $0x128] sm:$0xff] %v687
      %832 = vst [vmem:[%s182 + $0x130] sm:$0xff] %v692
      %833 = vst [vmem:[%s182 + $0x138] sm:$0xff] %v695
      %834 = vst [vmem:[%s182 + $0x140] sm:$0xff] %v700
      %835 = vst [vmem:[%s182 + $0x148] sm:$0xff] %v703
      %836 = vst [vmem:[%s182 + $0x150] sm:$0xff] %v708
      %837 = vst [vmem:[%s182 + $0x158] sm:$0xff] %v711
      %838 = vst [vmem:[%s182 + $0x160] sm:$0xff] %v716
      %839 = vst [vmem:[%s182 + $0x168] sm:$0xff] %v719
      %840 = vst [vmem:[%s182 + $0x170] sm:$0xff] %v724
      %841 = vst [vmem:[%s182 + $0x178] sm:$0xff] %v727
      %842 = vst [vmem:[%s182 + $0x180] sm:$0xff] %v732
      %843 = vst [vmem:[%s182 + $0x188] sm:$0xff] %v735
      %844 = vst [vmem:[%s182 + $0x190] sm:$0xff] %v740
      %845 = vst [vmem:[%s182 + $0x198] sm:$0xff] %v743
      %846 = vst [vmem:[%s182 + $0x1a0] sm:$0xff] %v748
      %847 = vst [vmem:[%s182 + $0x1a8] sm:$0xff] %v751
      %848 = vst [vmem:[%s182 + $0x1b0] sm:$0xff] %v756
      %849 = vst [vmem:[%s182 + $0x1b8] sm:$0xff] %v759
      %850 = vst [vmem:[%s182 + $0x1c0] sm:$0xff] %v764
      %851 = vst [vmem:[%s182 + $0x1c8] sm:$0xff] %v767
      %852 = vst [vmem:[%s182 + $0x1d0] sm:$0xff] %v772
      %853 = vst [vmem:[%s182 + $0x1d8] sm:$0xff] %v775
      %854 = vst [vmem:[%s182 + $0x1e0] sm:$0xff] %v780
      %855 = vst [vmem:[%s182 + $0x1e8] sm:$0xff] %v783
      %856 = vst [vmem:[%s182 + $0x1f0] sm:$0xff] %v788
      %857 = vst [vmem:[%s182 + $0x1f8] sm:$0xff] %v791
      %s858 = smul.u32 64, %s17
      %p859 = scmp.lt.s32.totalorder %s858, 1023
      %s860 = scalar_select %p859, %s858, 1023
      %p861 = scmp.lt.s32.totalorder %s18, 0
      %s862 = scalar_select %p861, %s18, 0
      %s863 = sadd.s32 %s862, %s860
      %s864 = smul.addr %s863, 8
      %s865 = scalar_lea.vmem %s2, %s864
      // Predicated region
      $region29: #{sparse_resnet_encoder.5} parent=27 // pred_check
        %p866 = pneg %p97
      $region30: #{sparse_resnet_encoder.5} parent=27 // pred_check_branch
        %868 = sbr.rel (%p866) target = $region32
      $region31: #{sparse_resnet_encoder.5} parent=27 // pred_region
        %s869 = smul.u32 64, %s17
      $region32: #{sparse_resnet_encoder.5} parent=27 // pred_fallthru
        _
    $region28: #{sparse_resnet_encoder.5} parent=5 // pred_fallthru
      _
    %p870 = scmp.le.s32.totalorder 2, %s8
    // Predicated region
    $region33: #{sparse_resnet_encoder.5} parent=5 // pred_check
      %p871 = pneg %p870
    $region34: #{sparse_resnet_encoder.5} parent=5 // pred_check_branch
      %873 = sbr.rel (%p871) target = $region36
    $region35: #{sparse_resnet_encoder.5} parent=5 // pred_region
      %s874 = ssub.s32 %s8, 2
      // Predicated region
      $region37: #{sparse_resnet_encoder.5} parent=35 // pred_check
        %p875 = pneg %p103
      $region38: #{sparse_resnet_encoder.5} parent=35 // pred_check_branch
        %877 = sbr.rel (%p875) target = $region40
      $region39: #{sparse_resnet_encoder.5} parent=35 // pred_region
        %s878 = smul.u32 64, %s19
        %p879 = scmp.lt.s32.totalorder %s878, 1023
        %s880 = scalar_select %p879, %s878, 1023
        %p881 = scmp.lt.s32.totalorder %s20, 0
        %s882 = scalar_select %p881, %s20, 0
        %s883 = sadd.s32 %s882, %s880
        %s884 = smul.addr %s883, 8
        %s885 = scalar_lea.vmem %s2, %s884
      $region40: #{sparse_resnet_encoder.5} parent=35 // pred_fallthru
        _
    $region36: #{sparse_resnet_encoder.5} parent=5 // pred_fallthru
      _
  $region6: #{sparse_resnet_encoder.5} parent=0 // loop_footer
    %s12 = sadd.s32 1, %s8
  $region7: #{sparse_resnet_encoder.5} parent=0 // loop_footer_branch
    %7 = sbr.rel target = $region3
  $region8: #{sparse_resnet_encoder.5} parent=0 // loop_exit
    _

// kernel: sparse_resnet_encoder.6
$region0: #{sparse_resnet_encoder.6}
  #allocation0 [shape = 'u32[]', space=smem, size = 0x4, offset = 0x4, fixed_abs, tag = 'smem constant byte address 0x4 - core index']
  #allocation1 [shape = 'u32[144,128]{1,0:T(1,128)}', space=vmem, size = 0x12000, scoped, tag = 'internal scratch']
  %s0 = inlined_call_operand.vmem [shape: bf16[1024,512], index: 0, kind: input, shape index: {}]
  %s1 = inlined_call_operand.vmem [shape: bf16[512,128], index: 1, kind: input, shape index: {}]
  %s2 = inlined_call_operand.vmem [shape: f32[1024,128], index: 2, kind: output, shape index: {}]
  %s3 = sld [smem:[#allocation0]]
  $region41: #{sparse_resnet_encoder.6} parent=0
    _
  %s5 = ssub.s32 1, %s3
  %s6 = scalar_select 0, %s5, %s3
  loop: start=0, step=1, limit=4
  $region2: #{sparse_resnet_encoder.6} parent=0 // loop_pre_header
    _
  $region3: #{sparse_resnet_encoder.6} parent=0 // loop_header
    %s8 = sphi 0, %s12
    %p9 = scmp.ge.s32.totalorder %s8, 4
    %s15 = sphi 0, %s27
    %s16 = sphi 0, %s23
    %s17 = sphi 0, %s15
    %s18 = sphi 0, %s16
    %s19 = sphi 0, %s17
    %s20 = sphi 0, %s18
    %s30 = sphi 0, %s32
    %s33 = sphi 0, %s30
    %s34 = sphi 0, %s33
    %s50 = sphi 0, %s34
    %s56 = sphi 0, %s58
    %s59 = sphi 0, %s56
    %s60 = sphi 0, %s59
    %s76 = sphi 0, %s60
    %s84 = sphi 0, %s86
    %s87 = sphi 0, %s84
    %s88 = sphi 0, %s87
    %s104 = sphi 0, %s88
  $region4: #{sparse_resnet_encoder.6} parent=0 // loop_header_branch
    %11 = sbr.rel (%p9) target = $region8
  $region5: #{sparse_resnet_encoder.6} parent=0 // loop_body
    %s13 = ssub.s32 %s8, 1
    %s14 = ssub.s32 %s8, 2
    %s21 = sadd.s32 1, %s16
    %p22 = scmp.ge.s32.totalorder %s21, 1
    %s23 = scalar_select %p22, 0, %s21
    %s24 = sadd.s32 1, %s15
    %s25 = scalar_select %p22, %s24, %s15
    %p26 = scmp.ge.s32.totalorder %s25, 2
    %s27 = scalar_select %p26, 0, %s25
    %s28 = ssub.s32 %s15, %s27
    %p29 = scmp.eq.s32.totalorder %s28, 0
    %s31 = sadd.s32 %s30, 1
    %s32 = scalar_select %p29, %s30, %s31
    %p35 = pneg %p29
    %p36 = scmp.eq.s32.totalorder %s8, 1
    %p37 = por %p35, %p36
    %p38 = scmp.ne.s32.totalorder %s30, %s33
    %p39 = scmp.eq.s32.totalorder %s8, 0
    %p40 = por %p38, %p39
    %p41 = scmp.ne.s32.totalorder %s30, %s33
    %p42 = scmp.eq.s32.totalorder %s13, 1
    %p43 = por %p41, %p42
    %p44 = scmp.ne.s32.totalorder %s33, %s34
    %p45 = scmp.eq.s32.totalorder %s13, 0
    %p46 = por %p44, %p45
    %p47 = scmp.ne.s32.totalorder %s33, %s34
    %p48 = scmp.eq.s32.totalorder %s14, 1
    %p49 = por %p47, %p48
    %p51 = scmp.ne.s32.totalorder %s34, %s50
    %p52 = scmp.eq.s32.totalorder %s14, 0
    %p53 = por %p51, %p52
    %s54 = ssub.s32 %s16, %s23
    %p55 = scmp.eq.s32.totalorder %s54, 0
    %s57 = sadd.s32 %s56, 1
    %s58 = scalar_select %p55, %s56, %s57
    %p61 = pneg %p55
    %p62 = scmp.eq.s32.totalorder %s8, 1
    %p63 = por %p61, %p62
    %p64 = scmp.ne.s32.totalorder %s56, %s59
    %p65 = scmp.eq.s32.totalorder %s8, 0
    %p66 = por %p64, %p65
    %p67 = scmp.ne.s32.totalorder %s56, %s59
    %p68 = scmp.eq.s32.totalorder %s13, 1
    %p69 = por %p67, %p68
    %p70 = scmp.ne.s32.totalorder %s59, %s60
    %p71 = scmp.eq.s32.totalorder %s13, 0
    %p72 = por %p70, %p71
    %p73 = scmp.ne.s32.totalorder %s59, %s60
    %p74 = scmp.eq.s32.totalorder %s14, 1
    %p75 = por %p73, %p74
    %p77 = scmp.ne.s32.totalorder %s60, %s76
    %p78 = scmp.eq.s32.totalorder %s14, 0
    %p79 = por %p77, %p78
    %s80 = ssub.s32 %s15, %s27
    %s81 = ssub.s32 %s16, %s23
    %s82 = sor.u32 %s80, %s81
    %p83 = scmp.eq.s32.totalorder %s82, 0
    %s85 = sadd.s32 %s84, 1
    %s86 = scalar_select %p83, %s84, %s85
    %p89 = pneg %p83
    %p90 = scmp.eq.s32.totalorder %s8, 1
    %p91 = por %p89, %p90
    %p92 = scmp.ne.s32.totalorder %s84, %s87
    %p93 = scmp.eq.s32.totalorder %s8, 0
    %p94 = por %p92, %p93
    %p95 = scmp.ne.s32.totalorder %s84, %s87
    %p96 = scmp.eq.s32.totalorder %s13, 1
    %p97 = por %p95, %p96
    %p98 = scmp.ne.s32.totalorder %s87, %s88
    %p99 = scmp.eq.s32.totalorder %s13, 0
    %p100 = por %p98, %p99
    %p101 = scmp.ne.s32.totalorder %s87, %s88
    %p102 = scmp.eq.s32.totalorder %s14, 1
    %p103 = por %p101, %p102
    %p105 = scmp.ne.s32.totalorder %s88, %s104
    %p106 = scmp.eq.s32.totalorder %s14, 0
    %p107 = por %p105, %p106
    %p108 = scmp.le.s32.totalorder 1, %s8
    %p109 = scmp.lt.s32.totalorder %s8, 3
    %p110 = pnand %p108, %p109
    %p111 = pneg %p110
    // Predicated region
    $region9: #{sparse_resnet_encoder.6} parent=5 // pred_check
      _
    $region10: #{sparse_resnet_encoder.6} parent=5 // pred_check_branch
      %113 = sbr.rel (%p110) target = $region12
    $region11: #{sparse_resnet_encoder.6} parent=5 // pred_region
      %s114 = ssub.s32 %s8, 1
      // Predicated region
      $region13: #{sparse_resnet_encoder.6} parent=11 // pred_check
        %p115 = pneg %p72
      $region14: #{sparse_resnet_encoder.6} parent=11 // pred_check_branch
        %117 = sbr.rel (%p115) target = $region16
      $region15: #{sparse_resnet_encoder.6} parent=11 // pred_region
        %p118 = scmp.lt.s32.totalorder %s18, 0
        %s119 = scalar_select %p118, %s18, 0
        %s120 = smul.addr %s119, 4
        %s121 = scalar_lea.vmem %s1, %s120
      $region16: #{sparse_resnet_encoder.6} parent=11 // pred_fallthru
        _
    $region12: #{sparse_resnet_encoder.6} parent=5 // pred_fallthru
      _
    %p122 = scmp.lt.s32.totalorder %s8, 2
    // Predicated region
    $region17: #{sparse_resnet_encoder.6} parent=5 // pred_check
      %p123 = pneg %p122
    $region18: #{sparse_resnet_encoder.6} parent=5 // pred_check_branch
      %125 = sbr.rel (%p123) target = $region20
    $region19: #{sparse_resnet_encoder.6} parent=5 // pred_region
      // Predicated region
      $region21: #{sparse_resnet_encoder.6} parent=19 // pred_check
        %p126 = pneg %p40
      $region22: #{sparse_resnet_encoder.6} parent=19 // pred_check_branch
        %128 = sbr.rel (%p126) target = $region24
      $region23: #{sparse_resnet_encoder.6} parent=19 // pred_region
        %s129 = smul.u32 64, %s15
        %p130 = scmp.lt.s32.totalorder %s129, 127
        %s131 = scalar_select %p130, %s129, 127
        %s132 = smul.addr %s131, 4
        %s133 = smul.addr %s132, 4
        %s134 = scalar_lea.vmem %s0, %s133
        %s135 = smul.u32 64, %s15
      $region24: #{sparse_resnet_encoder.6} parent=19 // pred_fallthru
        _
    $region20: #{sparse_resnet_encoder.6} parent=5 // pred_fallthru
      _
    %p136 = scmp.le.s32.totalorder 1, %s8
    %p137 = scmp.lt.s32.totalorder %s8, 3
    %p138 = pnand %p136, %p137
    %p139 = pneg %p138
    // Predicated region
    $region25: #{sparse_resnet_encoder.6} parent=5 // pred_check
      _
    $region26: #{sparse_resnet_encoder.6} parent=5 // pred_check_branch
      %141 = sbr.rel (%p138) target = $region28
    $region27: #{sparse_resnet_encoder.6} parent=5 // pred_region
      %s142 = ssub.s32 %s8, 1
      %s143 = smul.u32 64, %s17
      %p144 = scmp.lt.s32.totalorder %s143, 127
      %s145 = scalar_select %p144, %s143, 127
      %s146 = smul.addr %s145, 4
      %s147 = smul.addr %s146, 4
      %s148 = scalar_lea.vmem %s0, %s147
      %p149 = pneg %p46
      %p150 = pneg %p43
      %p151 = scmp.lt.s32.totalorder %s18, 0
      %s152 = scalar_select %p151, %s18, 0
      %s153 = smul.addr %s152, 4
      %s154 = scalar_lea.vmem %s1, %s153
      %p155 = pneg %p72
      %p156 = pneg %p69
      %p157 = pneg %p100
      %p158 = pneg %p97
      %s159 = smul.u32 64, %s17
      %p160 = scmp.lt.s32.totalorder %s159, 127
      %s161 = scalar_select %p160, %s159, 127
      %p162 = scmp.lt.s32.totalorder %s18, 0
      %s163 = scalar_select %p162, %s18, 0
      %s164 = sadd.s32 %s163, %s161
      %s165 = smul.addr %s164, 8
      %s166 = scalar_lea.vmem %s2, %s165
      %s167 = smul.u32 64, %s17
      %p168 = scmp.lt.s32.totalorder %s167, 127
      %s169 = scalar_select %p168, %s167, 127
      %s170 = smul.addr %s169, 4
      %s171 = smul.addr %s170, 4
      %s172 = scalar_lea.vmem %s0, %s171
      %s173 = smul.u32 64, %s17
      %p174 = scmp.lt.s32.totalorder %s18, 0
      %s175 = scalar_select %p174, %s18, 0
      %s176 = smul.addr %s175, 4
      %s177 = scalar_lea.vmem %s1, %s176
      %s178 = smul.u32 64, %s17
      %p179 = scmp.lt.s32.totalorder %s178, 127
      %s180 = scalar_select %p179, %s178, 127
      %p181 = scmp.lt.s32.totalorder %s18, 0
      %s182 = scalar_select %p181, %s18, 0
      %s183 = sadd.s32 %s182, %s180
      %s184 = smul.addr %s183, 8
      %s185 = scalar_lea.vmem %s2, %s184
      %s186 = smul.u32 64, %s17
      %v188 = vld [vmem:[%s172] sm:$0xff]
      %v189 = vld [vmem:[%s172 + $0x8] sm:$0xff]
      %v190 = vld [vmem:[%s172 + $0x10] sm:$0xff]
      %v191 = vld [vmem:[%s172 + $0x18] sm:$0xff]
      %v192 = vld [vmem:[%s172 + $0x20] sm:$0xff]
      %v193 = vld [vmem:[%s172 + $0x28] sm:$0xff]
      %v194 = vld [vmem:[%s172 + $0x30] sm:$0xff]
      %v195 = vld [vmem:[%s172 + $0x38] sm:$0xff]
      %v196 = vld [vmem:[%s172 + $0x40] sm:$0xff]
      %v197 = vld [vmem:[%s172 + $0x48] sm:$0xff]
      %v198 = vld [vmem:[%s172 + $0x50] sm:$0xff]
      %v199 = vld [vmem:[%s172 + $0x58] sm:$0xff]
      %v200 = vld [vmem:[%s172 + $0x60] sm:$0xff]
      %v201 = vld [vmem:[%s172 + $0x68] sm:$0xff]
      %v202 = vld [vmem:[%s172 + $0x70] sm:$0xff]
      %v203 = vld [vmem:[%s172 + $0x78] sm:$0xff]
      %v204 = vld [vmem:[%s172 + $0x80] sm:$0xff]
      %v205 = vld [vmem:[%s172 + $0x88] sm:$0xff]
      %v206 = vld [vmem:[%s172 + $0x90] sm:$0xff]
      %v207 = vld [vmem:[%s172 + $0x98] sm:$0xff]
      %v208 = vld [vmem:[%s172 + $0xa0] sm:$0xff]
      %v209 = vld [vmem:[%s172 + $0xa8] sm:$0xff]
      %v210 = vld [vmem:[%s172 + $0xb0] sm:$0xff]
      %v211 = vld [vmem:[%s172 + $0xb8] sm:$0xff]
      %v212 = vld [vmem:[%s172 + $0xc0] sm:$0xff]
      %v213 = vld [vmem:[%s172 + $0xc8] sm:$0xff]
      %v214 = vld [vmem:[%s172 + $0xd0] sm:$0xff]
      %v215 = vld [vmem:[%s172 + $0xd8] sm:$0xff]
      %v216 = vld [vmem:[%s172 + $0xe0] sm:$0xff]
      %v217 = vld [vmem:[%s172 + $0xe8] sm:$0xff]
      %v218 = vld [vmem:[%s172 + $0xf0] sm:$0xff]
      %v219 = vld [vmem:[%s172 + $0xf8] sm:$0xff]
      %v220 = vld [vmem:[%s172 + $0x100] sm:$0xff]
      %v221 = vld [vmem:[%s172 + $0x108] sm:$0xff]
      %v222 = vld [vmem:[%s172 + $0x110] sm:$0xff]
      %v223 = vld [vmem:[%s172 + $0x118] sm:$0xff]
      %v224 = vld [vmem:[%s172 + $0x120] sm:$0xff]
      %v225 = vld [vmem:[%s172 + $0x128] sm:$0xff]
      %v226 = vld [vmem:[%s172 + $0x130] sm:$0xff]
      %v227 = vld [vmem:[%s172 + $0x138] sm:$0xff]
      %v228 = vld [vmem:[%s172 + $0x140] sm:$0xff]
      %v229 = vld [vmem:[%s172 + $0x148] sm:$0xff]
      %v230 = vld [vmem:[%s172 + $0x150] sm:$0xff]
      %v231 = vld [vmem:[%s172 + $0x158] sm:$0xff]
      %v232 = vld [vmem:[%s172 + $0x160] sm:$0xff]
      %v233 = vld [vmem:[%s172 + $0x168] sm:$0xff]
      %v234 = vld [vmem:[%s172 + $0x170] sm:$0xff]
      %v235 = vld [vmem:[%s172 + $0x178] sm:$0xff]
      %v236 = vld [vmem:[%s172 + $0x180] sm:$0xff]
      %v237 = vld [vmem:[%s172 + $0x188] sm:$0xff]
      %v238 = vld [vmem:[%s172 + $0x190] sm:$0xff]
      %v239 = vld [vmem:[%s172 + $0x198] sm:$0xff]
      %v240 = vld [vmem:[%s172 + $0x1a0] sm:$0xff]
      %v241 = vld [vmem:[%s172 + $0x1a8] sm:$0xff]
      %v242 = vld [vmem:[%s172 + $0x1b0] sm:$0xff]
      %v243 = vld [vmem:[%s172 + $0x1b8] sm:$0xff]
      %v244 = vld [vmem:[%s172 + $0x1c0] sm:$0xff]
      %v245 = vld [vmem:[%s172 + $0x1c8] sm:$0xff]
      %v246 = vld [vmem:[%s172 + $0x1d0] sm:$0xff]
      %v247 = vld [vmem:[%s172 + $0x1d8] sm:$0xff]
      %v248 = vld [vmem:[%s172 + $0x1e0] sm:$0xff]
      %v249 = vld [vmem:[%s172 + $0x1e8] sm:$0xff]
      %v250 = vld [vmem:[%s172 + $0x1f0] sm:$0xff]
      %v251 = vld [vmem:[%s172 + $0x1f8] sm:$0xff]
      %v252 = vld [vmem:[%s172 + $0x200] sm:$0xff]
      %v253 = vld [vmem:[%s172 + $0x208] sm:$0xff]
      %v254 = vld [vmem:[%s172 + $0x210] sm:$0xff]
      %v255 = vld [vmem:[%s172 + $0x218] sm:$0xff]
      %v256 = vld [vmem:[%s172 + $0x220] sm:$0xff]
      %v257 = vld [vmem:[%s172 + $0x228] sm:$0xff]
      %v258 = vld [vmem:[%s172 + $0x230] sm:$0xff]
      %v259 = vld [vmem:[%s172 + $0x238] sm:$0xff]
      %v260 = vld [vmem:[%s172 + $0x240] sm:$0xff]
      %v261 = vld [vmem:[%s172 + $0x248] sm:$0xff]
      %v262 = vld [vmem:[%s172 + $0x250] sm:$0xff]
      %v263 = vld [vmem:[%s172 + $0x258] sm:$0xff]
      %v264 = vld [vmem:[%s172 + $0x260] sm:$0xff]
      %v265 = vld [vmem:[%s172 + $0x268] sm:$0xff]
      %v266 = vld [vmem:[%s172 + $0x270] sm:$0xff]
      %v267 = vld [vmem:[%s172 + $0x278] sm:$0xff]
      %v268 = vld [vmem:[%s172 + $0x280] sm:$0xff]
      %v269 = vld [vmem:[%s172 + $0x288] sm:$0xff]
      %v270 = vld [vmem:[%s172 + $0x290] sm:$0xff]
      %v271 = vld [vmem:[%s172 + $0x298] sm:$0xff]
      %v272 = vld [vmem:[%s172 + $0x2a0] sm:$0xff]
      %v273 = vld [vmem:[%s172 + $0x2a8] sm:$0xff]
      %v274 = vld [vmem:[%s172 + $0x2b0] sm:$0xff]
      %v275 = vld [vmem:[%s172 + $0x2b8] sm:$0xff]
      %v276 = vld [vmem:[%s172 + $0x2c0] sm:$0xff]
      %v277 = vld [vmem:[%s172 + $0x2c8] sm:$0xff]
      %v278 = vld [vmem:[%s172 + $0x2d0] sm:$0xff]
      %v279 = vld [vmem:[%s172 + $0x2d8] sm:$0xff]
      %v280 = vld [vmem:[%s172 + $0x2e0] sm:$0xff]
      %v281 = vld [vmem:[%s172 + $0x2e8] sm:$0xff]
      %v282 = vld [vmem:[%s172 + $0x2f0] sm:$0xff]
      %v283 = vld [vmem:[%s172 + $0x2f8] sm:$0xff]
      %v284 = vld [vmem:[%s172 + $0x300] sm:$0xff]
      %v285 = vld [vmem:[%s172 + $0x308] sm:$0xff]
      %v286 = vld [vmem:[%s172 + $0x310] sm:$0xff]
      %v287 = vld [vmem:[%s172 + $0x318] sm:$0xff]
      %v288 = vld [vmem:[%s172 + $0x320] sm:$0xff]
      %v289 = vld [vmem:[%s172 + $0x328] sm:$0xff]
      %v290 = vld [vmem:[%s172 + $0x330] sm:$0xff]
      %v291 = vld [vmem:[%s172 + $0x338] sm:$0xff]
      %v292 = vld [vmem:[%s172 + $0x340] sm:$0xff]
      %v293 = vld [vmem:[%s172 + $0x348] sm:$0xff]
      %v294 = vld [vmem:[%s172 + $0x350] sm:$0xff]
      %v295 = vld [vmem:[%s172 + $0x358] sm:$0xff]
      %v296 = vld [vmem:[%s172 + $0x360] sm:$0xff]
      %v297 = vld [vmem:[%s172 + $0x368] sm:$0xff]
      %v298 = vld [vmem:[%s172 + $0x370] sm:$0xff]
      %v299 = vld [vmem:[%s172 + $0x378] sm:$0xff]
      %v300 = vld [vmem:[%s172 + $0x380] sm:$0xff]
      %v301 = vld [vmem:[%s172 + $0x388] sm:$0xff]
      %v302 = vld [vmem:[%s172 + $0x390] sm:$0xff]
      %v303 = vld [vmem:[%s172 + $0x398] sm:$0xff]
      %v304 = vld [vmem:[%s172 + $0x3a0] sm:$0xff]
      %v305 = vld [vmem:[%s172 + $0x3a8] sm:$0xff]
      %v306 = vld [vmem:[%s172 + $0x3b0] sm:$0xff]
      %v307 = vld [vmem:[%s172 + $0x3b8] sm:$0xff]
      %v308 = vld [vmem:[%s172 + $0x3c0] sm:$0xff]
      %v309 = vld [vmem:[%s172 + $0x3c8] sm:$0xff]
      %v310 = vld [vmem:[%s172 + $0x3d0] sm:$0xff]
      %v311 = vld [vmem:[%s172 + $0x3d8] sm:$0xff]
      %v312 = vld [vmem:[%s172 + $0x3e0] sm:$0xff]
      %v313 = vld [vmem:[%s172 + $0x3e8] sm:$0xff]
      %v314 = vld [vmem:[%s172 + $0x3f0] sm:$0xff]
      %v315 = vld [vmem:[%s172 + $0x3f8] sm:$0xff]
      %v316 = vld [vmem:[%s177] sm:$0xf]
      %v317 = vld [vmem:[%s177 + $0x4] sm:$0xf]
      %v318 = vld [vmem:[%s177 + $0x8] sm:$0xf]
      %v319 = vld [vmem:[%s177 + $0xc] sm:$0xf]
      %v320 = vld [vmem:[%s177 + $0x10] sm:$0xf]
      %v321 = vld [vmem:[%s177 + $0x14] sm:$0xf]
      %v322 = vld [vmem:[%s177 + $0x18] sm:$0xf]
      %v323 = vld [vmem:[%s177 + $0x1c] sm:$0xf]
      %v324 = vld [vmem:[%s177 + $0x20] sm:$0xf]
      %v325 = vld [vmem:[%s177 + $0x24] sm:$0xf]
      %v326 = vld [vmem:[%s177 + $0x28] sm:$0xf]
      %v327 = vld [vmem:[%s177 + $0x2c] sm:$0xf]
      %v328 = vld [vmem:[%s177 + $0x30] sm:$0xf]
      %v329 = vld [vmem:[%s177 + $0x34] sm:$0xf]
      %v330 = vld [vmem:[%s177 + $0x38] sm:$0xf]
      %v331 = vld [vmem:[%s177 + $0x3c] sm:$0xf]
      %v332 = vld [vmem:[%s177 + $0x40] sm:$0xf]
      %v333 = vld [vmem:[%s177 + $0x44] sm:$0xf]
      %v334 = vld [vmem:[%s177 + $0x48] sm:$0xf]
      %v335 = vld [vmem:[%s177 + $0x4c] sm:$0xf]
      %v336 = vld [vmem:[%s177 + $0x50] sm:$0xf]
      %v337 = vld [vmem:[%s177 + $0x54] sm:$0xf]
      %v338 = vld [vmem:[%s177 + $0x58] sm:$0xf]
      %v339 = vld [vmem:[%s177 + $0x5c] sm:$0xf]
      %v340 = vld [vmem:[%s177 + $0x60] sm:$0xf]
      %v341 = vld [vmem:[%s177 + $0x64] sm:$0xf]
      %v342 = vld [vmem:[%s177 + $0x68] sm:$0xf]
      %v343 = vld [vmem:[%s177 + $0x6c] sm:$0xf]
      %v344 = vld [vmem:[%s177 + $0x70] sm:$0xf]
      %v345 = vld [vmem:[%s177 + $0x74] sm:$0xf]
      %v346 = vld [vmem:[%s177 + $0x78] sm:$0xf]
      %v347 = vld [vmem:[%s177 + $0x7c] sm:$0xf]
      %v348 = vld [vmem:[%s177 + $0x80] sm:$0xf]
      %v349 = vld [vmem:[%s177 + $0x84] sm:$0xf]
      %v350 = vld [vmem:[%s177 + $0x88] sm:$0xf]
      %v351 = vld [vmem:[%s177 + $0x8c] sm:$0xf]
      %v352 = vld [vmem:[%s177 + $0x90] sm:$0xf]
      %v353 = vld [vmem:[%s177 + $0x94] sm:$0xf]
      %v354 = vld [vmem:[%s177 + $0x98] sm:$0xf]
      %v355 = vld [vmem:[%s177 + $0x9c] sm:$0xf]
      %v356 = vld [vmem:[%s177 + $0xa0] sm:$0xf]
      %v357 = vld [vmem:[%s177 + $0xa4] sm:$0xf]
      %v358 = vld [vmem:[%s177 + $0xa8] sm:$0xf]
      %v359 = vld [vmem:[%s177 + $0xac] sm:$0xf]
      %v360 = vld [vmem:[%s177 + $0xb0] sm:$0xf]
      %v361 = vld [vmem:[%s177 + $0xb4] sm:$0xf]
      %v362 = vld [vmem:[%s177 + $0xb8] sm:$0xf]
      %v363 = vld [vmem:[%s177 + $0xbc] sm:$0xf]
      %v364 = vld [vmem:[%s177 + $0xc0] sm:$0xf]
      %v365 = vld [vmem:[%s177 + $0xc4] sm:$0xf]
      %v366 = vld [vmem:[%s177 + $0xc8] sm:$0xf]
      %v367 = vld [vmem:[%s177 + $0xcc] sm:$0xf]
      %v368 = vld [vmem:[%s177 + $0xd0] sm:$0xf]
      %v369 = vld [vmem:[%s177 + $0xd4] sm:$0xf]
      %v370 = vld [vmem:[%s177 + $0xd8] sm:$0xf]
      %v371 = vld [vmem:[%s177 + $0xdc] sm:$0xf]
      %v372 = vld [vmem:[%s177 + $0xe0] sm:$0xf]
      %v373 = vld [vmem:[%s177 + $0xe4] sm:$0xf]
      %v374 = vld [vmem:[%s177 + $0xe8] sm:$0xf]
      %v375 = vld [vmem:[%s177 + $0xec] sm:$0xf]
      %v376 = vld [vmem:[%s177 + $0xf0] sm:$0xf]
      %v377 = vld [vmem:[%s177 + $0xf4] sm:$0xf]
      %v378 = vld [vmem:[%s177 + $0xf8] sm:$0xf]
      %v379 = vld [vmem:[%s177 + $0xfc] sm:$0xf]
      %v508 = vunpack.c.l.b16 %v188
      %v509 = vunpack.c.h.b16 %v188
      %v510 = vunpack.c.l.b16 %v189
      %v511 = vunpack.c.h.b16 %v189
      %v512 = vunpack.c.l.b16 %v190
      %v513 = vunpack.c.h.b16 %v190
      %v514 = vunpack.c.l.b16 %v191
      %v515 = vunpack.c.h.b16 %v191
      %v516 = vunpack.c.l.b16 %v192
      %v517 = vunpack.c.h.b16 %v192
      %v518 = vunpack.c.l.b16 %v193
      %v519 = vunpack.c.h.b16 %v193
      %v520 = vunpack.c.l.b16 %v194
      %v521 = vunpack.c.h.b16 %v194
      %v522 = vunpack.c.l.b16 %v195
      %v523 = vunpack.c.h.b16 %v195
      %v524 = vunpack.c.l.b16 %v196
      %v525 = vunpack.c.h.b16 %v196
      %v526 = vunpack.c.l.b16 %v197
      %v527 = vunpack.c.h.b16 %v197
      %v528 = vunpack.c.l.b16 %v198
      %v529 = vunpack.c.h.b16 %v198
      %v530 = vunpack.c.l.b16 %v199
      %v531 = vunpack.c.h.b16 %v199
      %v532 = vunpack.c.l.b16 %v200
      %v533 = vunpack.c.h.b16 %v200
      %v534 = vunpack.c.l.b16 %v201
      %v535 = vunpack.c.h.b16 %v201
      %v536 = vunpack.c.l.b16 %v202
      %v537 = vunpack.c.h.b16 %v202
      %v538 = vunpack.c.l.b16 %v203
      %v539 = vunpack.c.h.b16 %v203
      %v540 = vunpack.c.l.b16 %v204
      %v541 = vunpack.c.h.b16 %v204
      %v542 = vunpack.c.l.b16 %v205
      %v543 = vunpack.c.h.b16 %v205
      %v544 = vunpack.c.l.b16 %v206
      %v545 = vunpack.c.h.b16 %v206
      %v546 = vunpack.c.l.b16 %v207
      %v547 = vunpack.c.h.b16 %v207
      %v548 = vunpack.c.l.b16 %v208
      %v549 = vunpack.c.h.b16 %v208
      %v550 = vunpack.c.l.b16 %v209
      %v551 = vunpack.c.h.b16 %v209
      %v552 = vunpack.c.l.b16 %v210
      %v553 = vunpack.c.h.b16 %v210
      %v554 = vunpack.c.l.b16 %v211
      %v555 = vunpack.c.h.b16 %v211
      %v556 = vunpack.c.l.b16 %v212
      %v557 = vunpack.c.h.b16 %v212
      %v558 = vunpack.c.l.b16 %v213
      %v559 = vunpack.c.h.b16 %v213
      %v560 = vunpack.c.l.b16 %v214
      %v561 = vunpack.c.h.b16 %v214
      %v562 = vunpack.c.l.b16 %v215
      %v563 = vunpack.c.h.b16 %v215
      %v564 = vunpack.c.l.b16 %v216
      %v565 = vunpack.c.h.b16 %v216
      %v566 = vunpack.c.l.b16 %v217
      %v567 = vunpack.c.h.b16 %v217
      %v568 = vunpack.c.l.b16 %v218
      %v569 = vunpack.c.h.b16 %v218
      %v570 = vunpack.c.l.b16 %v219
      %v571 = vunpack.c.h.b16 %v219
      %v572 = vunpack.c.l.b16 %v220
      %v573 = vunpack.c.h.b16 %v220
      %v574 = vunpack.c.l.b16 %v221
      %v575 = vunpack.c.h.b16 %v221
      %v576 = vunpack.c.l.b16 %v222
      %v577 = vunpack.c.h.b16 %v222
      %v578 = vunpack.c.l.b16 %v223
      %v579 = vunpack.c.h.b16 %v223
      %v580 = vunpack.c.l.b16 %v224
      %v581 = vunpack.c.h.b16 %v224
      %v582 = vunpack.c.l.b16 %v225
      %v583 = vunpack.c.h.b16 %v225
      %v584 = vunpack.c.l.b16 %v226
      %v585 = vunpack.c.h.b16 %v226
      %v586 = vunpack.c.l.b16 %v227
      %v587 = vunpack.c.h.b16 %v227
      %v588 = vunpack.c.l.b16 %v228
      %v589 = vunpack.c.h.b16 %v228
      %v590 = vunpack.c.l.b16 %v229
      %v591 = vunpack.c.h.b16 %v229
      %v592 = vunpack.c.l.b16 %v230
      %v593 = vunpack.c.h.b16 %v230
      %v594 = vunpack.c.l.b16 %v231
      %v595 = vunpack.c.h.b16 %v231
      %v596 = vunpack.c.l.b16 %v232
      %v597 = vunpack.c.h.b16 %v232
      %v598 = vunpack.c.l.b16 %v233
      %v599 = vunpack.c.h.b16 %v233
      %v600 = vunpack.c.l.b16 %v234
      %v601 = vunpack.c.h.b16 %v234
      %v602 = vunpack.c.l.b16 %v235
      %v603 = vunpack.c.h.b16 %v235
      %v604 = vunpack.c.l.b16 %v236
      %v605 = vunpack.c.h.b16 %v236
      %v606 = vunpack.c.l.b16 %v237
      %v607 = vunpack.c.h.b16 %v237
      %v608 = vunpack.c.l.b16 %v238
      %v609 = vunpack.c.h.b16 %v238
      %v610 = vunpack.c.l.b16 %v239
      %v611 = vunpack.c.h.b16 %v239
      %v612 = vunpack.c.l.b16 %v240
      %v613 = vunpack.c.h.b16 %v240
      %v614 = vunpack.c.l.b16 %v241
      %v615 = vunpack.c.h.b16 %v241
      %v616 = vunpack.c.l.b16 %v242
      %v617 = vunpack.c.h.b16 %v242
      %v618 = vunpack.c.l.b16 %v243
      %v619 = vunpack.c.h.b16 %v243
      %v620 = vunpack.c.l.b16 %v244
      %v621 = vunpack.c.h.b16 %v244
      %v622 = vunpack.c.l.b16 %v245
      %v623 = vunpack.c.h.b16 %v245
      %v624 = vunpack.c.l.b16 %v246
      %v625 = vunpack.c.h.b16 %v246
      %v626 = vunpack.c.l.b16 %v247
      %v627 = vunpack.c.h.b16 %v247
      %v628 = vunpack.c.l.b16 %v248
      %v629 = vunpack.c.h.b16 %v248
      %v630 = vunpack.c.l.b16 %v249
      %v631 = vunpack.c.h.b16 %v249
      %v632 = vunpack.c.l.b16 %v250
      %v633 = vunpack.c.h.b16 %v250
      %v634 = vunpack.c.l.b16 %v251
      %v635 = vunpack.c.h.b16 %v251
      %v636 = vunpack.c.l.b16 %v252
      %v637 = vunpack.c.h.b16 %v252
      %v638 = vunpack.c.l.b16 %v253
      %v639 = vunpack.c.h.b16 %v253
      %v640 = vunpack.c.l.b16 %v254
      %v641 = vunpack.c.h.b16 %v254
      %v642 = vunpack.c.l.b16 %v255
      %v643 = vunpack.c.h.b16 %v255
      %v644 = vunpack.c.l.b16 %v256
      %v645 = vunpack.c.h.b16 %v256
      %v646 = vunpack.c.l.b16 %v257
      %v647 = vunpack.c.h.b16 %v257
      %v648 = vunpack.c.l.b16 %v258
      %v649 = vunpack.c.h.b16 %v258
      %v650 = vunpack.c.l.b16 %v259
      %v651 = vunpack.c.h.b16 %v259
      %v652 = vunpack.c.l.b16 %v260
      %v653 = vunpack.c.h.b16 %v260
      %v654 = vunpack.c.l.b16 %v261
      %v655 = vunpack.c.h.b16 %v261
      %v656 = vunpack.c.l.b16 %v262
      %v657 = vunpack.c.h.b16 %v262
      %v658 = vunpack.c.l.b16 %v263
      %v659 = vunpack.c.h.b16 %v263
      %v660 = vunpack.c.l.b16 %v264
      %v661 = vunpack.c.h.b16 %v264
      %v662 = vunpack.c.l.b16 %v265
      %v663 = vunpack.c.h.b16 %v265
      %v664 = vunpack.c.l.b16 %v266
      %v665 = vunpack.c.h.b16 %v266
      %v666 = vunpack.c.l.b16 %v267
      %v667 = vunpack.c.h.b16 %v267
      %v668 = vunpack.c.l.b16 %v268
      %v669 = vunpack.c.h.b16 %v268
      %v670 = vunpack.c.l.b16 %v269
      %v671 = vunpack.c.h.b16 %v269
      %v672 = vunpack.c.l.b16 %v270
      %v673 = vunpack.c.h.b16 %v270
      %v674 = vunpack.c.l.b16 %v271
      %v675 = vunpack.c.h.b16 %v271
      %v676 = vunpack.c.l.b16 %v272
      %v677 = vunpack.c.h.b16 %v272
      %v678 = vunpack.c.l.b16 %v273
      %v679 = vunpack.c.h.b16 %v273
      %v680 = vunpack.c.l.b16 %v274
      %v681 = vunpack.c.h.b16 %v274
      %v682 = vunpack.c.l.b16 %v275
      %v683 = vunpack.c.h.b16 %v275
      %v684 = vunpack.c.l.b16 %v276
      %v685 = vunpack.c.h.b16 %v276
      %v686 = vunpack.c.l.b16 %v277
      %v687 = vunpack.c.h.b16 %v277
      %v688 = vunpack.c.l.b16 %v278
      %v689 = vunpack.c.h.b16 %v278
      %v690 = vunpack.c.l.b16 %v279
      %v691 = vunpack.c.h.b16 %v279
      %v692 = vunpack.c.l.b16 %v280
      %v693 = vunpack.c.h.b16 %v280
      %v694 = vunpack.c.l.b16 %v281
      %v695 = vunpack.c.h.b16 %v281
      %v696 = vunpack.c.l.b16 %v282
      %v697 = vunpack.c.h.b16 %v282
      %v698 = vunpack.c.l.b16 %v283
      %v699 = vunpack.c.h.b16 %v283
      %v700 = vunpack.c.l.b16 %v284
      %v701 = vunpack.c.h.b16 %v284
      %v702 = vunpack.c.l.b16 %v285
      %v703 = vunpack.c.h.b16 %v285
      %v704 = vunpack.c.l.b16 %v286
      %v705 = vunpack.c.h.b16 %v286
      %v706 = vunpack.c.l.b16 %v287
      %v707 = vunpack.c.h.b16 %v287
      %v708 = vunpack.c.l.b16 %v288
      %v709 = vunpack.c.h.b16 %v288
      %v710 = vunpack.c.l.b16 %v289
      %v711 = vunpack.c.h.b16 %v289
      %v712 = vunpack.c.l.b16 %v290
      %v713 = vunpack.c.h.b16 %v290
      %v714 = vunpack.c.l.b16 %v291
      %v715 = vunpack.c.h.b16 %v291
      %v716 = vunpack.c.l.b16 %v292
      %v717 = vunpack.c.h.b16 %v292
      %v718 = vunpack.c.l.b16 %v293
      %v719 = vunpack.c.h.b16 %v293
      %v720 = vunpack.c.l.b16 %v294
      %v721 = vunpack.c.h.b16 %v294
      %v722 = vunpack.c.l.b16 %v295
      %v723 = vunpack.c.h.b16 %v295
      %v724 = vunpack.c.l.b16 %v296
      %v725 = vunpack.c.h.b16 %v296
      %v726 = vunpack.c.l.b16 %v297
      %v727 = vunpack.c.h.b16 %v297
      %v728 = vunpack.c.l.b16 %v298
      %v729 = vunpack.c.h.b16 %v298
      %v730 = vunpack.c.l.b16 %v299
      %v731 = vunpack.c.h.b16 %v299
      %v732 = vunpack.c.l.b16 %v300
      %v733 = vunpack.c.h.b16 %v300
      %v734 = vunpack.c.l.b16 %v301
      %v735 = vunpack.c.h.b16 %v301
      %v736 = vunpack.c.l.b16 %v302
      %v737 = vunpack.c.h.b16 %v302
      %v738 = vunpack.c.l.b16 %v303
      %v739 = vunpack.c.h.b16 %v303
      %v740 = vunpack.c.l.b16 %v304
      %v741 = vunpack.c.h.b16 %v304
      %v742 = vunpack.c.l.b16 %v305
      %v743 = vunpack.c.h.b16 %v305
      %v744 = vunpack.c.l.b16 %v306
      %v745 = vunpack.c.h.b16 %v306
      %v746 = vunpack.c.l.b16 %v307
      %v747 = vunpack.c.h.b16 %v307
      %v748 = vunpack.c.l.b16 %v308
      %v749 = vunpack.c.h.b16 %v308
      %v750 = vunpack.c.l.b16 %v309
      %v751 = vunpack.c.h.b16 %v309
      %v752 = vunpack.c.l.b16 %v310
      %v753 = vunpack.c.h.b16 %v310
      %v754 = vunpack.c.l.b16 %v311
      %v755 = vunpack.c.h.b16 %v311
      %v756 = vunpack.c.l.b16 %v312
      %v757 = vunpack.c.h.b16 %v312
      %v758 = vunpack.c.l.b16 %v313
      %v759 = vunpack.c.h.b16 %v313
      %v760 = vunpack.c.l.b16 %v314
      %v761 = vunpack.c.h.b16 %v314
      %v762 = vunpack.c.l.b16 %v315
      %v763 = vunpack.c.h.b16 %v315
      %v764 = vpack.c.b16 %v512, %v508
      %v765 = vpack.c.b16 %v513, %v509
      %v766 = vpack.c.b16 %v514, %v510
      %v767 = vpack.c.b16 %v515, %v511
      %v768 = vpack.c.b16 %v520, %v516
      %v769 = vpack.c.b16 %v521, %v517
      %v770 = vpack.c.b16 %v522, %v518
      %v771 = vpack.c.b16 %v523, %v519
      %v772 = vpack.c.b16 %v528, %v524
      %v773 = vpack.c.b16 %v529, %v525
      %v774 = vpack.c.b16 %v530, %v526
      %v775 = vpack.c.b16 %v531, %v527
      %v776 = vpack.c.b16 %v536, %v532
      %v777 = vpack.c.b16 %v537, %v533
      %v778 = vpack.c.b16 %v538, %v534
      %v779 = vpack.c.b16 %v539, %v535
      %v780 = vpack.c.b16 %v544, %v540
      %v781 = vpack.c.b16 %v545, %v541
      %v782 = vpack.c.b16 %v546, %v542
      %v783 = vpack.c.b16 %v547, %v543
      %v784 = vpack.c.b16 %v552, %v548
      %v785 = vpack.c.b16 %v553, %v549
      %v786 = vpack.c.b16 %v554, %v550
      %v787 = vpack.c.b16 %v555, %v551
      %v788 = vpack.c.b16 %v560, %v556
      %v789 = vpack.c.b16 %v561, %v557
      %v790 = vpack.c.b16 %v562, %v558
      %v791 = vpack.c.b16 %v563, %v559
      %v792 = vpack.c.b16 %v568, %v564
      %v793 = vpack.c.b16 %v569, %v565
      %v794 = vpack.c.b16 %v570, %v566
      %v795 = vpack.c.b16 %v571, %v567
      %v796 = vpack.c.b16 %v576, %v572
      %v797 = vpack.c.b16 %v577, %v573
      %v798 = vpack.c.b16 %v578, %v574
      %v799 = vpack.c.b16 %v579, %v575
      %v800 = vpack.c.b16 %v584, %v580
      %v801 = vpack.c.b16 %v585, %v581
      %v802 = vpack.c.b16 %v586, %v582
      %v803 = vpack.c.b16 %v587, %v583
      %v804 = vpack.c.b16 %v592, %v588
      %v805 = vpack.c.b16 %v593, %v589
      %v806 = vpack.c.b16 %v594, %v590
      %v807 = vpack.c.b16 %v595, %v591
      %v808 = vpack.c.b16 %v600, %v596
      %v809 = vpack.c.b16 %v601, %v597
      %v810 = vpack.c.b16 %v602, %v598
      %v811 = vpack.c.b16 %v603, %v599
      %v812 = vpack.c.b16 %v608, %v604
      %v813 = vpack.c.b16 %v609, %v605
      %v814 = vpack.c.b16 %v610, %v606
      %v815 = vpack.c.b16 %v611, %v607
      %v816 = vpack.c.b16 %v616, %v612
      %v817 = vpack.c.b16 %v617, %v613
      %v818 = vpack.c.b16 %v618, %v614
      %v819 = vpack.c.b16 %v619, %v615
      %v820 = vpack.c.b16 %v624, %v620
      %v821 = vpack.c.b16 %v625, %v621
      %v822 = vpack.c.b16 %v626, %v622
      %v823 = vpack.c.b16 %v627, %v623
      %v824 = vpack.c.b16 %v632, %v628
      %v825 = vpack.c.b16 %v633, %v629
      %v826 = vpack.c.b16 %v634, %v630
      %v827 = vpack.c.b16 %v635, %v631
      %v828 = vpack.c.b16 %v640, %v636
      %v829 = vpack.c.b16 %v641, %v637
      %v830 = vpack.c.b16 %v642, %v638
      %v831 = vpack.c.b16 %v643, %v639
      %v832 = vpack.c.b16 %v648, %v644
      %v833 = vpack.c.b16 %v649, %v645
      %v834 = vpack.c.b16 %v650, %v646
      %v835 = vpack.c.b16 %v651, %v647
      %v836 = vpack.c.b16 %v656, %v652
      %v837 = vpack.c.b16 %v657, %v653
      %v838 = vpack.c.b16 %v658, %v654
      %v839 = vpack.c.b16 %v659, %v655
      %v840 = vpack.c.b16 %v664, %v660
      %v841 = vpack.c.b16 %v665, %v661
      %v842 = vpack.c.b16 %v666, %v662
      %v843 = vpack.c.b16 %v667, %v663
      %v844 = vpack.c.b16 %v672, %v668
      %v845 = vpack.c.b16 %v673, %v669
      %v846 = vpack.c.b16 %v674, %v670
      %v847 = vpack.c.b16 %v675, %v671
      %v848 = vpack.c.b16 %v680, %v676
      %v849 = vpack.c.b16 %v681, %v677
      %v850 = vpack.c.b16 %v682, %v678
      %v851 = vpack.c.b16 %v683, %v679
      %v852 = vpack.c.b16 %v688, %v684
      %v853 = vpack.c.b16 %v689, %v685
      %v854 = vpack.c.b16 %v690, %v686
      %v855 = vpack.c.b16 %v691, %v687
      %v856 = vpack.c.b16 %v696, %v692
      %v857 = vpack.c.b16 %v697, %v693
      %v858 = vpack.c.b16 %v698, %v694
      %v859 = vpack.c.b16 %v699, %v695
      %v860 = vpack.c.b16 %v704, %v700
      %v861 = vpack.c.b16 %v705, %v701
      %v862 = vpack.c.b16 %v706, %v702
      %v863 = vpack.c.b16 %v707, %v703
      %v864 = vpack.c.b16 %v712, %v708
      %v865 = vpack.c.b16 %v713, %v709
      %v866 = vpack.c.b16 %v714, %v710
      %v867 = vpack.c.b16 %v715, %v711
      %v868 = vpack.c.b16 %v720, %v716
      %v869 = vpack.c.b16 %v721, %v717
      %v870 = vpack.c.b16 %v722, %v718
      %v871 = vpack.c.b16 %v723, %v719
      %v872 = vpack.c.b16 %v728, %v724
      %v873 = vpack.c.b16 %v729, %v725
      %v874 = vpack.c.b16 %v730, %v726
      %v875 = vpack.c.b16 %v731, %v727
      %v876 = vpack.c.b16 %v736, %v732
      %v877 = vpack.c.b16 %v737, %v733
      %v878 = vpack.c.b16 %v738, %v734
      %v879 = vpack.c.b16 %v739, %v735
      %v880 = vpack.c.b16 %v744, %v740
      %v881 = vpack.c.b16 %v745, %v741
      %v882 = vpack.c.b16 %v746, %v742
      %v883 = vpack.c.b16 %v747, %v743
      %v884 = vpack.c.b16 %v752, %v748
      %v885 = vpack.c.b16 %v753, %v749
      %v886 = vpack.c.b16 %v754, %v750
      %v887 = vpack.c.b16 %v755, %v751
      %v888 = vpack.c.b16 %v760, %v756
      %v889 = vpack.c.b16 %v761, %v757
      %v890 = vpack.c.b16 %v762, %v758
      %v891 = vpack.c.b16 %v763, %v759
      %v1084 = vunpack.c.l.b16 %v316
      %v1085 = vunpack.c.l.b16 %v317
      %v1086 = vunpack.c.l.b16 %v318
      %v1087 = vunpack.c.l.b16 %v319
      %v1088 = vunpack.c.l.b16 %v320
      %v1089 = vunpack.c.l.b16 %v321
      %v1090 = vunpack.c.l.b16 %v322
      %v1091 = vunpack.c.l.b16 %v323
      %v1092 = vunpack.c.l.b16 %v324
      %v1093 = vunpack.c.l.b16 %v325
      %v1094 = vunpack.c.l.b16 %v326
      %v1095 = vunpack.c.l.b16 %v327
      %v1096 = vunpack.c.l.b16 %v328
      %v1097 = vunpack.c.l.b16 %v329
      %v1098 = vunpack.c.l.b16 %v330
      %v1099 = vunpack.c.l.b16 %v331
      %v1100 = vunpack.c.l.b16 %v332
      %v1101 = vunpack.c.l.b16 %v333
      %v1102 = vunpack.c.l.b16 %v334
      %v1103 = vunpack.c.l.b16 %v335
      %v1104 = vunpack.c.l.b16 %v336
      %v1105 = vunpack.c.l.b16 %v337
      %v1106 = vunpack.c.l.b16 %v338
      %v1107 = vunpack.c.l.b16 %v339
      %v1108 = vunpack.c.l.b16 %v340
      %v1109 = vunpack.c.l.b16 %v341
      %v1110 = vunpack.c.l.b16 %v342
      %v1111 = vunpack.c.l.b16 %v343
      %v1112 = vunpack.c.l.b16 %v344
      %v1113 = vunpack.c.l.b16 %v345
      %v1114 = vunpack.c.l.b16 %v346
      %v1115 = vunpack.c.l.b16 %v347
      %v1116 = vunpack.c.l.b16 %v348
      %v1117 = vunpack.c.l.b16 %v349
      %v1118 = vunpack.c.l.b16 %v350
      %v1119 = vunpack.c.l.b16 %v351
      %v1120 = vunpack.c.l.b16 %v352
      %v1121 = vunpack.c.l.b16 %v353
      %v1122 = vunpack.c.l.b16 %v354
      %v1123 = vunpack.c.l.b16 %v355
      %v1124 = vunpack.c.l.b16 %v356
      %v1125 = vunpack.c.l.b16 %v357
      %v1126 = vunpack.c.l.b16 %v358
      %v1127 = vunpack.c.l.b16 %v359
      %v1128 = vunpack.c.l.b16 %v360
      %v1129 = vunpack.c.l.b16 %v361
      %v1130 = vunpack.c.l.b16 %v362
      %v1131 = vunpack.c.l.b16 %v363
      %v1132 = vunpack.c.l.b16 %v364
      %v1133 = vunpack.c.l.b16 %v365
      %v1134 = vunpack.c.l.b16 %v366
      %v1135 = vunpack.c.l.b16 %v367
      %v1136 = vunpack.c.l.b16 %v368
      %v1137 = vunpack.c.l.b16 %v369
      %v1138 = vunpack.c.l.b16 %v370
      %v1139 = vunpack.c.l.b16 %v371
      %v1140 = vunpack.c.l.b16 %v372
      %v1141 = vunpack.c.l.b16 %v373
      %v1142 = vunpack.c.l.b16 %v374
      %v1143 = vunpack.c.l.b16 %v375
      %v1144 = vunpack.c.l.b16 %v376
      %v1145 = vunpack.c.l.b16 %v377
      %v1146 = vunpack.c.l.b16 %v378
      %v1147 = vunpack.c.l.b16 %v379
      %v1148 = vpack.c.b16 %v1085, %v1084
      %v1149 = vpack.c.b16 %v1087, %v1086
      %v1150 = vpack.c.b16 %v1089, %v1088
      %v1151 = vpack.c.b16 %v1091, %v1090
      %v1152 = vpack.c.b16 %v1093, %v1092
      %v1153 = vpack.c.b16 %v1095, %v1094
      %v1154 = vpack.c.b16 %v1097, %v1096
      %v1155 = vpack.c.b16 %v1099, %v1098
      %v1156 = vpack.c.b16 %v1101, %v1100
      %v1157 = vpack.c.b16 %v1103, %v1102
      %v1158 = vpack.c.b16 %v1105, %v1104
      %v1159 = vpack.c.b16 %v1107, %v1106
      %v1160 = vpack.c.b16 %v1109, %v1108
      %v1161 = vpack.c.b16 %v1111, %v1110
      %v1162 = vpack.c.b16 %v1113, %v1112
      %v1163 = vpack.c.b16 %v1115, %v1114
      %v1164 = vpack.c.b16 %v1117, %v1116
      %v1165 = vpack.c.b16 %v1119, %v1118
      %v1166 = vpack.c.b16 %v1121, %v1120
      %v1167 = vpack.c.b16 %v1123, %v1122
      %v1168 = vpack.c.b16 %v1125, %v1124
      %v1169 = vpack.c.b16 %v1127, %v1126
      %v1170 = vpack.c.b16 %v1129, %v1128
      %v1171 = vpack.c.b16 %v1131, %v1130
      %v1172 = vpack.c.b16 %v1133, %v1132
      %v1173 = vpack.c.b16 %v1135, %v1134
      %v1174 = vpack.c.b16 %v1137, %v1136
      %v1175 = vpack.c.b16 %v1139, %v1138
      %v1176 = vpack.c.b16 %v1141, %v1140
      %v1177 = vpack.c.b16 %v1143, %v1142
      %v1178 = vpack.c.b16 %v1145, %v1144
      %v1179 = vpack.c.b16 %v1147, %v1146
      %1212 = vmatprep.subr.bf16.mxu0 0
      %1213 = vmatpush1.bf16.msra.mxu0 %v1148
      %1214 = vmatprep.subr.bf16.mxu0 0
      %1215 = vmatpush1.bf16.msra.mxu0 %v1149
      %1216 = vmatprep.subr.bf16.mxu0 0
      %1217 = vmatpush1.bf16.msra.mxu0 %v1150
      %1218 = vmatprep.subr.bf16.mxu0 0
      %1219 = vmatpush1.bf16.msra.mxu0 %v1151
      %1220 = vmatprep.subr.bf16.mxu0 0
      %1221 = vmatpush1.bf16.msra.mxu0 %v1152
      %1222 = vmatprep.subr.bf16.mxu0 0
      %1223 = vmatpush1.bf16.msra.mxu0 %v1153
      %1224 = vmatprep.subr.bf16.mxu0 0
      %1225 = vmatpush1.bf16.msra.mxu0 %v1154
      %1226 = vmatprep.subr.bf16.mxu0 0
      %1227 = vmatpush1.bf16.msra.mxu0 %v1155
      %1228 = vmatprep.subr.bf16.mxu0 0
      %1229 = vmatpush1.bf16.msra.mxu0 %v1156
      %1230 = vmatprep.subr.bf16.mxu0 0
      %1231 = vmatpush1.bf16.msra.mxu0 %v1157
      %1232 = vmatprep.subr.bf16.mxu0 0
      %1233 = vmatpush1.bf16.msra.mxu0 %v1158
      %1234 = vmatprep.subr.bf16.mxu0 0
      %1235 = vmatpush1.bf16.msra.mxu0 %v1159
      %1236 = vmatprep.subr.bf16.mxu0 0
      %1237 = vmatpush1.bf16.msra.mxu0 %v1160
      %1238 = vmatprep.subr.bf16.mxu0 0
      %1239 = vmatpush1.bf16.msra.mxu0 %v1161
      %1240 = vmatprep.subr.bf16.mxu0 0
      %1241 = vmatpush1.bf16.msra.mxu0 %v1162
      %1242 = vmatprep.subr.bf16.mxu0 0
      %1243 = vmatpush1.bf16.msra.mxu0 %v1163
      %1244 = vmatprep.mubr.bf16.mxu0 %v765
      %1245 = vmatmul.mubr.bf16.gmra.mrb[0].mxu0 %v764
      %v1246 = vpop.f32.mrb[0].mxu0
      %v1247 = vadd.f32 0.0, %v1246
      %v1248 = vpop.f32.mrb[0].mxu0
      %v1249 = vpop.f32.mrb[0].mxu0
      %v1250 = vadd.f32 0.0, %v1249
      %v1251 = vpop.f32.mrb[0].mxu0
      %1252 = vmatprep.mubr.bf16.mxu0 %v769
      %1253 = vmatmul.mubr.bf16.gmra.mrb[0].mxu0 %v768
      %v1254 = vpop.f32.mrb[0].mxu0
      %v1255 = vadd.f32 0.0, %v1254
      %v1256 = vpop.f32.mrb[0].mxu0
      %v1257 = vpop.f32.mrb[0].mxu0
      %v1258 = vadd.f32 0.0, %v1257
      %v1259 = vpop.f32.mrb[0].mxu0
      %1260 = vmatprep.mubr.bf16.mxu0 %v773
      %1261 = vmatmul.mubr.bf16.gmra.mrb[0].mxu0 %v772
      %v1262 = vpop.f32.mrb[0].mxu0
      %v1263 = vadd.f32 0.0, %v1262
      %v1264 = vpop.f32.mrb[0].mxu0
      %v1265 = vpop.f32.mrb[0].mxu0
      %v1266 = vadd.f32 0.0, %v1265
      %v1267 = vpop.f32.mrb[0].mxu0
      %1268 = vmatprep.mubr.bf16.mxu0 %v777
      %1269 = vmatmul.mubr.bf16.gmra.mrb[0].mxu0 %v776
      %v1270 = vpop.f32.mrb[0].mxu0
      %v1271 = vadd.f32 0.0, %v1270
      %v1272 = vpop.f32.mrb[0].mxu0
      %v1273 = vpop.f32.mrb[0].mxu0
      %v1274 = vadd.f32 0.0, %v1273
      %v1275 = vpop.f32.mrb[0].mxu0
      %1276 = vmatprep.mubr.bf16.mxu0 %v781
      %1277 = vmatmul.mubr.bf16.gmra.mrb[0].mxu0 %v780
      %v1278 = vpop.f32.mrb[0].mxu0
      %v1279 = vadd.f32 0.0, %v1278
      %v1280 = vpop.f32.mrb[0].mxu0
      %v1281 = vpop.f32.mrb[0].mxu0
      %v1282 = vadd.f32 0.0, %v1281
      %v1283 = vpop.f32.mrb[0].mxu0
      %1284 = vmatprep.mubr.bf16.mxu0 %v785
      %1285 = vmatmul.mubr.bf16.gmra.mrb[0].mxu0 %v784
      %v1286 = vpop.f32.mrb[0].mxu0
      %v1287 = vadd.f32 0.0, %v1286
      %v1288 = vpop.f32.mrb[0].mxu0
      %v1289 = vpop.f32.mrb[0].mxu0
      %v1290 = vadd.f32 0.0, %v1289
      %v1291 = vpop.f32.mrb[0].mxu0
      %1292 = vmatprep.mubr.bf16.mxu0 %v789
      %1293 = vmatmul.mubr.bf16.gmra.mrb[0].mxu0 %v788
      %v1294 = vpop.f32.mrb[0].mxu0
      %v1295 = vadd.f32 0.0, %v1294
      %v1296 = vpop.f32.mrb[0].mxu0
      %v1297 = vpop.f32.mrb[0].mxu0
      %v1298 = vadd.f32 0.0, %v1297
      %v1299 = vpop.f32.mrb[0].mxu0
      %1300 = vmatprep.mubr.bf16.mxu0 %v793
      %1301 = vmatmul.mubr.bf16.gmra.mrb[0].mxu0 %v792
      %v1302 = vpop.f32.mrb[0].mxu0
      %v1303 = vadd.f32 0.0, %v1302
      %v1304 = vpop.f32.mrb[0].mxu0
      %v1305 = vpop.f32.mrb[0].mxu0
      %v1306 = vadd.f32 0.0, %v1305
      %v1307 = vpop.f32.mrb[0].mxu0
      %1308 = vmatprep.mubr.bf16.mxu0 %v797
      %1309 = vmatmul.mubr.bf16.gmra.mrb[0].mxu0 %v796
      %v1310 = vpop.f32.mrb[0].mxu0
      %v1311 = vadd.f32 0.0, %v1310
      %v1312 = vpop.f32.mrb[0].mxu0
      %v1313 = vpop.f32.mrb[0].mxu0
      %v1314 = vadd.f32 0.0, %v1313
      %v1315 = vpop.f32.mrb[0].mxu0
      %1316 = vmatprep.mubr.bf16.mxu0 %v801
      %1317 = vmatmul.mubr.bf16.gmra.mrb[0].mxu0 %v800
      %v1318 = vpop.f32.mrb[0].mxu0
      %v1319 = vadd.f32 0.0, %v1318
      %v1320 = vpop.f32.mrb[0].mxu0
      %v1321 = vpop.f32.mrb[0].mxu0
      %v1322 = vadd.f32 0.0, %v1321
      %v1323 = vpop.f32.mrb[0].mxu0
      %1324 = vmatprep.mubr.bf16.mxu0 %v805
      %1325 = vmatmul.mubr.bf16.gmra.mrb[0].mxu0 %v804
      %v1326 = vpop.f32.mrb[0].mxu0
      %v1327 = vadd.f32 0.0, %v1326
      %v1328 = vpop.f32.mrb[0].mxu0
      %v1329 = vpop.f32.mrb[0].mxu0
      %v1330 = vadd.f32 0.0, %v1329
      %v1331 = vpop.f32.mrb[0].mxu0
      %1332 = vmatprep.mubr.bf16.mxu0 %v809
      %1333 = vmatmul.mubr.bf16.gmra.mrb[0].mxu0 %v808
      %v1334 = vpop.f32.mrb[0].mxu0
      %v1335 = vadd.f32 0.0, %v1334
      %v1336 = vpop.f32.mrb[0].mxu0
      %v1337 = vpop.f32.mrb[0].mxu0
      %v1338 = vadd.f32 0.0, %v1337
      %v1339 = vpop.f32.mrb[0].mxu0
      %1340 = vmatprep.mubr.bf16.mxu0 %v813
      %1341 = vmatmul.mubr.bf16.gmra.mrb[0].mxu0 %v812
      %v1342 = vpop.f32.mrb[0].mxu0
      %v1343 = vadd.f32 0.0, %v1342
      %v1344 = vpop.f32.mrb[0].mxu0
      %v1345 = vpop.f32.mrb[0].mxu0
      %v1346 = vadd.f32 0.0, %v1345
      %v1347 = vpop.f32.mrb[0].mxu0
      %1348 = vmatprep.mubr.bf16.mxu0 %v817
      %1349 = vmatmul.mubr.bf16.gmra.mrb[0].mxu0 %v816
      %v1350 = vpop.f32.mrb[0].mxu0
      %v1351 = vadd.f32 0.0, %v1350
      %v1352 = vpop.f32.mrb[0].mxu0
      %v1353 = vpop.f32.mrb[0].mxu0
      %v1354 = vadd.f32 0.0, %v1353
      %v1355 = vpop.f32.mrb[0].mxu0
      %1356 = vmatprep.mubr.bf16.mxu0 %v821
      %1357 = vmatmul.mubr.bf16.gmra.mrb[0].mxu0 %v820
      %v1358 = vpop.f32.mrb[0].mxu0
      %v1359 = vadd.f32 0.0, %v1358
      %v1360 = vpop.f32.mrb[0].mxu0
      %v1361 = vpop.f32.mrb[0].mxu0
      %v1362 = vadd.f32 0.0, %v1361
      %v1363 = vpop.f32.mrb[0].mxu0
      %1364 = vmatprep.mubr.bf16.mxu0 %v825
      %1365 = vmatmul.mubr.bf16.gmra.mrb[0].mxu0 %v824
      %v1366 = vpop.f32.mrb[0].mxu0
      %v1367 = vadd.f32 0.0, %v1366
      %v1368 = vpop.f32.mrb[0].mxu0
      %v1369 = vpop.f32.mrb[0].mxu0
      %v1370 = vadd.f32 0.0, %v1369
      %v1371 = vpop.f32.mrb[0].mxu0
      %1372 = vmatprep.mubr.bf16.mxu0 %v829
      %1373 = vmatmul.mubr.bf16.gmra.mrb[0].mxu0 %v828
      %v1374 = vpop.f32.mrb[0].mxu0
      %v1375 = vadd.f32 0.0, %v1374
      %v1376 = vpop.f32.mrb[0].mxu0
      %v1377 = vpop.f32.mrb[0].mxu0
      %v1378 = vadd.f32 0.0, %v1377
      %v1379 = vpop.f32.mrb[0].mxu0
      %1380 = vmatprep.mubr.bf16.mxu0 %v833
      %1381 = vmatmul.mubr.bf16.gmra.mrb[0].mxu0 %v832
      %v1382 = vpop.f32.mrb[0].mxu0
      %v1383 = vadd.f32 0.0, %v1382
      %v1384 = vpop.f32.mrb[0].mxu0
      %v1385 = vpop.f32.mrb[0].mxu0
      %v1386 = vadd.f32 0.0, %v1385
      %v1387 = vpop.f32.mrb[0].mxu0
      %1388 = vmatprep.mubr.bf16.mxu0 %v837
      %1389 = vmatmul.mubr.bf16.gmra.mrb[0].mxu0 %v836
      %v1390 = vpop.f32.mrb[0].mxu0
      %v1391 = vadd.f32 0.0, %v1390
      %v1392 = vpop.f32.mrb[0].mxu0
      %v1393 = vpop.f32.mrb[0].mxu0
      %v1394 = vadd.f32 0.0, %v1393
      %v1395 = vpop.f32.mrb[0].mxu0
      %1396 = vmatprep.mubr.bf16.mxu0 %v841
      %1397 = vmatmul.mubr.bf16.gmra.mrb[0].mxu0 %v840
      %v1398 = vpop.f32.mrb[0].mxu0
      %v1399 = vadd.f32 0.0, %v1398
      %v1400 = vpop.f32.mrb[0].mxu0
      %v1401 = vpop.f32.mrb[0].mxu0
      %v1402 = vadd.f32 0.0, %v1401
      %v1403 = vpop.f32.mrb[0].mxu0
      %1404 = vmatprep.mubr.bf16.mxu0 %v845
      %1405 = vmatmul.mubr.bf16.gmra.mrb[0].mxu0 %v844
      %v1406 = vpop.f32.mrb[0].mxu0
      %v1407 = vadd.f32 0.0, %v1406
      %v1408 = vpop.f32.mrb[0].mxu0
      %v1409 = vpop.f32.mrb[0].mxu0
      %v1410 = vadd.f32 0.0, %v1409
      %v1411 = vpop.f32.mrb[0].mxu0
      %1412 = vmatprep.mubr.bf16.mxu0 %v849
      %1413 = vmatmul.mubr.bf16.gmra.mrb[0].mxu0 %v848
      %v1414 = vpop.f32.mrb[0].mxu0
      %v1415 = vadd.f32 0.0, %v1414
      %v1416 = vpop.f32.mrb[0].mxu0
      %v1417 = vpop.f32.mrb[0].mxu0
      %v1418 = vadd.f32 0.0, %v1417
      %v1419 = vpop.f32.mrb[0].mxu0
      %1420 = vmatprep.mubr.bf16.mxu0 %v853
      %1421 = vmatmul.mubr.bf16.gmra.mrb[0].mxu0 %v852
      %v1422 = vpop.f32.mrb[0].mxu0
      %v1423 = vadd.f32 0.0, %v1422
      %v1424 = vpop.f32.mrb[0].mxu0
      %v1425 = vpop.f32.mrb[0].mxu0
      %v1426 = vadd.f32 0.0, %v1425
      %v1427 = vpop.f32.mrb[0].mxu0
      %1428 = vmatprep.mubr.bf16.mxu0 %v857
      %1429 = vmatmul.mubr.bf16.gmra.mrb[0].mxu0 %v856
      %v1430 = vpop.f32.mrb[0].mxu0
      %v1431 = vadd.f32 0.0, %v1430
      %v1432 = vpop.f32.mrb[0].mxu0
      %v1433 = vpop.f32.mrb[0].mxu0
      %v1434 = vadd.f32 0.0, %v1433
      %v1435 = vpop.f32.mrb[0].mxu0
      %1436 = vmatprep.mubr.bf16.mxu0 %v861
      %1437 = vmatmul.mubr.bf16.gmra.mrb[0].mxu0 %v860
      %v1438 = vpop.f32.mrb[0].mxu0
      %v1439 = vadd.f32 0.0, %v1438
      %v1440 = vpop.f32.mrb[0].mxu0
      %v1441 = vpop.f32.mrb[0].mxu0
      %v1442 = vadd.f32 0.0, %v1441
      %v1443 = vpop.f32.mrb[0].mxu0
      %1444 = vmatprep.mubr.bf16.mxu0 %v865
      %1445 = vmatmul.mubr.bf16.gmra.mrb[0].mxu0 %v864
      %v1446 = vpop.f32.mrb[0].mxu0
      %v1447 = vadd.f32 0.0, %v1446
      %v1448 = vpop.f32.mrb[0].mxu0
      %v1449 = vpop.f32.mrb[0].mxu0
      %v1450 = vadd.f32 0.0, %v1449
      %v1451 = vpop.f32.mrb[0].mxu0
      %1452 = vmatprep.mubr.bf16.mxu0 %v869
      %1453 = vmatmul.mubr.bf16.gmra.mrb[0].mxu0 %v868
      %v1454 = vpop.f32.mrb[0].mxu0
      %v1455 = vadd.f32 0.0, %v1454
      %v1456 = vpop.f32.mrb[0].mxu0
      %v1457 = vpop.f32.mrb[0].mxu0
      %v1458 = vadd.f32 0.0, %v1457
      %v1459 = vpop.f32.mrb[0].mxu0
      %1460 = vmatprep.mubr.bf16.mxu0 %v873
      %1461 = vmatmul.mubr.bf16.gmra.mrb[0].mxu0 %v872
      %v1462 = vpop.f32.mrb[0].mxu0
      %v1463 = vadd.f32 0.0, %v1462
      %v1464 = vpop.f32.mrb[0].mxu0
      %v1465 = vpop.f32.mrb[0].mxu0
      %v1466 = vadd.f32 0.0, %v1465
      %v1467 = vpop.f32.mrb[0].mxu0
      %1468 = vmatprep.mubr.bf16.mxu0 %v877
      %1469 = vmatmul.mubr.bf16.gmra.mrb[0].mxu0 %v876
      %v1470 = vpop.f32.mrb[0].mxu0
      %v1471 = vadd.f32 0.0, %v1470
      %v1472 = vpop.f32.mrb[0].mxu0
      %v1473 = vpop.f32.mrb[0].mxu0
      %v1474 = vadd.f32 0.0, %v1473
      %v1475 = vpop.f32.mrb[0].mxu0
      %1476 = vmatprep.mubr.bf16.mxu0 %v881
      %1477 = vmatmul.mubr.bf16.gmra.mrb[0].mxu0 %v880
      %v1478 = vpop.f32.mrb[0].mxu0
      %v1479 = vadd.f32 0.0, %v1478
      %v1480 = vpop.f32.mrb[0].mxu0
      %v1481 = vpop.f32.mrb[0].mxu0
      %v1482 = vadd.f32 0.0, %v1481
      %v1483 = vpop.f32.mrb[0].mxu0
      %1484 = vmatprep.mubr.bf16.mxu0 %v885
      %1485 = vmatmul.mubr.bf16.gmra.mrb[0].mxu0 %v884
      %v1486 = vpop.f32.mrb[0].mxu0
      %v1487 = vadd.f32 0.0, %v1486
      %v1488 = vpop.f32.mrb[0].mxu0
      %v1489 = vpop.f32.mrb[0].mxu0
      %v1490 = vadd.f32 0.0, %v1489
      %v1491 = vpop.f32.mrb[0].mxu0
      %1492 = vmatprep.mubr.bf16.mxu0 %v889
      %1493 = vmatmul.mubr.bf16.gmra.mrb[0].mxu0 %v888
      %v1494 = vpop.f32.mrb[0].mxu0
      %v1495 = vadd.f32 0.0, %v1494
      %v1496 = vpop.f32.mrb[0].mxu0
      %v1497 = vpop.f32.mrb[0].mxu0
      %v1498 = vadd.f32 0.0, %v1497
      %v1499 = vpop.f32.mrb[0].mxu0
      %1500 = vdwg.mxu0
      %1501 = vmatprep.subr.bf16.mxu0 0
      %1502 = vmatpush1.bf16.msra.mxu0 %v1164
      %1503 = vmatprep.subr.bf16.mxu0 0
      %1504 = vmatpush1.bf16.msra.mxu0 %v1165
      %1505 = vmatprep.subr.bf16.mxu0 0
      %1506 = vmatpush1.bf16.msra.mxu0 %v1166
      %1507 = vmatprep.subr.bf16.mxu0 0
      %1508 = vmatpush1.bf16.msra.mxu0 %v1167
      %1509 = vmatprep.subr.bf16.mxu0 0
      %1510 = vmatpush1.bf16.msra.mxu0 %v1168
      %1511 = vmatprep.subr.bf16.mxu0 0
      %1512 = vmatpush1.bf16.msra.mxu0 %v1169
      %1513 = vmatprep.subr.bf16.mxu0 0
      %1514 = vmatpush1.bf16.msra.mxu0 %v1170
      %1515 = vmatprep.subr.bf16.mxu0 0
      %1516 = vmatpush1.bf16.msra.mxu0 %v1171
      %1517 = vmatprep.subr.bf16.mxu0 0
      %1518 = vmatpush1.bf16.msra.mxu0 %v1172
      %1519 = vmatprep.subr.bf16.mxu0 0
      %1520 = vmatpush1.bf16.msra.mxu0 %v1173
      %1521 = vmatprep.subr.bf16.mxu0 0
      %1522 = vmatpush1.bf16.msra.mxu0 %v1174
      %1523 = vmatprep.subr.bf16.mxu0 0
      %1524 = vmatpush1.bf16.msra.mxu0 %v1175
      %1525 = vmatprep.subr.bf16.mxu0 0
      %1526 = vmatpush1.bf16.msra.mxu0 %v1176
      %1527 = vmatprep.subr.bf16.mxu0 0
      %1528 = vmatpush1.bf16.msra.mxu0 %v1177
      %1529 = vmatprep.subr.bf16.mxu0 0
      %1530 = vmatpush1.bf16.msra.mxu0 %v1178
      %1531 = vmatprep.subr.bf16.mxu0 0
      %1532 = vmatpush1.bf16.msra.mxu0 %v1179
      %1533 = vmatprep.mubr.bf16.mxu0 %v767
      %1534 = vmatmul.mubr.bf16.gmra.mrb[0].mxu0 %v766
      %v1535 = vpop.f32.mrb[0].mxu0
      %v1536 = vadd.f32 %v1247, %v1535
      %v1537 = vpop.f32.mrb[0].mxu0
      %v1538 = vpop.f32.mrb[0].mxu0
      %v1539 = vadd.f32 %v1250, %v1538
      %v1540 = vpop.f32.mrb[0].mxu0
      %1541 = vmatprep.mubr.bf16.mxu0 %v771
      %1542 = vmatmul.mubr.bf16.gmra.mrb[0].mxu0 %v770
      %v1543 = vpop.f32.mrb[0].mxu0
      %v1544 = vadd.f32 %v1255, %v1543
      %v1545 = vpop.f32.mrb[0].mxu0
      %v1546 = vpop.f32.mrb[0].mxu0
      %v1547 = vadd.f32 %v1258, %v1546
      %v1548 = vpop.f32.mrb[0].mxu0
      %1549 = vmatprep.mubr.bf16.mxu0 %v775
      %1550 = vmatmul.mubr.bf16.gmra.mrb[0].mxu0 %v774
      %v1551 = vpop.f32.mrb[0].mxu0
      %v1552 = vadd.f32 %v1263, %v1551
      %v1553 = vpop.f32.mrb[0].mxu0
      %v1554 = vpop.f32.mrb[0].mxu0
      %v1555 = vadd.f32 %v1266, %v1554
      %v1556 = vpop.f32.mrb[0].mxu0
      %1557 = vmatprep.mubr.bf16.mxu0 %v779
      %1558 = vmatmul.mubr.bf16.gmra.mrb[0].mxu0 %v778
      %v1559 = vpop.f32.mrb[0].mxu0
      %v1560 = vadd.f32 %v1271, %v1559
      %v1561 = vpop.f32.mrb[0].mxu0
      %v1562 = vpop.f32.mrb[0].mxu0
      %v1563 = vadd.f32 %v1274, %v1562
      %v1564 = vpop.f32.mrb[0].mxu0
      %1565 = vmatprep.mubr.bf16.mxu0 %v783
      %1566 = vmatmul.mubr.bf16.gmra.mrb[0].mxu0 %v782
      %v1567 = vpop.f32.mrb[0].mxu0
      %v1568 = vadd.f32 %v1279, %v1567
      %v1569 = vpop.f32.mrb[0].mxu0
      %v1570 = vpop.f32.mrb[0].mxu0
      %v1571 = vadd.f32 %v1282, %v1570
      %v1572 = vpop.f32.mrb[0].mxu0
      %1573 = vmatprep.mubr.bf16.mxu0 %v787
      %1574 = vmatmul.mubr.bf16.gmra.mrb[0].mxu0 %v786
      %v1575 = vpop.f32.mrb[0].mxu0
      %v1576 = vadd.f32 %v1287, %v1575
      %v1577 = vpop.f32.mrb[0].mxu0
      %v1578 = vpop.f32.mrb[0].mxu0
      %v1579 = vadd.f32 %v1290, %v1578
      %v1580 = vpop.f32.mrb[0].mxu0
      %1581 = vmatprep.mubr.bf16.mxu0 %v791
      %1582 = vmatmul.mubr.bf16.gmra.mrb[0].mxu0 %v790
      %v1583 = vpop.f32.mrb[0].mxu0
      %v1584 = vadd.f32 %v1295, %v1583
      %v1585 = vpop.f32.mrb[0].mxu0
      %v1586 = vpop.f32.mrb[0].mxu0
      %v1587 = vadd.f32 %v1298, %v1586
      %v1588 = vpop.f32.mrb[0].mxu0
      %1589 = vmatprep.mubr.bf16.mxu0 %v795
      %1590 = vmatmul.mubr.bf16.gmra.mrb[0].mxu0 %v794
      %v1591 = vpop.f32.mrb[0].mxu0
      %v1592 = vadd.f32 %v1303, %v1591
      %v1593 = vpop.f32.mrb[0].mxu0
      %v1594 = vpop.f32.mrb[0].mxu0
      %v1595 = vadd.f32 %v1306, %v1594
      %v1596 = vpop.f32.mrb[0].mxu0
      %1597 = vmatprep.mubr.bf16.mxu0 %v799
      %1598 = vmatmul.mubr.bf16.gmra.mrb[0].mxu0 %v798
      %v1599 = vpop.f32.mrb[0].mxu0
      %v1600 = vadd.f32 %v1311, %v1599
      %v1601 = vpop.f32.mrb[0].mxu0
      %v1602 = vpop.f32.mrb[0].mxu0
      %v1603 = vadd.f32 %v1314, %v1602
      %v1604 = vpop.f32.mrb[0].mxu0
      %1605 = vmatprep.mubr.bf16.mxu0 %v803
      %1606 = vmatmul.mubr.bf16.gmra.mrb[0].mxu0 %v802
      %v1607 = vpop.f32.mrb[0].mxu0
      %v1608 = vadd.f32 %v1319, %v1607
      %v1609 = vpop.f32.mrb[0].mxu0
      %v1610 = vpop.f32.mrb[0].mxu0
      %v1611 = vadd.f32 %v1322, %v1610
      %v1612 = vpop.f32.mrb[0].mxu0
      %1613 = vmatprep.mubr.bf16.mxu0 %v807
      %1614 = vmatmul.mubr.bf16.gmra.mrb[0].mxu0 %v806
      %v1615 = vpop.f32.mrb[0].mxu0
      %v1616 = vadd.f32 %v1327, %v1615
      %v1617 = vpop.f32.mrb[0].mxu0
      %v1618 = vpop.f32.mrb[0].mxu0
      %v1619 = vadd.f32 %v1330, %v1618
      %v1620 = vpop.f32.mrb[0].mxu0
      %1621 = vmatprep.mubr.bf16.mxu0 %v811
      %1622 = vmatmul.mubr.bf16.gmra.mrb[0].mxu0 %v810
      %v1623 = vpop.f32.mrb[0].mxu0
      %v1624 = vadd.f32 %v1335, %v1623
      %v1625 = vpop.f32.mrb[0].mxu0
      %v1626 = vpop.f32.mrb[0].mxu0
      %v1627 = vadd.f32 %v1338, %v1626
      %v1628 = vpop.f32.mrb[0].mxu0
      %1629 = vmatprep.mubr.bf16.mxu0 %v815
      %1630 = vmatmul.mubr.bf16.gmra.mrb[0].mxu0 %v814
      %v1631 = vpop.f32.mrb[0].mxu0
      %v1632 = vadd.f32 %v1343, %v1631
      %v1633 = vpop.f32.mrb[0].mxu0
      %v1634 = vpop.f32.mrb[0].mxu0
      %v1635 = vadd.f32 %v1346, %v1634
      %v1636 = vpop.f32.mrb[0].mxu0
      %1637 = vmatprep.mubr.bf16.mxu0 %v819
      %1638 = vmatmul.mubr.bf16.gmra.mrb[0].mxu0 %v818
      %v1639 = vpop.f32.mrb[0].mxu0
      %v1640 = vadd.f32 %v1351, %v1639
      %v1641 = vpop.f32.mrb[0].mxu0
      %v1642 = vpop.f32.mrb[0].mxu0
      %v1643 = vadd.f32 %v1354, %v1642
      %v1644 = vpop.f32.mrb[0].mxu0
      %1645 = vmatprep.mubr.bf16.mxu0 %v823
      %1646 = vmatmul.mubr.bf16.gmra.mrb[0].mxu0 %v822
      %v1647 = vpop.f32.mrb[0].mxu0
      %v1648 = vadd.f32 %v1359, %v1647
      %v1649 = vpop.f32.mrb[0].mxu0
      %v1650 = vpop.f32.mrb[0].mxu0
      %v1651 = vadd.f32 %v1362, %v1650
      %v1652 = vpop.f32.mrb[0].mxu0
      %1653 = vmatprep.mubr.bf16.mxu0 %v827
      %1654 = vmatmul.mubr.bf16.gmra.mrb[0].mxu0 %v826
      %v1655 = vpop.f32.mrb[0].mxu0
      %v1656 = vadd.f32 %v1367, %v1655
      %v1657 = vpop.f32.mrb[0].mxu0
      %v1658 = vpop.f32.mrb[0].mxu0
      %v1659 = vadd.f32 %v1370, %v1658
      %v1660 = vpop.f32.mrb[0].mxu0
      %1661 = vmatprep.mubr.bf16.mxu0 %v831
      %1662 = vmatmul.mubr.bf16.gmra.mrb[0].mxu0 %v830
      %v1663 = vpop.f32.mrb[0].mxu0
      %v1664 = vadd.f32 %v1375, %v1663
      %v1665 = vpop.f32.mrb[0].mxu0
      %v1666 = vpop.f32.mrb[0].mxu0
      %v1667 = vadd.f32 %v1378, %v1666
      %v1668 = vpop.f32.mrb[0].mxu0
      %1669 = vmatprep.mubr.bf16.mxu0 %v835
      %1670 = vmatmul.mubr.bf16.gmra.mrb[0].mxu0 %v834
      %v1671 = vpop.f32.mrb[0].mxu0
      %v1672 = vadd.f32 %v1383, %v1671
      %v1673 = vpop.f32.mrb[0].mxu0
      %v1674 = vpop.f32.mrb[0].mxu0
      %v1675 = vadd.f32 %v1386, %v1674
      %v1676 = vpop.f32.mrb[0].mxu0
      %1677 = vmatprep.mubr.bf16.mxu0 %v839
      %1678 = vmatmul.mubr.bf16.gmra.mrb[0].mxu0 %v838
      %v1679 = vpop.f32.mrb[0].mxu0
      %v1680 = vadd.f32 %v1391, %v1679
      %v1681 = vpop.f32.mrb[0].mxu0
      %v1682 = vpop.f32.mrb[0].mxu0
      %v1683 = vadd.f32 %v1394, %v1682
      %v1684 = vpop.f32.mrb[0].mxu0
      %1685 = vmatprep.mubr.bf16.mxu0 %v843
      %1686 = vmatmul.mubr.bf16.gmra.mrb[0].mxu0 %v842
      %v1687 = vpop.f32.mrb[0].mxu0
      %v1688 = vadd.f32 %v1399, %v1687
      %v1689 = vpop.f32.mrb[0].mxu0
      %v1690 = vpop.f32.mrb[0].mxu0
      %v1691 = vadd.f32 %v1402, %v1690
      %v1692 = vpop.f32.mrb[0].mxu0
      %1693 = vmatprep.mubr.bf16.mxu0 %v847
      %1694 = vmatmul.mubr.bf16.gmra.mrb[0].mxu0 %v846
      %v1695 = vpop.f32.mrb[0].mxu0
      %v1696 = vadd.f32 %v1407, %v1695
      %v1697 = vpop.f32.mrb[0].mxu0
      %v1698 = vpop.f32.mrb[0].mxu0
      %v1699 = vadd.f32 %v1410, %v1698
      %v1700 = vpop.f32.mrb[0].mxu0
      %1701 = vmatprep.mubr.bf16.mxu0 %v851
      %1702 = vmatmul.mubr.bf16.gmra.mrb[0].mxu0 %v850
      %v1703 = vpop.f32.mrb[0].mxu0
      %v1704 = vadd.f32 %v1415, %v1703
      %v1705 = vpop.f32.mrb[0].mxu0
      %v1706 = vpop.f32.mrb[0].mxu0
      %v1707 = vadd.f32 %v1418, %v1706
      %v1708 = vpop.f32.mrb[0].mxu0
      %1709 = vmatprep.mubr.bf16.mxu0 %v855
      %1710 = vmatmul.mubr.bf16.gmra.mrb[0].mxu0 %v854
      %v1711 = vpop.f32.mrb[0].mxu0
      %v1712 = vadd.f32 %v1423, %v1711
      %v1713 = vpop.f32.mrb[0].mxu0
      %v1714 = vpop.f32.mrb[0].mxu0
      %v1715 = vadd.f32 %v1426, %v1714
      %v1716 = vpop.f32.mrb[0].mxu0
      %1717 = vmatprep.mubr.bf16.mxu0 %v859
      %1718 = vmatmul.mubr.bf16.gmra.mrb[0].mxu0 %v858
      %v1719 = vpop.f32.mrb[0].mxu0
      %v1720 = vadd.f32 %v1431, %v1719
      %v1721 = vpop.f32.mrb[0].mxu0
      %v1722 = vpop.f32.mrb[0].mxu0
      %v1723 = vadd.f32 %v1434, %v1722
      %v1724 = vpop.f32.mrb[0].mxu0
      %1725 = vmatprep.mubr.bf16.mxu0 %v863
      %1726 = vmatmul.mubr.bf16.gmra.mrb[0].mxu0 %v862
      %v1727 = vpop.f32.mrb[0].mxu0
      %v1728 = vadd.f32 %v1439, %v1727
      %v1729 = vpop.f32.mrb[0].mxu0
      %v1730 = vpop.f32.mrb[0].mxu0
      %v1731 = vadd.f32 %v1442, %v1730
      %v1732 = vpop.f32.mrb[0].mxu0
      %1733 = vmatprep.mubr.bf16.mxu0 %v867
      %1734 = vmatmul.mubr.bf16.gmra.mrb[0].mxu0 %v866
      %v1735 = vpop.f32.mrb[0].mxu0
      %v1736 = vadd.f32 %v1447, %v1735
      %v1737 = vpop.f32.mrb[0].mxu0
      %v1738 = vpop.f32.mrb[0].mxu0
      %v1739 = vadd.f32 %v1450, %v1738
      %v1740 = vpop.f32.mrb[0].mxu0
      %1741 = vmatprep.mubr.bf16.mxu0 %v871
      %1742 = vmatmul.mubr.bf16.gmra.mrb[0].mxu0 %v870
      %v1743 = vpop.f32.mrb[0].mxu0
      %v1744 = vadd.f32 %v1455, %v1743
      %v1745 = vpop.f32.mrb[0].mxu0
      %v1746 = vpop.f32.mrb[0].mxu0
      %v1747 = vadd.f32 %v1458, %v1746
      %v1748 = vpop.f32.mrb[0].mxu0
      %1749 = vmatprep.mubr.bf16.mxu0 %v875
      %1750 = vmatmul.mubr.bf16.gmra.mrb[0].mxu0 %v874
      %v1751 = vpop.f32.mrb[0].mxu0
      %v1752 = vadd.f32 %v1463, %v1751
      %v1753 = vpop.f32.mrb[0].mxu0
      %v1754 = vpop.f32.mrb[0].mxu0
      %v1755 = vadd.f32 %v1466, %v1754
      %v1756 = vpop.f32.mrb[0].mxu0
      %1757 = vmatprep.mubr.bf16.mxu0 %v879
      %1758 = vmatmul.mubr.bf16.gmra.mrb[0].mxu0 %v878
      %v1759 = vpop.f32.mrb[0].mxu0
      %v1760 = vadd.f32 %v1471, %v1759
      %v1761 = vpop.f32.mrb[0].mxu0
      %v1762 = vpop.f32.mrb[0].mxu0
      %v1763 = vadd.f32 %v1474, %v1762
      %v1764 = vpop.f32.mrb[0].mxu0
      %1765 = vmatprep.mubr.bf16.mxu0 %v883
      %1766 = vmatmul.mubr.bf16.gmra.mrb[0].mxu0 %v882
      %v1767 = vpop.f32.mrb[0].mxu0
      %v1768 = vadd.f32 %v1479, %v1767
      %v1769 = vpop.f32.mrb[0].mxu0
      %v1770 = vpop.f32.mrb[0].mxu0
      %v1771 = vadd.f32 %v1482, %v1770
      %v1772 = vpop.f32.mrb[0].mxu0
      %1773 = vmatprep.mubr.bf16.mxu0 %v887
      %1774 = vmatmul.mubr.bf16.gmra.mrb[0].mxu0 %v886
      %v1775 = vpop.f32.mrb[0].mxu0
      %v1776 = vadd.f32 %v1487, %v1775
      %v1777 = vpop.f32.mrb[0].mxu0
      %v1778 = vpop.f32.mrb[0].mxu0
      %v1779 = vadd.f32 %v1490, %v1778
      %v1780 = vpop.f32.mrb[0].mxu0
      %1781 = vmatprep.mubr.bf16.mxu0 %v891
      %1782 = vmatmul.mubr.bf16.gmra.mrb[0].mxu0 %v890
      %v1783 = vpop.f32.mrb[0].mxu0
      %v1784 = vadd.f32 %v1495, %v1783
      %v1785 = vpop.f32.mrb[0].mxu0
      %v1786 = vpop.f32.mrb[0].mxu0
      %v1787 = vadd.f32 %v1498, %v1786
      %v1788 = vpop.f32.mrb[0].mxu0
      %1789 = vdwg.mxu0
      %1790 = vst [vmem:[%s185] sm:$0xff] %v1536
      %1791 = vst [vmem:[%s185 + $0x8] sm:$0xff] %v1539
      %1792 = vst [vmem:[%s185 + $0x10] sm:$0xff] %v1544
      %1793 = vst [vmem:[%s185 + $0x18] sm:$0xff] %v1547
      %1794 = vst [vmem:[%s185 + $0x20] sm:$0xff] %v1552
      %1795 = vst [vmem:[%s185 + $0x28] sm:$0xff] %v1555
      %1796 = vst [vmem:[%s185 + $0x30] sm:$0xff] %v1560
      %1797 = vst [vmem:[%s185 + $0x38] sm:$0xff] %v1563
      %1798 = vst [vmem:[%s185 + $0x40] sm:$0xff] %v1568
      %1799 = vst [vmem:[%s185 + $0x48] sm:$0xff] %v1571
      %1800 = vst [vmem:[%s185 + $0x50] sm:$0xff] %v1576
      %1801 = vst [vmem:[%s185 + $0x58] sm:$0xff] %v1579
      %1802 = vst [vmem:[%s185 + $0x60] sm:$0xff] %v1584
      %1803 = vst [vmem:[%s185 + $0x68] sm:$0xff] %v1587
      %1804 = vst [vmem:[%s185 + $0x70] sm:$0xff] %v1592
      %1805 = vst [vmem:[%s185 + $0x78] sm:$0xff] %v1595
      %1806 = vst [vmem:[%s185 + $0x80] sm:$0xff] %v1600
      %1807 = vst [vmem:[%s185 + $0x88] sm:$0xff] %v1603
      %1808 = vst [vmem:[%s185 + $0x90] sm:$0xff] %v1608
      %1809 = vst [vmem:[%s185 + $0x98] sm:$0xff] %v1611
      %1810 = vst [vmem:[%s185 + $0xa0] sm:$0xff] %v1616
      %1811 = vst [vmem:[%s185 + $0xa8] sm:$0xff] %v1619
      %1812 = vst [vmem:[%s185 + $0xb0] sm:$0xff] %v1624
      %1813 = vst [vmem:[%s185 + $0xb8] sm:$0xff] %v1627
      %1814 = vst [vmem:[%s185 + $0xc0] sm:$0xff] %v1632
      %1815 = vst [vmem:[%s185 + $0xc8] sm:$0xff] %v1635
      %1816 = vst [vmem:[%s185 + $0xd0] sm:$0xff] %v1640
      %1817 = vst [vmem:[%s185 + $0xd8] sm:$0xff] %v1643
      %1818 = vst [vmem:[%s185 + $0xe0] sm:$0xff] %v1648
      %1819 = vst [vmem:[%s185 + $0xe8] sm:$0xff] %v1651
      %1820 = vst [vmem:[%s185 + $0xf0] sm:$0xff] %v1656
      %1821 = vst [vmem:[%s185 + $0xf8] sm:$0xff] %v1659
      %1822 = vst [vmem:[%s185 + $0x100] sm:$0xff] %v1664
      %1823 = vst [vmem:[%s185 + $0x108] sm:$0xff] %v1667
      %1824 = vst [vmem:[%s185 + $0x110] sm:$0xff] %v1672
      %1825 = vst [vmem:[%s185 + $0x118] sm:$0xff] %v1675
      %1826 = vst [vmem:[%s185 + $0x120] sm:$0xff] %v1680
      %1827 = vst [vmem:[%s185 + $0x128] sm:$0xff] %v1683
      %1828 = vst [vmem:[%s185 + $0x130] sm:$0xff] %v1688
      %1829 = vst [vmem:[%s185 + $0x138] sm:$0xff] %v1691
      %1830 = vst [vmem:[%s185 + $0x140] sm:$0xff] %v1696
      %1831 = vst [vmem:[%s185 + $0x148] sm:$0xff] %v1699
      %1832 = vst [vmem:[%s185 + $0x150] sm:$0xff] %v1704
      %1833 = vst [vmem:[%s185 + $0x158] sm:$0xff] %v1707
      %1834 = vst [vmem:[%s185 + $0x160] sm:$0xff] %v1712
      %1835 = vst [vmem:[%s185 + $0x168] sm:$0xff] %v1715
      %1836 = vst [vmem:[%s185 + $0x170] sm:$0xff] %v1720
      %1837 = vst [vmem:[%s185 + $0x178] sm:$0xff] %v1723
      %1838 = vst [vmem:[%s185 + $0x180] sm:$0xff] %v1728
      %1839 = vst [vmem:[%s185 + $0x188] sm:$0xff] %v1731
      %1840 = vst [vmem:[%s185 + $0x190] sm:$0xff] %v1736
      %1841 = vst [vmem:[%s185 + $0x198] sm:$0xff] %v1739
      %1842 = vst [vmem:[%s185 + $0x1a0] sm:$0xff] %v1744
      %1843 = vst [vmem:[%s185 + $0x1a8] sm:$0xff] %v1747
      %1844 = vst [vmem:[%s185 + $0x1b0] sm:$0xff] %v1752
      %1845 = vst [vmem:[%s185 + $0x1b8] sm:$0xff] %v1755
      %1846 = vst [vmem:[%s185 + $0x1c0] sm:$0xff] %v1760
      %1847 = vst [vmem:[%s185 + $0x1c8] sm:$0xff] %v1763
      %1848 = vst [vmem:[%s185 + $0x1d0] sm:$0xff] %v1768
      %1849 = vst [vmem:[%s185 + $0x1d8] sm:$0xff] %v1771
      %1850 = vst [vmem:[%s185 + $0x1e0] sm:$0xff] %v1776
      %1851 = vst [vmem:[%s185 + $0x1e8] sm:$0xff] %v1779
      %1852 = vst [vmem:[%s185 + $0x1f0] sm:$0xff] %v1784
      %1853 = vst [vmem:[%s185 + $0x1f8] sm:$0xff] %v1787
      %s1854 = smul.u32 64, %s17
      %p1855 = scmp.lt.s32.totalorder %s1854, 127
      %s1856 = scalar_select %p1855, %s1854, 127
      %p1857 = scmp.lt.s32.totalorder %s18, 0
      %s1858 = scalar_select %p1857, %s18, 0
      %s1859 = sadd.s32 %s1858, %s1856
      %s1860 = smul.addr %s1859, 8
      %s1861 = scalar_lea.vmem %s2, %s1860
      // Predicated region
      $region29: #{sparse_resnet_encoder.6} parent=27 // pred_check
        %p1862 = pneg %p97
      $region30: #{sparse_resnet_encoder.6} parent=27 // pred_check_branch
        %1864 = sbr.rel (%p1862) target = $region32
      $region31: #{sparse_resnet_encoder.6} parent=27 // pred_region
        %s1865 = smul.u32 64, %s17
      $region32: #{sparse_resnet_encoder.6} parent=27 // pred_fallthru
        _
    $region28: #{sparse_resnet_encoder.6} parent=5 // pred_fallthru
      _
    %p1866 = scmp.le.s32.totalorder 2, %s8
    // Predicated region
    $region33: #{sparse_resnet_encoder.6} parent=5 // pred_check
      %p1867 = pneg %p1866
    $region34: #{sparse_resnet_encoder.6} parent=5 // pred_check_branch
      %1869 = sbr.rel (%p1867) target = $region36
    $region35: #{sparse_resnet_encoder.6} parent=5 // pred_region
      %s1870 = ssub.s32 %s8, 2
      // Predicated region
      $region37: #{sparse_resnet_encoder.6} parent=35 // pred_check
        %p1871 = pneg %p103
      $region38: #{sparse_resnet_encoder.6} parent=35 // pred_check_branch
        %1873 = sbr.rel (%p1871) target = $region40
      $region39: #{sparse_resnet_encoder.6} parent=35 // pred_region
        %s1874 = smul.u32 64, %s19
        %p1875 = scmp.lt.s32.totalorder %s1874, 127
        %s1876 = scalar_select %p1875, %s1874, 127
        %p1877 = scmp.lt.s32.totalorder %s20, 0
        %s1878 = scalar_select %p1877, %s20, 0
        %s1879 = sadd.s32 %s1878, %s1876
        %s1880 = smul.addr %s1879, 8
        %s1881 = scalar_lea.vmem %s2, %s1880
      $region40: #{sparse_resnet_encoder.6} parent=35 // pred_fallthru
        _
    $region36: #{sparse_resnet_encoder.6} parent=5 // pred_fallthru
      _
  $region6: #{sparse_resnet_encoder.6} parent=0 // loop_footer
    %s12 = sadd.s32 1, %s8
  $region7: #{sparse_resnet_encoder.6} parent=0 // loop_footer_branch
    %7 = sbr.rel target = $region3
  $region8: #{sparse_resnet_encoder.6} parent=0 // loop_exit
    _

// kernel: sparse_resnet_encoder.7
$region0: #{sparse_resnet_encoder.7}
  #allocation0 [shape = 'u32[]', space=smem, size = 0x4, offset = 0x4, fixed_abs, tag = 'smem constant byte address 0x4 - core index']
  #allocation1 [shape = 'u32[144,128]{1,0:T(1,128)}', space=vmem, size = 0x12000, scoped, tag = 'internal scratch']
  %s0 = inlined_call_operand.vmem [shape: bf16[128,896], index: 0, kind: input, shape index: {}]
  %s1 = inlined_call_operand.vmem [shape: bf16[896,128], index: 1, kind: input, shape index: {}]
  %s2 = inlined_call_operand.vmem [shape: f32[128,128], index: 2, kind: output, shape index: {}]
  %s3 = sld [smem:[#allocation0]]
  $region18: #{sparse_resnet_encoder.7} parent=0
    _
  %s5 = ssub.s32 1, %s3
  %s6 = scalar_select 0, %s5, %s3
  // Predicated region
  $region2: #{sparse_resnet_encoder.7} parent=0 // pred_check
    _
  $region3: #{sparse_resnet_encoder.7} parent=0 // pred_check_branch
    %8 = sbr.rel (0) target = $region5
  $region4: #{sparse_resnet_encoder.7} parent=0 // pred_region
    _
  $region5: #{sparse_resnet_encoder.7} parent=0 // pred_fallthru
    _
  // Predicated region
  $region6: #{sparse_resnet_encoder.7} parent=0 // pred_check
    _
  $region7: #{sparse_resnet_encoder.7} parent=0 // pred_check_branch
    %10 = sbr.rel (0) target = $region9
  $region8: #{sparse_resnet_encoder.7} parent=0 // pred_region
    _
  $region9: #{sparse_resnet_encoder.7} parent=0 // pred_fallthru
    _
  %v12 = vld [vmem:[%s0] sm:$0xff]
  %v13 = vld [vmem:[%s0 + $0x8] sm:$0xff]
  %v14 = vld [vmem:[%s0 + $0x10] sm:$0xff]
  %v15 = vld [vmem:[%s0 + $0x18] sm:$0xf]
  %v16 = vld [vmem:[%s0 + $0x1c] sm:$0xff]
  %v17 = vld [vmem:[%s0 + $0x24] sm:$0xff]
  %v18 = vld [vmem:[%s0 + $0x2c] sm:$0xff]
  %v19 = vld [vmem:[%s0 + $0x34] sm:$0xf]
  %v20 = vld [vmem:[%s0 + $0x38] sm:$0xff]
  %v21 = vld [vmem:[%s0 + $0x40] sm:$0xff]
  %v22 = vld [vmem:[%s0 + $0x48] sm:$0xff]
  %v23 = vld [vmem:[%s0 + $0x50] sm:$0xf]
  %v24 = vld [vmem:[%s0 + $0x54] sm:$0xff]
  %v25 = vld [vmem:[%s0 + $0x5c] sm:$0xff]
  %v26 = vld [vmem:[%s0 + $0x64] sm:$0xff]
  %v27 = vld [vmem:[%s0 + $0x6c] sm:$0xf]
  %v28 = vld [vmem:[%s0 + $0x70] sm:$0xff]
  %v29 = vld [vmem:[%s0 + $0x78] sm:$0xff]
  %v30 = vld [vmem:[%s0 + $0x80] sm:$0xff]
  %v31 = vld [vmem:[%s0 + $0x88] sm:$0xf]
  %v32 = vld [vmem:[%s0 + $0x8c] sm:$0xff]
  %v33 = vld [vmem:[%s0 + $0x94] sm:$0xff]
  %v34 = vld [vmem:[%s0 + $0x9c] sm:$0xff]
  %v35 = vld [vmem:[%s0 + $0xa4] sm:$0xf]
  %v36 = vld [vmem:[%s0 + $0xa8] sm:$0xff]
  %v37 = vld [vmem:[%s0 + $0xb0] sm:$0xff]
  %v38 = vld [vmem:[%s0 + $0xb8] sm:$0xff]
  %v39 = vld [vmem:[%s0 + $0xc0] sm:$0xf]
  %v40 = vld [vmem:[%s0 + $0xc4] sm:$0xff]
  %v41 = vld [vmem:[%s0 + $0xcc] sm:$0xff]
  %v42 = vld [vmem:[%s0 + $0xd4] sm:$0xff]
  %v43 = vld [vmem:[%s0 + $0xdc] sm:$0xf]
  %v44 = vld [vmem:[%s0 + $0xe0] sm:$0xff]
  %v45 = vld [vmem:[%s0 + $0xe8] sm:$0xff]
  %v46 = vld [vmem:[%s0 + $0xf0] sm:$0xff]
  %v47 = vld [vmem:[%s0 + $0xf8] sm:$0xf]
  %v48 = vld [vmem:[%s0 + $0xfc] sm:$0xff]
  %v49 = vld [vmem:[%s0 + $0x104] sm:$0xff]
  %v50 = vld [vmem:[%s0 + $0x10c] sm:$0xff]
  %v51 = vld [vmem:[%s0 + $0x114] sm:$0xf]
  %v52 = vld [vmem:[%s0 + $0x118] sm:$0xff]
  %v53 = vld [vmem:[%s0 + $0x120] sm:$0xff]
  %v54 = vld [vmem:[%s0 + $0x128] sm:$0xff]
  %v55 = vld [vmem:[%s0 + $0x130] sm:$0xf]
  %v56 = vld [vmem:[%s0 + $0x134] sm:$0xff]
  %v57 = vld [vmem:[%s0 + $0x13c] sm:$0xff]
  %v58 = vld [vmem:[%s0 + $0x144] sm:$0xff]
  %v59 = vld [vmem:[%s0 + $0x14c] sm:$0xf]
  %v60 = vld [vmem:[%s0 + $0x150] sm:$0xff]
  %v61 = vld [vmem:[%s0 + $0x158] sm:$0xff]
  %v62 = vld [vmem:[%s0 + $0x160] sm:$0xff]
  %v63 = vld [vmem:[%s0 + $0x168] sm:$0xf]
  %v64 = vld [vmem:[%s0 + $0x16c] sm:$0xff]
  %v65 = vld [vmem:[%s0 + $0x174] sm:$0xff]
  %v66 = vld [vmem:[%s0 + $0x17c] sm:$0xff]
  %v67 = vld [vmem:[%s0 + $0x184] sm:$0xf]
  %v68 = vld [vmem:[%s0 + $0x188] sm:$0xff]
  %v69 = vld [vmem:[%s0 + $0x190] sm:$0xff]
  %v70 = vld [vmem:[%s0 + $0x198] sm:$0xff]
  %v71 = vld [vmem:[%s0 + $0x1a0] sm:$0xf]
  %v72 = vld [vmem:[%s0 + $0x1a4] sm:$0xff]
  %v73 = vld [vmem:[%s0 + $0x1ac] sm:$0xff]
  %v74 = vld [vmem:[%s0 + $0x1b4] sm:$0xff]
  %v75 = vld [vmem:[%s0 + $0x1bc] sm:$0xf]
  %v76 = vld [vmem:[%s1] sm:$0xf]
  %v77 = vld [vmem:[%s1 + $0x4] sm:$0xf]
  %v78 = vld [vmem:[%s1 + $0x8] sm:$0xf]
  %v79 = vld [vmem:[%s1 + $0xc] sm:$0xf]
  %v80 = vld [vmem:[%s1 + $0x10] sm:$0xf]
  %v81 = vld [vmem:[%s1 + $0x14] sm:$0xf]
  %v82 = vld [vmem:[%s1 + $0x18] sm:$0xf]
  %v83 = vld [vmem:[%s1 + $0x1c] sm:$0xf]
  %v84 = vld [vmem:[%s1 + $0x20] sm:$0xf]
  %v85 = vld [vmem:[%s1 + $0x24] sm:$0xf]
  %v86 = vld [vmem:[%s1 + $0x28] sm:$0xf]
  %v87 = vld [vmem:[%s1 + $0x2c] sm:$0xf]
  %v88 = vld [vmem:[%s1 + $0x30] sm:$0xf]
  %v89 = vld [vmem:[%s1 + $0x34] sm:$0xf]
  %v90 = vld [vmem:[%s1 + $0x38] sm:$0xf]
  %v91 = vld [vmem:[%s1 + $0x3c] sm:$0xf]
  %v92 = vld [vmem:[%s1 + $0x40] sm:$0xf]
  %v93 = vld [vmem:[%s1 + $0x44] sm:$0xf]
  %v94 = vld [vmem:[%s1 + $0x48] sm:$0xf]
  %v95 = vld [vmem:[%s1 + $0x4c] sm:$0xf]
  %v96 = vld [vmem:[%s1 + $0x50] sm:$0xf]
  %v97 = vld [vmem:[%s1 + $0x54] sm:$0xf]
  %v98 = vld [vmem:[%s1 + $0x58] sm:$0xf]
  %v99 = vld [vmem:[%s1 + $0x5c] sm:$0xf]
  %v100 = vld [vmem:[%s1 + $0x60] sm:$0xf]
  %v101 = vld [vmem:[%s1 + $0x64] sm:$0xf]
  %v102 = vld [vmem:[%s1 + $0x68] sm:$0xf]
  %v103 = vld [vmem:[%s1 + $0x6c] sm:$0xf]
  %v104 = vld [vmem:[%s1 + $0x70] sm:$0xf]
  %v105 = vld [vmem:[%s1 + $0x74] sm:$0xf]
  %v106 = vld [vmem:[%s1 + $0x78] sm:$0xf]
  %v107 = vld [vmem:[%s1 + $0x7c] sm:$0xf]
  %v108 = vld [vmem:[%s1 + $0x80] sm:$0xf]
  %v109 = vld [vmem:[%s1 + $0x84] sm:$0xf]
  %v110 = vld [vmem:[%s1 + $0x88] sm:$0xf]
  %v111 = vld [vmem:[%s1 + $0x8c] sm:$0xf]
  %v112 = vld [vmem:[%s1 + $0x90] sm:$0xf]
  %v113 = vld [vmem:[%s1 + $0x94] sm:$0xf]
  %v114 = vld [vmem:[%s1 + $0x98] sm:$0xf]
  %v115 = vld [vmem:[%s1 + $0x9c] sm:$0xf]
  %v116 = vld [vmem:[%s1 + $0xa0] sm:$0xf]
  %v117 = vld [vmem:[%s1 + $0xa4] sm:$0xf]
  %v118 = vld [vmem:[%s1 + $0xa8] sm:$0xf]
  %v119 = vld [vmem:[%s1 + $0xac] sm:$0xf]
  %v120 = vld [vmem:[%s1 + $0xb0] sm:$0xf]
  %v121 = vld [vmem:[%s1 + $0xb4] sm:$0xf]
  %v122 = vld [vmem:[%s1 + $0xb8] sm:$0xf]
  %v123 = vld [vmem:[%s1 + $0xbc] sm:$0xf]
  %v124 = vld [vmem:[%s1 + $0xc0] sm:$0xf]
  %v125 = vld [vmem:[%s1 + $0xc4] sm:$0xf]
  %v126 = vld [vmem:[%s1 + $0xc8] sm:$0xf]
  %v127 = vld [vmem:[%s1 + $0xcc] sm:$0xf]
  %v128 = vld [vmem:[%s1 + $0xd0] sm:$0xf]
  %v129 = vld [vmem:[%s1 + $0xd4] sm:$0xf]
  %v130 = vld [vmem:[%s1 + $0xd8] sm:$0xf]
  %v131 = vld [vmem:[%s1 + $0xdc] sm:$0xf]
  %v132 = vld [vmem:[%s1 + $0xe0] sm:$0xf]
  %v133 = vld [vmem:[%s1 + $0xe4] sm:$0xf]
  %v134 = vld [vmem:[%s1 + $0xe8] sm:$0xf]
  %v135 = vld [vmem:[%s1 + $0xec] sm:$0xf]
  %v136 = vld [vmem:[%s1 + $0xf0] sm:$0xf]
  %v137 = vld [vmem:[%s1 + $0xf4] sm:$0xf]
  %v138 = vld [vmem:[%s1 + $0xf8] sm:$0xf]
  %v139 = vld [vmem:[%s1 + $0xfc] sm:$0xf]
  %v140 = vld [vmem:[%s1 + $0x100] sm:$0xf]
  %v141 = vld [vmem:[%s1 + $0x104] sm:$0xf]
  %v142 = vld [vmem:[%s1 + $0x108] sm:$0xf]
  %v143 = vld [vmem:[%s1 + $0x10c] sm:$0xf]
  %v144 = vld [vmem:[%s1 + $0x110] sm:$0xf]
  %v145 = vld [vmem:[%s1 + $0x114] sm:$0xf]
  %v146 = vld [vmem:[%s1 + $0x118] sm:$0xf]
  %v147 = vld [vmem:[%s1 + $0x11c] sm:$0xf]
  %v148 = vld [vmem:[%s1 + $0x120] sm:$0xf]
  %v149 = vld [vmem:[%s1 + $0x124] sm:$0xf]
  %v150 = vld [vmem:[%s1 + $0x128] sm:$0xf]
  %v151 = vld [vmem:[%s1 + $0x12c] sm:$0xf]
  %v152 = vld [vmem:[%s1 + $0x130] sm:$0xf]
  %v153 = vld [vmem:[%s1 + $0x134] sm:$0xf]
  %v154 = vld [vmem:[%s1 + $0x138] sm:$0xf]
  %v155 = vld [vmem:[%s1 + $0x13c] sm:$0xf]
  %v156 = vld [vmem:[%s1 + $0x140] sm:$0xf]
  %v157 = vld [vmem:[%s1 + $0x144] sm:$0xf]
  %v158 = vld [vmem:[%s1 + $0x148] sm:$0xf]
  %v159 = vld [vmem:[%s1 + $0x14c] sm:$0xf]
  %v160 = vld [vmem:[%s1 + $0x150] sm:$0xf]
  %v161 = vld [vmem:[%s1 + $0x154] sm:$0xf]
  %v162 = vld [vmem:[%s1 + $0x158] sm:$0xf]
  %v163 = vld [vmem:[%s1 + $0x15c] sm:$0xf]
  %v164 = vld [vmem:[%s1 + $0x160] sm:$0xf]
  %v165 = vld [vmem:[%s1 + $0x164] sm:$0xf]
  %v166 = vld [vmem:[%s1 + $0x168] sm:$0xf]
  %v167 = vld [vmem:[%s1 + $0x16c] sm:$0xf]
  %v168 = vld [vmem:[%s1 + $0x170] sm:$0xf]
  %v169 = vld [vmem:[%s1 + $0x174] sm:$0xf]
  %v170 = vld [vmem:[%s1 + $0x178] sm:$0xf]
  %v171 = vld [vmem:[%s1 + $0x17c] sm:$0xf]
  %v172 = vld [vmem:[%s1 + $0x180] sm:$0xf]
  %v173 = vld [vmem:[%s1 + $0x184] sm:$0xf]
  %v174 = vld [vmem:[%s1 + $0x188] sm:$0xf]
  %v175 = vld [vmem:[%s1 + $0x18c] sm:$0xf]
  %v176 = vld [vmem:[%s1 + $0x190] sm:$0xf]
  %v177 = vld [vmem:[%s1 + $0x194] sm:$0xf]
  %v178 = vld [vmem:[%s1 + $0x198] sm:$0xf]
  %v179 = vld [vmem:[%s1 + $0x19c] sm:$0xf]
  %v180 = vld [vmem:[%s1 + $0x1a0] sm:$0xf]
  %v181 = vld [vmem:[%s1 + $0x1a4] sm:$0xf]
  %v182 = vld [vmem:[%s1 + $0x1a8] sm:$0xf]
  %v183 = vld [vmem:[%s1 + $0x1ac] sm:$0xf]
  %v184 = vld [vmem:[%s1 + $0x1b0] sm:$0xf]
  %v185 = vld [vmem:[%s1 + $0x1b4] sm:$0xf]
  %v186 = vld [vmem:[%s1 + $0x1b8] sm:$0xf]
  %v187 = vld [vmem:[%s1 + $0x1bc] sm:$0xf]
  %v252 = vunpack.c.l.b16 %v12
  %v253 = vunpack.c.h.b16 %v12
  %v254 = vunpack.c.l.b16 %v13
  %v255 = vunpack.c.h.b16 %v13
  %v256 = vunpack.c.l.b16 %v14
  %v257 = vunpack.c.h.b16 %v14
  %v258 = vunpack.c.l.b16 %v15
  %v259 = vunpack.c.l.b16 %v16
  %v260 = vunpack.c.h.b16 %v16
  %v261 = vunpack.c.l.b16 %v17
  %v262 = vunpack.c.h.b16 %v17
  %v263 = vunpack.c.l.b16 %v18
  %v264 = vunpack.c.h.b16 %v18
  %v265 = vunpack.c.l.b16 %v19
  %v266 = vunpack.c.l.b16 %v20
  %v267 = vunpack.c.h.b16 %v20
  %v268 = vunpack.c.l.b16 %v21
  %v269 = vunpack.c.h.b16 %v21
  %v270 = vunpack.c.l.b16 %v22
  %v271 = vunpack.c.h.b16 %v22
  %v272 = vunpack.c.l.b16 %v23
  %v273 = vunpack.c.l.b16 %v24
  %v274 = vunpack.c.h.b16 %v24
  %v275 = vunpack.c.l.b16 %v25
  %v276 = vunpack.c.h.b16 %v25
  %v277 = vunpack.c.l.b16 %v26
  %v278 = vunpack.c.h.b16 %v26
  %v279 = vunpack.c.l.b16 %v27
  %v280 = vunpack.c.l.b16 %v28
  %v281 = vunpack.c.h.b16 %v28
  %v282 = vunpack.c.l.b16 %v29
  %v283 = vunpack.c.h.b16 %v29
  %v284 = vunpack.c.l.b16 %v30
  %v285 = vunpack.c.h.b16 %v30
  %v286 = vunpack.c.l.b16 %v31
  %v287 = vunpack.c.l.b16 %v32
  %v288 = vunpack.c.h.b16 %v32
  %v289 = vunpack.c.l.b16 %v33
  %v290 = vunpack.c.h.b16 %v33
  %v291 = vunpack.c.l.b16 %v34
  %v292 = vunpack.c.h.b16 %v34
  %v293 = vunpack.c.l.b16 %v35
  %v294 = vunpack.c.l.b16 %v36
  %v295 = vunpack.c.h.b16 %v36
  %v296 = vunpack.c.l.b16 %v37
  %v297 = vunpack.c.h.b16 %v37
  %v298 = vunpack.c.l.b16 %v38
  %v299 = vunpack.c.h.b16 %v38
  %v300 = vunpack.c.l.b16 %v39
  %v301 = vunpack.c.l.b16 %v40
  %v302 = vunpack.c.h.b16 %v40
  %v303 = vunpack.c.l.b16 %v41
  %v304 = vunpack.c.h.b16 %v41
  %v305 = vunpack.c.l.b16 %v42
  %v306 = vunpack.c.h.b16 %v42
  %v307 = vunpack.c.l.b16 %v43
  %v308 = vunpack.c.l.b16 %v44
  %v309 = vunpack.c.h.b16 %v44
  %v310 = vunpack.c.l.b16 %v45
  %v311 = vunpack.c.h.b16 %v45
  %v312 = vunpack.c.l.b16 %v46
  %v313 = vunpack.c.h.b16 %v46
  %v314 = vunpack.c.l.b16 %v47
  %v315 = vunpack.c.l.b16 %v48
  %v316 = vunpack.c.h.b16 %v48
  %v317 = vunpack.c.l.b16 %v49
  %v318 = vunpack.c.h.b16 %v49
  %v319 = vunpack.c.l.b16 %v50
  %v320 = vunpack.c.h.b16 %v50
  %v321 = vunpack.c.l.b16 %v51
  %v322 = vunpack.c.l.b16 %v52
  %v323 = vunpack.c.h.b16 %v52
  %v324 = vunpack.c.l.b16 %v53
  %v325 = vunpack.c.h.b16 %v53
  %v326 = vunpack.c.l.b16 %v54
  %v327 = vunpack.c.h.b16 %v54
  %v328 = vunpack.c.l.b16 %v55
  %v329 = vunpack.c.l.b16 %v56
  %v330 = vunpack.c.h.b16 %v56
  %v331 = vunpack.c.l.b16 %v57
  %v332 = vunpack.c.h.b16 %v57
  %v333 = vunpack.c.l.b16 %v58
  %v334 = vunpack.c.h.b16 %v58
  %v335 = vunpack.c.l.b16 %v59
  %v336 = vunpack.c.l.b16 %v60
  %v337 = vunpack.c.h.b16 %v60
  %v338 = vunpack.c.l.b16 %v61
  %v339 = vunpack.c.h.b16 %v61
  %v340 = vunpack.c.l.b16 %v62
  %v341 = vunpack.c.h.b16 %v62
  %v342 = vunpack.c.l.b16 %v63
  %v343 = vunpack.c.l.b16 %v64
  %v344 = vunpack.c.h.b16 %v64
  %v345 = vunpack.c.l.b16 %v65
  %v346 = vunpack.c.h.b16 %v65
  %v347 = vunpack.c.l.b16 %v66
  %v348 = vunpack.c.h.b16 %v66
  %v349 = vunpack.c.l.b16 %v67
  %v350 = vunpack.c.l.b16 %v68
  %v351 = vunpack.c.h.b16 %v68
  %v352 = vunpack.c.l.b16 %v69
  %v353 = vunpack.c.h.b16 %v69
  %v354 = vunpack.c.l.b16 %v70
  %v355 = vunpack.c.h.b16 %v70
  %v356 = vunpack.c.l.b16 %v71
  %v357 = vunpack.c.l.b16 %v72
  %v358 = vunpack.c.h.b16 %v72
  %v359 = vunpack.c.l.b16 %v73
  %v360 = vunpack.c.h.b16 %v73
  %v361 = vunpack.c.l.b16 %v74
  %v362 = vunpack.c.h.b16 %v74
  %v363 = vunpack.c.l.b16 %v75
  %v364 = vpack.c.b16 %v259, %v252
  %v365 = vpack.c.b16 %v260, %v253
  %v366 = vpack.c.b16 %v261, %v254
  %v367 = vpack.c.b16 %v262, %v255
  %v368 = vpack.c.b16 %v263, %v256
  %v369 = vpack.c.b16 %v264, %v257
  %v370 = vpack.c.b16 %v265, %v258
  %v371 = vpack.c.b16 %v273, %v266
  %v372 = vpack.c.b16 %v274, %v267
  %v373 = vpack.c.b16 %v275, %v268
  %v374 = vpack.c.b16 %v276, %v269
  %v375 = vpack.c.b16 %v277, %v270
  %v376 = vpack.c.b16 %v278, %v271
  %v377 = vpack.c.b16 %v279, %v272
  %v378 = vpack.c.b16 %v287, %v280
  %v379 = vpack.c.b16 %v288, %v281
  %v380 = vpack.c.b16 %v289, %v282
  %v381 = vpack.c.b16 %v290, %v283
  %v382 = vpack.c.b16 %v291, %v284
  %v383 = vpack.c.b16 %v292, %v285
  %v384 = vpack.c.b16 %v293, %v286
  %v385 = vpack.c.b16 %v301, %v294
  %v386 = vpack.c.b16 %v302, %v295
  %v387 = vpack.c.b16 %v303, %v296
  %v388 = vpack.c.b16 %v304, %v297
  %v389 = vpack.c.b16 %v305, %v298
  %v390 = vpack.c.b16 %v306, %v299
  %v391 = vpack.c.b16 %v307, %v300
  %v392 = vpack.c.b16 %v315, %v308
  %v393 = vpack.c.b16 %v316, %v309
  %v394 = vpack.c.b16 %v317, %v310
  %v395 = vpack.c.b16 %v318, %v311
  %v396 = vpack.c.b16 %v319, %v312
  %v397 = vpack.c.b16 %v320, %v313
  %v398 = vpack.c.b16 %v321, %v314
  %v399 = vpack.c.b16 %v329, %v322
  %v400 = vpack.c.b16 %v330, %v323
  %v401 = vpack.c.b16 %v331, %v324
  %v402 = vpack.c.b16 %v332, %v325
  %v403 = vpack.c.b16 %v333, %v326
  %v404 = vpack.c.b16 %v334, %v327
  %v405 = vpack.c.b16 %v335, %v328
  %v406 = vpack.c.b16 %v343, %v336
  %v407 = vpack.c.b16 %v344, %v337
  %v408 = vpack.c.b16 %v345, %v338
  %v409 = vpack.c.b16 %v346, %v339
  %v410 = vpack.c.b16 %v347, %v340
  %v411 = vpack.c.b16 %v348, %v341
  %v412 = vpack.c.b16 %v349, %v342
  %v413 = vpack.c.b16 %v357, %v350
  %v414 = vpack.c.b16 %v358, %v351
  %v415 = vpack.c.b16 %v359, %v352
  %v416 = vpack.c.b16 %v360, %v353
  %v417 = vpack.c.b16 %v361, %v354
  %v418 = vpack.c.b16 %v362, %v355
  %v419 = vpack.c.b16 %v363, %v356
  %v588 = vunpack.c.l.b16 %v76
  %v589 = vunpack.c.l.b16 %v77
  %v590 = vunpack.c.l.b16 %v78
  %v591 = vunpack.c.l.b16 %v79
  %v592 = vunpack.c.l.b16 %v80
  %v593 = vunpack.c.l.b16 %v81
  %v594 = vunpack.c.l.b16 %v82
  %v595 = vunpack.c.l.b16 %v83
  %v596 = vunpack.c.l.b16 %v84
  %v597 = vunpack.c.l.b16 %v85
  %v598 = vunpack.c.l.b16 %v86
  %v599 = vunpack.c.l.b16 %v87
  %v600 = vunpack.c.l.b16 %v88
  %v601 = vunpack.c.l.b16 %v89
  %v602 = vunpack.c.l.b16 %v90
  %v603 = vunpack.c.l.b16 %v91
  %v604 = vunpack.c.l.b16 %v92
  %v605 = vunpack.c.l.b16 %v93
  %v606 = vunpack.c.l.b16 %v94
  %v607 = vunpack.c.l.b16 %v95
  %v608 = vunpack.c.l.b16 %v96
  %v609 = vunpack.c.l.b16 %v97
  %v610 = vunpack.c.l.b16 %v98
  %v611 = vunpack.c.l.b16 %v99
  %v612 = vunpack.c.l.b16 %v100
  %v613 = vunpack.c.l.b16 %v101
  %v614 = vunpack.c.l.b16 %v102
  %v615 = vunpack.c.l.b16 %v103
  %v616 = vunpack.c.l.b16 %v104
  %v617 = vunpack.c.l.b16 %v105
  %v618 = vunpack.c.l.b16 %v106
  %v619 = vunpack.c.l.b16 %v107
  %v620 = vunpack.c.l.b16 %v108
  %v621 = vunpack.c.l.b16 %v109
  %v622 = vunpack.c.l.b16 %v110
  %v623 = vunpack.c.l.b16 %v111
  %v624 = vunpack.c.l.b16 %v112
  %v625 = vunpack.c.l.b16 %v113
  %v626 = vunpack.c.l.b16 %v114
  %v627 = vunpack.c.l.b16 %v115
  %v628 = vunpack.c.l.b16 %v116
  %v629 = vunpack.c.l.b16 %v117
  %v630 = vunpack.c.l.b16 %v118
  %v631 = vunpack.c.l.b16 %v119
  %v632 = vunpack.c.l.b16 %v120
  %v633 = vunpack.c.l.b16 %v121
  %v634 = vunpack.c.l.b16 %v122
  %v635 = vunpack.c.l.b16 %v123
  %v636 = vunpack.c.l.b16 %v124
  %v637 = vunpack.c.l.b16 %v125
  %v638 = vunpack.c.l.b16 %v126
  %v639 = vunpack.c.l.b16 %v127
  %v640 = vunpack.c.l.b16 %v128
  %v641 = vunpack.c.l.b16 %v129
  %v642 = vunpack.c.l.b16 %v130
  %v643 = vunpack.c.l.b16 %v131
  %v644 = vunpack.c.l.b16 %v132
  %v645 = vunpack.c.l.b16 %v133
  %v646 = vunpack.c.l.b16 %v134
  %v647 = vunpack.c.l.b16 %v135
  %v648 = vunpack.c.l.b16 %v136
  %v649 = vunpack.c.l.b16 %v137
  %v650 = vunpack.c.l.b16 %v138
  %v651 = vunpack.c.l.b16 %v139
  %v652 = vunpack.c.l.b16 %v140
  %v653 = vunpack.c.l.b16 %v141
  %v654 = vunpack.c.l.b16 %v142
  %v655 = vunpack.c.l.b16 %v143
  %v656 = vunpack.c.l.b16 %v144
  %v657 = vunpack.c.l.b16 %v145
  %v658 = vunpack.c.l.b16 %v146
  %v659 = vunpack.c.l.b16 %v147
  %v660 = vunpack.c.l.b16 %v148
  %v661 = vunpack.c.l.b16 %v149
  %v662 = vunpack.c.l.b16 %v150
  %v663 = vunpack.c.l.b16 %v151
  %v664 = vunpack.c.l.b16 %v152
  %v665 = vunpack.c.l.b16 %v153
  %v666 = vunpack.c.l.b16 %v154
  %v667 = vunpack.c.l.b16 %v155
  %v668 = vunpack.c.l.b16 %v156
  %v669 = vunpack.c.l.b16 %v157
  %v670 = vunpack.c.l.b16 %v158
  %v671 = vunpack.c.l.b16 %v159
  %v672 = vunpack.c.l.b16 %v160
  %v673 = vunpack.c.l.b16 %v161
  %v674 = vunpack.c.l.b16 %v162
  %v675 = vunpack.c.l.b16 %v163
  %v676 = vunpack.c.l.b16 %v164
  %v677 = vunpack.c.l.b16 %v165
  %v678 = vunpack.c.l.b16 %v166
  %v679 = vunpack.c.l.b16 %v167
  %v680 = vunpack.c.l.b16 %v168
  %v681 = vunpack.c.l.b16 %v169
  %v682 = vunpack.c.l.b16 %v170
  %v683 = vunpack.c.l.b16 %v171
  %v684 = vunpack.c.l.b16 %v172
  %v685 = vunpack.c.l.b16 %v173
  %v686 = vunpack.c.l.b16 %v174
  %v687 = vunpack.c.l.b16 %v175
  %v688 = vunpack.c.l.b16 %v176
  %v689 = vunpack.c.l.b16 %v177
  %v690 = vunpack.c.l.b16 %v178
  %v691 = vunpack.c.l.b16 %v179
  %v692 = vunpack.c.l.b16 %v180
  %v693 = vunpack.c.l.b16 %v181
  %v694 = vunpack.c.l.b16 %v182
  %v695 = vunpack.c.l.b16 %v183
  %v696 = vunpack.c.l.b16 %v184
  %v697 = vunpack.c.l.b16 %v185
  %v698 = vunpack.c.l.b16 %v186
  %v699 = vunpack.c.l.b16 %v187
  %v700 = vpack.c.b16 %v589, %v588
  %v701 = vpack.c.b16 %v591, %v590
  %v702 = vpack.c.b16 %v593, %v592
  %v703 = vpack.c.b16 %v595, %v594
  %v704 = vpack.c.b16 %v597, %v596
  %v705 = vpack.c.b16 %v599, %v598
  %v706 = vpack.c.b16 %v601, %v600
  %v707 = vpack.c.b16 %v603, %v602
  %v708 = vpack.c.b16 %v605, %v604
  %v709 = vpack.c.b16 %v607, %v606
  %v710 = vpack.c.b16 %v609, %v608
  %v711 = vpack.c.b16 %v611, %v610
  %v712 = vpack.c.b16 %v613, %v612
  %v713 = vpack.c.b16 %v615, %v614
  %v714 = vpack.c.b16 %v617, %v616
  %v715 = vpack.c.b16 %v619, %v618
  %v716 = vpack.c.b16 %v621, %v620
  %v717 = vpack.c.b16 %v623, %v622
  %v718 = vpack.c.b16 %v625, %v624
  %v719 = vpack.c.b16 %v627, %v626
  %v720 = vpack.c.b16 %v629, %v628
  %v721 = vpack.c.b16 %v631, %v630
  %v722 = vpack.c.b16 %v633, %v632
  %v723 = vpack.c.b16 %v635, %v634
  %v724 = vpack.c.b16 %v637, %v636
  %v725 = vpack.c.b16 %v639, %v638
  %v726 = vpack.c.b16 %v641, %v640
  %v727 = vpack.c.b16 %v643, %v642
  %v728 = vpack.c.b16 %v645, %v644
  %v729 = vpack.c.b16 %v647, %v646
  %v730 = vpack.c.b16 %v649, %v648
  %v731 = vpack.c.b16 %v651, %v650
  %v732 = vpack.c.b16 %v653, %v652
  %v733 = vpack.c.b16 %v655, %v654
  %v734 = vpack.c.b16 %v657, %v656
  %v735 = vpack.c.b16 %v659, %v658
  %v736 = vpack.c.b16 %v661, %v660
  %v737 = vpack.c.b16 %v663, %v662
  %v738 = vpack.c.b16 %v665, %v664
  %v739 = vpack.c.b16 %v667, %v666
  %v740 = vpack.c.b16 %v669, %v668
  %v741 = vpack.c.b16 %v671, %v670
  %v742 = vpack.c.b16 %v673, %v672
  %v743 = vpack.c.b16 %v675, %v674
  %v744 = vpack.c.b16 %v677, %v676
  %v745 = vpack.c.b16 %v679, %v678
  %v746 = vpack.c.b16 %v681, %v680
  %v747 = vpack.c.b16 %v683, %v682
  %v748 = vpack.c.b16 %v685, %v684
  %v749 = vpack.c.b16 %v687, %v686
  %v750 = vpack.c.b16 %v689, %v688
  %v751 = vpack.c.b16 %v691, %v690
  %v752 = vpack.c.b16 %v693, %v692
  %v753 = vpack.c.b16 %v695, %v694
  %v754 = vpack.c.b16 %v697, %v696
  %v755 = vpack.c.b16 %v699, %v698
  %812 = vmatprep.subr.bf16.mxu0 0
  %813 = vmatpush1.bf16.msra.mxu0 %v700
  %814 = vmatprep.subr.bf16.mxu0 0
  %815 = vmatpush1.bf16.msra.mxu0 %v701
  %816 = vmatprep.subr.bf16.mxu0 0
  %817 = vmatpush1.bf16.msra.mxu0 %v702
  %818 = vmatprep.subr.bf16.mxu0 0
  %819 = vmatpush1.bf16.msra.mxu0 %v703
  %820 = vmatprep.subr.bf16.mxu0 0
  %821 = vmatpush1.bf16.msra.mxu0 %v704
  %822 = vmatprep.subr.bf16.mxu0 0
  %823 = vmatpush1.bf16.msra.mxu0 %v705
  %824 = vmatprep.subr.bf16.mxu0 0
  %825 = vmatpush1.bf16.msra.mxu0 %v706
  %826 = vmatprep.subr.bf16.mxu0 0
  %827 = vmatpush1.bf16.msra.mxu0 %v707
  %828 = vmatprep.subr.bf16.mxu0 0
  %829 = vmatpush1.bf16.msra.mxu0 %v708
  %830 = vmatprep.subr.bf16.mxu0 0
  %831 = vmatpush1.bf16.msra.mxu0 %v709
  %832 = vmatprep.subr.bf16.mxu0 0
  %833 = vmatpush1.bf16.msra.mxu0 %v710
  %834 = vmatprep.subr.bf16.mxu0 0
  %835 = vmatpush1.bf16.msra.mxu0 %v711
  %836 = vmatprep.subr.bf16.mxu0 0
  %837 = vmatpush1.bf16.msra.mxu0 %v712
  %838 = vmatprep.subr.bf16.mxu0 0
  %839 = vmatpush1.bf16.msra.mxu0 %v713
  %840 = vmatprep.subr.bf16.mxu0 0
  %841 = vmatpush1.bf16.msra.mxu0 %v714
  %842 = vmatprep.subr.bf16.mxu0 0
  %843 = vmatpush1.bf16.msra.mxu0 %v715
  %844 = vmatprep.mubr.bf16.mxu0 %v365
  %845 = vmatmul.mubr.bf16.gmra.mrb[0].mxu0 %v364
  %v846 = vpop.f32.mrb[0].mxu0
  %v847 = vadd.f32 0.0, %v846
  %v848 = vpop.f32.mrb[0].mxu0
  %v849 = vpop.f32.mrb[0].mxu0
  %v850 = vadd.f32 0.0, %v849
  %v851 = vpop.f32.mrb[0].mxu0
  %852 = vmatprep.mubr.bf16.mxu0 %v372
  %853 = vmatmul.mubr.bf16.gmra.mrb[0].mxu0 %v371
  %v854 = vpop.f32.mrb[0].mxu0
  %v855 = vadd.f32 0.0, %v854
  %v856 = vpop.f32.mrb[0].mxu0
  %v857 = vpop.f32.mrb[0].mxu0
  %v858 = vadd.f32 0.0, %v857
  %v859 = vpop.f32.mrb[0].mxu0
  %860 = vmatprep.mubr.bf16.mxu0 %v379
  %861 = vmatmul.mubr.bf16.gmra.mrb[0].mxu0 %v378
  %v862 = vpop.f32.mrb[0].mxu0
  %v863 = vadd.f32 0.0, %v862
  %v864 = vpop.f32.mrb[0].mxu0
  %v865 = vpop.f32.mrb[0].mxu0
  %v866 = vadd.f32 0.0, %v865
  %v867 = vpop.f32.mrb[0].mxu0
  %868 = vmatprep.mubr.bf16.mxu0 %v386
  %869 = vmatmul.mubr.bf16.gmra.mrb[0].mxu0 %v385
  %v870 = vpop.f32.mrb[0].mxu0
  %v871 = vadd.f32 0.0, %v870
  %v872 = vpop.f32.mrb[0].mxu0
  %v873 = vpop.f32.mrb[0].mxu0
  %v874 = vadd.f32 0.0, %v873
  %v875 = vpop.f32.mrb[0].mxu0
  %876 = vmatprep.mubr.bf16.mxu0 %v393
  %877 = vmatmul.mubr.bf16.gmra.mrb[0].mxu0 %v392
  %v878 = vpop.f32.mrb[0].mxu0
  %v879 = vadd.f32 0.0, %v878
  %v880 = vpop.f32.mrb[0].mxu0
  %v881 = vpop.f32.mrb[0].mxu0
  %v882 = vadd.f32 0.0, %v881
  %v883 = vpop.f32.mrb[0].mxu0
  %884 = vmatprep.mubr.bf16.mxu0 %v400
  %885 = vmatmul.mubr.bf16.gmra.mrb[0].mxu0 %v399
  %v886 = vpop.f32.mrb[0].mxu0
  %v887 = vadd.f32 0.0, %v886
  %v888 = vpop.f32.mrb[0].mxu0
  %v889 = vpop.f32.mrb[0].mxu0
  %v890 = vadd.f32 0.0, %v889
  %v891 = vpop.f32.mrb[0].mxu0
  %892 = vmatprep.mubr.bf16.mxu0 %v407
  %893 = vmatmul.mubr.bf16.gmra.mrb[0].mxu0 %v406
  %v894 = vpop.f32.mrb[0].mxu0
  %v895 = vadd.f32 0.0, %v894
  %v896 = vpop.f32.mrb[0].mxu0
  %v897 = vpop.f32.mrb[0].mxu0
  %v898 = vadd.f32 0.0, %v897
  %v899 = vpop.f32.mrb[0].mxu0
  %900 = vmatprep.mubr.bf16.mxu0 %v414
  %901 = vmatmul.mubr.bf16.gmra.mrb[0].mxu0 %v413
  %v902 = vpop.f32.mrb[0].mxu0
  %v903 = vadd.f32 0.0, %v902
  %v904 = vpop.f32.mrb[0].mxu0
  %v905 = vpop.f32.mrb[0].mxu0
  %v906 = vadd.f32 0.0, %v905
  %v907 = vpop.f32.mrb[0].mxu0
  %908 = vdwg.mxu0
  %909 = vmatprep.subr.bf16.mxu0 0
  %910 = vmatpush1.bf16.msra.mxu0 %v716
  %911 = vmatprep.subr.bf16.mxu0 0
  %912 = vmatpush1.bf16.msra.mxu0 %v717
  %913 = vmatprep.subr.bf16.mxu0 0
  %914 = vmatpush1.bf16.msra.mxu0 %v718
  %915 = vmatprep.subr.bf16.mxu0 0
  %916 = vmatpush1.bf16.msra.mxu0 %v719
  %917 = vmatprep.subr.bf16.mxu0 0
  %918 = vmatpush1.bf16.msra.mxu0 %v720
  %919 = vmatprep.subr.bf16.mxu0 0
  %920 = vmatpush1.bf16.msra.mxu0 %v721
  %921 = vmatprep.subr.bf16.mxu0 0
  %922 = vmatpush1.bf16.msra.mxu0 %v722
  %923 = vmatprep.subr.bf16.mxu0 0
  %924 = vmatpush1.bf16.msra.mxu0 %v723
  %925 = vmatprep.subr.bf16.mxu0 0
  %926 = vmatpush1.bf16.msra.mxu0 %v724
  %927 = vmatprep.subr.bf16.mxu0 0
  %928 = vmatpush1.bf16.msra.mxu0 %v725
  %929 = vmatprep.subr.bf16.mxu0 0
  %930 = vmatpush1.bf16.msra.mxu0 %v726
  %931 = vmatprep.subr.bf16.mxu0 0
  %932 = vmatpush1.bf16.msra.mxu0 %v727
  %933 = vmatprep.subr.bf16.mxu0 0
  %934 = vmatpush1.bf16.msra.mxu0 %v728
  %935 = vmatprep.subr.bf16.mxu0 0
  %936 = vmatpush1.bf16.msra.mxu0 %v729
  %937 = vmatprep.subr.bf16.mxu0 0
  %938 = vmatpush1.bf16.msra.mxu0 %v730
  %939 = vmatprep.subr.bf16.mxu0 0
  %940 = vmatpush1.bf16.msra.mxu0 %v731
  %941 = vmatprep.mubr.bf16.mxu0 %v367
  %942 = vmatmul.mubr.bf16.gmra.mrb[0].mxu0 %v366
  %v943 = vpop.f32.mrb[0].mxu0
  %v944 = vadd.f32 %v847, %v943
  %v945 = vpop.f32.mrb[0].mxu0
  %v946 = vpop.f32.mrb[0].mxu0
  %v947 = vadd.f32 %v850, %v946
  %v948 = vpop.f32.mrb[0].mxu0
  %949 = vmatprep.mubr.bf16.mxu0 %v374
  %950 = vmatmul.mubr.bf16.gmra.mrb[0].mxu0 %v373
  %v951 = vpop.f32.mrb[0].mxu0
  %v952 = vadd.f32 %v855, %v951
  %v953 = vpop.f32.mrb[0].mxu0
  %v954 = vpop.f32.mrb[0].mxu0
  %v955 = vadd.f32 %v858, %v954
  %v956 = vpop.f32.mrb[0].mxu0
  %957 = vmatprep.mubr.bf16.mxu0 %v381
  %958 = vmatmul.mubr.bf16.gmra.mrb[0].mxu0 %v380
  %v959 = vpop.f32.mrb[0].mxu0
  %v960 = vadd.f32 %v863, %v959
  %v961 = vpop.f32.mrb[0].mxu0
  %v962 = vpop.f32.mrb[0].mxu0
  %v963 = vadd.f32 %v866, %v962
  %v964 = vpop.f32.mrb[0].mxu0
  %965 = vmatprep.mubr.bf16.mxu0 %v388
  %966 = vmatmul.mubr.bf16.gmra.mrb[0].mxu0 %v387
  %v967 = vpop.f32.mrb[0].mxu0
  %v968 = vadd.f32 %v871, %v967
  %v969 = vpop.f32.mrb[0].mxu0
  %v970 = vpop.f32.mrb[0].mxu0
  %v971 = vadd.f32 %v874, %v970
  %v972 = vpop.f32.mrb[0].mxu0
  %973 = vmatprep.mubr.bf16.mxu0 %v395
  %974 = vmatmul.mubr.bf16.gmra.mrb[0].mxu0 %v394
  %v975 = vpop.f32.mrb[0].mxu0
  %v976 = vadd.f32 %v879, %v975
  %v977 = vpop.f32.mrb[0].mxu0
  %v978 = vpop.f32.mrb[0].mxu0
  %v979 = vadd.f32 %v882, %v978
  %v980 = vpop.f32.mrb[0].mxu0
  %981 = vmatprep.mubr.bf16.mxu0 %v402
  %982 = vmatmul.mubr.bf16.gmra.mrb[0].mxu0 %v401
  %v983 = vpop.f32.mrb[0].mxu0
  %v984 = vadd.f32 %v887, %v983
  %v985 = vpop.f32.mrb[0].mxu0
  %v986 = vpop.f32.mrb[0].mxu0
  %v987 = vadd.f32 %v890, %v986
  %v988 = vpop.f32.mrb[0].mxu0
  %989 = vmatprep.mubr.bf16.mxu0 %v409
  %990 = vmatmul.mubr.bf16.gmra.mrb[0].mxu0 %v408
  %v991 = vpop.f32.mrb[0].mxu0
  %v992 = vadd.f32 %v895, %v991
  %v993 = vpop.f32.mrb[0].mxu0
  %v994 = vpop.f32.mrb[0].mxu0
  %v995 = vadd.f32 %v898, %v994
  %v996 = vpop.f32.mrb[0].mxu0
  %997 = vmatprep.mubr.bf16.mxu0 %v416
  %998 = vmatmul.mubr.bf16.gmra.mrb[0].mxu0 %v415
  %v999 = vpop.f32.mrb[0].mxu0
  %v1000 = vadd.f32 %v903, %v999
  %v1001 = vpop.f32.mrb[0].mxu0
  %v1002 = vpop.f32.mrb[0].mxu0
  %v1003 = vadd.f32 %v906, %v1002
  %v1004 = vpop.f32.mrb[0].mxu0
  %1005 = vdwg.mxu0
  %1006 = vmatprep.subr.bf16.mxu0 0
  %1007 = vmatpush1.bf16.msra.mxu0 %v732
  %1008 = vmatprep.subr.bf16.mxu0 0
  %1009 = vmatpush1.bf16.msra.mxu0 %v733
  %1010 = vmatprep.subr.bf16.mxu0 0
  %1011 = vmatpush1.bf16.msra.mxu0 %v734
  %1012 = vmatprep.subr.bf16.mxu0 0
  %1013 = vmatpush1.bf16.msra.mxu0 %v735
  %1014 = vmatprep.subr.bf16.mxu0 0
  %1015 = vmatpush1.bf16.msra.mxu0 %v736
  %1016 = vmatprep.subr.bf16.mxu0 0
  %1017 = vmatpush1.bf16.msra.mxu0 %v737
  %1018 = vmatprep.subr.bf16.mxu0 0
  %1019 = vmatpush1.bf16.msra.mxu0 %v738
  %1020 = vmatprep.subr.bf16.mxu0 0
  %1021 = vmatpush1.bf16.msra.mxu0 %v739
  %1022 = vmatprep.subr.bf16.mxu0 0
  %1023 = vmatpush1.bf16.msra.mxu0 %v740
  %1024 = vmatprep.subr.bf16.mxu0 0
  %1025 = vmatpush1.bf16.msra.mxu0 %v741
  %1026 = vmatprep.subr.bf16.mxu0 0
  %1027 = vmatpush1.bf16.msra.mxu0 %v742
  %1028 = vmatprep.subr.bf16.mxu0 0
  %1029 = vmatpush1.bf16.msra.mxu0 %v743
  %1030 = vmatprep.subr.bf16.mxu0 0
  %1031 = vmatpush1.bf16.msra.mxu0 %v744
  %1032 = vmatprep.subr.bf16.mxu0 0
  %1033 = vmatpush1.bf16.msra.mxu0 %v745
  %1034 = vmatprep.subr.bf16.mxu0 0
  %1035 = vmatpush1.bf16.msra.mxu0 %v746
  %1036 = vmatprep.subr.bf16.mxu0 0
  %1037 = vmatpush1.bf16.msra.mxu0 %v747
  %1038 = vmatprep.mubr.bf16.mxu0 %v369
  %1039 = vmatmul.mubr.bf16.gmra.mrb[0].mxu0 %v368
  %v1040 = vpop.f32.mrb[0].mxu0
  %v1041 = vadd.f32 %v944, %v1040
  %v1042 = vpop.f32.mrb[0].mxu0
  %v1043 = vpop.f32.mrb[0].mxu0
  %v1044 = vadd.f32 %v947, %v1043
  %v1045 = vpop.f32.mrb[0].mxu0
  %1046 = vmatprep.mubr.bf16.mxu0 %v376
  %1047 = vmatmul.mubr.bf16.gmra.mrb[0].mxu0 %v375
  %v1048 = vpop.f32.mrb[0].mxu0
  %v1049 = vadd.f32 %v952, %v1048
  %v1050 = vpop.f32.mrb[0].mxu0
  %v1051 = vpop.f32.mrb[0].mxu0
  %v1052 = vadd.f32 %v955, %v1051
  %v1053 = vpop.f32.mrb[0].mxu0
  %1054 = vmatprep.mubr.bf16.mxu0 %v383
  %1055 = vmatmul.mubr.bf16.gmra.mrb[0].mxu0 %v382
  %v1056 = vpop.f32.mrb[0].mxu0
  %v1057 = vadd.f32 %v960, %v1056
  %v1058 = vpop.f32.mrb[0].mxu0
  %v1059 = vpop.f32.mrb[0].mxu0
  %v1060 = vadd.f32 %v963, %v1059
  %v1061 = vpop.f32.mrb[0].mxu0
  %1062 = vmatprep.mubr.bf16.mxu0 %v390
  %1063 = vmatmul.mubr.bf16.gmra.mrb[0].mxu0 %v389
  %v1064 = vpop.f32.mrb[0].mxu0
  %v1065 = vadd.f32 %v968, %v1064
  %v1066 = vpop.f32.mrb[0].mxu0
  %v1067 = vpop.f32.mrb[0].mxu0
  %v1068 = vadd.f32 %v971, %v1067
  %v1069 = vpop.f32.mrb[0].mxu0
  %1070 = vmatprep.mubr.bf16.mxu0 %v397
  %1071 = vmatmul.mubr.bf16.gmra.mrb[0].mxu0 %v396
  %v1072 = vpop.f32.mrb[0].mxu0
  %v1073 = vadd.f32 %v976, %v1072
  %v1074 = vpop.f32.mrb[0].mxu0
  %v1075 = vpop.f32.mrb[0].mxu0
  %v1076 = vadd.f32 %v979, %v1075
  %v1077 = vpop.f32.mrb[0].mxu0
  %1078 = vmatprep.mubr.bf16.mxu0 %v404
  %1079 = vmatmul.mubr.bf16.gmra.mrb[0].mxu0 %v403
  %v1080 = vpop.f32.mrb[0].mxu0
  %v1081 = vadd.f32 %v984, %v1080
  %v1082 = vpop.f32.mrb[0].mxu0
  %v1083 = vpop.f32.mrb[0].mxu0
  %v1084 = vadd.f32 %v987, %v1083
  %v1085 = vpop.f32.mrb[0].mxu0
  %1086 = vmatprep.mubr.bf16.mxu0 %v411
  %1087 = vmatmul.mubr.bf16.gmra.mrb[0].mxu0 %v410
  %v1088 = vpop.f32.mrb[0].mxu0
  %v1089 = vadd.f32 %v992, %v1088
  %v1090 = vpop.f32.mrb[0].mxu0
  %v1091 = vpop.f32.mrb[0].mxu0
  %v1092 = vadd.f32 %v995, %v1091
  %v1093 = vpop.f32.mrb[0].mxu0
  %1094 = vmatprep.mubr.bf16.mxu0 %v418
  %1095 = vmatmul.mubr.bf16.gmra.mrb[0].mxu0 %v417
  %v1096 = vpop.f32.mrb[0].mxu0
  %v1097 = vadd.f32 %v1000, %v1096
  %v1098 = vpop.f32.mrb[0].mxu0
  %v1099 = vpop.f32.mrb[0].mxu0
  %v1100 = vadd.f32 %v1003, %v1099
  %v1101 = vpop.f32.mrb[0].mxu0
  %1102 = vdwg.mxu0
  %1103 = vmatprep.subr.bf16.mxu0 0
  %1104 = vmatpush1.bf16.msra.mxu0 %v748
  %1105 = vmatprep.subr.bf16.mxu0 0
  %1106 = vmatpush1.bf16.msra.mxu0 %v749
  %1107 = vmatprep.subr.bf16.mxu0 0
  %1108 = vmatpush1.bf16.msra.mxu0 %v750
  %1109 = vmatprep.subr.bf16.mxu0 0
  %1110 = vmatpush1.bf16.msra.mxu0 %v751
  %1111 = vmatprep.subr.bf16.mxu0 0
  %1112 = vmatpush1.bf16.msra.mxu0 %v752
  %1113 = vmatprep.subr.bf16.mxu0 0
  %1114 = vmatpush1.bf16.msra.mxu0 %v753
  %1115 = vmatprep.subr.bf16.mxu0 0
  %1116 = vmatpush1.bf16.msra.mxu0 %v754
  %1117 = vmatprep.subr.bf16.mxu0 0
  %1118 = vmatpush1.bf16.msra.mxu0 %v755
  %1119 = vmatprep.subr.bf16.mxu0 0
  %1120 = vmatpush1.bf16.msra.mxu0 0
  %1121 = vmatprep.subr.bf16.mxu0 0
  %1122 = vmatpush1.bf16.msra.mxu0 0
  %1123 = vmatprep.subr.bf16.mxu0 0
  %1124 = vmatpush1.bf16.msra.mxu0 0
  %1125 = vmatprep.subr.bf16.mxu0 0
  %1126 = vmatpush1.bf16.msra.mxu0 0
  %1127 = vmatprep.subr.bf16.mxu0 0
  %1128 = vmatpush1.bf16.msra.mxu0 0
  %1129 = vmatprep.subr.bf16.mxu0 0
  %1130 = vmatpush1.bf16.msra.mxu0 0
  %1131 = vmatprep.subr.bf16.mxu0 0
  %1132 = vmatpush1.bf16.msra.mxu0 0
  %1133 = vmatprep.subr.bf16.mxu0 0
  %1134 = vmatpush1.bf16.msra.mxu0 0
  %1135 = vmatprep.mubr.bf16.mxu0 0
  %1136 = vmatmul.mubr.bf16.gmra.mrb[0].mxu0 %v370
  %v1137 = vpop.f32.mrb[0].mxu0
  %v1138 = vadd.f32 %v1041, %v1137
  %v1139 = vpop.f32.mrb[0].mxu0
  %v1140 = vpop.f32.mrb[0].mxu0
  %v1141 = vadd.f32 %v1044, %v1140
  %v1142 = vpop.f32.mrb[0].mxu0
  %1143 = vmatprep.mubr.bf16.mxu0 0
  %1144 = vmatmul.mubr.bf16.gmra.mrb[0].mxu0 %v377
  %v1145 = vpop.f32.mrb[0].mxu0
  %v1146 = vadd.f32 %v1049, %v1145
  %v1147 = vpop.f32.mrb[0].mxu0
  %v1148 = vpop.f32.mrb[0].mxu0
  %v1149 = vadd.f32 %v1052, %v1148
  %v1150 = vpop.f32.mrb[0].mxu0
  %1151 = vmatprep.mubr.bf16.mxu0 0
  %1152 = vmatmul.mubr.bf16.gmra.mrb[0].mxu0 %v384
  %v1153 = vpop.f32.mrb[0].mxu0
  %v1154 = vadd.f32 %v1057, %v1153
  %v1155 = vpop.f32.mrb[0].mxu0
  %v1156 = vpop.f32.mrb[0].mxu0
  %v1157 = vadd.f32 %v1060, %v1156
  %v1158 = vpop.f32.mrb[0].mxu0
  %1159 = vmatprep.mubr.bf16.mxu0 0
  %1160 = vmatmul.mubr.bf16.gmra.mrb[0].mxu0 %v391
  %v1161 = vpop.f32.mrb[0].mxu0
  %v1162 = vadd.f32 %v1065, %v1161
  %v1163 = vpop.f32.mrb[0].mxu0
  %v1164 = vpop.f32.mrb[0].mxu0
  %v1165 = vadd.f32 %v1068, %v1164
  %v1166 = vpop.f32.mrb[0].mxu0
  %1167 = vmatprep.mubr.bf16.mxu0 0
  %1168 = vmatmul.mubr.bf16.gmra.mrb[0].mxu0 %v398
  %v1169 = vpop.f32.mrb[0].mxu0
  %v1170 = vadd.f32 %v1073, %v1169
  %v1171 = vpop.f32.mrb[0].mxu0
  %v1172 = vpop.f32.mrb[0].mxu0
  %v1173 = vadd.f32 %v1076, %v1172
  %v1174 = vpop.f32.mrb[0].mxu0
  %1175 = vmatprep.mubr.bf16.mxu0 0
  %1176 = vmatmul.mubr.bf16.gmra.mrb[0].mxu0 %v405
  %v1177 = vpop.f32.mrb[0].mxu0
  %v1178 = vadd.f32 %v1081, %v1177
  %v1179 = vpop.f32.mrb[0].mxu0
  %v1180 = vpop.f32.mrb[0].mxu0
  %v1181 = vadd.f32 %v1084, %v1180
  %v1182 = vpop.f32.mrb[0].mxu0
  %1183 = vmatprep.mubr.bf16.mxu0 0
  %1184 = vmatmul.mubr.bf16.gmra.mrb[0].mxu0 %v412
  %v1185 = vpop.f32.mrb[0].mxu0
  %v1186 = vadd.f32 %v1089, %v1185
  %v1187 = vpop.f32.mrb[0].mxu0
  %v1188 = vpop.f32.mrb[0].mxu0
  %v1189 = vadd.f32 %v1092, %v1188
  %v1190 = vpop.f32.mrb[0].mxu0
  %1191 = vmatprep.mubr.bf16.mxu0 0
  %1192 = vmatmul.mubr.bf16.gmra.mrb[0].mxu0 %v419
  %v1193 = vpop.f32.mrb[0].mxu0
  %v1194 = vadd.f32 %v1097, %v1193
  %v1195 = vpop.f32.mrb[0].mxu0
  %v1196 = vpop.f32.mrb[0].mxu0
  %v1197 = vadd.f32 %v1100, %v1196
  %v1198 = vpop.f32.mrb[0].mxu0
  %1199 = vdwg.mxu0
  %1200 = vst [vmem:[%s2] sm:$0xff] %v1138
  %1201 = vst [vmem:[%s2 + $0x8] sm:$0xff] %v1141
  %1202 = vst [vmem:[%s2 + $0x10] sm:$0xff] %v1146
  %1203 = vst [vmem:[%s2 + $0x18] sm:$0xff] %v1149
  %1204 = vst [vmem:[%s2 + $0x20] sm:$0xff] %v1154
  %1205 = vst [vmem:[%s2 + $0x28] sm:$0xff] %v1157
  %1206 = vst [vmem:[%s2 + $0x30] sm:$0xff] %v1162
  %1207 = vst [vmem:[%s2 + $0x38] sm:$0xff] %v1165
  %1208 = vst [vmem:[%s2 + $0x40] sm:$0xff] %v1170
  %1209 = vst [vmem:[%s2 + $0x48] sm:$0xff] %v1173
  %1210 = vst [vmem:[%s2 + $0x50] sm:$0xff] %v1178
  %1211 = vst [vmem:[%s2 + $0x58] sm:$0xff] %v1181
  %1212 = vst [vmem:[%s2 + $0x60] sm:$0xff] %v1186
  %1213 = vst [vmem:[%s2 + $0x68] sm:$0xff] %v1189
  %1214 = vst [vmem:[%s2 + $0x70] sm:$0xff] %v1194
  %1215 = vst [vmem:[%s2 + $0x78] sm:$0xff] %v1197
  // Predicated region
  $region10: #{sparse_resnet_encoder.7} parent=0 // pred_check
    _
  $region11: #{sparse_resnet_encoder.7} parent=0 // pred_check_branch
    %1217 = sbr.rel (0) target = $region13
  $region12: #{sparse_resnet_encoder.7} parent=0 // pred_region
    _
  $region13: #{sparse_resnet_encoder.7} parent=0 // pred_fallthru
    _
  // Predicated region
  $region14: #{sparse_resnet_encoder.7} parent=0 // pred_check
    _
  $region15: #{sparse_resnet_encoder.7} parent=0 // pred_check_branch
    %1219 = sbr.rel (0) target = $region17
  $region16: #{sparse_resnet_encoder.7} parent=0 // pred_region
    _
  $region17: #{sparse_resnet_encoder.7} parent=0 // pred_fallthru
    _

// kernel: sparse_resnet_encoder.8
$region0: #{sparse_resnet_encoder.8}
  #allocation0 [shape = 'u32[]', space=smem, size = 0x4, offset = 0x4, fixed_abs, tag = 'smem constant byte address 0x4 - core index']
  #allocation1 [shape = 'u32[144,128]{1,0:T(1,128)}', space=vmem, size = 0x12000, scoped, tag = 'internal scratch']
  %s0 = inlined_call_operand.vmem [shape: bf16[16,1792], index: 0, kind: input, shape index: {}]
  %s1 = inlined_call_operand.vmem [shape: bf16[1792,128], index: 1, kind: input, shape index: {}]
  %s2 = inlined_call_operand.vmem [shape: f32[16,128], index: 2, kind: output, shape index: {}]
  %s3 = sld [smem:[#allocation0]]
  $region18: #{sparse_resnet_encoder.8} parent=0
    _
  %s5 = ssub.s32 1, %s3
  %s6 = scalar_select 0, %s5, %s3
  // Predicated region
  $region2: #{sparse_resnet_encoder.8} parent=0 // pred_check
    _
  $region3: #{sparse_resnet_encoder.8} parent=0 // pred_check_branch
    %8 = sbr.rel (0) target = $region5
  $region4: #{sparse_resnet_encoder.8} parent=0 // pred_region
    _
  $region5: #{sparse_resnet_encoder.8} parent=0 // pred_fallthru
    _
  // Predicated region
  $region6: #{sparse_resnet_encoder.8} parent=0 // pred_check
    _
  $region7: #{sparse_resnet_encoder.8} parent=0 // pred_check_branch
    %10 = sbr.rel (0) target = $region9
  $region8: #{sparse_resnet_encoder.8} parent=0 // pred_region
    _
  $region9: #{sparse_resnet_encoder.8} parent=0 // pred_fallthru
    _
  %v12 = vld [vmem:[%s0] sm:$0xff]
  %v13 = vld [vmem:[%s0 + $0x8] sm:$0xff]
  %v14 = vld [vmem:[%s0 + $0x10] sm:$0xff]
  %v15 = vld [vmem:[%s0 + $0x18] sm:$0xff]
  %v16 = vld [vmem:[%s0 + $0x20] sm:$0xff]
  %v17 = vld [vmem:[%s0 + $0x28] sm:$0xff]
  %v18 = vld [vmem:[%s0 + $0x30] sm:$0xff]
  %v19 = vld [vmem:[%s0 + $0x38] sm:$0xff]
  %v20 = vld [vmem:[%s0 + $0x40] sm:$0xff]
  %v21 = vld [vmem:[%s0 + $0x48] sm:$0xff]
  %v22 = vld [vmem:[%s0 + $0x50] sm:$0xff]
  %v23 = vld [vmem:[%s0 + $0x58] sm:$0xff]
  %v24 = vld [vmem:[%s0 + $0x60] sm:$0xff]
  %v25 = vld [vmem:[%s0 + $0x68] sm:$0xff]
  %v26 = vld [vmem:[%s1] sm:$0xf]
  %v27 = vld [vmem:[%s1 + $0x4] sm:$0xf]
  %v28 = vld [vmem:[%s1 + $0x8] sm:$0xf]
  %v29 = vld [vmem:[%s1 + $0xc] sm:$0xf]
  %v30 = vld [vmem:[%s1 + $0x10] sm:$0xf]
  %v31 = vld [vmem:[%s1 + $0x14] sm:$0xf]
  %v32 = vld [vmem:[%s1 + $0x18] sm:$0xf]
  %v33 = vld [vmem:[%s1 + $0x1c] sm:$0xf]
  %v34 = vld [vmem:[%s1 + $0x20] sm:$0xf]
  %v35 = vld [vmem:[%s1 + $0x24] sm:$0xf]
  %v36 = vld [vmem:[%s1 + $0x28] sm:$0xf]
  %v37 = vld [vmem:[%s1 + $0x2c] sm:$0xf]
  %v38 = vld [vmem:[%s1 + $0x30] sm:$0xf]
  %v39 = vld [vmem:[%s1 + $0x34] sm:$0xf]
  %v40 = vld [vmem:[%s1 + $0x38] sm:$0xf]
  %v41 = vld [vmem:[%s1 + $0x3c] sm:$0xf]
  %v42 = vld [vmem:[%s1 + $0x40] sm:$0xf]
  %v43 = vld [vmem:[%s1 + $0x44] sm:$0xf]
  %v44 = vld [vmem:[%s1 + $0x48] sm:$0xf]
  %v45 = vld [vmem:[%s1 + $0x4c] sm:$0xf]
  %v46 = vld [vmem:[%s1 + $0x50] sm:$0xf]
  %v47 = vld [vmem:[%s1 + $0x54] sm:$0xf]
  %v48 = vld [vmem:[%s1 + $0x58] sm:$0xf]
  %v49 = vld [vmem:[%s1 + $0x5c] sm:$0xf]
  %v50 = vld [vmem:[%s1 + $0x60] sm:$0xf]
  %v51 = vld [vmem:[%s1 + $0x64] sm:$0xf]
  %v52 = vld [vmem:[%s1 + $0x68] sm:$0xf]
  %v53 = vld [vmem:[%s1 + $0x6c] sm:$0xf]
  %v54 = vld [vmem:[%s1 + $0x70] sm:$0xf]
  %v55 = vld [vmem:[%s1 + $0x74] sm:$0xf]
  %v56 = vld [vmem:[%s1 + $0x78] sm:$0xf]
  %v57 = vld [vmem:[%s1 + $0x7c] sm:$0xf]
  %v58 = vld [vmem:[%s1 + $0x80] sm:$0xf]
  %v59 = vld [vmem:[%s1 + $0x84] sm:$0xf]
  %v60 = vld [vmem:[%s1 + $0x88] sm:$0xf]
  %v61 = vld [vmem:[%s1 + $0x8c] sm:$0xf]
  %v62 = vld [vmem:[%s1 + $0x90] sm:$0xf]
  %v63 = vld [vmem:[%s1 + $0x94] sm:$0xf]
  %v64 = vld [vmem:[%s1 + $0x98] sm:$0xf]
  %v65 = vld [vmem:[%s1 + $0x9c] sm:$0xf]
  %v66 = vld [vmem:[%s1 + $0xa0] sm:$0xf]
  %v67 = vld [vmem:[%s1 + $0xa4] sm:$0xf]
  %v68 = vld [vmem:[%s1 + $0xa8] sm:$0xf]
  %v69 = vld [vmem:[%s1 + $0xac] sm:$0xf]
  %v70 = vld [vmem:[%s1 + $0xb0] sm:$0xf]
  %v71 = vld [vmem:[%s1 + $0xb4] sm:$0xf]
  %v72 = vld [vmem:[%s1 + $0xb8] sm:$0xf]
  %v73 = vld [vmem:[%s1 + $0xbc] sm:$0xf]
  %v74 = vld [vmem:[%s1 + $0xc0] sm:$0xf]
  %v75 = vld [vmem:[%s1 + $0xc4] sm:$0xf]
  %v76 = vld [vmem:[%s1 + $0xc8] sm:$0xf]
  %v77 = vld [vmem:[%s1 + $0xcc] sm:$0xf]
  %v78 = vld [vmem:[%s1 + $0xd0] sm:$0xf]
  %v79 = vld [vmem:[%s1 + $0xd4] sm:$0xf]
  %v80 = vld [vmem:[%s1 + $0xd8] sm:$0xf]
  %v81 = vld [vmem:[%s1 + $0xdc] sm:$0xf]
  %v82 = vld [vmem:[%s1 + $0xe0] sm:$0xf]
  %v83 = vld [vmem:[%s1 + $0xe4] sm:$0xf]
  %v84 = vld [vmem:[%s1 + $0xe8] sm:$0xf]
  %v85 = vld [vmem:[%s1 + $0xec] sm:$0xf]
  %v86 = vld [vmem:[%s1 + $0xf0] sm:$0xf]
  %v87 = vld [vmem:[%s1 + $0xf4] sm:$0xf]
  %v88 = vld [vmem:[%s1 + $0xf8] sm:$0xf]
  %v89 = vld [vmem:[%s1 + $0xfc] sm:$0xf]
  %v90 = vld [vmem:[%s1 + $0x100] sm:$0xf]
  %v91 = vld [vmem:[%s1 + $0x104] sm:$0xf]
  %v92 = vld [vmem:[%s1 + $0x108] sm:$0xf]
  %v93 = vld [vmem:[%s1 + $0x10c] sm:$0xf]
  %v94 = vld [vmem:[%s1 + $0x110] sm:$0xf]
  %v95 = vld [vmem:[%s1 + $0x114] sm:$0xf]
  %v96 = vld [vmem:[%s1 + $0x118] sm:$0xf]
  %v97 = vld [vmem:[%s1 + $0x11c] sm:$0xf]
  %v98 = vld [vmem:[%s1 + $0x120] sm:$0xf]
  %v99 = vld [vmem:[%s1 + $0x124] sm:$0xf]
  %v100 = vld [vmem:[%s1 + $0x128] sm:$0xf]
  %v101 = vld [vmem:[%s1 + $0x12c] sm:$0xf]
  %v102 = vld [vmem:[%s1 + $0x130] sm:$0xf]
  %v103 = vld [vmem:[%s1 + $0x134] sm:$0xf]
  %v104 = vld [vmem:[%s1 + $0x138] sm:$0xf]
  %v105 = vld [vmem:[%s1 + $0x13c] sm:$0xf]
  %v106 = vld [vmem:[%s1 + $0x140] sm:$0xf]
  %v107 = vld [vmem:[%s1 + $0x144] sm:$0xf]
  %v108 = vld [vmem:[%s1 + $0x148] sm:$0xf]
  %v109 = vld [vmem:[%s1 + $0x14c] sm:$0xf]
  %v110 = vld [vmem:[%s1 + $0x150] sm:$0xf]
  %v111 = vld [vmem:[%s1 + $0x154] sm:$0xf]
  %v112 = vld [vmem:[%s1 + $0x158] sm:$0xf]
  %v113 = vld [vmem:[%s1 + $0x15c] sm:$0xf]
  %v114 = vld [vmem:[%s1 + $0x160] sm:$0xf]
  %v115 = vld [vmem:[%s1 + $0x164] sm:$0xf]
  %v116 = vld [vmem:[%s1 + $0x168] sm:$0xf]
  %v117 = vld [vmem:[%s1 + $0x16c] sm:$0xf]
  %v118 = vld [vmem:[%s1 + $0x170] sm:$0xf]
  %v119 = vld [vmem:[%s1 + $0x174] sm:$0xf]
  %v120 = vld [vmem:[%s1 + $0x178] sm:$0xf]
  %v121 = vld [vmem:[%s1 + $0x17c] sm:$0xf]
  %v122 = vld [vmem:[%s1 + $0x180] sm:$0xf]
  %v123 = vld [vmem:[%s1 + $0x184] sm:$0xf]
  %v124 = vld [vmem:[%s1 + $0x188] sm:$0xf]
  %v125 = vld [vmem:[%s1 + $0x18c] sm:$0xf]
  %v126 = vld [vmem:[%s1 + $0x190] sm:$0xf]
  %v127 = vld [vmem:[%s1 + $0x194] sm:$0xf]
  %v128 = vld [vmem:[%s1 + $0x198] sm:$0xf]
  %v129 = vld [vmem:[%s1 + $0x19c] sm:$0xf]
  %v130 = vld [vmem:[%s1 + $0x1a0] sm:$0xf]
  %v131 = vld [vmem:[%s1 + $0x1a4] sm:$0xf]
  %v132 = vld [vmem:[%s1 + $0x1a8] sm:$0xf]
  %v133 = vld [vmem:[%s1 + $0x1ac] sm:$0xf]
  %v134 = vld [vmem:[%s1 + $0x1b0] sm:$0xf]
  %v135 = vld [vmem:[%s1 + $0x1b4] sm:$0xf]
  %v136 = vld [vmem:[%s1 + $0x1b8] sm:$0xf]
  %v137 = vld [vmem:[%s1 + $0x1bc] sm:$0xf]
  %v138 = vld [vmem:[%s1 + $0x1c0] sm:$0xf]
  %v139 = vld [vmem:[%s1 + $0x1c4] sm:$0xf]
  %v140 = vld [vmem:[%s1 + $0x1c8] sm:$0xf]
  %v141 = vld [vmem:[%s1 + $0x1cc] sm:$0xf]
  %v142 = vld [vmem:[%s1 + $0x1d0] sm:$0xf]
  %v143 = vld [vmem:[%s1 + $0x1d4] sm:$0xf]
  %v144 = vld [vmem:[%s1 + $0x1d8] sm:$0xf]
  %v145 = vld [vmem:[%s1 + $0x1dc] sm:$0xf]
  %v146 = vld [vmem:[%s1 + $0x1e0] sm:$0xf]
  %v147 = vld [vmem:[%s1 + $0x1e4] sm:$0xf]
  %v148 = vld [vmem:[%s1 + $0x1e8] sm:$0xf]
  %v149 = vld [vmem:[%s1 + $0x1ec] sm:$0xf]
  %v150 = vld [vmem:[%s1 + $0x1f0] sm:$0xf]
  %v151 = vld [vmem:[%s1 + $0x1f4] sm:$0xf]
  %v152 = vld [vmem:[%s1 + $0x1f8] sm:$0xf]
  %v153 = vld [vmem:[%s1 + $0x1fc] sm:$0xf]
  %v154 = vld [vmem:[%s1 + $0x200] sm:$0xf]
  %v155 = vld [vmem:[%s1 + $0x204] sm:$0xf]
  %v156 = vld [vmem:[%s1 + $0x208] sm:$0xf]
  %v157 = vld [vmem:[%s1 + $0x20c] sm:$0xf]
  %v158 = vld [vmem:[%s1 + $0x210] sm:$0xf]
  %v159 = vld [vmem:[%s1 + $0x214] sm:$0xf]
  %v160 = vld [vmem:[%s1 + $0x218] sm:$0xf]
  %v161 = vld [vmem:[%s1 + $0x21c] sm:$0xf]
  %v162 = vld [vmem:[%s1 + $0x220] sm:$0xf]
  %v163 = vld [vmem:[%s1 + $0x224] sm:$0xf]
  %v164 = vld [vmem:[%s1 + $0x228] sm:$0xf]
  %v165 = vld [vmem:[%s1 + $0x22c] sm:$0xf]
  %v166 = vld [vmem:[%s1 + $0x230] sm:$0xf]
  %v167 = vld [vmem:[%s1 + $0x234] sm:$0xf]
  %v168 = vld [vmem:[%s1 + $0x238] sm:$0xf]
  %v169 = vld [vmem:[%s1 + $0x23c] sm:$0xf]
  %v170 = vld [vmem:[%s1 + $0x240] sm:$0xf]
  %v171 = vld [vmem:[%s1 + $0x244] sm:$0xf]
  %v172 = vld [vmem:[%s1 + $0x248] sm:$0xf]
  %v173 = vld [vmem:[%s1 + $0x24c] sm:$0xf]
  %v174 = vld [vmem:[%s1 + $0x250] sm:$0xf]
  %v175 = vld [vmem:[%s1 + $0x254] sm:$0xf]
  %v176 = vld [vmem:[%s1 + $0x258] sm:$0xf]
  %v177 = vld [vmem:[%s1 + $0x25c] sm:$0xf]
  %v178 = vld [vmem:[%s1 + $0x260] sm:$0xf]
  %v179 = vld [vmem:[%s1 + $0x264] sm:$0xf]
  %v180 = vld [vmem:[%s1 + $0x268] sm:$0xf]
  %v181 = vld [vmem:[%s1 + $0x26c] sm:$0xf]
  %v182 = vld [vmem:[%s1 + $0x270] sm:$0xf]
  %v183 = vld [vmem:[%s1 + $0x274] sm:$0xf]
  %v184 = vld [vmem:[%s1 + $0x278] sm:$0xf]
  %v185 = vld [vmem:[%s1 + $0x27c] sm:$0xf]
  %v186 = vld [vmem:[%s1 + $0x280] sm:$0xf]
  %v187 = vld [vmem:[%s1 + $0x284] sm:$0xf]
  %v188 = vld [vmem:[%s1 + $0x288] sm:$0xf]
  %v189 = vld [vmem:[%s1 + $0x28c] sm:$0xf]
  %v190 = vld [vmem:[%s1 + $0x290] sm:$0xf]
  %v191 = vld [vmem:[%s1 + $0x294] sm:$0xf]
  %v192 = vld [vmem:[%s1 + $0x298] sm:$0xf]
  %v193 = vld [vmem:[%s1 + $0x29c] sm:$0xf]
  %v194 = vld [vmem:[%s1 + $0x2a0] sm:$0xf]
  %v195 = vld [vmem:[%s1 + $0x2a4] sm:$0xf]
  %v196 = vld [vmem:[%s1 + $0x2a8] sm:$0xf]
  %v197 = vld [vmem:[%s1 + $0x2ac] sm:$0xf]
  %v198 = vld [vmem:[%s1 + $0x2b0] sm:$0xf]
  %v199 = vld [vmem:[%s1 + $0x2b4] sm:$0xf]
  %v200 = vld [vmem:[%s1 + $0x2b8] sm:$0xf]
  %v201 = vld [vmem:[%s1 + $0x2bc] sm:$0xf]
  %v202 = vld [vmem:[%s1 + $0x2c0] sm:$0xf]
  %v203 = vld [vmem:[%s1 + $0x2c4] sm:$0xf]
  %v204 = vld [vmem:[%s1 + $0x2c8] sm:$0xf]
  %v205 = vld [vmem:[%s1 + $0x2cc] sm:$0xf]
  %v206 = vld [vmem:[%s1 + $0x2d0] sm:$0xf]
  %v207 = vld [vmem:[%s1 + $0x2d4] sm:$0xf]
  %v208 = vld [vmem:[%s1 + $0x2d8] sm:$0xf]
  %v209 = vld [vmem:[%s1 + $0x2dc] sm:$0xf]
  %v210 = vld [vmem:[%s1 + $0x2e0] sm:$0xf]
  %v211 = vld [vmem:[%s1 + $0x2e4] sm:$0xf]
  %v212 = vld [vmem:[%s1 + $0x2e8] sm:$0xf]
  %v213 = vld [vmem:[%s1 + $0x2ec] sm:$0xf]
  %v214 = vld [vmem:[%s1 + $0x2f0] sm:$0xf]
  %v215 = vld [vmem:[%s1 + $0x2f4] sm:$0xf]
  %v216 = vld [vmem:[%s1 + $0x2f8] sm:$0xf]
  %v217 = vld [vmem:[%s1 + $0x2fc] sm:$0xf]
  %v218 = vld [vmem:[%s1 + $0x300] sm:$0xf]
  %v219 = vld [vmem:[%s1 + $0x304] sm:$0xf]
  %v220 = vld [vmem:[%s1 + $0x308] sm:$0xf]
  %v221 = vld [vmem:[%s1 + $0x30c] sm:$0xf]
  %v222 = vld [vmem:[%s1 + $0x310] sm:$0xf]
  %v223 = vld [vmem:[%s1 + $0x314] sm:$0xf]
  %v224 = vld [vmem:[%s1 + $0x318] sm:$0xf]
  %v225 = vld [vmem:[%s1 + $0x31c] sm:$0xf]
  %v226 = vld [vmem:[%s1 + $0x320] sm:$0xf]
  %v227 = vld [vmem:[%s1 + $0x324] sm:$0xf]
  %v228 = vld [vmem:[%s1 + $0x328] sm:$0xf]
  %v229 = vld [vmem:[%s1 + $0x32c] sm:$0xf]
  %v230 = vld [vmem:[%s1 + $0x330] sm:$0xf]
  %v231 = vld [vmem:[%s1 + $0x334] sm:$0xf]
  %v232 = vld [vmem:[%s1 + $0x338] sm:$0xf]
  %v233 = vld [vmem:[%s1 + $0x33c] sm:$0xf]
  %v234 = vld [vmem:[%s1 + $0x340] sm:$0xf]
  %v235 = vld [vmem:[%s1 + $0x344] sm:$0xf]
  %v236 = vld [vmem:[%s1 + $0x348] sm:$0xf]
  %v237 = vld [vmem:[%s1 + $0x34c] sm:$0xf]
  %v238 = vld [vmem:[%s1 + $0x350] sm:$0xf]
  %v239 = vld [vmem:[%s1 + $0x354] sm:$0xf]
  %v240 = vld [vmem:[%s1 + $0x358] sm:$0xf]
  %v241 = vld [vmem:[%s1 + $0x35c] sm:$0xf]
  %v242 = vld [vmem:[%s1 + $0x360] sm:$0xf]
  %v243 = vld [vmem:[%s1 + $0x364] sm:$0xf]
  %v244 = vld [vmem:[%s1 + $0x368] sm:$0xf]
  %v245 = vld [vmem:[%s1 + $0x36c] sm:$0xf]
  %v246 = vld [vmem:[%s1 + $0x370] sm:$0xf]
  %v247 = vld [vmem:[%s1 + $0x374] sm:$0xf]
  %v248 = vld [vmem:[%s1 + $0x378] sm:$0xf]
  %v249 = vld [vmem:[%s1 + $0x37c] sm:$0xf]
  %v264 = vunpack.c.l.b16 %v12
  %v265 = vunpack.c.h.b16 %v12
  %v266 = vunpack.c.l.b16 %v13
  %v267 = vunpack.c.h.b16 %v13
  %v268 = vunpack.c.l.b16 %v14
  %v269 = vunpack.c.h.b16 %v14
  %v270 = vunpack.c.l.b16 %v15
  %v271 = vunpack.c.h.b16 %v15
  %v272 = vunpack.c.l.b16 %v16
  %v273 = vunpack.c.h.b16 %v16
  %v274 = vunpack.c.l.b16 %v17
  %v275 = vunpack.c.h.b16 %v17
  %v276 = vunpack.c.l.b16 %v18
  %v277 = vunpack.c.h.b16 %v18
  %v278 = vunpack.c.l.b16 %v19
  %v279 = vunpack.c.h.b16 %v19
  %v280 = vunpack.c.l.b16 %v20
  %v281 = vunpack.c.h.b16 %v20
  %v282 = vunpack.c.l.b16 %v21
  %v283 = vunpack.c.h.b16 %v21
  %v284 = vunpack.c.l.b16 %v22
  %v285 = vunpack.c.h.b16 %v22
  %v286 = vunpack.c.l.b16 %v23
  %v287 = vunpack.c.h.b16 %v23
  %v288 = vunpack.c.l.b16 %v24
  %v289 = vunpack.c.h.b16 %v24
  %v290 = vunpack.c.l.b16 %v25
  %v291 = vunpack.c.h.b16 %v25
  %v292 = vpack.c.b16 %v278, %v264
  %v293 = vpack.c.b16 %v279, %v265
  %v294 = vpack.c.b16 %v280, %v266
  %v295 = vpack.c.b16 %v281, %v267
  %v296 = vpack.c.b16 %v282, %v268
  %v297 = vpack.c.b16 %v283, %v269
  %v298 = vpack.c.b16 %v284, %v270
  %v299 = vpack.c.b16 %v285, %v271
  %v300 = vpack.c.b16 %v286, %v272
  %v301 = vpack.c.b16 %v287, %v273
  %v302 = vpack.c.b16 %v288, %v274
  %v303 = vpack.c.b16 %v289, %v275
  %v304 = vpack.c.b16 %v290, %v276
  %v305 = vpack.c.b16 %v291, %v277
  %v544 = vunpack.c.l.b16 %v26
  %v545 = vunpack.c.l.b16 %v27
  %v546 = vunpack.c.l.b16 %v28
  %v547 = vunpack.c.l.b16 %v29
  %v548 = vunpack.c.l.b16 %v30
  %v549 = vunpack.c.l.b16 %v31
  %v550 = vunpack.c.l.b16 %v32
  %v551 = vunpack.c.l.b16 %v33
  %v552 = vunpack.c.l.b16 %v34
  %v553 = vunpack.c.l.b16 %v35
  %v554 = vunpack.c.l.b16 %v36
  %v555 = vunpack.c.l.b16 %v37
  %v556 = vunpack.c.l.b16 %v38
  %v557 = vunpack.c.l.b16 %v39
  %v558 = vunpack.c.l.b16 %v40
  %v559 = vunpack.c.l.b16 %v41
  %v560 = vunpack.c.l.b16 %v42
  %v561 = vunpack.c.l.b16 %v43
  %v562 = vunpack.c.l.b16 %v44
  %v563 = vunpack.c.l.b16 %v45
  %v564 = vunpack.c.l.b16 %v46
  %v565 = vunpack.c.l.b16 %v47
  %v566 = vunpack.c.l.b16 %v48
  %v567 = vunpack.c.l.b16 %v49
  %v568 = vunpack.c.l.b16 %v50
  %v569 = vunpack.c.l.b16 %v51
  %v570 = vunpack.c.l.b16 %v52
  %v571 = vunpack.c.l.b16 %v53
  %v572 = vunpack.c.l.b16 %v54
  %v573 = vunpack.c.l.b16 %v55
  %v574 = vunpack.c.l.b16 %v56
  %v575 = vunpack.c.l.b16 %v57
  %v576 = vunpack.c.l.b16 %v58
  %v577 = vunpack.c.l.b16 %v59
  %v578 = vunpack.c.l.b16 %v60
  %v579 = vunpack.c.l.b16 %v61
  %v580 = vunpack.c.l.b16 %v62
  %v581 = vunpack.c.l.b16 %v63
  %v582 = vunpack.c.l.b16 %v64
  %v583 = vunpack.c.l.b16 %v65
  %v584 = vunpack.c.l.b16 %v66
  %v585 = vunpack.c.l.b16 %v67
  %v586 = vunpack.c.l.b16 %v68
  %v587 = vunpack.c.l.b16 %v69
  %v588 = vunpack.c.l.b16 %v70
  %v589 = vunpack.c.l.b16 %v71
  %v590 = vunpack.c.l.b16 %v72
  %v591 = vunpack.c.l.b16 %v73
  %v592 = vunpack.c.l.b16 %v74
  %v593 = vunpack.c.l.b16 %v75
  %v594 = vunpack.c.l.b16 %v76
  %v595 = vunpack.c.l.b16 %v77
  %v596 = vunpack.c.l.b16 %v78
  %v597 = vunpack.c.l.b16 %v79
  %v598 = vunpack.c.l.b16 %v80
  %v599 = vunpack.c.l.b16 %v81
  %v600 = vunpack.c.l.b16 %v82
  %v601 = vunpack.c.l.b16 %v83
  %v602 = vunpack.c.l.b16 %v84
  %v603 = vunpack.c.l.b16 %v85
  %v604 = vunpack.c.l.b16 %v86
  %v605 = vunpack.c.l.b16 %v87
  %v606 = vunpack.c.l.b16 %v88
  %v607 = vunpack.c.l.b16 %v89
  %v608 = vunpack.c.l.b16 %v90
  %v609 = vunpack.c.l.b16 %v91
  %v610 = vunpack.c.l.b16 %v92
  %v611 = vunpack.c.l.b16 %v93
  %v612 = vunpack.c.l.b16 %v94
  %v613 = vunpack.c.l.b16 %v95
  %v614 = vunpack.c.l.b16 %v96
  %v615 = vunpack.c.l.b16 %v97
  %v616 = vunpack.c.l.b16 %v98
  %v617 = vunpack.c.l.b16 %v99
  %v618 = vunpack.c.l.b16 %v100
  %v619 = vunpack.c.l.b16 %v101
  %v620 = vunpack.c.l.b16 %v102
  %v621 = vunpack.c.l.b16 %v103
  %v622 = vunpack.c.l.b16 %v104
  %v623 = vunpack.c.l.b16 %v105
  %v624 = vunpack.c.l.b16 %v106
  %v625 = vunpack.c.l.b16 %v107
  %v626 = vunpack.c.l.b16 %v108
  %v627 = vunpack.c.l.b16 %v109
  %v628 = vunpack.c.l.b16 %v110
  %v629 = vunpack.c.l.b16 %v111
  %v630 = vunpack.c.l.b16 %v112
  %v631 = vunpack.c.l.b16 %v113
  %v632 = vunpack.c.l.b16 %v114
  %v633 = vunpack.c.l.b16 %v115
  %v634 = vunpack.c.l.b16 %v116
  %v635 = vunpack.c.l.b16 %v117
  %v636 = vunpack.c.l.b16 %v118
  %v637 = vunpack.c.l.b16 %v119
  %v638 = vunpack.c.l.b16 %v120
  %v639 = vunpack.c.l.b16 %v121
  %v640 = vunpack.c.l.b16 %v122
  %v641 = vunpack.c.l.b16 %v123
  %v642 = vunpack.c.l.b16 %v124
  %v643 = vunpack.c.l.b16 %v125
  %v644 = vunpack.c.l.b16 %v126
  %v645 = vunpack.c.l.b16 %v127
  %v646 = vunpack.c.l.b16 %v128
  %v647 = vunpack.c.l.b16 %v129
  %v648 = vunpack.c.l.b16 %v130
  %v649 = vunpack.c.l.b16 %v131
  %v650 = vunpack.c.l.b16 %v132
  %v651 = vunpack.c.l.b16 %v133
  %v652 = vunpack.c.l.b16 %v134
  %v653 = vunpack.c.l.b16 %v135
  %v654 = vunpack.c.l.b16 %v136
  %v655 = vunpack.c.l.b16 %v137
  %v656 = vunpack.c.l.b16 %v138
  %v657 = vunpack.c.l.b16 %v139
  %v658 = vunpack.c.l.b16 %v140
  %v659 = vunpack.c.l.b16 %v141
  %v660 = vunpack.c.l.b16 %v142
  %v661 = vunpack.c.l.b16 %v143
  %v662 = vunpack.c.l.b16 %v144
  %v663 = vunpack.c.l.b16 %v145
  %v664 = vunpack.c.l.b16 %v146
  %v665 = vunpack.c.l.b16 %v147
  %v666 = vunpack.c.l.b16 %v148
  %v667 = vunpack.c.l.b16 %v149
  %v668 = vunpack.c.l.b16 %v150
  %v669 = vunpack.c.l.b16 %v151
  %v670 = vunpack.c.l.b16 %v152
  %v671 = vunpack.c.l.b16 %v153
  %v672 = vunpack.c.l.b16 %v154
  %v673 = vunpack.c.l.b16 %v155
  %v674 = vunpack.c.l.b16 %v156
  %v675 = vunpack.c.l.b16 %v157
  %v676 = vunpack.c.l.b16 %v158
  %v677 = vunpack.c.l.b16 %v159
  %v678 = vunpack.c.l.b16 %v160
  %v679 = vunpack.c.l.b16 %v161
  %v680 = vunpack.c.l.b16 %v162
  %v681 = vunpack.c.l.b16 %v163
  %v682 = vunpack.c.l.b16 %v164
  %v683 = vunpack.c.l.b16 %v165
  %v684 = vunpack.c.l.b16 %v166
  %v685 = vunpack.c.l.b16 %v167
  %v686 = vunpack.c.l.b16 %v168
  %v687 = vunpack.c.l.b16 %v169
  %v688 = vunpack.c.l.b16 %v170
  %v689 = vunpack.c.l.b16 %v171
  %v690 = vunpack.c.l.b16 %v172
  %v691 = vunpack.c.l.b16 %v173
  %v692 = vunpack.c.l.b16 %v174
  %v693 = vunpack.c.l.b16 %v175
  %v694 = vunpack.c.l.b16 %v176
  %v695 = vunpack.c.l.b16 %v177
  %v696 = vunpack.c.l.b16 %v178
  %v697 = vunpack.c.l.b16 %v179
  %v698 = vunpack.c.l.b16 %v180
  %v699 = vunpack.c.l.b16 %v181
  %v700 = vunpack.c.l.b16 %v182
  %v701 = vunpack.c.l.b16 %v183
  %v702 = vunpack.c.l.b16 %v184
  %v703 = vunpack.c.l.b16 %v185
  %v704 = vunpack.c.l.b16 %v186
  %v705 = vunpack.c.l.b16 %v187
  %v706 = vunpack.c.l.b16 %v188
  %v707 = vunpack.c.l.b16 %v189
  %v708 = vunpack.c.l.b16 %v190
  %v709 = vunpack.c.l.b16 %v191
  %v710 = vunpack.c.l.b16 %v192
  %v711 = vunpack.c.l.b16 %v193
  %v712 = vunpack.c.l.b16 %v194
  %v713 = vunpack.c.l.b16 %v195
  %v714 = vunpack.c.l.b16 %v196
  %v715 = vunpack.c.l.b16 %v197
  %v716 = vunpack.c.l.b16 %v198
  %v717 = vunpack.c.l.b16 %v199
  %v718 = vunpack.c.l.b16 %v200
  %v719 = vunpack.c.l.b16 %v201
  %v720 = vunpack.c.l.b16 %v202
  %v721 = vunpack.c.l.b16 %v203
  %v722 = vunpack.c.l.b16 %v204
  %v723 = vunpack.c.l.b16 %v205
  %v724 = vunpack.c.l.b16 %v206
  %v725 = vunpack.c.l.b16 %v207
  %v726 = vunpack.c.l.b16 %v208
  %v727 = vunpack.c.l.b16 %v209
  %v728 = vunpack.c.l.b16 %v210
  %v729 = vunpack.c.l.b16 %v211
  %v730 = vunpack.c.l.b16 %v212
  %v731 = vunpack.c.l.b16 %v213
  %v732 = vunpack.c.l.b16 %v214
  %v733 = vunpack.c.l.b16 %v215
  %v734 = vunpack.c.l.b16 %v216
  %v735 = vunpack.c.l.b16 %v217
  %v736 = vunpack.c.l.b16 %v218
  %v737 = vunpack.c.l.b16 %v219
  %v738 = vunpack.c.l.b16 %v220
  %v739 = vunpack.c.l.b16 %v221
  %v740 = vunpack.c.l.b16 %v222
  %v741 = vunpack.c.l.b16 %v223
  %v742 = vunpack.c.l.b16 %v224
  %v743 = vunpack.c.l.b16 %v225
  %v744 = vunpack.c.l.b16 %v226
  %v745 = vunpack.c.l.b16 %v227
  %v746 = vunpack.c.l.b16 %v228
  %v747 = vunpack.c.l.b16 %v229
  %v748 = vunpack.c.l.b16 %v230
  %v749 = vunpack.c.l.b16 %v231
  %v750 = vunpack.c.l.b16 %v232
  %v751 = vunpack.c.l.b16 %v233
  %v752 = vunpack.c.l.b16 %v234
  %v753 = vunpack.c.l.b16 %v235
  %v754 = vunpack.c.l.b16 %v236
  %v755 = vunpack.c.l.b16 %v237
  %v756 = vunpack.c.l.b16 %v238
  %v757 = vunpack.c.l.b16 %v239
  %v758 = vunpack.c.l.b16 %v240
  %v759 = vunpack.c.l.b16 %v241
  %v760 = vunpack.c.l.b16 %v242
  %v761 = vunpack.c.l.b16 %v243
  %v762 = vunpack.c.l.b16 %v244
  %v763 = vunpack.c.l.b16 %v245
  %v764 = vunpack.c.l.b16 %v246
  %v765 = vunpack.c.l.b16 %v247
  %v766 = vunpack.c.l.b16 %v248
  %v767 = vunpack.c.l.b16 %v249
  %v768 = vpack.c.b16 %v545, %v544
  %v769 = vpack.c.b16 %v547, %v546
  %v770 = vpack.c.b16 %v549, %v548
  %v771 = vpack.c.b16 %v551, %v550
  %v772 = vpack.c.b16 %v553, %v552
  %v773 = vpack.c.b16 %v555, %v554
  %v774 = vpack.c.b16 %v557, %v556
  %v775 = vpack.c.b16 %v559, %v558
  %v776 = vpack.c.b16 %v561, %v560
  %v777 = vpack.c.b16 %v563, %v562
  %v778 = vpack.c.b16 %v565, %v564
  %v779 = vpack.c.b16 %v567, %v566
  %v780 = vpack.c.b16 %v569, %v568
  %v781 = vpack.c.b16 %v571, %v570
  %v782 = vpack.c.b16 %v573, %v572
  %v783 = vpack.c.b16 %v575, %v574
  %v784 = vpack.c.b16 %v577, %v576
  %v785 = vpack.c.b16 %v579, %v578
  %v786 = vpack.c.b16 %v581, %v580
  %v787 = vpack.c.b16 %v583, %v582
  %v788 = vpack.c.b16 %v585, %v584
  %v789 = vpack.c.b16 %v587, %v586
  %v790 = vpack.c.b16 %v589, %v588
  %v791 = vpack.c.b16 %v591, %v590
  %v792 = vpack.c.b16 %v593, %v592
  %v793 = vpack.c.b16 %v595, %v594
  %v794 = vpack.c.b16 %v597, %v596
  %v795 = vpack.c.b16 %v599, %v598
  %v796 = vpack.c.b16 %v601, %v600
  %v797 = vpack.c.b16 %v603, %v602
  %v798 = vpack.c.b16 %v605, %v604
  %v799 = vpack.c.b16 %v607, %v606
  %v800 = vpack.c.b16 %v609, %v608
  %v801 = vpack.c.b16 %v611, %v610
  %v802 = vpack.c.b16 %v613, %v612
  %v803 = vpack.c.b16 %v615, %v614
  %v804 = vpack.c.b16 %v617, %v616
  %v805 = vpack.c.b16 %v619, %v618
  %v806 = vpack.c.b16 %v621, %v620
  %v807 = vpack.c.b16 %v623, %v622
  %v808 = vpack.c.b16 %v625, %v624
  %v809 = vpack.c.b16 %v627, %v626
  %v810 = vpack.c.b16 %v629, %v628
  %v811 = vpack.c.b16 %v631, %v630
  %v812 = vpack.c.b16 %v633, %v632
  %v813 = vpack.c.b16 %v635, %v634
  %v814 = vpack.c.b16 %v637, %v636
  %v815 = vpack.c.b16 %v639, %v638
  %v816 = vpack.c.b16 %v641, %v640
  %v817 = vpack.c.b16 %v643, %v642
  %v818 = vpack.c.b16 %v645, %v644
  %v819 = vpack.c.b16 %v647, %v646
  %v820 = vpack.c.b16 %v649, %v648
  %v821 = vpack.c.b16 %v651, %v650
  %v822 = vpack.c.b16 %v653, %v652
  %v823 = vpack.c.b16 %v655, %v654
  %v824 = vpack.c.b16 %v657, %v656
  %v825 = vpack.c.b16 %v659, %v658
  %v826 = vpack.c.b16 %v661, %v660
  %v827 = vpack.c.b16 %v663, %v662
  %v828 = vpack.c.b16 %v665, %v664
  %v829 = vpack.c.b16 %v667, %v666
  %v830 = vpack.c.b16 %v669, %v668
  %v831 = vpack.c.b16 %v671, %v670
  %v832 = vpack.c.b16 %v673, %v672
  %v833 = vpack.c.b16 %v675, %v674
  %v834 = vpack.c.b16 %v677, %v676
  %v835 = vpack.c.b16 %v679, %v678
  %v836 = vpack.c.b16 %v681, %v680
  %v837 = vpack.c.b16 %v683, %v682
  %v838 = vpack.c.b16 %v685, %v684
  %v839 = vpack.c.b16 %v687, %v686
  %v840 = vpack.c.b16 %v689, %v688
  %v841 = vpack.c.b16 %v691, %v690
  %v842 = vpack.c.b16 %v693, %v692
  %v843 = vpack.c.b16 %v695, %v694
  %v844 = vpack.c.b16 %v697, %v696
  %v845 = vpack.c.b16 %v699, %v698
  %v846 = vpack.c.b16 %v701, %v700
  %v847 = vpack.c.b16 %v703, %v702
  %v848 = vpack.c.b16 %v705, %v704
  %v849 = vpack.c.b16 %v707, %v706
  %v850 = vpack.c.b16 %v709, %v708
  %v851 = vpack.c.b16 %v711, %v710
  %v852 = vpack.c.b16 %v713, %v712
  %v853 = vpack.c.b16 %v715, %v714
  %v854 = vpack.c.b16 %v717, %v716
  %v855 = vpack.c.b16 %v719, %v718
  %v856 = vpack.c.b16 %v721, %v720
  %v857 = vpack.c.b16 %v723, %v722
  %v858 = vpack.c.b16 %v725, %v724
  %v859 = vpack.c.b16 %v727, %v726
  %v860 = vpack.c.b16 %v729, %v728
  %v861 = vpack.c.b16 %v731, %v730
  %v862 = vpack.c.b16 %v733, %v732
  %v863 = vpack.c.b16 %v735, %v734
  %v864 = vpack.c.b16 %v737, %v736
  %v865 = vpack.c.b16 %v739, %v738
  %v866 = vpack.c.b16 %v741, %v740
  %v867 = vpack.c.b16 %v743, %v742
  %v868 = vpack.c.b16 %v745, %v744
  %v869 = vpack.c.b16 %v747, %v746
  %v870 = vpack.c.b16 %v749, %v748
  %v871 = vpack.c.b16 %v751, %v750
  %v872 = vpack.c.b16 %v753, %v752
  %v873 = vpack.c.b16 %v755, %v754
  %v874 = vpack.c.b16 %v757, %v756
  %v875 = vpack.c.b16 %v759, %v758
  %v876 = vpack.c.b16 %v761, %v760
  %v877 = vpack.c.b16 %v763, %v762
  %v878 = vpack.c.b16 %v765, %v764
  %v879 = vpack.c.b16 %v767, %v766
  %992 = vmatprep.subr.bf16.mxu0 0
  %993 = vmatpush1.bf16.msra.mxu0 %v768
  %994 = vmatprep.subr.bf16.mxu0 0
  %995 = vmatpush1.bf16.msra.mxu0 %v769
  %996 = vmatprep.subr.bf16.mxu0 0
  %997 = vmatpush1.bf16.msra.mxu0 %v770
  %998 = vmatprep.subr.bf16.mxu0 0
  %999 = vmatpush1.bf16.msra.mxu0 %v771
  %1000 = vmatprep.subr.bf16.mxu0 0
  %1001 = vmatpush1.bf16.msra.mxu0 %v772
  %1002 = vmatprep.subr.bf16.mxu0 0
  %1003 = vmatpush1.bf16.msra.mxu0 %v773
  %1004 = vmatprep.subr.bf16.mxu0 0
  %1005 = vmatpush1.bf16.msra.mxu0 %v774
  %1006 = vmatprep.subr.bf16.mxu0 0
  %1007 = vmatpush1.bf16.msra.mxu0 %v775
  %1008 = vmatprep.subr.bf16.mxu0 0
  %1009 = vmatpush1.bf16.msra.mxu0 %v776
  %1010 = vmatprep.subr.bf16.mxu0 0
  %1011 = vmatpush1.bf16.msra.mxu0 %v777
  %1012 = vmatprep.subr.bf16.mxu0 0
  %1013 = vmatpush1.bf16.msra.mxu0 %v778
  %1014 = vmatprep.subr.bf16.mxu0 0
  %1015 = vmatpush1.bf16.msra.mxu0 %v779
  %1016 = vmatprep.subr.bf16.mxu0 0
  %1017 = vmatpush1.bf16.msra.mxu0 %v780
  %1018 = vmatprep.subr.bf16.mxu0 0
  %1019 = vmatpush1.bf16.msra.mxu0 %v781
  %1020 = vmatprep.subr.bf16.mxu0 0
  %1021 = vmatpush1.bf16.msra.mxu0 %v782
  %1022 = vmatprep.subr.bf16.mxu0 0
  %1023 = vmatpush1.bf16.msra.mxu0 %v783
  %1024 = vmatprep.mubr.bf16.mxu0 %v293
  %1025 = vmatmul.mubr.bf16.gmra.mrb[0].mxu0 %v292
  %v1026 = vpop.f32.mrb[0].mxu0
  %v1027 = vadd.f32 0.0, %v1026
  %v1028 = vpop.f32.mrb[0].mxu0
  %v1029 = vpop.f32.mrb[0].mxu0
  %v1030 = vadd.f32 0.0, %v1029
  %v1031 = vpop.f32.mrb[0].mxu0
  %1032 = vdwg.mxu0
  %1033 = vmatprep.subr.bf16.mxu0 0
  %1034 = vmatpush1.bf16.msra.mxu0 %v784
  %1035 = vmatprep.subr.bf16.mxu0 0
  %1036 = vmatpush1.bf16.msra.mxu0 %v785
  %1037 = vmatprep.subr.bf16.mxu0 0
  %1038 = vmatpush1.bf16.msra.mxu0 %v786
  %1039 = vmatprep.subr.bf16.mxu0 0
  %1040 = vmatpush1.bf16.msra.mxu0 %v787
  %1041 = vmatprep.subr.bf16.mxu0 0
  %1042 = vmatpush1.bf16.msra.mxu0 %v788
  %1043 = vmatprep.subr.bf16.mxu0 0
  %1044 = vmatpush1.bf16.msra.mxu0 %v789
  %1045 = vmatprep.subr.bf16.mxu0 0
  %1046 = vmatpush1.bf16.msra.mxu0 %v790
  %1047 = vmatprep.subr.bf16.mxu0 0
  %1048 = vmatpush1.bf16.msra.mxu0 %v791
  %1049 = vmatprep.subr.bf16.mxu0 0
  %1050 = vmatpush1.bf16.msra.mxu0 %v792
  %1051 = vmatprep.subr.bf16.mxu0 0
  %1052 = vmatpush1.bf16.msra.mxu0 %v793
  %1053 = vmatprep.subr.bf16.mxu0 0
  %1054 = vmatpush1.bf16.msra.mxu0 %v794
  %1055 = vmatprep.subr.bf16.mxu0 0
  %1056 = vmatpush1.bf16.msra.mxu0 %v795
  %1057 = vmatprep.subr.bf16.mxu0 0
  %1058 = vmatpush1.bf16.msra.mxu0 %v796
  %1059 = vmatprep.subr.bf16.mxu0 0
  %1060 = vmatpush1.bf16.msra.mxu0 %v797
  %1061 = vmatprep.subr.bf16.mxu0 0
  %1062 = vmatpush1.bf16.msra.mxu0 %v798
  %1063 = vmatprep.subr.bf16.mxu0 0
  %1064 = vmatpush1.bf16.msra.mxu0 %v799
  %1065 = vmatprep.mubr.bf16.mxu0 %v295
  %1066 = vmatmul.mubr.bf16.gmra.mrb[0].mxu0 %v294
  %v1067 = vpop.f32.mrb[0].mxu0
  %v1068 = vadd.f32 %v1027, %v1067
  %v1069 = vpop.f32.mrb[0].mxu0
  %v1070 = vpop.f32.mrb[0].mxu0
  %v1071 = vadd.f32 %v1030, %v1070
  %v1072 = vpop.f32.mrb[0].mxu0
  %1073 = vdwg.mxu0
  %1074 = vmatprep.subr.bf16.mxu0 0
  %1075 = vmatpush1.bf16.msra.mxu0 %v800
  %1076 = vmatprep.subr.bf16.mxu0 0
  %1077 = vmatpush1.bf16.msra.mxu0 %v801
  %1078 = vmatprep.subr.bf16.mxu0 0
  %1079 = vmatpush1.bf16.msra.mxu0 %v802
  %1080 = vmatprep.subr.bf16.mxu0 0
  %1081 = vmatpush1.bf16.msra.mxu0 %v803
  %1082 = vmatprep.subr.bf16.mxu0 0
  %1083 = vmatpush1.bf16.msra.mxu0 %v804
  %1084 = vmatprep.subr.bf16.mxu0 0
  %1085 = vmatpush1.bf16.msra.mxu0 %v805
  %1086 = vmatprep.subr.bf16.mxu0 0
  %1087 = vmatpush1.bf16.msra.mxu0 %v806
  %1088 = vmatprep.subr.bf16.mxu0 0
  %1089 = vmatpush1.bf16.msra.mxu0 %v807
  %1090 = vmatprep.subr.bf16.mxu0 0
  %1091 = vmatpush1.bf16.msra.mxu0 %v808
  %1092 = vmatprep.subr.bf16.mxu0 0
  %1093 = vmatpush1.bf16.msra.mxu0 %v809
  %1094 = vmatprep.subr.bf16.mxu0 0
  %1095 = vmatpush1.bf16.msra.mxu0 %v810
  %1096 = vmatprep.subr.bf16.mxu0 0
  %1097 = vmatpush1.bf16.msra.mxu0 %v811
  %1098 = vmatprep.subr.bf16.mxu0 0
  %1099 = vmatpush1.bf16.msra.mxu0 %v812
  %1100 = vmatprep.subr.bf16.mxu0 0
  %1101 = vmatpush1.bf16.msra.mxu0 %v813
  %1102 = vmatprep.subr.bf16.mxu0 0
  %1103 = vmatpush1.bf16.msra.mxu0 %v814
  %1104 = vmatprep.subr.bf16.mxu0 0
  %1105 = vmatpush1.bf16.msra.mxu0 %v815
  %1106 = vmatprep.mubr.bf16.mxu0 %v297
  %1107 = vmatmul.mubr.bf16.gmra.mrb[0].mxu0 %v296
  %v1108 = vpop.f32.mrb[0].mxu0
  %v1109 = vadd.f32 %v1068, %v1108
  %v1110 = vpop.f32.mrb[0].mxu0
  %v1111 = vpop.f32.mrb[0].mxu0
  %v1112 = vadd.f32 %v1071, %v1111
  %v1113 = vpop.f32.mrb[0].mxu0
  %1114 = vdwg.mxu0
  %1115 = vmatprep.subr.bf16.mxu0 0
  %1116 = vmatpush1.bf16.msra.mxu0 %v816
  %1117 = vmatprep.subr.bf16.mxu0 0
  %1118 = vmatpush1.bf16.msra.mxu0 %v817
  %1119 = vmatprep.subr.bf16.mxu0 0
  %1120 = vmatpush1.bf16.msra.mxu0 %v818
  %1121 = vmatprep.subr.bf16.mxu0 0
  %1122 = vmatpush1.bf16.msra.mxu0 %v819
  %1123 = vmatprep.subr.bf16.mxu0 0
  %1124 = vmatpush1.bf16.msra.mxu0 %v820
  %1125 = vmatprep.subr.bf16.mxu0 0
  %1126 = vmatpush1.bf16.msra.mxu0 %v821
  %1127 = vmatprep.subr.bf16.mxu0 0
  %1128 = vmatpush1.bf16.msra.mxu0 %v822
  %1129 = vmatprep.subr.bf16.mxu0 0
  %1130 = vmatpush1.bf16.msra.mxu0 %v823
  %1131 = vmatprep.subr.bf16.mxu0 0
  %1132 = vmatpush1.bf16.msra.mxu0 %v824
  %1133 = vmatprep.subr.bf16.mxu0 0
  %1134 = vmatpush1.bf16.msra.mxu0 %v825
  %1135 = vmatprep.subr.bf16.mxu0 0
  %1136 = vmatpush1.bf16.msra.mxu0 %v826
  %1137 = vmatprep.subr.bf16.mxu0 0
  %1138 = vmatpush1.bf16.msra.mxu0 %v827
  %1139 = vmatprep.subr.bf16.mxu0 0
  %1140 = vmatpush1.bf16.msra.mxu0 %v828
  %1141 = vmatprep.subr.bf16.mxu0 0
  %1142 = vmatpush1.bf16.msra.mxu0 %v829
  %1143 = vmatprep.subr.bf16.mxu0 0
  %1144 = vmatpush1.bf16.msra.mxu0 %v830
  %1145 = vmatprep.subr.bf16.mxu0 0
  %1146 = vmatpush1.bf16.msra.mxu0 %v831
  %1147 = vmatprep.mubr.bf16.mxu0 %v299
  %1148 = vmatmul.mubr.bf16.gmra.mrb[0].mxu0 %v298
  %v1149 = vpop.f32.mrb[0].mxu0
  %v1150 = vadd.f32 %v1109, %v1149
  %v1151 = vpop.f32.mrb[0].mxu0
  %v1152 = vpop.f32.mrb[0].mxu0
  %v1153 = vadd.f32 %v1112, %v1152
  %v1154 = vpop.f32.mrb[0].mxu0
  %1155 = vdwg.mxu0
  %1156 = vmatprep.subr.bf16.mxu0 0
  %1157 = vmatpush1.bf16.msra.mxu0 %v832
  %1158 = vmatprep.subr.bf16.mxu0 0
  %1159 = vmatpush1.bf16.msra.mxu0 %v833
  %1160 = vmatprep.subr.bf16.mxu0 0
  %1161 = vmatpush1.bf16.msra.mxu0 %v834
  %1162 = vmatprep.subr.bf16.mxu0 0
  %1163 = vmatpush1.bf16.msra.mxu0 %v835
  %1164 = vmatprep.subr.bf16.mxu0 0
  %1165 = vmatpush1.bf16.msra.mxu0 %v836
  %1166 = vmatprep.subr.bf16.mxu0 0
  %1167 = vmatpush1.bf16.msra.mxu0 %v837
  %1168 = vmatprep.subr.bf16.mxu0 0
  %1169 = vmatpush1.bf16.msra.mxu0 %v838
  %1170 = vmatprep.subr.bf16.mxu0 0
  %1171 = vmatpush1.bf16.msra.mxu0 %v839
  %1172 = vmatprep.subr.bf16.mxu0 0
  %1173 = vmatpush1.bf16.msra.mxu0 %v840
  %1174 = vmatprep.subr.bf16.mxu0 0
  %1175 = vmatpush1.bf16.msra.mxu0 %v841
  %1176 = vmatprep.subr.bf16.mxu0 0
  %1177 = vmatpush1.bf16.msra.mxu0 %v842
  %1178 = vmatprep.subr.bf16.mxu0 0
  %1179 = vmatpush1.bf16.msra.mxu0 %v843
  %1180 = vmatprep.subr.bf16.mxu0 0
  %1181 = vmatpush1.bf16.msra.mxu0 %v844
  %1182 = vmatprep.subr.bf16.mxu0 0
  %1183 = vmatpush1.bf16.msra.mxu0 %v845
  %1184 = vmatprep.subr.bf16.mxu0 0
  %1185 = vmatpush1.bf16.msra.mxu0 %v846
  %1186 = vmatprep.subr.bf16.mxu0 0
  %1187 = vmatpush1.bf16.msra.mxu0 %v847
  %1188 = vmatprep.mubr.bf16.mxu0 %v301
  %1189 = vmatmul.mubr.bf16.gmra.mrb[0].mxu0 %v300
  %v1190 = vpop.f32.mrb[0].mxu0
  %v1191 = vadd.f32 %v1150, %v1190
  %v1192 = vpop.f32.mrb[0].mxu0
  %v1193 = vpop.f32.mrb[0].mxu0
  %v1194 = vadd.f32 %v1153, %v1193
  %v1195 = vpop.f32.mrb[0].mxu0
  %1196 = vdwg.mxu0
  %1197 = vmatprep.subr.bf16.mxu0 0
  %1198 = vmatpush1.bf16.msra.mxu0 %v848
  %1199 = vmatprep.subr.bf16.mxu0 0
  %1200 = vmatpush1.bf16.msra.mxu0 %v849
  %1201 = vmatprep.subr.bf16.mxu0 0
  %1202 = vmatpush1.bf16.msra.mxu0 %v850
  %1203 = vmatprep.subr.bf16.mxu0 0
  %1204 = vmatpush1.bf16.msra.mxu0 %v851
  %1205 = vmatprep.subr.bf16.mxu0 0
  %1206 = vmatpush1.bf16.msra.mxu0 %v852
  %1207 = vmatprep.subr.bf16.mxu0 0
  %1208 = vmatpush1.bf16.msra.mxu0 %v853
  %1209 = vmatprep.subr.bf16.mxu0 0
  %1210 = vmatpush1.bf16.msra.mxu0 %v854
  %1211 = vmatprep.subr.bf16.mxu0 0
  %1212 = vmatpush1.bf16.msra.mxu0 %v855
  %1213 = vmatprep.subr.bf16.mxu0 0
  %1214 = vmatpush1.bf16.msra.mxu0 %v856
  %1215 = vmatprep.subr.bf16.mxu0 0
  %1216 = vmatpush1.bf16.msra.mxu0 %v857
  %1217 = vmatprep.subr.bf16.mxu0 0
  %1218 = vmatpush1.bf16.msra.mxu0 %v858
  %1219 = vmatprep.subr.bf16.mxu0 0
  %1220 = vmatpush1.bf16.msra.mxu0 %v859
  %1221 = vmatprep.subr.bf16.mxu0 0
  %1222 = vmatpush1.bf16.msra.mxu0 %v860
  %1223 = vmatprep.subr.bf16.mxu0 0
  %1224 = vmatpush1.bf16.msra.mxu0 %v861
  %1225 = vmatprep.subr.bf16.mxu0 0
  %1226 = vmatpush1.bf16.msra.mxu0 %v862
  %1227 = vmatprep.subr.bf16.mxu0 0
  %1228 = vmatpush1.bf16.msra.mxu0 %v863
  %1229 = vmatprep.mubr.bf16.mxu0 %v303
  %1230 = vmatmul.mubr.bf16.gmra.mrb[0].mxu0 %v302
  %v1231 = vpop.f32.mrb[0].mxu0
  %v1232 = vadd.f32 %v1191, %v1231
  %v1233 = vpop.f32.mrb[0].mxu0
  %v1234 = vpop.f32.mrb[0].mxu0
  %v1235 = vadd.f32 %v1194, %v1234
  %v1236 = vpop.f32.mrb[0].mxu0
  %1237 = vdwg.mxu0
  %1238 = vmatprep.subr.bf16.mxu0 0
  %1239 = vmatpush1.bf16.msra.mxu0 %v864
  %1240 = vmatprep.subr.bf16.mxu0 0
  %1241 = vmatpush1.bf16.msra.mxu0 %v865
  %1242 = vmatprep.subr.bf16.mxu0 0
  %1243 = vmatpush1.bf16.msra.mxu0 %v866
  %1244 = vmatprep.subr.bf16.mxu0 0
  %1245 = vmatpush1.bf16.msra.mxu0 %v867
  %1246 = vmatprep.subr.bf16.mxu0 0
  %1247 = vmatpush1.bf16.msra.mxu0 %v868
  %1248 = vmatprep.subr.bf16.mxu0 0
  %1249 = vmatpush1.bf16.msra.mxu0 %v869
  %1250 = vmatprep.subr.bf16.mxu0 0
  %1251 = vmatpush1.bf16.msra.mxu0 %v870
  %1252 = vmatprep.subr.bf16.mxu0 0
  %1253 = vmatpush1.bf16.msra.mxu0 %v871
  %1254 = vmatprep.subr.bf16.mxu0 0
  %1255 = vmatpush1.bf16.msra.mxu0 %v872
  %1256 = vmatprep.subr.bf16.mxu0 0
  %1257 = vmatpush1.bf16.msra.mxu0 %v873
  %1258 = vmatprep.subr.bf16.mxu0 0
  %1259 = vmatpush1.bf16.msra.mxu0 %v874
  %1260 = vmatprep.subr.bf16.mxu0 0
  %1261 = vmatpush1.bf16.msra.mxu0 %v875
  %1262 = vmatprep.subr.bf16.mxu0 0
  %1263 = vmatpush1.bf16.msra.mxu0 %v876
  %1264 = vmatprep.subr.bf16.mxu0 0
  %1265 = vmatpush1.bf16.msra.mxu0 %v877
  %1266 = vmatprep.subr.bf16.mxu0 0
  %1267 = vmatpush1.bf16.msra.mxu0 %v878
  %1268 = vmatprep.subr.bf16.mxu0 0
  %1269 = vmatpush1.bf16.msra.mxu0 %v879
  %1270 = vmatprep.mubr.bf16.mxu0 %v305
  %1271 = vmatmul.mubr.bf16.gmra.mrb[0].mxu0 %v304
  %v1272 = vpop.f32.mrb[0].mxu0
  %v1273 = vadd.f32 %v1232, %v1272
  %v1274 = vpop.f32.mrb[0].mxu0
  %v1275 = vpop.f32.mrb[0].mxu0
  %v1276 = vadd.f32 %v1235, %v1275
  %v1277 = vpop.f32.mrb[0].mxu0
  %1278 = vdwg.mxu0
  %1279 = vst [vmem:[%s2] sm:$0xff] %v1273
  %1280 = vst [vmem:[%s2 + $0x8] sm:$0xff] %v1276
  // Predicated region
  $region10: #{sparse_resnet_encoder.8} parent=0 // pred_check
    _
  $region11: #{sparse_resnet_encoder.8} parent=0 // pred_check_branch
    %1282 = sbr.rel (0) target = $region13
  $region12: #{sparse_resnet_encoder.8} parent=0 // pred_region
    _
  $region13: #{sparse_resnet_encoder.8} parent=0 // pred_fallthru
    _
  // Predicated region
  $region14: #{sparse_resnet_encoder.8} parent=0 // pred_check
    _
  $region15: #{sparse_resnet_encoder.8} parent=0 // pred_check_branch
    %1284 = sbr.rel (0) target = $region17
  $region16: #{sparse_resnet_encoder.8} parent=0 // pred_region
    _
  $region17: #{sparse_resnet_encoder.8} parent=0 // pred_fallthru
    _

// kernel: sparse_resnet_encoder.9
$region0: #{sparse_resnet_encoder.9}
  #allocation0 [shape = 'u32[]', space=smem, size = 0x4, offset = 0x4, fixed_abs, tag = 'smem constant byte address 0x4 - core index']
  #allocation1 [shape = 'u32[144,128]{1,0:T(1,128)}', space=vmem, size = 0x12000, scoped, tag = 'internal scratch']
  %s0 = inlined_call_operand.vmem [shape: bf16[16,3456], index: 0, kind: input, shape index: {}]
  %s1 = inlined_call_operand.vmem [shape: bf16[3456,512], index: 1, kind: input, shape index: {}]
  %s2 = inlined_call_operand.vmem [shape: f32[16,512], index: 2, kind: output, shape index: {}]
  %s3 = sld [smem:[#allocation0]]
  $region98: #{sparse_resnet_encoder.9} parent=0
    _
  %s5 = ssub.s32 1, %s3
  %s6 = scalar_select 0, %s5, %s3
  $region1: #{sparse_resnet_encoder.9} parent=0
    #allocation2 [shape = 'u8[3538944]{0}', space=vmem, size = 0x360000, scoped, tag = 'input window, operand 1']
    #allocation3 [shape = 'u8[32768]{0}', space=vmem, size = 0x8000, scoped, tag = 'output window, operand 0']
    loop: start=0, step=1, limit=4
    $region2: #{sparse_resnet_encoder.9} parent=1 // loop_pre_header
      _
    $region3: #{sparse_resnet_encoder.9} parent=1 // loop_header
      %s8 = sphi 0, %s12
      %p9 = scmp.ge.s32.totalorder %s8, 4
      %s15 = sphi 0, %s27
      %s16 = sphi 0, %s23
      %s17 = sphi 0, %s15
      %s18 = sphi 0, %s16
      %s19 = sphi 0, %s17
      %s20 = sphi 0, %s18
      %s30 = sphi 0, %s32
      %s33 = sphi 0, %s30
      %s34 = sphi 0, %s33
      %s50 = sphi 0, %s34
      %s56 = sphi 0, %s58
      %s59 = sphi 0, %s56
      %s60 = sphi 0, %s59
      %s76 = sphi 0, %s60
      %s84 = sphi 0, %s86
      %s87 = sphi 0, %s84
      %s88 = sphi 0, %s87
      %s104 = sphi 0, %s88
    $region4: #{sparse_resnet_encoder.9} parent=1 // loop_header_branch
      %11 = sbr.rel (%p9) target = $region8
    $region5: #{sparse_resnet_encoder.9} parent=1 // loop_body
      %s13 = ssub.s32 %s8, 1
      %s14 = ssub.s32 %s8, 2
      %s21 = sadd.s32 1, %s16
      %p22 = scmp.ge.s32.totalorder %s21, 2
      %s23 = scalar_select %p22, 0, %s21
      %s24 = sadd.s32 1, %s15
      %s25 = scalar_select %p22, %s24, %s15
      %p26 = scmp.ge.s32.totalorder %s25, 1
      %s27 = scalar_select %p26, 0, %s25
      %s28 = ssub.s32 %s15, %s27
      %p29 = scmp.eq.s32.totalorder %s28, 0
      %s31 = sadd.s32 %s30, 1
      %s32 = scalar_select %p29, %s30, %s31
      %p35 = pneg %p29
      %p36 = scmp.eq.s32.totalorder %s8, 1
      %p37 = por %p35, %p36
      %p38 = scmp.ne.s32.totalorder %s30, %s33
      %p39 = scmp.eq.s32.totalorder %s8, 0
      %p40 = por %p38, %p39
      %p41 = scmp.ne.s32.totalorder %s30, %s33
      %p42 = scmp.eq.s32.totalorder %s13, 1
      %p43 = por %p41, %p42
      %p44 = scmp.ne.s32.totalorder %s33, %s34
      %p45 = scmp.eq.s32.totalorder %s13, 0
      %p46 = por %p44, %p45
      %p47 = scmp.ne.s32.totalorder %s33, %s34
      %p48 = scmp.eq.s32.totalorder %s14, 1
      %p49 = por %p47, %p48
      %p51 = scmp.ne.s32.totalorder %s34, %s50
      %p52 = scmp.eq.s32.totalorder %s14, 0
      %p53 = por %p51, %p52
      %s54 = ssub.s32 %s16, %s23
      %p55 = scmp.eq.s32.totalorder %s54, 0
      %s57 = sadd.s32 %s56, 1
      %s58 = scalar_select %p55, %s56, %s57
      %p61 = pneg %p55
      %p62 = scmp.eq.s32.totalorder %s8, 1
      %p63 = por %p61, %p62
      %p64 = scmp.ne.s32.totalorder %s56, %s59
      %p65 = scmp.eq.s32.totalorder %s8, 0
      %p66 = por %p64, %p65
      %p67 = scmp.ne.s32.totalorder %s56, %s59
      %p68 = scmp.eq.s32.totalorder %s13, 1
      %p69 = por %p67, %p68
      %p70 = scmp.ne.s32.totalorder %s59, %s60
      %p71 = scmp.eq.s32.totalorder %s13, 0
      %p72 = por %p70, %p71
      %p73 = scmp.ne.s32.totalorder %s59, %s60
      %p74 = scmp.eq.s32.totalorder %s14, 1
      %p75 = por %p73, %p74
      %p77 = scmp.ne.s32.totalorder %s60, %s76
      %p78 = scmp.eq.s32.totalorder %s14, 0
      %p79 = por %p77, %p78
      %s80 = ssub.s32 %s15, %s27
      %s81 = ssub.s32 %s16, %s23
      %s82 = sor.u32 %s80, %s81
      %p83 = scmp.eq.s32.totalorder %s82, 0
      %s85 = sadd.s32 %s84, 1
      %s86 = scalar_select %p83, %s84, %s85
      %p89 = pneg %p83
      %p90 = scmp.eq.s32.totalorder %s8, 1
      %p91 = por %p89, %p90
      %p92 = scmp.ne.s32.totalorder %s84, %s87
      %p93 = scmp.eq.s32.totalorder %s8, 0
      %p94 = por %p92, %p93
      %p95 = scmp.ne.s32.totalorder %s84, %s87
      %p96 = scmp.eq.s32.totalorder %s13, 1
      %p97 = por %p95, %p96
      %p98 = scmp.ne.s32.totalorder %s87, %s88
      %p99 = scmp.eq.s32.totalorder %s13, 0
      %p100 = por %p98, %p99
      %p101 = scmp.ne.s32.totalorder %s87, %s88
      %p102 = scmp.eq.s32.totalorder %s14, 1
      %p103 = por %p101, %p102
      %p105 = scmp.ne.s32.totalorder %s88, %s104
      %p106 = scmp.eq.s32.totalorder %s14, 0
      %p107 = por %p105, %p106
      %p108 = scmp.le.s32.totalorder 1, %s8
      %p109 = scmp.lt.s32.totalorder %s8, 3
      %p110 = pnand %p108, %p109
      %p111 = pneg %p110
      // Predicated region
      $region9: #{sparse_resnet_encoder.9} parent=5 // pred_check
        _
      $region10: #{sparse_resnet_encoder.9} parent=5 // pred_check_branch
        %113 = sbr.rel (%p110) target = $region12
      $region11: #{sparse_resnet_encoder.9} parent=5 // pred_region
        %s114 = ssub.s32 %s8, 1
        // Predicated region
        $region13: #{sparse_resnet_encoder.9} parent=11 // pred_check
          %p115 = pneg %p46
        $region14: #{sparse_resnet_encoder.9} parent=11 // pred_check_branch
          %117 = sbr.rel (%p115) target = $region16
        $region15: #{sparse_resnet_encoder.9} parent=11 // pred_region
          %s118 = smul.u32 2, %s17
          %p119 = scmp.lt.s32.totalorder %s118, 1
          %s120 = scalar_select %p119, %s118, 1
          %s121 = smul.addr %s120, 27
          %s122 = smul.addr %s121, 4
          %s123 = scalar_lea.vmem %s0, %s122
          %s124 = smul.u32 2, %s17
        $region16: #{sparse_resnet_encoder.9} parent=11 // pred_fallthru
          _
      $region12: #{sparse_resnet_encoder.9} parent=5 // pred_fallthru
        _
      %p125 = scmp.lt.s32.totalorder %s8, 2
      // Predicated region
      $region17: #{sparse_resnet_encoder.9} parent=5 // pred_check
        %p126 = pneg %p125
      $region18: #{sparse_resnet_encoder.9} parent=5 // pred_check_branch
        %128 = sbr.rel (%p126) target = $region20
      $region19: #{sparse_resnet_encoder.9} parent=5 // pred_region
        // Predicated region
        $region21: #{sparse_resnet_encoder.9} parent=19 // pred_check
          %p129 = pneg %p66
        $region22: #{sparse_resnet_encoder.9} parent=19 // pred_check_branch
          %131 = sbr.rel (%p129) target = $region24
        $region23: #{sparse_resnet_encoder.9} parent=19 // pred_region
          %s132 = sand.u32 %s56, 1
          %s133 = sand.u32 %s56, 1
          %s134 = smul.addr %s133, 3456
          %s135 = scalar_lea.vmem [#allocation2], %s134
          %s136 = smul.u32 2, %s16
          %s137 = smul.addr %s136, 4
          %s138 = scalar_lea.vmem %s1, %s137
          // Predicated region
          $region25: #{sparse_resnet_encoder.9} parent=23 // pred_check
            _
          $region26: #{sparse_resnet_encoder.9} parent=23 // pred_check_branch
            %140 = sbr.rel (0) target = $region28
          $region27: #{sparse_resnet_encoder.9} parent=23 // pred_region
            // Predicated region
            $region29: #{sparse_resnet_encoder.9} parent=27 // pred_check
              _
            $region30: #{sparse_resnet_encoder.9} parent=27 // pred_check_branch
              %142 = sbr.rel (0) target = $region32
            $region31: #{sparse_resnet_encoder.9} parent=27 // pred_region
              // Predicated region
              $region44: #{sparse_resnet_encoder.9} parent=31 // pred_check
                _
              $region45: #{sparse_resnet_encoder.9} parent=31 // pred_check_branch
                %1019 = sbr.rel (0) target = $region47
              $region46: #{sparse_resnet_encoder.9} parent=31 // pred_region
                loop: start=0, step=1, limit=1
                $region48: #{sparse_resnet_encoder.9} parent=46 // loop_pre_header
                  _
                $region49: #{sparse_resnet_encoder.9} parent=46 // loop_header
                  %s1021 = sphi 0, %s1025
                  %p1022 = scmp.ge.s32.totalorder %s1021, 1
                  %s1026 = sphi %s138, %s138
                  %s1027 = sphi %s135, %s135
                $region50: #{sparse_resnet_encoder.9} parent=46 // loop_header_branch
                  %1024 = sbr.rel (%p1022) target = $region54
                $region51: #{sparse_resnet_encoder.9} parent=46 // loop_body
                  %v1028 = vld [vmem:[%s1026] sm:$0xff]
                  %1029 = vst [vmem:[%s1027] sm:$0xff] %v1028
                  %v1030 = vld [vmem:[%s1026 + $0x10] sm:$0xff]
                  %1031 = vst [vmem:[%s1027 + $0x8] sm:$0xff] %v1030
                  %v1032 = vld [vmem:[%s1026 + $0x20] sm:$0xff]
                  %1033 = vst [vmem:[%s1027 + $0x10] sm:$0xff] %v1032
                  %v1034 = vld [vmem:[%s1026 + $0x30] sm:$0xff]
                  %1035 = vst [vmem:[%s1027 + $0x18] sm:$0xff] %v1034
                  %v1036 = vld [vmem:[%s1026 + $0x40] sm:$0xff]
                  %1037 = vst [vmem:[%s1027 + $0x20] sm:$0xff] %v1036
                  %v1038 = vld [vmem:[%s1026 + $0x50] sm:$0xff]
                  %1039 = vst [vmem:[%s1027 + $0x28] sm:$0xff] %v1038
                  %v1040 = vld [vmem:[%s1026 + $0x60] sm:$0xff]
                  %1041 = vst [vmem:[%s1027 + $0x30] sm:$0xff] %v1040
                  %v1042 = vld [vmem:[%s1026 + $0x70] sm:$0xff]
                  %1043 = vst [vmem:[%s1027 + $0x38] sm:$0xff] %v1042
                  %v1044 = vld [vmem:[%s1026 + $0x80] sm:$0xff]
                  %1045 = vst [vmem:[%s1027 + $0x40] sm:$0xff] %v1044
                  %v1046 = vld [vmem:[%s1026 + $0x90] sm:$0xff]
                  %1047 = vst [vmem:[%s1027 + $0x48] sm:$0xff] %v1046
                  %v1048 = vld [vmem:[%s1026 + $0xa0] sm:$0xff]
                  %1049 = vst [vmem:[%s1027 + $0x50] sm:$0xff] %v1048
                  %v1050 = vld [vmem:[%s1026 + $0xb0] sm:$0xff]
                  %1051 = vst [vmem:[%s1027 + $0x58] sm:$0xff] %v1050
                  %v1052 = vld [vmem:[%s1026 + $0xc0] sm:$0xff]
                  %1053 = vst [vmem:[%s1027 + $0x60] sm:$0xff] %v1052
                  %v1054 = vld [vmem:[%s1026 + $0xd0] sm:$0xff]
                  %1055 = vst [vmem:[%s1027 + $0x68] sm:$0xff] %v1054
                  %v1056 = vld [vmem:[%s1026 + $0xe0] sm:$0xff]
                  %1057 = vst [vmem:[%s1027 + $0x70] sm:$0xff] %v1056
                  %v1058 = vld [vmem:[%s1026 + $0xf0] sm:$0xff]
                  %1059 = vst [vmem:[%s1027 + $0x78] sm:$0xff] %v1058
                  %v1060 = vld [vmem:[%s1026 + $0x100] sm:$0xff]
                  %1061 = vst [vmem:[%s1027 + $0x80] sm:$0xff] %v1060
                  %v1062 = vld [vmem:[%s1026 + $0x110] sm:$0xff]
                  %1063 = vst [vmem:[%s1027 + $0x88] sm:$0xff] %v1062
                  %v1064 = vld [vmem:[%s1026 + $0x120] sm:$0xff]
                  %1065 = vst [vmem:[%s1027 + $0x90] sm:$0xff] %v1064
                  %v1066 = vld [vmem:[%s1026 + $0x130] sm:$0xff]
                  %1067 = vst [vmem:[%s1027 + $0x98] sm:$0xff] %v1066
                  %v1068 = vld [vmem:[%s1026 + $0x140] sm:$0xff]
                  %1069 = vst [vmem:[%s1027 + $0xa0] sm:$0xff] %v1068
                  %v1070 = vld [vmem:[%s1026 + $0x150] sm:$0xff]
                  %1071 = vst [vmem:[%s1027 + $0xa8] sm:$0xff] %v1070
                  %v1072 = vld [vmem:[%s1026 + $0x160] sm:$0xff]
                  %1073 = vst [vmem:[%s1027 + $0xb0] sm:$0xff] %v1072
                  %v1074 = vld [vmem:[%s1026 + $0x170] sm:$0xff]
                  %1075 = vst [vmem:[%s1027 + $0xb8] sm:$0xff] %v1074
                  %v1076 = vld [vmem:[%s1026 + $0x180] sm:$0xff]
                  %1077 = vst [vmem:[%s1027 + $0xc0] sm:$0xff] %v1076
                  %v1078 = vld [vmem:[%s1026 + $0x190] sm:$0xff]
                  %1079 = vst [vmem:[%s1027 + $0xc8] sm:$0xff] %v1078
                  %v1080 = vld [vmem:[%s1026 + $0x1a0] sm:$0xff]
                  %1081 = vst [vmem:[%s1027 + $0xd0] sm:$0xff] %v1080
                  %v1082 = vld [vmem:[%s1026 + $0x1b0] sm:$0xff]
                  %1083 = vst [vmem:[%s1027 + $0xd8] sm:$0xff] %v1082
                  %v1084 = vld [vmem:[%s1026 + $0x1c0] sm:$0xff]
                  %1085 = vst [vmem:[%s1027 + $0xe0] sm:$0xff] %v1084
                  %v1086 = vld [vmem:[%s1026 + $0x1d0] sm:$0xff]
                  %1087 = vst [vmem:[%s1027 + $0xe8] sm:$0xff] %v1086
                  %v1088 = vld [vmem:[%s1026 + $0x1e0] sm:$0xff]
                  %1089 = vst [vmem:[%s1027 + $0xf0] sm:$0xff] %v1088
                  %v1090 = vld [vmem:[%s1026 + $0x1f0] sm:$0xff]
                  %1091 = vst [vmem:[%s1027 + $0xf8] sm:$0xff] %v1090
                  %v1092 = vld [vmem:[%s1026 + $0x200] sm:$0xff]
                  %1093 = vst [vmem:[%s1027 + $0x100] sm:$0xff] %v1092
                  %v1094 = vld [vmem:[%s1026 + $0x210] sm:$0xff]
                  %1095 = vst [vmem:[%s1027 + $0x108] sm:$0xff] %v1094
                  %v1096 = vld [vmem:[%s1026 + $0x220] sm:$0xff]
                  %1097 = vst [vmem:[%s1027 + $0x110] sm:$0xff] %v1096
                  %v1098 = vld [vmem:[%s1026 + $0x230] sm:$0xff]
                  %1099 = vst [vmem:[%s1027 + $0x118] sm:$0xff] %v1098
                  %v1100 = vld [vmem:[%s1026 + $0x240] sm:$0xff]
                  %1101 = vst [vmem:[%s1027 + $0x120] sm:$0xff] %v1100
                  %v1102 = vld [vmem:[%s1026 + $0x250] sm:$0xff]
                  %1103 = vst [vmem:[%s1027 + $0x128] sm:$0xff] %v1102
                  %v1104 = vld [vmem:[%s1026 + $0x260] sm:$0xff]
                  %1105 = vst [vmem:[%s1027 + $0x130] sm:$0xff] %v1104
                  %v1106 = vld [vmem:[%s1026 + $0x270] sm:$0xff]
                  %1107 = vst [vmem:[%s1027 + $0x138] sm:$0xff] %v1106
                  %v1108 = vld [vmem:[%s1026 + $0x280] sm:$0xff]
                  %1109 = vst [vmem:[%s1027 + $0x140] sm:$0xff] %v1108
                  %v1110 = vld [vmem:[%s1026 + $0x290] sm:$0xff]
                  %1111 = vst [vmem:[%s1027 + $0x148] sm:$0xff] %v1110
                  %v1112 = vld [vmem:[%s1026 + $0x2a0] sm:$0xff]
                  %1113 = vst [vmem:[%s1027 + $0x150] sm:$0xff] %v1112
                  %v1114 = vld [vmem:[%s1026 + $0x2b0] sm:$0xff]
                  %1115 = vst [vmem:[%s1027 + $0x158] sm:$0xff] %v1114
                  %v1116 = vld [vmem:[%s1026 + $0x2c0] sm:$0xff]
                  %1117 = vst [vmem:[%s1027 + $0x160] sm:$0xff] %v1116
                  %v1118 = vld [vmem:[%s1026 + $0x2d0] sm:$0xff]
                  %1119 = vst [vmem:[%s1027 + $0x168] sm:$0xff] %v1118
                  %v1120 = vld [vmem:[%s1026 + $0x2e0] sm:$0xff]
                  %1121 = vst [vmem:[%s1027 + $0x170] sm:$0xff] %v1120
                  %v1122 = vld [vmem:[%s1026 + $0x2f0] sm:$0xff]
                  %1123 = vst [vmem:[%s1027 + $0x178] sm:$0xff] %v1122
                  %v1124 = vld [vmem:[%s1026 + $0x300] sm:$0xff]
                  %1125 = vst [vmem:[%s1027 + $0x180] sm:$0xff] %v1124
                  %v1126 = vld [vmem:[%s1026 + $0x310] sm:$0xff]
                  %1127 = vst [vmem:[%s1027 + $0x188] sm:$0xff] %v1126
                  %v1128 = vld [vmem:[%s1026 + $0x320] sm:$0xff]
                  %1129 = vst [vmem:[%s1027 + $0x190] sm:$0xff] %v1128
                  %v1130 = vld [vmem:[%s1026 + $0x330] sm:$0xff]
                  %1131 = vst [vmem:[%s1027 + $0x198] sm:$0xff] %v1130
                  %v1132 = vld [vmem:[%s1026 + $0x340] sm:$0xff]
                  %1133 = vst [vmem:[%s1027 + $0x1a0] sm:$0xff] %v1132
                  %v1134 = vld [vmem:[%s1026 + $0x350] sm:$0xff]
                  %1135 = vst [vmem:[%s1027 + $0x1a8] sm:$0xff] %v1134
                  %v1136 = vld [vmem:[%s1026 + $0x360] sm:$0xff]
                  %1137 = vst [vmem:[%s1027 + $0x1b0] sm:$0xff] %v1136
                  %v1138 = vld [vmem:[%s1026 + $0x370] sm:$0xff]
                  %1139 = vst [vmem:[%s1027 + $0x1b8] sm:$0xff] %v1138
                  %v1140 = vld [vmem:[%s1026 + $0x380] sm:$0xff]
                  %1141 = vst [vmem:[%s1027 + $0x1c0] sm:$0xff] %v1140
                  %v1142 = vld [vmem:[%s1026 + $0x390] sm:$0xff]
                  %1143 = vst [vmem:[%s1027 + $0x1c8] sm:$0xff] %v1142
                  %v1144 = vld [vmem:[%s1026 + $0x3a0] sm:$0xff]
                  %1145 = vst [vmem:[%s1027 + $0x1d0] sm:$0xff] %v1144
                  %v1146 = vld [vmem:[%s1026 + $0x3b0] sm:$0xff]
                  %1147 = vst [vmem:[%s1027 + $0x1d8] sm:$0xff] %v1146
                  %v1148 = vld [vmem:[%s1026 + $0x3c0] sm:$0xff]
                  %1149 = vst [vmem:[%s1027 + $0x1e0] sm:$0xff] %v1148
                  %v1150 = vld [vmem:[%s1026 + $0x3d0] sm:$0xff]
                  %1151 = vst [vmem:[%s1027 + $0x1e8] sm:$0xff] %v1150
                  %v1152 = vld [vmem:[%s1026 + $0x3e0] sm:$0xff]
                  %1153 = vst [vmem:[%s1027 + $0x1f0] sm:$0xff] %v1152
                  %v1154 = vld [vmem:[%s1026 + $0x3f0] sm:$0xff]
                  %1155 = vst [vmem:[%s1027 + $0x1f8] sm:$0xff] %v1154
                  %v1156 = vld [vmem:[%s1026 + $0x400] sm:$0xff]
                  %1157 = vst [vmem:[%s1027 + $0x200] sm:$0xff] %v1156
                  %v1158 = vld [vmem:[%s1026 + $0x410] sm:$0xff]
                  %1159 = vst [vmem:[%s1027 + $0x208] sm:$0xff] %v1158
                  %v1160 = vld [vmem:[%s1026 + $0x420] sm:$0xff]
                  %1161 = vst [vmem:[%s1027 + $0x210] sm:$0xff] %v1160
                  %v1162 = vld [vmem:[%s1026 + $0x430] sm:$0xff]
                  %1163 = vst [vmem:[%s1027 + $0x218] sm:$0xff] %v1162
                  %v1164 = vld [vmem:[%s1026 + $0x440] sm:$0xff]
                  %1165 = vst [vmem:[%s1027 + $0x220] sm:$0xff] %v1164
                  %v1166 = vld [vmem:[%s1026 + $0x450] sm:$0xff]
                  %1167 = vst [vmem:[%s1027 + $0x228] sm:$0xff] %v1166
                  %v1168 = vld [vmem:[%s1026 + $0x460] sm:$0xff]
                  %1169 = vst [vmem:[%s1027 + $0x230] sm:$0xff] %v1168
                  %v1170 = vld [vmem:[%s1026 + $0x470] sm:$0xff]
                  %1171 = vst [vmem:[%s1027 + $0x238] sm:$0xff] %v1170
                  %v1172 = vld [vmem:[%s1026 + $0x480] sm:$0xff]
                  %1173 = vst [vmem:[%s1027 + $0x240] sm:$0xff] %v1172
                  %v1174 = vld [vmem:[%s1026 + $0x490] sm:$0xff]
                  %1175 = vst [vmem:[%s1027 + $0x248] sm:$0xff] %v1174
                  %v1176 = vld [vmem:[%s1026 + $0x4a0] sm:$0xff]
                  %1177 = vst [vmem:[%s1027 + $0x250] sm:$0xff] %v1176
                  %v1178 = vld [vmem:[%s1026 + $0x4b0] sm:$0xff]
                  %1179 = vst [vmem:[%s1027 + $0x258] sm:$0xff] %v1178
                  %v1180 = vld [vmem:[%s1026 + $0x4c0] sm:$0xff]
                  %1181 = vst [vmem:[%s1027 + $0x260] sm:$0xff] %v1180
                  %v1182 = vld [vmem:[%s1026 + $0x4d0] sm:$0xff]
                  %1183 = vst [vmem:[%s1027 + $0x268] sm:$0xff] %v1182
                  %v1184 = vld [vmem:[%s1026 + $0x4e0] sm:$0xff]
                  %1185 = vst [vmem:[%s1027 + $0x270] sm:$0xff] %v1184
                  %v1186 = vld [vmem:[%s1026 + $0x4f0] sm:$0xff]
                  %1187 = vst [vmem:[%s1027 + $0x278] sm:$0xff] %v1186
                  %v1188 = vld [vmem:[%s1026 + $0x500] sm:$0xff]
                  %1189 = vst [vmem:[%s1027 + $0x280] sm:$0xff] %v1188
                  %v1190 = vld [vmem:[%s1026 + $0x510] sm:$0xff]
                  %1191 = vst [vmem:[%s1027 + $0x288] sm:$0xff] %v1190
                  %v1192 = vld [vmem:[%s1026 + $0x520] sm:$0xff]
                  %1193 = vst [vmem:[%s1027 + $0x290] sm:$0xff] %v1192
                  %v1194 = vld [vmem:[%s1026 + $0x530] sm:$0xff]
                  %1195 = vst [vmem:[%s1027 + $0x298] sm:$0xff] %v1194
                  %v1196 = vld [vmem:[%s1026 + $0x540] sm:$0xff]
                  %1197 = vst [vmem:[%s1027 + $0x2a0] sm:$0xff] %v1196
                  %v1198 = vld [vmem:[%s1026 + $0x550] sm:$0xff]
                  %1199 = vst [vmem:[%s1027 + $0x2a8] sm:$0xff] %v1198
                  %v1200 = vld [vmem:[%s1026 + $0x560] sm:$0xff]
                  %1201 = vst [vmem:[%s1027 + $0x2b0] sm:$0xff] %v1200
                  %v1202 = vld [vmem:[%s1026 + $0x570] sm:$0xff]
                  %1203 = vst [vmem:[%s1027 + $0x2b8] sm:$0xff] %v1202
                  %v1204 = vld [vmem:[%s1026 + $0x580] sm:$0xff]
                  %1205 = vst [vmem:[%s1027 + $0x2c0] sm:$0xff] %v1204
                  %v1206 = vld [vmem:[%s1026 + $0x590] sm:$0xff]
                  %1207 = vst [vmem:[%s1027 + $0x2c8] sm:$0xff] %v1206
                  %v1208 = vld [vmem:[%s1026 + $0x5a0] sm:$0xff]
                  %1209 = vst [vmem:[%s1027 + $0x2d0] sm:$0xff] %v1208
                  %v1210 = vld [vmem:[%s1026 + $0x5b0] sm:$0xff]
                  %1211 = vst [vmem:[%s1027 + $0x2d8] sm:$0xff] %v1210
                  %v1212 = vld [vmem:[%s1026 + $0x5c0] sm:$0xff]
                  %1213 = vst [vmem:[%s1027 + $0x2e0] sm:$0xff] %v1212
                  %v1214 = vld [vmem:[%s1026 + $0x5d0] sm:$0xff]
                  %1215 = vst [vmem:[%s1027 + $0x2e8] sm:$0xff] %v1214
                  %v1216 = vld [vmem:[%s1026 + $0x5e0] sm:$0xff]
                  %1217 = vst [vmem:[%s1027 + $0x2f0] sm:$0xff] %v1216
                  %v1218 = vld [vmem:[%s1026 + $0x5f0] sm:$0xff]
                  %1219 = vst [vmem:[%s1027 + $0x2f8] sm:$0xff] %v1218
                  %v1220 = vld [vmem:[%s1026 + $0x600] sm:$0xff]
                  %1221 = vst [vmem:[%s1027 + $0x300] sm:$0xff] %v1220
                  %v1222 = vld [vmem:[%s1026 + $0x610] sm:$0xff]
                  %1223 = vst [vmem:[%s1027 + $0x308] sm:$0xff] %v1222
                  %v1224 = vld [vmem:[%s1026 + $0x620] sm:$0xff]
                  %1225 = vst [vmem:[%s1027 + $0x310] sm:$0xff] %v1224
                  %v1226 = vld [vmem:[%s1026 + $0x630] sm:$0xff]
                  %1227 = vst [vmem:[%s1027 + $0x318] sm:$0xff] %v1226
                  %v1228 = vld [vmem:[%s1026 + $0x640] sm:$0xff]
                  %1229 = vst [vmem:[%s1027 + $0x320] sm:$0xff] %v1228
                  %v1230 = vld [vmem:[%s1026 + $0x650] sm:$0xff]
                  %1231 = vst [vmem:[%s1027 + $0x328] sm:$0xff] %v1230
                  %v1232 = vld [vmem:[%s1026 + $0x660] sm:$0xff]
                  %1233 = vst [vmem:[%s1027 + $0x330] sm:$0xff] %v1232
                  %v1234 = vld [vmem:[%s1026 + $0x670] sm:$0xff]
                  %1235 = vst [vmem:[%s1027 + $0x338] sm:$0xff] %v1234
                  %v1236 = vld [vmem:[%s1026 + $0x680] sm:$0xff]
                  %1237 = vst [vmem:[%s1027 + $0x340] sm:$0xff] %v1236
                  %v1238 = vld [vmem:[%s1026 + $0x690] sm:$0xff]
                  %1239 = vst [vmem:[%s1027 + $0x348] sm:$0xff] %v1238
                  %v1240 = vld [vmem:[%s1026 + $0x6a0] sm:$0xff]
                  %1241 = vst [vmem:[%s1027 + $0x350] sm:$0xff] %v1240
                  %v1242 = vld [vmem:[%s1026 + $0x6b0] sm:$0xff]
                  %1243 = vst [vmem:[%s1027 + $0x358] sm:$0xff] %v1242
                  %v1244 = vld [vmem:[%s1026 + $0x6c0] sm:$0xff]
                  %1245 = vst [vmem:[%s1027 + $0x360] sm:$0xff] %v1244
                  %v1246 = vld [vmem:[%s1026 + $0x6d0] sm:$0xff]
                  %1247 = vst [vmem:[%s1027 + $0x368] sm:$0xff] %v1246
                  %v1248 = vld [vmem:[%s1026 + $0x6e0] sm:$0xff]
                  %1249 = vst [vmem:[%s1027 + $0x370] sm:$0xff] %v1248
                  %v1250 = vld [vmem:[%s1026 + $0x6f0] sm:$0xff]
                  %1251 = vst [vmem:[%s1027 + $0x378] sm:$0xff] %v1250
                  %v1252 = vld [vmem:[%s1026 + $0x700] sm:$0xff]
                  %1253 = vst [vmem:[%s1027 + $0x380] sm:$0xff] %v1252
                  %v1254 = vld [vmem:[%s1026 + $0x710] sm:$0xff]
                  %1255 = vst [vmem:[%s1027 + $0x388] sm:$0xff] %v1254
                  %v1256 = vld [vmem:[%s1026 + $0x720] sm:$0xff]
                  %1257 = vst [vmem:[%s1027 + $0x390] sm:$0xff] %v1256
                  %v1258 = vld [vmem:[%s1026 + $0x730] sm:$0xff]
                  %1259 = vst [vmem:[%s1027 + $0x398] sm:$0xff] %v1258
                  %v1260 = vld [vmem:[%s1026 + $0x740] sm:$0xff]
                  %1261 = vst [vmem:[%s1027 + $0x3a0] sm:$0xff] %v1260
                  %v1262 = vld [vmem:[%s1026 + $0x750] sm:$0xff]
                  %1263 = vst [vmem:[%s1027 + $0x3a8] sm:$0xff] %v1262
                  %v1264 = vld [vmem:[%s1026 + $0x760] sm:$0xff]
                  %1265 = vst [vmem:[%s1027 + $0x3b0] sm:$0xff] %v1264
                  %v1266 = vld [vmem:[%s1026 + $0x770] sm:$0xff]
                  %1267 = vst [vmem:[%s1027 + $0x3b8] sm:$0xff] %v1266
                  %v1268 = vld [vmem:[%s1026 + $0x780] sm:$0xff]
                  %1269 = vst [vmem:[%s1027 + $0x3c0] sm:$0xff] %v1268
                  %v1270 = vld [vmem:[%s1026 + $0x790] sm:$0xff]
                  %1271 = vst [vmem:[%s1027 + $0x3c8] sm:$0xff] %v1270
                  %v1272 = vld [vmem:[%s1026 + $0x7a0] sm:$0xff]
                  %1273 = vst [vmem:[%s1027 + $0x3d0] sm:$0xff] %v1272
                  %v1274 = vld [vmem:[%s1026 + $0x7b0] sm:$0xff]
                  %1275 = vst [vmem:[%s1027 + $0x3d8] sm:$0xff] %v1274
                  %v1276 = vld [vmem:[%s1026 + $0x7c0] sm:$0xff]
                  %1277 = vst [vmem:[%s1027 + $0x3e0] sm:$0xff] %v1276
                  %v1278 = vld [vmem:[%s1026 + $0x7d0] sm:$0xff]
                  %1279 = vst [vmem:[%s1027 + $0x3e8] sm:$0xff] %v1278
                  %v1280 = vld [vmem:[%s1026 + $0x7e0] sm:$0xff]
                  %1281 = vst [vmem:[%s1027 + $0x3f0] sm:$0xff] %v1280
                  %v1282 = vld [vmem:[%s1026 + $0x7f0] sm:$0xff]
                  %1283 = vst [vmem:[%s1027 + $0x3f8] sm:$0xff] %v1282
                  %v1284 = vld [vmem:[%s1026 + $0x800] sm:$0xff]
                  %1285 = vst [vmem:[%s1027 + $0x400] sm:$0xff] %v1284
                  %v1286 = vld [vmem:[%s1026 + $0x810] sm:$0xff]
                  %1287 = vst [vmem:[%s1027 + $0x408] sm:$0xff] %v1286
                  %v1288 = vld [vmem:[%s1026 + $0x820] sm:$0xff]
                  %1289 = vst [vmem:[%s1027 + $0x410] sm:$0xff] %v1288
                  %v1290 = vld [vmem:[%s1026 + $0x830] sm:$0xff]
                  %1291 = vst [vmem:[%s1027 + $0x418] sm:$0xff] %v1290
                  %v1292 = vld [vmem:[%s1026 + $0x840] sm:$0xff]
                  %1293 = vst [vmem:[%s1027 + $0x420] sm:$0xff] %v1292
                  %v1294 = vld [vmem:[%s1026 + $0x850] sm:$0xff]
                  %1295 = vst [vmem:[%s1027 + $0x428] sm:$0xff] %v1294
                  %v1296 = vld [vmem:[%s1026 + $0x860] sm:$0xff]
                  %1297 = vst [vmem:[%s1027 + $0x430] sm:$0xff] %v1296
                  %v1298 = vld [vmem:[%s1026 + $0x870] sm:$0xff]
                  %1299 = vst [vmem:[%s1027 + $0x438] sm:$0xff] %v1298
                  %v1300 = vld [vmem:[%s1026 + $0x880] sm:$0xff]
                  %1301 = vst [vmem:[%s1027 + $0x440] sm:$0xff] %v1300
                  %v1302 = vld [vmem:[%s1026 + $0x890] sm:$0xff]
                  %1303 = vst [vmem:[%s1027 + $0x448] sm:$0xff] %v1302
                  %v1304 = vld [vmem:[%s1026 + $0x8a0] sm:$0xff]
                  %1305 = vst [vmem:[%s1027 + $0x450] sm:$0xff] %v1304
                  %v1306 = vld [vmem:[%s1026 + $0x8b0] sm:$0xff]
                  %1307 = vst [vmem:[%s1027 + $0x458] sm:$0xff] %v1306
                  %v1308 = vld [vmem:[%s1026 + $0x8c0] sm:$0xff]
                  %1309 = vst [vmem:[%s1027 + $0x460] sm:$0xff] %v1308
                  %v1310 = vld [vmem:[%s1026 + $0x8d0] sm:$0xff]
                  %1311 = vst [vmem:[%s1027 + $0x468] sm:$0xff] %v1310
                  %v1312 = vld [vmem:[%s1026 + $0x8e0] sm:$0xff]
                  %1313 = vst [vmem:[%s1027 + $0x470] sm:$0xff] %v1312
                  %v1314 = vld [vmem:[%s1026 + $0x8f0] sm:$0xff]
                  %1315 = vst [vmem:[%s1027 + $0x478] sm:$0xff] %v1314
                  %v1316 = vld [vmem:[%s1026 + $0x900] sm:$0xff]
                  %1317 = vst [vmem:[%s1027 + $0x480] sm:$0xff] %v1316
                  %v1318 = vld [vmem:[%s1026 + $0x910] sm:$0xff]
                  %1319 = vst [vmem:[%s1027 + $0x488] sm:$0xff] %v1318
                  %v1320 = vld [vmem:[%s1026 + $0x920] sm:$0xff]
                  %1321 = vst [vmem:[%s1027 + $0x490] sm:$0xff] %v1320
                  %v1322 = vld [vmem:[%s1026 + $0x930] sm:$0xff]
                  %1323 = vst [vmem:[%s1027 + $0x498] sm:$0xff] %v1322
                  %v1324 = vld [vmem:[%s1026 + $0x940] sm:$0xff]
                  %1325 = vst [vmem:[%s1027 + $0x4a0] sm:$0xff] %v1324
                  %v1326 = vld [vmem:[%s1026 + $0x950] sm:$0xff]
                  %1327 = vst [vmem:[%s1027 + $0x4a8] sm:$0xff] %v1326
                  %v1328 = vld [vmem:[%s1026 + $0x960] sm:$0xff]
                  %1329 = vst [vmem:[%s1027 + $0x4b0] sm:$0xff] %v1328
                  %v1330 = vld [vmem:[%s1026 + $0x970] sm:$0xff]
                  %1331 = vst [vmem:[%s1027 + $0x4b8] sm:$0xff] %v1330
                  %v1332 = vld [vmem:[%s1026 + $0x980] sm:$0xff]
                  %1333 = vst [vmem:[%s1027 + $0x4c0] sm:$0xff] %v1332
                  %v1334 = vld [vmem:[%s1026 + $0x990] sm:$0xff]
                  %1335 = vst [vmem:[%s1027 + $0x4c8] sm:$0xff] %v1334
                  %v1336 = vld [vmem:[%s1026 + $0x9a0] sm:$0xff]
                  %1337 = vst [vmem:[%s1027 + $0x4d0] sm:$0xff] %v1336
                  %v1338 = vld [vmem:[%s1026 + $0x9b0] sm:$0xff]
                  %1339 = vst [vmem:[%s1027 + $0x4d8] sm:$0xff] %v1338
                  %v1340 = vld [vmem:[%s1026 + $0x9c0] sm:$0xff]
                  %1341 = vst [vmem:[%s1027 + $0x4e0] sm:$0xff] %v1340
                  %v1342 = vld [vmem:[%s1026 + $0x9d0] sm:$0xff]
                  %1343 = vst [vmem:[%s1027 + $0x4e8] sm:$0xff] %v1342
                  %v1344 = vld [vmem:[%s1026 + $0x9e0] sm:$0xff]
                  %1345 = vst [vmem:[%s1027 + $0x4f0] sm:$0xff] %v1344
                  %v1346 = vld [vmem:[%s1026 + $0x9f0] sm:$0xff]
                  %1347 = vst [vmem:[%s1027 + $0x4f8] sm:$0xff] %v1346
                  %v1348 = vld [vmem:[%s1026 + $0xa00] sm:$0xff]
                  %1349 = vst [vmem:[%s1027 + $0x500] sm:$0xff] %v1348
                  %v1350 = vld [vmem:[%s1026 + $0xa10] sm:$0xff]
                  %1351 = vst [vmem:[%s1027 + $0x508] sm:$0xff] %v1350
                  %v1352 = vld [vmem:[%s1026 + $0xa20] sm:$0xff]
                  %1353 = vst [vmem:[%s1027 + $0x510] sm:$0xff] %v1352
                  %v1354 = vld [vmem:[%s1026 + $0xa30] sm:$0xff]
                  %1355 = vst [vmem:[%s1027 + $0x518] sm:$0xff] %v1354
                  %v1356 = vld [vmem:[%s1026 + $0xa40] sm:$0xff]
                  %1357 = vst [vmem:[%s1027 + $0x520] sm:$0xff] %v1356
                  %v1358 = vld [vmem:[%s1026 + $0xa50] sm:$0xff]
                  %1359 = vst [vmem:[%s1027 + $0x528] sm:$0xff] %v1358
                  %v1360 = vld [vmem:[%s1026 + $0xa60] sm:$0xff]
                  %1361 = vst [vmem:[%s1027 + $0x530] sm:$0xff] %v1360
                  %v1362 = vld [vmem:[%s1026 + $0xa70] sm:$0xff]
                  %1363 = vst [vmem:[%s1027 + $0x538] sm:$0xff] %v1362
                  %v1364 = vld [vmem:[%s1026 + $0xa80] sm:$0xff]
                  %1365 = vst [vmem:[%s1027 + $0x540] sm:$0xff] %v1364
                  %v1366 = vld [vmem:[%s1026 + $0xa90] sm:$0xff]
                  %1367 = vst [vmem:[%s1027 + $0x548] sm:$0xff] %v1366
                  %v1368 = vld [vmem:[%s1026 + $0xaa0] sm:$0xff]
                  %1369 = vst [vmem:[%s1027 + $0x550] sm:$0xff] %v1368
                  %v1370 = vld [vmem:[%s1026 + $0xab0] sm:$0xff]
                  %1371 = vst [vmem:[%s1027 + $0x558] sm:$0xff] %v1370
                  %v1372 = vld [vmem:[%s1026 + $0xac0] sm:$0xff]
                  %1373 = vst [vmem:[%s1027 + $0x560] sm:$0xff] %v1372
                  %v1374 = vld [vmem:[%s1026 + $0xad0] sm:$0xff]
                  %1375 = vst [vmem:[%s1027 + $0x568] sm:$0xff] %v1374
                  %v1376 = vld [vmem:[%s1026 + $0xae0] sm:$0xff]
                  %1377 = vst [vmem:[%s1027 + $0x570] sm:$0xff] %v1376
                  %v1378 = vld [vmem:[%s1026 + $0xaf0] sm:$0xff]
                  %1379 = vst [vmem:[%s1027 + $0x578] sm:$0xff] %v1378
                  %v1380 = vld [vmem:[%s1026 + $0xb00] sm:$0xff]
                  %1381 = vst [vmem:[%s1027 + $0x580] sm:$0xff] %v1380
                  %v1382 = vld [vmem:[%s1026 + $0xb10] sm:$0xff]
                  %1383 = vst [vmem:[%s1027 + $0x588] sm:$0xff] %v1382
                  %v1384 = vld [vmem:[%s1026 + $0xb20] sm:$0xff]
                  %1385 = vst [vmem:[%s1027 + $0x590] sm:$0xff] %v1384
                  %v1386 = vld [vmem:[%s1026 + $0xb30] sm:$0xff]
                  %1387 = vst [vmem:[%s1027 + $0x598] sm:$0xff] %v1386
                  %v1388 = vld [vmem:[%s1026 + $0xb40] sm:$0xff]
                  %1389 = vst [vmem:[%s1027 + $0x5a0] sm:$0xff] %v1388
                  %v1390 = vld [vmem:[%s1026 + $0xb50] sm:$0xff]
                  %1391 = vst [vmem:[%s1027 + $0x5a8] sm:$0xff] %v1390
                  %v1392 = vld [vmem:[%s1026 + $0xb60] sm:$0xff]
                  %1393 = vst [vmem:[%s1027 + $0x5b0] sm:$0xff] %v1392
                  %v1394 = vld [vmem:[%s1026 + $0xb70] sm:$0xff]
                  %1395 = vst [vmem:[%s1027 + $0x5b8] sm:$0xff] %v1394
                  %v1396 = vld [vmem:[%s1026 + $0xb80] sm:$0xff]
                  %1397 = vst [vmem:[%s1027 + $0x5c0] sm:$0xff] %v1396
                  %v1398 = vld [vmem:[%s1026 + $0xb90] sm:$0xff]
                  %1399 = vst [vmem:[%s1027 + $0x5c8] sm:$0xff] %v1398
                  %v1400 = vld [vmem:[%s1026 + $0xba0] sm:$0xff]
                  %1401 = vst [vmem:[%s1027 + $0x5d0] sm:$0xff] %v1400
                  %v1402 = vld [vmem:[%s1026 + $0xbb0] sm:$0xff]
                  %1403 = vst [vmem:[%s1027 + $0x5d8] sm:$0xff] %v1402
                  %v1404 = vld [vmem:[%s1026 + $0xbc0] sm:$0xff]
                  %1405 = vst [vmem:[%s1027 + $0x5e0] sm:$0xff] %v1404
                  %v1406 = vld [vmem:[%s1026 + $0xbd0] sm:$0xff]
                  %1407 = vst [vmem:[%s1027 + $0x5e8] sm:$0xff] %v1406
                  %v1408 = vld [vmem:[%s1026 + $0xbe0] sm:$0xff]
                  %1409 = vst [vmem:[%s1027 + $0x5f0] sm:$0xff] %v1408
                  %v1410 = vld [vmem:[%s1026 + $0xbf0] sm:$0xff]
                  %1411 = vst [vmem:[%s1027 + $0x5f8] sm:$0xff] %v1410
                  %v1412 = vld [vmem:[%s1026 + $0xc00] sm:$0xff]
                  %1413 = vst [vmem:[%s1027 + $0x600] sm:$0xff] %v1412
                  %v1414 = vld [vmem:[%s1026 + $0xc10] sm:$0xff]
                  %1415 = vst [vmem:[%s1027 + $0x608] sm:$0xff] %v1414
                  %v1416 = vld [vmem:[%s1026 + $0xc20] sm:$0xff]
                  %1417 = vst [vmem:[%s1027 + $0x610] sm:$0xff] %v1416
                  %v1418 = vld [vmem:[%s1026 + $0xc30] sm:$0xff]
                  %1419 = vst [vmem:[%s1027 + $0x618] sm:$0xff] %v1418
                  %v1420 = vld [vmem:[%s1026 + $0xc40] sm:$0xff]
                  %1421 = vst [vmem:[%s1027 + $0x620] sm:$0xff] %v1420
                  %v1422 = vld [vmem:[%s1026 + $0xc50] sm:$0xff]
                  %1423 = vst [vmem:[%s1027 + $0x628] sm:$0xff] %v1422
                  %v1424 = vld [vmem:[%s1026 + $0xc60] sm:$0xff]
                  %1425 = vst [vmem:[%s1027 + $0x630] sm:$0xff] %v1424
                  %v1426 = vld [vmem:[%s1026 + $0xc70] sm:$0xff]
                  %1427 = vst [vmem:[%s1027 + $0x638] sm:$0xff] %v1426
                  %v1428 = vld [vmem:[%s1026 + $0xc80] sm:$0xff]
                  %1429 = vst [vmem:[%s1027 + $0x640] sm:$0xff] %v1428
                  %v1430 = vld [vmem:[%s1026 + $0xc90] sm:$0xff]
                  %1431 = vst [vmem:[%s1027 + $0x648] sm:$0xff] %v1430
                  %v1432 = vld [vmem:[%s1026 + $0xca0] sm:$0xff]
                  %1433 = vst [vmem:[%s1027 + $0x650] sm:$0xff] %v1432
                  %v1434 = vld [vmem:[%s1026 + $0xcb0] sm:$0xff]
                  %1435 = vst [vmem:[%s1027 + $0x658] sm:$0xff] %v1434
                  %v1436 = vld [vmem:[%s1026 + $0xcc0] sm:$0xff]
                  %1437 = vst [vmem:[%s1027 + $0x660] sm:$0xff] %v1436
                  %v1438 = vld [vmem:[%s1026 + $0xcd0] sm:$0xff]
                  %1439 = vst [vmem:[%s1027 + $0x668] sm:$0xff] %v1438
                  %v1440 = vld [vmem:[%s1026 + $0xce0] sm:$0xff]
                  %1441 = vst [vmem:[%s1027 + $0x670] sm:$0xff] %v1440
                  %v1442 = vld [vmem:[%s1026 + $0xcf0] sm:$0xff]
                  %1443 = vst [vmem:[%s1027 + $0x678] sm:$0xff] %v1442
                  %v1444 = vld [vmem:[%s1026 + $0xd00] sm:$0xff]
                  %1445 = vst [vmem:[%s1027 + $0x680] sm:$0xff] %v1444
                  %v1446 = vld [vmem:[%s1026 + $0xd10] sm:$0xff]
                  %1447 = vst [vmem:[%s1027 + $0x688] sm:$0xff] %v1446
                  %v1448 = vld [vmem:[%s1026 + $0xd20] sm:$0xff]
                  %1449 = vst [vmem:[%s1027 + $0x690] sm:$0xff] %v1448
                  %v1450 = vld [vmem:[%s1026 + $0xd30] sm:$0xff]
                  %1451 = vst [vmem:[%s1027 + $0x698] sm:$0xff] %v1450
                  %v1452 = vld [vmem:[%s1026 + $0xd40] sm:$0xff]
                  %1453 = vst [vmem:[%s1027 + $0x6a0] sm:$0xff] %v1452
                  %v1454 = vld [vmem:[%s1026 + $0xd50] sm:$0xff]
                  %1455 = vst [vmem:[%s1027 + $0x6a8] sm:$0xff] %v1454
                  %v1456 = vld [vmem:[%s1026 + $0xd60] sm:$0xff]
                  %1457 = vst [vmem:[%s1027 + $0x6b0] sm:$0xff] %v1456
                  %v1458 = vld [vmem:[%s1026 + $0xd70] sm:$0xff]
                  %1459 = vst [vmem:[%s1027 + $0x6b8] sm:$0xff] %v1458
                  %v1460 = vld [vmem:[%s1026 + $0xd80] sm:$0xff]
                  %1461 = vst [vmem:[%s1027 + $0x6c0] sm:$0xff] %v1460
                  %v1462 = vld [vmem:[%s1026 + $0xd90] sm:$0xff]
                  %1463 = vst [vmem:[%s1027 + $0x6c8] sm:$0xff] %v1462
                  %v1464 = vld [vmem:[%s1026 + $0xda0] sm:$0xff]
                  %1465 = vst [vmem:[%s1027 + $0x6d0] sm:$0xff] %v1464
                  %v1466 = vld [vmem:[%s1026 + $0xdb0] sm:$0xff]
                  %1467 = vst [vmem:[%s1027 + $0x6d8] sm:$0xff] %v1466
                  %v1468 = vld [vmem:[%s1026 + $0xdc0] sm:$0xff]
                  %1469 = vst [vmem:[%s1027 + $0x6e0] sm:$0xff] %v1468
                  %v1470 = vld [vmem:[%s1026 + $0xdd0] sm:$0xff]
                  %1471 = vst [vmem:[%s1027 + $0x6e8] sm:$0xff] %v1470
                  %v1472 = vld [vmem:[%s1026 + $0xde0] sm:$0xff]
                  %1473 = vst [vmem:[%s1027 + $0x6f0] sm:$0xff] %v1472
                  %v1474 = vld [vmem:[%s1026 + $0xdf0] sm:$0xff]
                  %1475 = vst [vmem:[%s1027 + $0x6f8] sm:$0xff] %v1474
                  %v1476 = vld [vmem:[%s1026 + $0xe00] sm:$0xff]
                  %1477 = vst [vmem:[%s1027 + $0x700] sm:$0xff] %v1476
                  %v1478 = vld [vmem:[%s1026 + $0xe10] sm:$0xff]
                  %1479 = vst [vmem:[%s1027 + $0x708] sm:$0xff] %v1478
                  %v1480 = vld [vmem:[%s1026 + $0xe20] sm:$0xff]
                  %1481 = vst [vmem:[%s1027 + $0x710] sm:$0xff] %v1480
                  %v1482 = vld [vmem:[%s1026 + $0xe30] sm:$0xff]
                  %1483 = vst [vmem:[%s1027 + $0x718] sm:$0xff] %v1482
                  %v1484 = vld [vmem:[%s1026 + $0xe40] sm:$0xff]
                  %1485 = vst [vmem:[%s1027 + $0x720] sm:$0xff] %v1484
                  %v1486 = vld [vmem:[%s1026 + $0xe50] sm:$0xff]
                  %1487 = vst [vmem:[%s1027 + $0x728] sm:$0xff] %v1486
                  %v1488 = vld [vmem:[%s1026 + $0xe60] sm:$0xff]
                  %1489 = vst [vmem:[%s1027 + $0x730] sm:$0xff] %v1488
                  %v1490 = vld [vmem:[%s1026 + $0xe70] sm:$0xff]
                  %1491 = vst [vmem:[%s1027 + $0x738] sm:$0xff] %v1490
                  %v1492 = vld [vmem:[%s1026 + $0xe80] sm:$0xff]
                  %1493 = vst [vmem:[%s1027 + $0x740] sm:$0xff] %v1492
                  %v1494 = vld [vmem:[%s1026 + $0xe90] sm:$0xff]
                  %1495 = vst [vmem:[%s1027 + $0x748] sm:$0xff] %v1494
                  %v1496 = vld [vmem:[%s1026 + $0xea0] sm:$0xff]
                  %1497 = vst [vmem:[%s1027 + $0x750] sm:$0xff] %v1496
                  %v1498 = vld [vmem:[%s1026 + $0xeb0] sm:$0xff]
                  %1499 = vst [vmem:[%s1027 + $0x758] sm:$0xff] %v1498
                  %v1500 = vld [vmem:[%s1026 + $0xec0] sm:$0xff]
                  %1501 = vst [vmem:[%s1027 + $0x760] sm:$0xff] %v1500
                  %v1502 = vld [vmem:[%s1026 + $0xed0] sm:$0xff]
                  %1503 = vst [vmem:[%s1027 + $0x768] sm:$0xff] %v1502
                  %v1504 = vld [vmem:[%s1026 + $0xee0] sm:$0xff]
                  %1505 = vst [vmem:[%s1027 + $0x770] sm:$0xff] %v1504
                  %v1506 = vld [vmem:[%s1026 + $0xef0] sm:$0xff]
                  %1507 = vst [vmem:[%s1027 + $0x778] sm:$0xff] %v1506
                  %v1508 = vld [vmem:[%s1026 + $0xf00] sm:$0xff]
                  %1509 = vst [vmem:[%s1027 + $0x780] sm:$0xff] %v1508
                  %v1510 = vld [vmem:[%s1026 + $0xf10] sm:$0xff]
                  %1511 = vst [vmem:[%s1027 + $0x788] sm:$0xff] %v1510
                  %v1512 = vld [vmem:[%s1026 + $0xf20] sm:$0xff]
                  %1513 = vst [vmem:[%s1027 + $0x790] sm:$0xff] %v1512
                  %v1514 = vld [vmem:[%s1026 + $0xf30] sm:$0xff]
                  %1515 = vst [vmem:[%s1027 + $0x798] sm:$0xff] %v1514
                  %v1516 = vld [vmem:[%s1026 + $0xf40] sm:$0xff]
                  %1517 = vst [vmem:[%s1027 + $0x7a0] sm:$0xff] %v1516
                  %v1518 = vld [vmem:[%s1026 + $0xf50] sm:$0xff]
                  %1519 = vst [vmem:[%s1027 + $0x7a8] sm:$0xff] %v1518
                  %v1520 = vld [vmem:[%s1026 + $0xf60] sm:$0xff]
                  %1521 = vst [vmem:[%s1027 + $0x7b0] sm:$0xff] %v1520
                  %v1522 = vld [vmem:[%s1026 + $0xf70] sm:$0xff]
                  %1523 = vst [vmem:[%s1027 + $0x7b8] sm:$0xff] %v1522
                  %v1524 = vld [vmem:[%s1026 + $0xf80] sm:$0xff]
                  %1525 = vst [vmem:[%s1027 + $0x7c0] sm:$0xff] %v1524
                  %v1526 = vld [vmem:[%s1026 + $0xf90] sm:$0xff]
                  %1527 = vst [vmem:[%s1027 + $0x7c8] sm:$0xff] %v1526
                  %v1528 = vld [vmem:[%s1026 + $0xfa0] sm:$0xff]
                  %1529 = vst [vmem:[%s1027 + $0x7d0] sm:$0xff] %v1528
                  %v1530 = vld [vmem:[%s1026 + $0xfb0] sm:$0xff]
                  %1531 = vst [vmem:[%s1027 + $0x7d8] sm:$0xff] %v1530
                  %v1532 = vld [vmem:[%s1026 + $0xfc0] sm:$0xff]
                  %1533 = vst [vmem:[%s1027 + $0x7e0] sm:$0xff] %v1532
                  %v1534 = vld [vmem:[%s1026 + $0xfd0] sm:$0xff]
                  %1535 = vst [vmem:[%s1027 + $0x7e8] sm:$0xff] %v1534
                  %v1536 = vld [vmem:[%s1026 + $0xfe0] sm:$0xff]
                  %1537 = vst [vmem:[%s1027 + $0x7f0] sm:$0xff] %v1536
                  %v1538 = vld [vmem:[%s1026 + $0xff0] sm:$0xff]
                  %1539 = vst [vmem:[%s1027 + $0x7f8] sm:$0xff] %v1538
                  %v1540 = vld [vmem:[%s1026 + $0x1000] sm:$0xff]
                  %1541 = vst [vmem:[%s1027 + $0x800] sm:$0xff] %v1540
                  %v1542 = vld [vmem:[%s1026 + $0x1010] sm:$0xff]
                  %1543 = vst [vmem:[%s1027 + $0x808] sm:$0xff] %v1542
                  %v1544 = vld [vmem:[%s1026 + $0x1020] sm:$0xff]
                  %1545 = vst [vmem:[%s1027 + $0x810] sm:$0xff] %v1544
                  %v1546 = vld [vmem:[%s1026 + $0x1030] sm:$0xff]
                  %1547 = vst [vmem:[%s1027 + $0x818] sm:$0xff] %v1546
                  %v1548 = vld [vmem:[%s1026 + $0x1040] sm:$0xff]
                  %1549 = vst [vmem:[%s1027 + $0x820] sm:$0xff] %v1548
                  %v1550 = vld [vmem:[%s1026 + $0x1050] sm:$0xff]
                  %1551 = vst [vmem:[%s1027 + $0x828] sm:$0xff] %v1550
                  %v1552 = vld [vmem:[%s1026 + $0x1060] sm:$0xff]
                  %1553 = vst [vmem:[%s1027 + $0x830] sm:$0xff] %v1552
                  %v1554 = vld [vmem:[%s1026 + $0x1070] sm:$0xff]
                  %1555 = vst [vmem:[%s1027 + $0x838] sm:$0xff] %v1554
                  %v1556 = vld [vmem:[%s1026 + $0x1080] sm:$0xff]
                  %1557 = vst [vmem:[%s1027 + $0x840] sm:$0xff] %v1556
                  %v1558 = vld [vmem:[%s1026 + $0x1090] sm:$0xff]
                  %1559 = vst [vmem:[%s1027 + $0x848] sm:$0xff] %v1558
                  %v1560 = vld [vmem:[%s1026 + $0x10a0] sm:$0xff]
                  %1561 = vst [vmem:[%s1027 + $0x850] sm:$0xff] %v1560
                  %v1562 = vld [vmem:[%s1026 + $0x10b0] sm:$0xff]
                  %1563 = vst [vmem:[%s1027 + $0x858] sm:$0xff] %v1562
                  %v1564 = vld [vmem:[%s1026 + $0x10c0] sm:$0xff]
                  %1565 = vst [vmem:[%s1027 + $0x860] sm:$0xff] %v1564
                  %v1566 = vld [vmem:[%s1026 + $0x10d0] sm:$0xff]
                  %1567 = vst [vmem:[%s1027 + $0x868] sm:$0xff] %v1566
                  %v1568 = vld [vmem:[%s1026 + $0x10e0] sm:$0xff]
                  %1569 = vst [vmem:[%s1027 + $0x870] sm:$0xff] %v1568
                  %v1570 = vld [vmem:[%s1026 + $0x10f0] sm:$0xff]
                  %1571 = vst [vmem:[%s1027 + $0x878] sm:$0xff] %v1570
                  %v1572 = vld [vmem:[%s1026 + $0x1100] sm:$0xff]
                  %1573 = vst [vmem:[%s1027 + $0x880] sm:$0xff] %v1572
                  %v1574 = vld [vmem:[%s1026 + $0x1110] sm:$0xff]
                  %1575 = vst [vmem:[%s1027 + $0x888] sm:$0xff] %v1574
                  %v1576 = vld [vmem:[%s1026 + $0x1120] sm:$0xff]
                  %1577 = vst [vmem:[%s1027 + $0x890] sm:$0xff] %v1576
                  %v1578 = vld [vmem:[%s1026 + $0x1130] sm:$0xff]
                  %1579 = vst [vmem:[%s1027 + $0x898] sm:$0xff] %v1578
                  %v1580 = vld [vmem:[%s1026 + $0x1140] sm:$0xff]
                  %1581 = vst [vmem:[%s1027 + $0x8a0] sm:$0xff] %v1580
                  %v1582 = vld [vmem:[%s1026 + $0x1150] sm:$0xff]
                  %1583 = vst [vmem:[%s1027 + $0x8a8] sm:$0xff] %v1582
                  %v1584 = vld [vmem:[%s1026 + $0x1160] sm:$0xff]
                  %1585 = vst [vmem:[%s1027 + $0x8b0] sm:$0xff] %v1584
                  %v1586 = vld [vmem:[%s1026 + $0x1170] sm:$0xff]
                  %1587 = vst [vmem:[%s1027 + $0x8b8] sm:$0xff] %v1586
                  %v1588 = vld [vmem:[%s1026 + $0x1180] sm:$0xff]
                  %1589 = vst [vmem:[%s1027 + $0x8c0] sm:$0xff] %v1588
                  %v1590 = vld [vmem:[%s1026 + $0x1190] sm:$0xff]
                  %1591 = vst [vmem:[%s1027 + $0x8c8] sm:$0xff] %v1590
                  %v1592 = vld [vmem:[%s1026 + $0x11a0] sm:$0xff]
                  %1593 = vst [vmem:[%s1027 + $0x8d0] sm:$0xff] %v1592
                  %v1594 = vld [vmem:[%s1026 + $0x11b0] sm:$0xff]
                  %1595 = vst [vmem:[%s1027 + $0x8d8] sm:$0xff] %v1594
                  %v1596 = vld [vmem:[%s1026 + $0x11c0] sm:$0xff]
                  %1597 = vst [vmem:[%s1027 + $0x8e0] sm:$0xff] %v1596
                  %v1598 = vld [vmem:[%s1026 + $0x11d0] sm:$0xff]
                  %1599 = vst [vmem:[%s1027 + $0x8e8] sm:$0xff] %v1598
                  %v1600 = vld [vmem:[%s1026 + $0x11e0] sm:$0xff]
                  %1601 = vst [vmem:[%s1027 + $0x8f0] sm:$0xff] %v1600
                  %v1602 = vld [vmem:[%s1026 + $0x11f0] sm:$0xff]
                  %1603 = vst [vmem:[%s1027 + $0x8f8] sm:$0xff] %v1602
                  %v1604 = vld [vmem:[%s1026 + $0x1200] sm:$0xff]
                  %1605 = vst [vmem:[%s1027 + $0x900] sm:$0xff] %v1604
                  %v1606 = vld [vmem:[%s1026 + $0x1210] sm:$0xff]
                  %1607 = vst [vmem:[%s1027 + $0x908] sm:$0xff] %v1606
                  %v1608 = vld [vmem:[%s1026 + $0x1220] sm:$0xff]
                  %1609 = vst [vmem:[%s1027 + $0x910] sm:$0xff] %v1608
                  %v1610 = vld [vmem:[%s1026 + $0x1230] sm:$0xff]
                  %1611 = vst [vmem:[%s1027 + $0x918] sm:$0xff] %v1610
                  %v1612 = vld [vmem:[%s1026 + $0x1240] sm:$0xff]
                  %1613 = vst [vmem:[%s1027 + $0x920] sm:$0xff] %v1612
                  %v1614 = vld [vmem:[%s1026 + $0x1250] sm:$0xff]
                  %1615 = vst [vmem:[%s1027 + $0x928] sm:$0xff] %v1614
                  %v1616 = vld [vmem:[%s1026 + $0x1260] sm:$0xff]
                  %1617 = vst [vmem:[%s1027 + $0x930] sm:$0xff] %v1616
                  %v1618 = vld [vmem:[%s1026 + $0x1270] sm:$0xff]
                  %1619 = vst [vmem:[%s1027 + $0x938] sm:$0xff] %v1618
                  %v1620 = vld [vmem:[%s1026 + $0x1280] sm:$0xff]
                  %1621 = vst [vmem:[%s1027 + $0x940] sm:$0xff] %v1620
                  %v1622 = vld [vmem:[%s1026 + $0x1290] sm:$0xff]
                  %1623 = vst [vmem:[%s1027 + $0x948] sm:$0xff] %v1622
                  %v1624 = vld [vmem:[%s1026 + $0x12a0] sm:$0xff]
                  %1625 = vst [vmem:[%s1027 + $0x950] sm:$0xff] %v1624
                  %v1626 = vld [vmem:[%s1026 + $0x12b0] sm:$0xff]
                  %1627 = vst [vmem:[%s1027 + $0x958] sm:$0xff] %v1626
                  %v1628 = vld [vmem:[%s1026 + $0x12c0] sm:$0xff]
                  %1629 = vst [vmem:[%s1027 + $0x960] sm:$0xff] %v1628
                  %v1630 = vld [vmem:[%s1026 + $0x12d0] sm:$0xff]
                  %1631 = vst [vmem:[%s1027 + $0x968] sm:$0xff] %v1630
                  %v1632 = vld [vmem:[%s1026 + $0x12e0] sm:$0xff]
                  %1633 = vst [vmem:[%s1027 + $0x970] sm:$0xff] %v1632
                  %v1634 = vld [vmem:[%s1026 + $0x12f0] sm:$0xff]
                  %1635 = vst [vmem:[%s1027 + $0x978] sm:$0xff] %v1634
                  %v1636 = vld [vmem:[%s1026 + $0x1300] sm:$0xff]
                  %1637 = vst [vmem:[%s1027 + $0x980] sm:$0xff] %v1636
                  %v1638 = vld [vmem:[%s1026 + $0x1310] sm:$0xff]
                  %1639 = vst [vmem:[%s1027 + $0x988] sm:$0xff] %v1638
                  %v1640 = vld [vmem:[%s1026 + $0x1320] sm:$0xff]
                  %1641 = vst [vmem:[%s1027 + $0x990] sm:$0xff] %v1640
                  %v1642 = vld [vmem:[%s1026 + $0x1330] sm:$0xff]
                  %1643 = vst [vmem:[%s1027 + $0x998] sm:$0xff] %v1642
                  %v1644 = vld [vmem:[%s1026 + $0x1340] sm:$0xff]
                  %1645 = vst [vmem:[%s1027 + $0x9a0] sm:$0xff] %v1644
                  %v1646 = vld [vmem:[%s1026 + $0x1350] sm:$0xff]
                  %1647 = vst [vmem:[%s1027 + $0x9a8] sm:$0xff] %v1646
                  %v1648 = vld [vmem:[%s1026 + $0x1360] sm:$0xff]
                  %1649 = vst [vmem:[%s1027 + $0x9b0] sm:$0xff] %v1648
                  %v1650 = vld [vmem:[%s1026 + $0x1370] sm:$0xff]
                  %1651 = vst [vmem:[%s1027 + $0x9b8] sm:$0xff] %v1650
                  %v1652 = vld [vmem:[%s1026 + $0x1380] sm:$0xff]
                  %1653 = vst [vmem:[%s1027 + $0x9c0] sm:$0xff] %v1652
                  %v1654 = vld [vmem:[%s1026 + $0x1390] sm:$0xff]
                  %1655 = vst [vmem:[%s1027 + $0x9c8] sm:$0xff] %v1654
                  %v1656 = vld [vmem:[%s1026 + $0x13a0] sm:$0xff]
                  %1657 = vst [vmem:[%s1027 + $0x9d0] sm:$0xff] %v1656
                  %v1658 = vld [vmem:[%s1026 + $0x13b0] sm:$0xff]
                  %1659 = vst [vmem:[%s1027 + $0x9d8] sm:$0xff] %v1658
                  %v1660 = vld [vmem:[%s1026 + $0x13c0] sm:$0xff]
                  %1661 = vst [vmem:[%s1027 + $0x9e0] sm:$0xff] %v1660
                  %v1662 = vld [vmem:[%s1026 + $0x13d0] sm:$0xff]
                  %1663 = vst [vmem:[%s1027 + $0x9e8] sm:$0xff] %v1662
                  %v1664 = vld [vmem:[%s1026 + $0x13e0] sm:$0xff]
                  %1665 = vst [vmem:[%s1027 + $0x9f0] sm:$0xff] %v1664
                  %v1666 = vld [vmem:[%s1026 + $0x13f0] sm:$0xff]
                  %1667 = vst [vmem:[%s1027 + $0x9f8] sm:$0xff] %v1666
                  %v1668 = vld [vmem:[%s1026 + $0x1400] sm:$0xff]
                  %1669 = vst [vmem:[%s1027 + $0xa00] sm:$0xff] %v1668
                  %v1670 = vld [vmem:[%s1026 + $0x1410] sm:$0xff]
                  %1671 = vst [vmem:[%s1027 + $0xa08] sm:$0xff] %v1670
                  %v1672 = vld [vmem:[%s1026 + $0x1420] sm:$0xff]
                  %1673 = vst [vmem:[%s1027 + $0xa10] sm:$0xff] %v1672
                  %v1674 = vld [vmem:[%s1026 + $0x1430] sm:$0xff]
                  %1675 = vst [vmem:[%s1027 + $0xa18] sm:$0xff] %v1674
                  %v1676 = vld [vmem:[%s1026 + $0x1440] sm:$0xff]
                  %1677 = vst [vmem:[%s1027 + $0xa20] sm:$0xff] %v1676
                  %v1678 = vld [vmem:[%s1026 + $0x1450] sm:$0xff]
                  %1679 = vst [vmem:[%s1027 + $0xa28] sm:$0xff] %v1678
                  %v1680 = vld [vmem:[%s1026 + $0x1460] sm:$0xff]
                  %1681 = vst [vmem:[%s1027 + $0xa30] sm:$0xff] %v1680
                  %v1682 = vld [vmem:[%s1026 + $0x1470] sm:$0xff]
                  %1683 = vst [vmem:[%s1027 + $0xa38] sm:$0xff] %v1682
                  %v1684 = vld [vmem:[%s1026 + $0x1480] sm:$0xff]
                  %1685 = vst [vmem:[%s1027 + $0xa40] sm:$0xff] %v1684
                  %v1686 = vld [vmem:[%s1026 + $0x1490] sm:$0xff]
                  %1687 = vst [vmem:[%s1027 + $0xa48] sm:$0xff] %v1686
                  %v1688 = vld [vmem:[%s1026 + $0x14a0] sm:$0xff]
                  %1689 = vst [vmem:[%s1027 + $0xa50] sm:$0xff] %v1688
                  %v1690 = vld [vmem:[%s1026 + $0x14b0] sm:$0xff]
                  %1691 = vst [vmem:[%s1027 + $0xa58] sm:$0xff] %v1690
                  %v1692 = vld [vmem:[%s1026 + $0x14c0] sm:$0xff]
                  %1693 = vst [vmem:[%s1027 + $0xa60] sm:$0xff] %v1692
                  %v1694 = vld [vmem:[%s1026 + $0x14d0] sm:$0xff]
                  %1695 = vst [vmem:[%s1027 + $0xa68] sm:$0xff] %v1694
                  %v1696 = vld [vmem:[%s1026 + $0x14e0] sm:$0xff]
                  %1697 = vst [vmem:[%s1027 + $0xa70] sm:$0xff] %v1696
                  %v1698 = vld [vmem:[%s1026 + $0x14f0] sm:$0xff]
                  %1699 = vst [vmem:[%s1027 + $0xa78] sm:$0xff] %v1698
                  %v1700 = vld [vmem:[%s1026 + $0x1500] sm:$0xff]
                  %1701 = vst [vmem:[%s1027 + $0xa80] sm:$0xff] %v1700
                  %v1702 = vld [vmem:[%s1026 + $0x1510] sm:$0xff]
                  %1703 = vst [vmem:[%s1027 + $0xa88] sm:$0xff] %v1702
                  %v1704 = vld [vmem:[%s1026 + $0x1520] sm:$0xff]
                  %1705 = vst [vmem:[%s1027 + $0xa90] sm:$0xff] %v1704
                  %v1706 = vld [vmem:[%s1026 + $0x1530] sm:$0xff]
                  %1707 = vst [vmem:[%s1027 + $0xa98] sm:$0xff] %v1706
                  %v1708 = vld [vmem:[%s1026 + $0x1540] sm:$0xff]
                  %1709 = vst [vmem:[%s1027 + $0xaa0] sm:$0xff] %v1708
                  %v1710 = vld [vmem:[%s1026 + $0x1550] sm:$0xff]
                  %1711 = vst [vmem:[%s1027 + $0xaa8] sm:$0xff] %v1710
                  %v1712 = vld [vmem:[%s1026 + $0x1560] sm:$0xff]
                  %1713 = vst [vmem:[%s1027 + $0xab0] sm:$0xff] %v1712
                  %v1714 = vld [vmem:[%s1026 + $0x1570] sm:$0xff]
                  %1715 = vst [vmem:[%s1027 + $0xab8] sm:$0xff] %v1714
                  %v1716 = vld [vmem:[%s1026 + $0x1580] sm:$0xff]
                  %1717 = vst [vmem:[%s1027 + $0xac0] sm:$0xff] %v1716
                  %v1718 = vld [vmem:[%s1026 + $0x1590] sm:$0xff]
                  %1719 = vst [vmem:[%s1027 + $0xac8] sm:$0xff] %v1718
                  %v1720 = vld [vmem:[%s1026 + $0x15a0] sm:$0xff]
                  %1721 = vst [vmem:[%s1027 + $0xad0] sm:$0xff] %v1720
                  %v1722 = vld [vmem:[%s1026 + $0x15b0] sm:$0xff]
                  %1723 = vst [vmem:[%s1027 + $0xad8] sm:$0xff] %v1722
                  %v1724 = vld [vmem:[%s1026 + $0x15c0] sm:$0xff]
                  %1725 = vst [vmem:[%s1027 + $0xae0] sm:$0xff] %v1724
                  %v1726 = vld [vmem:[%s1026 + $0x15d0] sm:$0xff]
                  %1727 = vst [vmem:[%s1027 + $0xae8] sm:$0xff] %v1726
                  %v1728 = vld [vmem:[%s1026 + $0x15e0] sm:$0xff]
                  %1729 = vst [vmem:[%s1027 + $0xaf0] sm:$0xff] %v1728
                  %v1730 = vld [vmem:[%s1026 + $0x15f0] sm:$0xff]
                  %1731 = vst [vmem:[%s1027 + $0xaf8] sm:$0xff] %v1730
                  %v1732 = vld [vmem:[%s1026 + $0x1600] sm:$0xff]
                  %1733 = vst [vmem:[%s1027 + $0xb00] sm:$0xff] %v1732
                  %v1734 = vld [vmem:[%s1026 + $0x1610] sm:$0xff]
                  %1735 = vst [vmem:[%s1027 + $0xb08] sm:$0xff] %v1734
                  %v1736 = vld [vmem:[%s1026 + $0x1620] sm:$0xff]
                  %1737 = vst [vmem:[%s1027 + $0xb10] sm:$0xff] %v1736
                  %v1738 = vld [vmem:[%s1026 + $0x1630] sm:$0xff]
                  %1739 = vst [vmem:[%s1027 + $0xb18] sm:$0xff] %v1738
                  %v1740 = vld [vmem:[%s1026 + $0x1640] sm:$0xff]
                  %1741 = vst [vmem:[%s1027 + $0xb20] sm:$0xff] %v1740
                  %v1742 = vld [vmem:[%s1026 + $0x1650] sm:$0xff]
                  %1743 = vst [vmem:[%s1027 + $0xb28] sm:$0xff] %v1742
                  %v1744 = vld [vmem:[%s1026 + $0x1660] sm:$0xff]
                  %1745 = vst [vmem:[%s1027 + $0xb30] sm:$0xff] %v1744
                  %v1746 = vld [vmem:[%s1026 + $0x1670] sm:$0xff]
                  %1747 = vst [vmem:[%s1027 + $0xb38] sm:$0xff] %v1746
                  %v1748 = vld [vmem:[%s1026 + $0x1680] sm:$0xff]
                  %1749 = vst [vmem:[%s1027 + $0xb40] sm:$0xff] %v1748
                  %v1750 = vld [vmem:[%s1026 + $0x1690] sm:$0xff]
                  %1751 = vst [vmem:[%s1027 + $0xb48] sm:$0xff] %v1750
                  %v1752 = vld [vmem:[%s1026 + $0x16a0] sm:$0xff]
                  %1753 = vst [vmem:[%s1027 + $0xb50] sm:$0xff] %v1752
                  %v1754 = vld [vmem:[%s1026 + $0x16b0] sm:$0xff]
                  %1755 = vst [vmem:[%s1027 + $0xb58] sm:$0xff] %v1754
                  %v1756 = vld [vmem:[%s1026 + $0x16c0] sm:$0xff]
                  %1757 = vst [vmem:[%s1027 + $0xb60] sm:$0xff] %v1756
                  %v1758 = vld [vmem:[%s1026 + $0x16d0] sm:$0xff]
                  %1759 = vst [vmem:[%s1027 + $0xb68] sm:$0xff] %v1758
                  %v1760 = vld [vmem:[%s1026 + $0x16e0] sm:$0xff]
                  %1761 = vst [vmem:[%s1027 + $0xb70] sm:$0xff] %v1760
                  %v1762 = vld [vmem:[%s1026 + $0x16f0] sm:$0xff]
                  %1763 = vst [vmem:[%s1027 + $0xb78] sm:$0xff] %v1762
                  %v1764 = vld [vmem:[%s1026 + $0x1700] sm:$0xff]
                  %1765 = vst [vmem:[%s1027 + $0xb80] sm:$0xff] %v1764
                  %v1766 = vld [vmem:[%s1026 + $0x1710] sm:$0xff]
                  %1767 = vst [vmem:[%s1027 + $0xb88] sm:$0xff] %v1766
                  %v1768 = vld [vmem:[%s1026 + $0x1720] sm:$0xff]
                  %1769 = vst [vmem:[%s1027 + $0xb90] sm:$0xff] %v1768
                  %v1770 = vld [vmem:[%s1026 + $0x1730] sm:$0xff]
                  %1771 = vst [vmem:[%s1027 + $0xb98] sm:$0xff] %v1770
                  %v1772 = vld [vmem:[%s1026 + $0x1740] sm:$0xff]
                  %1773 = vst [vmem:[%s1027 + $0xba0] sm:$0xff] %v1772
                  %v1774 = vld [vmem:[%s1026 + $0x1750] sm:$0xff]
                  %1775 = vst [vmem:[%s1027 + $0xba8] sm:$0xff] %v1774
                  %v1776 = vld [vmem:[%s1026 + $0x1760] sm:$0xff]
                  %1777 = vst [vmem:[%s1027 + $0xbb0] sm:$0xff] %v1776
                  %v1778 = vld [vmem:[%s1026 + $0x1770] sm:$0xff]
                  %1779 = vst [vmem:[%s1027 + $0xbb8] sm:$0xff] %v1778
                  %v1780 = vld [vmem:[%s1026 + $0x1780] sm:$0xff]
                  %1781 = vst [vmem:[%s1027 + $0xbc0] sm:$0xff] %v1780
                  %v1782 = vld [vmem:[%s1026 + $0x1790] sm:$0xff]
                  %1783 = vst [vmem:[%s1027 + $0xbc8] sm:$0xff] %v1782
                  %v1784 = vld [vmem:[%s1026 + $0x17a0] sm:$0xff]
                  %1785 = vst [vmem:[%s1027 + $0xbd0] sm:$0xff] %v1784
                  %v1786 = vld [vmem:[%s1026 + $0x17b0] sm:$0xff]
                  %1787 = vst [vmem:[%s1027 + $0xbd8] sm:$0xff] %v1786
                  %v1788 = vld [vmem:[%s1026 + $0x17c0] sm:$0xff]
                  %1789 = vst [vmem:[%s1027 + $0xbe0] sm:$0xff] %v1788
                  %v1790 = vld [vmem:[%s1026 + $0x17d0] sm:$0xff]
                  %1791 = vst [vmem:[%s1027 + $0xbe8] sm:$0xff] %v1790
                  %v1792 = vld [vmem:[%s1026 + $0x17e0] sm:$0xff]
                  %1793 = vst [vmem:[%s1027 + $0xbf0] sm:$0xff] %v1792
                  %v1794 = vld [vmem:[%s1026 + $0x17f0] sm:$0xff]
                  %1795 = vst [vmem:[%s1027 + $0xbf8] sm:$0xff] %v1794
                  %v1796 = vld [vmem:[%s1026 + $0x1800] sm:$0xff]
                  %1797 = vst [vmem:[%s1027 + $0xc00] sm:$0xff] %v1796
                  %v1798 = vld [vmem:[%s1026 + $0x1810] sm:$0xff]
                  %1799 = vst [vmem:[%s1027 + $0xc08] sm:$0xff] %v1798
                  %v1800 = vld [vmem:[%s1026 + $0x1820] sm:$0xff]
                  %1801 = vst [vmem:[%s1027 + $0xc10] sm:$0xff] %v1800
                  %v1802 = vld [vmem:[%s1026 + $0x1830] sm:$0xff]
                  %1803 = vst [vmem:[%s1027 + $0xc18] sm:$0xff] %v1802
                  %v1804 = vld [vmem:[%s1026 + $0x1840] sm:$0xff]
                  %1805 = vst [vmem:[%s1027 + $0xc20] sm:$0xff] %v1804
                  %v1806 = vld [vmem:[%s1026 + $0x1850] sm:$0xff]
                  %1807 = vst [vmem:[%s1027 + $0xc28] sm:$0xff] %v1806
                  %v1808 = vld [vmem:[%s1026 + $0x1860] sm:$0xff]
                  %1809 = vst [vmem:[%s1027 + $0xc30] sm:$0xff] %v1808
                  %v1810 = vld [vmem:[%s1026 + $0x1870] sm:$0xff]
                  %1811 = vst [vmem:[%s1027 + $0xc38] sm:$0xff] %v1810
                  %v1812 = vld [vmem:[%s1026 + $0x1880] sm:$0xff]
                  %1813 = vst [vmem:[%s1027 + $0xc40] sm:$0xff] %v1812
                  %v1814 = vld [vmem:[%s1026 + $0x1890] sm:$0xff]
                  %1815 = vst [vmem:[%s1027 + $0xc48] sm:$0xff] %v1814
                  %v1816 = vld [vmem:[%s1026 + $0x18a0] sm:$0xff]
                  %1817 = vst [vmem:[%s1027 + $0xc50] sm:$0xff] %v1816
                  %v1818 = vld [vmem:[%s1026 + $0x18b0] sm:$0xff]
                  %1819 = vst [vmem:[%s1027 + $0xc58] sm:$0xff] %v1818
                  %v1820 = vld [vmem:[%s1026 + $0x18c0] sm:$0xff]
                  %1821 = vst [vmem:[%s1027 + $0xc60] sm:$0xff] %v1820
                  %v1822 = vld [vmem:[%s1026 + $0x18d0] sm:$0xff]
                  %1823 = vst [vmem:[%s1027 + $0xc68] sm:$0xff] %v1822
                  %v1824 = vld [vmem:[%s1026 + $0x18e0] sm:$0xff]
                  %1825 = vst [vmem:[%s1027 + $0xc70] sm:$0xff] %v1824
                  %v1826 = vld [vmem:[%s1026 + $0x18f0] sm:$0xff]
                  %1827 = vst [vmem:[%s1027 + $0xc78] sm:$0xff] %v1826
                  %v1828 = vld [vmem:[%s1026 + $0x1900] sm:$0xff]
                  %1829 = vst [vmem:[%s1027 + $0xc80] sm:$0xff] %v1828
                  %v1830 = vld [vmem:[%s1026 + $0x1910] sm:$0xff]
                  %1831 = vst [vmem:[%s1027 + $0xc88] sm:$0xff] %v1830
                  %v1832 = vld [vmem:[%s1026 + $0x1920] sm:$0xff]
                  %1833 = vst [vmem:[%s1027 + $0xc90] sm:$0xff] %v1832
                  %v1834 = vld [vmem:[%s1026 + $0x1930] sm:$0xff]
                  %1835 = vst [vmem:[%s1027 + $0xc98] sm:$0xff] %v1834
                  %v1836 = vld [vmem:[%s1026 + $0x1940] sm:$0xff]
                  %1837 = vst [vmem:[%s1027 + $0xca0] sm:$0xff] %v1836
                  %v1838 = vld [vmem:[%s1026 + $0x1950] sm:$0xff]
                  %1839 = vst [vmem:[%s1027 + $0xca8] sm:$0xff] %v1838
                  %v1840 = vld [vmem:[%s1026 + $0x1960] sm:$0xff]
                  %1841 = vst [vmem:[%s1027 + $0xcb0] sm:$0xff] %v1840
                  %v1842 = vld [vmem:[%s1026 + $0x1970] sm:$0xff]
                  %1843 = vst [vmem:[%s1027 + $0xcb8] sm:$0xff] %v1842
                  %v1844 = vld [vmem:[%s1026 + $0x1980] sm:$0xff]
                  %1845 = vst [vmem:[%s1027 + $0xcc0] sm:$0xff] %v1844
                  %v1846 = vld [vmem:[%s1026 + $0x1990] sm:$0xff]
                  %1847 = vst [vmem:[%s1027 + $0xcc8] sm:$0xff] %v1846
                  %v1848 = vld [vmem:[%s1026 + $0x19a0] sm:$0xff]
                  %1849 = vst [vmem:[%s1027 + $0xcd0] sm:$0xff] %v1848
                  %v1850 = vld [vmem:[%s1026 + $0x19b0] sm:$0xff]
                  %1851 = vst [vmem:[%s1027 + $0xcd8] sm:$0xff] %v1850
                  %v1852 = vld [vmem:[%s1026 + $0x19c0] sm:$0xff]
                  %1853 = vst [vmem:[%s1027 + $0xce0] sm:$0xff] %v1852
                  %v1854 = vld [vmem:[%s1026 + $0x19d0] sm:$0xff]
                  %1855 = vst [vmem:[%s1027 + $0xce8] sm:$0xff] %v1854
                  %v1856 = vld [vmem:[%s1026 + $0x19e0] sm:$0xff]
                  %1857 = vst [vmem:[%s1027 + $0xcf0] sm:$0xff] %v1856
                  %v1858 = vld [vmem:[%s1026 + $0x19f0] sm:$0xff]
                  %1859 = vst [vmem:[%s1027 + $0xcf8] sm:$0xff] %v1858
                  %v1860 = vld [vmem:[%s1026 + $0x1a00] sm:$0xff]
                  %1861 = vst [vmem:[%s1027 + $0xd00] sm:$0xff] %v1860
                  %v1862 = vld [vmem:[%s1026 + $0x1a10] sm:$0xff]
                  %1863 = vst [vmem:[%s1027 + $0xd08] sm:$0xff] %v1862
                  %v1864 = vld [vmem:[%s1026 + $0x1a20] sm:$0xff]
                  %1865 = vst [vmem:[%s1027 + $0xd10] sm:$0xff] %v1864
                  %v1866 = vld [vmem:[%s1026 + $0x1a30] sm:$0xff]
                  %1867 = vst [vmem:[%s1027 + $0xd18] sm:$0xff] %v1866
                  %v1868 = vld [vmem:[%s1026 + $0x1a40] sm:$0xff]
                  %1869 = vst [vmem:[%s1027 + $0xd20] sm:$0xff] %v1868
                  %v1870 = vld [vmem:[%s1026 + $0x1a50] sm:$0xff]
                  %1871 = vst [vmem:[%s1027 + $0xd28] sm:$0xff] %v1870
                  %v1872 = vld [vmem:[%s1026 + $0x1a60] sm:$0xff]
                  %1873 = vst [vmem:[%s1027 + $0xd30] sm:$0xff] %v1872
                  %v1874 = vld [vmem:[%s1026 + $0x1a70] sm:$0xff]
                  %1875 = vst [vmem:[%s1027 + $0xd38] sm:$0xff] %v1874
                  %v1876 = vld [vmem:[%s1026 + $0x1a80] sm:$0xff]
                  %1877 = vst [vmem:[%s1027 + $0xd40] sm:$0xff] %v1876
                  %v1878 = vld [vmem:[%s1026 + $0x1a90] sm:$0xff]
                  %1879 = vst [vmem:[%s1027 + $0xd48] sm:$0xff] %v1878
                  %v1880 = vld [vmem:[%s1026 + $0x1aa0] sm:$0xff]
                  %1881 = vst [vmem:[%s1027 + $0xd50] sm:$0xff] %v1880
                  %v1882 = vld [vmem:[%s1026 + $0x1ab0] sm:$0xff]
                  %1883 = vst [vmem:[%s1027 + $0xd58] sm:$0xff] %v1882
                  %v1884 = vld [vmem:[%s1026 + $0x1ac0] sm:$0xff]
                  %1885 = vst [vmem:[%s1027 + $0xd60] sm:$0xff] %v1884
                  %v1886 = vld [vmem:[%s1026 + $0x1ad0] sm:$0xff]
                  %1887 = vst [vmem:[%s1027 + $0xd68] sm:$0xff] %v1886
                  %v1888 = vld [vmem:[%s1026 + $0x1ae0] sm:$0xff]
                  %1889 = vst [vmem:[%s1027 + $0xd70] sm:$0xff] %v1888
                  %v1890 = vld [vmem:[%s1026 + $0x1af0] sm:$0xff]
                  %1891 = vst [vmem:[%s1027 + $0xd78] sm:$0xff] %v1890
                $region52: #{sparse_resnet_encoder.9} parent=46 // loop_footer
                  %s1025 = sadd.s32 1, %s1021
                $region53: #{sparse_resnet_encoder.9} parent=46 // loop_footer_branch
                  %1020 = sbr.rel target = $region49
                $region54: #{sparse_resnet_encoder.9} parent=46 // loop_exit
                  _
              $region47: #{sparse_resnet_encoder.9} parent=31 // pred_fallthru
                _
              // Predicated region
              $region55: #{sparse_resnet_encoder.9} parent=31 // pred_check
                _
              $region56: #{sparse_resnet_encoder.9} parent=31 // pred_check_branch
                %1893 = sbr.rel target = $region58
              $region57: #{sparse_resnet_encoder.9} parent=31 // pred_region
                _
              $region58: #{sparse_resnet_encoder.9} parent=31 // pred_fallthru
                _
            $region32: #{sparse_resnet_encoder.9} parent=27 // pred_fallthru
              _
            // Predicated region
            $region33: #{sparse_resnet_encoder.9} parent=27 // pred_check
              _
            $region34: #{sparse_resnet_encoder.9} parent=27 // pred_check_branch
              %144 = sbr.rel target = $region36
            $region35: #{sparse_resnet_encoder.9} parent=27 // pred_region
              loop: start=0, step=1, limit=1
              $region37: #{sparse_resnet_encoder.9} parent=35 // loop_pre_header
                _
              $region38: #{sparse_resnet_encoder.9} parent=35 // loop_header
                %s147 = sphi 0, %s151
                %p148 = scmp.ge.s32.totalorder %s147, 1
                %s152 = sphi %s138, %s138
                %s153 = sphi %s135, %s135
              $region39: #{sparse_resnet_encoder.9} parent=35 // loop_header_branch
                %150 = sbr.rel (%p148) target = $region43
              $region40: #{sparse_resnet_encoder.9} parent=35 // loop_body
                %v154 = vld [vmem:[%s152] sm:$0xff]
                %155 = vst [vmem:[%s153] sm:$0xff] %v154
                %v156 = vld [vmem:[%s152 + $0x10] sm:$0xff]
                %157 = vst [vmem:[%s153 + $0x8] sm:$0xff] %v156
                %v158 = vld [vmem:[%s152 + $0x20] sm:$0xff]
                %159 = vst [vmem:[%s153 + $0x10] sm:$0xff] %v158
                %v160 = vld [vmem:[%s152 + $0x30] sm:$0xff]
                %161 = vst [vmem:[%s153 + $0x18] sm:$0xff] %v160
                %v162 = vld [vmem:[%s152 + $0x40] sm:$0xff]
                %163 = vst [vmem:[%s153 + $0x20] sm:$0xff] %v162
                %v164 = vld [vmem:[%s152 + $0x50] sm:$0xff]
                %165 = vst [vmem:[%s153 + $0x28] sm:$0xff] %v164
                %v166 = vld [vmem:[%s152 + $0x60] sm:$0xff]
                %167 = vst [vmem:[%s153 + $0x30] sm:$0xff] %v166
                %v168 = vld [vmem:[%s152 + $0x70] sm:$0xff]
                %169 = vst [vmem:[%s153 + $0x38] sm:$0xff] %v168
                %v170 = vld [vmem:[%s152 + $0x80] sm:$0xff]
                %171 = vst [vmem:[%s153 + $0x40] sm:$0xff] %v170
                %v172 = vld [vmem:[%s152 + $0x90] sm:$0xff]
                %173 = vst [vmem:[%s153 + $0x48] sm:$0xff] %v172
                %v174 = vld [vmem:[%s152 + $0xa0] sm:$0xff]
                %175 = vst [vmem:[%s153 + $0x50] sm:$0xff] %v174
                %v176 = vld [vmem:[%s152 + $0xb0] sm:$0xff]
                %177 = vst [vmem:[%s153 + $0x58] sm:$0xff] %v176
                %v178 = vld [vmem:[%s152 + $0xc0] sm:$0xff]
                %179 = vst [vmem:[%s153 + $0x60] sm:$0xff] %v178
                %v180 = vld [vmem:[%s152 + $0xd0] sm:$0xff]
                %181 = vst [vmem:[%s153 + $0x68] sm:$0xff] %v180
                %v182 = vld [vmem:[%s152 + $0xe0] sm:$0xff]
                %183 = vst [vmem:[%s153 + $0x70] sm:$0xff] %v182
                %v184 = vld [vmem:[%s152 + $0xf0] sm:$0xff]
                %185 = vst [vmem:[%s153 + $0x78] sm:$0xff] %v184
                %v186 = vld [vmem:[%s152 + $0x100] sm:$0xff]
                %187 = vst [vmem:[%s153 + $0x80] sm:$0xff] %v186
                %v188 = vld [vmem:[%s152 + $0x110] sm:$0xff]
                %189 = vst [vmem:[%s153 + $0x88] sm:$0xff] %v188
                %v190 = vld [vmem:[%s152 + $0x120] sm:$0xff]
                %191 = vst [vmem:[%s153 + $0x90] sm:$0xff] %v190
                %v192 = vld [vmem:[%s152 + $0x130] sm:$0xff]
                %193 = vst [vmem:[%s153 + $0x98] sm:$0xff] %v192
                %v194 = vld [vmem:[%s152 + $0x140] sm:$0xff]
                %195 = vst [vmem:[%s153 + $0xa0] sm:$0xff] %v194
                %v196 = vld [vmem:[%s152 + $0x150] sm:$0xff]
                %197 = vst [vmem:[%s153 + $0xa8] sm:$0xff] %v196
                %v198 = vld [vmem:[%s152 + $0x160] sm:$0xff]
                %199 = vst [vmem:[%s153 + $0xb0] sm:$0xff] %v198
                %v200 = vld [vmem:[%s152 + $0x170] sm:$0xff]
                %201 = vst [vmem:[%s153 + $0xb8] sm:$0xff] %v200
                %v202 = vld [vmem:[%s152 + $0x180] sm:$0xff]
                %203 = vst [vmem:[%s153 + $0xc0] sm:$0xff] %v202
                %v204 = vld [vmem:[%s152 + $0x190] sm:$0xff]
                %205 = vst [vmem:[%s153 + $0xc8] sm:$0xff] %v204
                %v206 = vld [vmem:[%s152 + $0x1a0] sm:$0xff]
                %207 = vst [vmem:[%s153 + $0xd0] sm:$0xff] %v206
                %v208 = vld [vmem:[%s152 + $0x1b0] sm:$0xff]
                %209 = vst [vmem:[%s153 + $0xd8] sm:$0xff] %v208
                %v210 = vld [vmem:[%s152 + $0x1c0] sm:$0xff]
                %211 = vst [vmem:[%s153 + $0xe0] sm:$0xff] %v210
                %v212 = vld [vmem:[%s152 + $0x1d0] sm:$0xff]
                %213 = vst [vmem:[%s153 + $0xe8] sm:$0xff] %v212
                %v214 = vld [vmem:[%s152 + $0x1e0] sm:$0xff]
                %215 = vst [vmem:[%s153 + $0xf0] sm:$0xff] %v214
                %v216 = vld [vmem:[%s152 + $0x1f0] sm:$0xff]
                %217 = vst [vmem:[%s153 + $0xf8] sm:$0xff] %v216
                %v218 = vld [vmem:[%s152 + $0x200] sm:$0xff]
                %219 = vst [vmem:[%s153 + $0x100] sm:$0xff] %v218
                %v220 = vld [vmem:[%s152 + $0x210] sm:$0xff]
                %221 = vst [vmem:[%s153 + $0x108] sm:$0xff] %v220
                %v222 = vld [vmem:[%s152 + $0x220] sm:$0xff]
                %223 = vst [vmem:[%s153 + $0x110] sm:$0xff] %v222
                %v224 = vld [vmem:[%s152 + $0x230] sm:$0xff]
                %225 = vst [vmem:[%s153 + $0x118] sm:$0xff] %v224
                %v226 = vld [vmem:[%s152 + $0x240] sm:$0xff]
                %227 = vst [vmem:[%s153 + $0x120] sm:$0xff] %v226
                %v228 = vld [vmem:[%s152 + $0x250] sm:$0xff]
                %229 = vst [vmem:[%s153 + $0x128] sm:$0xff] %v228
                %v230 = vld [vmem:[%s152 + $0x260] sm:$0xff]
                %231 = vst [vmem:[%s153 + $0x130] sm:$0xff] %v230
                %v232 = vld [vmem:[%s152 + $0x270] sm:$0xff]
                %233 = vst [vmem:[%s153 + $0x138] sm:$0xff] %v232
                %v234 = vld [vmem:[%s152 + $0x280] sm:$0xff]
                %235 = vst [vmem:[%s153 + $0x140] sm:$0xff] %v234
                %v236 = vld [vmem:[%s152 + $0x290] sm:$0xff]
                %237 = vst [vmem:[%s153 + $0x148] sm:$0xff] %v236
                %v238 = vld [vmem:[%s152 + $0x2a0] sm:$0xff]
                %239 = vst [vmem:[%s153 + $0x150] sm:$0xff] %v238
                %v240 = vld [vmem:[%s152 + $0x2b0] sm:$0xff]
                %241 = vst [vmem:[%s153 + $0x158] sm:$0xff] %v240
                %v242 = vld [vmem:[%s152 + $0x2c0] sm:$0xff]
                %243 = vst [vmem:[%s153 + $0x160] sm:$0xff] %v242
                %v244 = vld [vmem:[%s152 + $0x2d0] sm:$0xff]
                %245 = vst [vmem:[%s153 + $0x168] sm:$0xff] %v244
                %v246 = vld [vmem:[%s152 + $0x2e0] sm:$0xff]
                %247 = vst [vmem:[%s153 + $0x170] sm:$0xff] %v246
                %v248 = vld [vmem:[%s152 + $0x2f0] sm:$0xff]
                %249 = vst [vmem:[%s153 + $0x178] sm:$0xff] %v248
                %v250 = vld [vmem:[%s152 + $0x300] sm:$0xff]
                %251 = vst [vmem:[%s153 + $0x180] sm:$0xff] %v250
                %v252 = vld [vmem:[%s152 + $0x310] sm:$0xff]
                %253 = vst [vmem:[%s153 + $0x188] sm:$0xff] %v252
                %v254 = vld [vmem:[%s152 + $0x320] sm:$0xff]
                %255 = vst [vmem:[%s153 + $0x190] sm:$0xff] %v254
                %v256 = vld [vmem:[%s152 + $0x330] sm:$0xff]
                %257 = vst [vmem:[%s153 + $0x198] sm:$0xff] %v256
                %v258 = vld [vmem:[%s152 + $0x340] sm:$0xff]
                %259 = vst [vmem:[%s153 + $0x1a0] sm:$0xff] %v258
                %v260 = vld [vmem:[%s152 + $0x350] sm:$0xff]
                %261 = vst [vmem:[%s153 + $0x1a8] sm:$0xff] %v260
                %v262 = vld [vmem:[%s152 + $0x360] sm:$0xff]
                %263 = vst [vmem:[%s153 + $0x1b0] sm:$0xff] %v262
                %v264 = vld [vmem:[%s152 + $0x370] sm:$0xff]
                %265 = vst [vmem:[%s153 + $0x1b8] sm:$0xff] %v264
                %v266 = vld [vmem:[%s152 + $0x380] sm:$0xff]
                %267 = vst [vmem:[%s153 + $0x1c0] sm:$0xff] %v266
                %v268 = vld [vmem:[%s152 + $0x390] sm:$0xff]
                %269 = vst [vmem:[%s153 + $0x1c8] sm:$0xff] %v268
                %v270 = vld [vmem:[%s152 + $0x3a0] sm:$0xff]
                %271 = vst [vmem:[%s153 + $0x1d0] sm:$0xff] %v270
                %v272 = vld [vmem:[%s152 + $0x3b0] sm:$0xff]
                %273 = vst [vmem:[%s153 + $0x1d8] sm:$0xff] %v272
                %v274 = vld [vmem:[%s152 + $0x3c0] sm:$0xff]
                %275 = vst [vmem:[%s153 + $0x1e0] sm:$0xff] %v274
                %v276 = vld [vmem:[%s152 + $0x3d0] sm:$0xff]
                %277 = vst [vmem:[%s153 + $0x1e8] sm:$0xff] %v276
                %v278 = vld [vmem:[%s152 + $0x3e0] sm:$0xff]
                %279 = vst [vmem:[%s153 + $0x1f0] sm:$0xff] %v278
                %v280 = vld [vmem:[%s152 + $0x3f0] sm:$0xff]
                %281 = vst [vmem:[%s153 + $0x1f8] sm:$0xff] %v280
                %v282 = vld [vmem:[%s152 + $0x400] sm:$0xff]
                %283 = vst [vmem:[%s153 + $0x200] sm:$0xff] %v282
                %v284 = vld [vmem:[%s152 + $0x410] sm:$0xff]
                %285 = vst [vmem:[%s153 + $0x208] sm:$0xff] %v284
                %v286 = vld [vmem:[%s152 + $0x420] sm:$0xff]
                %287 = vst [vmem:[%s153 + $0x210] sm:$0xff] %v286
                %v288 = vld [vmem:[%s152 + $0x430] sm:$0xff]
                %289 = vst [vmem:[%s153 + $0x218] sm:$0xff] %v288
                %v290 = vld [vmem:[%s152 + $0x440] sm:$0xff]
                %291 = vst [vmem:[%s153 + $0x220] sm:$0xff] %v290
                %v292 = vld [vmem:[%s152 + $0x450] sm:$0xff]
                %293 = vst [vmem:[%s153 + $0x228] sm:$0xff] %v292
                %v294 = vld [vmem:[%s152 + $0x460] sm:$0xff]
                %295 = vst [vmem:[%s153 + $0x230] sm:$0xff] %v294
                %v296 = vld [vmem:[%s152 + $0x470] sm:$0xff]
                %297 = vst [vmem:[%s153 + $0x238] sm:$0xff] %v296
                %v298 = vld [vmem:[%s152 + $0x480] sm:$0xff]
                %299 = vst [vmem:[%s153 + $0x240] sm:$0xff] %v298
                %v300 = vld [vmem:[%s152 + $0x490] sm:$0xff]
                %301 = vst [vmem:[%s153 + $0x248] sm:$0xff] %v300
                %v302 = vld [vmem:[%s152 + $0x4a0] sm:$0xff]
                %303 = vst [vmem:[%s153 + $0x250] sm:$0xff] %v302
                %v304 = vld [vmem:[%s152 + $0x4b0] sm:$0xff]
                %305 = vst [vmem:[%s153 + $0x258] sm:$0xff] %v304
                %v306 = vld [vmem:[%s152 + $0x4c0] sm:$0xff]
                %307 = vst [vmem:[%s153 + $0x260] sm:$0xff] %v306
                %v308 = vld [vmem:[%s152 + $0x4d0] sm:$0xff]
                %309 = vst [vmem:[%s153 + $0x268] sm:$0xff] %v308
                %v310 = vld [vmem:[%s152 + $0x4e0] sm:$0xff]
                %311 = vst [vmem:[%s153 + $0x270] sm:$0xff] %v310
                %v312 = vld [vmem:[%s152 + $0x4f0] sm:$0xff]
                %313 = vst [vmem:[%s153 + $0x278] sm:$0xff] %v312
                %v314 = vld [vmem:[%s152 + $0x500] sm:$0xff]
                %315 = vst [vmem:[%s153 + $0x280] sm:$0xff] %v314
                %v316 = vld [vmem:[%s152 + $0x510] sm:$0xff]
                %317 = vst [vmem:[%s153 + $0x288] sm:$0xff] %v316
                %v318 = vld [vmem:[%s152 + $0x520] sm:$0xff]
                %319 = vst [vmem:[%s153 + $0x290] sm:$0xff] %v318
                %v320 = vld [vmem:[%s152 + $0x530] sm:$0xff]
                %321 = vst [vmem:[%s153 + $0x298] sm:$0xff] %v320
                %v322 = vld [vmem:[%s152 + $0x540] sm:$0xff]
                %323 = vst [vmem:[%s153 + $0x2a0] sm:$0xff] %v322
                %v324 = vld [vmem:[%s152 + $0x550] sm:$0xff]
                %325 = vst [vmem:[%s153 + $0x2a8] sm:$0xff] %v324
                %v326 = vld [vmem:[%s152 + $0x560] sm:$0xff]
                %327 = vst [vmem:[%s153 + $0x2b0] sm:$0xff] %v326
                %v328 = vld [vmem:[%s152 + $0x570] sm:$0xff]
                %329 = vst [vmem:[%s153 + $0x2b8] sm:$0xff] %v328
                %v330 = vld [vmem:[%s152 + $0x580] sm:$0xff]
                %331 = vst [vmem:[%s153 + $0x2c0] sm:$0xff] %v330
                %v332 = vld [vmem:[%s152 + $0x590] sm:$0xff]
                %333 = vst [vmem:[%s153 + $0x2c8] sm:$0xff] %v332
                %v334 = vld [vmem:[%s152 + $0x5a0] sm:$0xff]
                %335 = vst [vmem:[%s153 + $0x2d0] sm:$0xff] %v334
                %v336 = vld [vmem:[%s152 + $0x5b0] sm:$0xff]
                %337 = vst [vmem:[%s153 + $0x2d8] sm:$0xff] %v336
                %v338 = vld [vmem:[%s152 + $0x5c0] sm:$0xff]
                %339 = vst [vmem:[%s153 + $0x2e0] sm:$0xff] %v338
                %v340 = vld [vmem:[%s152 + $0x5d0] sm:$0xff]
                %341 = vst [vmem:[%s153 + $0x2e8] sm:$0xff] %v340
                %v342 = vld [vmem:[%s152 + $0x5e0] sm:$0xff]
                %343 = vst [vmem:[%s153 + $0x2f0] sm:$0xff] %v342
                %v344 = vld [vmem:[%s152 + $0x5f0] sm:$0xff]
                %345 = vst [vmem:[%s153 + $0x2f8] sm:$0xff] %v344
                %v346 = vld [vmem:[%s152 + $0x600] sm:$0xff]
                %347 = vst [vmem:[%s153 + $0x300] sm:$0xff] %v346
                %v348 = vld [vmem:[%s152 + $0x610] sm:$0xff]
                %349 = vst [vmem:[%s153 + $0x308] sm:$0xff] %v348
                %v350 = vld [vmem:[%s152 + $0x620] sm:$0xff]
                %351 = vst [vmem:[%s153 + $0x310] sm:$0xff] %v350
                %v352 = vld [vmem:[%s152 + $0x630] sm:$0xff]
                %353 = vst [vmem:[%s153 + $0x318] sm:$0xff] %v352
                %v354 = vld [vmem:[%s152 + $0x640] sm:$0xff]
                %355 = vst [vmem:[%s153 + $0x320] sm:$0xff] %v354
                %v356 = vld [vmem:[%s152 + $0x650] sm:$0xff]
                %357 = vst [vmem:[%s153 + $0x328] sm:$0xff] %v356
                %v358 = vld [vmem:[%s152 + $0x660] sm:$0xff]
                %359 = vst [vmem:[%s153 + $0x330] sm:$0xff] %v358
                %v360 = vld [vmem:[%s152 + $0x670] sm:$0xff]
                %361 = vst [vmem:[%s153 + $0x338] sm:$0xff] %v360
                %v362 = vld [vmem:[%s152 + $0x680] sm:$0xff]
                %363 = vst [vmem:[%s153 + $0x340] sm:$0xff] %v362
                %v364 = vld [vmem:[%s152 + $0x690] sm:$0xff]
                %365 = vst [vmem:[%s153 + $0x348] sm:$0xff] %v364
                %v366 = vld [vmem:[%s152 + $0x6a0] sm:$0xff]
                %367 = vst [vmem:[%s153 + $0x350] sm:$0xff] %v366
                %v368 = vld [vmem:[%s152 + $0x6b0] sm:$0xff]
                %369 = vst [vmem:[%s153 + $0x358] sm:$0xff] %v368
                %v370 = vld [vmem:[%s152 + $0x6c0] sm:$0xff]
                %371 = vst [vmem:[%s153 + $0x360] sm:$0xff] %v370
                %v372 = vld [vmem:[%s152 + $0x6d0] sm:$0xff]
                %373 = vst [vmem:[%s153 + $0x368] sm:$0xff] %v372
                %v374 = vld [vmem:[%s152 + $0x6e0] sm:$0xff]
                %375 = vst [vmem:[%s153 + $0x370] sm:$0xff] %v374
                %v376 = vld [vmem:[%s152 + $0x6f0] sm:$0xff]
                %377 = vst [vmem:[%s153 + $0x378] sm:$0xff] %v376
                %v378 = vld [vmem:[%s152 + $0x700] sm:$0xff]
                %379 = vst [vmem:[%s153 + $0x380] sm:$0xff] %v378
                %v380 = vld [vmem:[%s152 + $0x710] sm:$0xff]
                %381 = vst [vmem:[%s153 + $0x388] sm:$0xff] %v380
                %v382 = vld [vmem:[%s152 + $0x720] sm:$0xff]
                %383 = vst [vmem:[%s153 + $0x390] sm:$0xff] %v382
                %v384 = vld [vmem:[%s152 + $0x730] sm:$0xff]
                %385 = vst [vmem:[%s153 + $0x398] sm:$0xff] %v384
                %v386 = vld [vmem:[%s152 + $0x740] sm:$0xff]
                %387 = vst [vmem:[%s153 + $0x3a0] sm:$0xff] %v386
                %v388 = vld [vmem:[%s152 + $0x750] sm:$0xff]
                %389 = vst [vmem:[%s153 + $0x3a8] sm:$0xff] %v388
                %v390 = vld [vmem:[%s152 + $0x760] sm:$0xff]
                %391 = vst [vmem:[%s153 + $0x3b0] sm:$0xff] %v390
                %v392 = vld [vmem:[%s152 + $0x770] sm:$0xff]
                %393 = vst [vmem:[%s153 + $0x3b8] sm:$0xff] %v392
                %v394 = vld [vmem:[%s152 + $0x780] sm:$0xff]
                %395 = vst [vmem:[%s153 + $0x3c0] sm:$0xff] %v394
                %v396 = vld [vmem:[%s152 + $0x790] sm:$0xff]
                %397 = vst [vmem:[%s153 + $0x3c8] sm:$0xff] %v396
                %v398 = vld [vmem:[%s152 + $0x7a0] sm:$0xff]
                %399 = vst [vmem:[%s153 + $0x3d0] sm:$0xff] %v398
                %v400 = vld [vmem:[%s152 + $0x7b0] sm:$0xff]
                %401 = vst [vmem:[%s153 + $0x3d8] sm:$0xff] %v400
                %v402 = vld [vmem:[%s152 + $0x7c0] sm:$0xff]
                %403 = vst [vmem:[%s153 + $0x3e0] sm:$0xff] %v402
                %v404 = vld [vmem:[%s152 + $0x7d0] sm:$0xff]
                %405 = vst [vmem:[%s153 + $0x3e8] sm:$0xff] %v404
                %v406 = vld [vmem:[%s152 + $0x7e0] sm:$0xff]
                %407 = vst [vmem:[%s153 + $0x3f0] sm:$0xff] %v406
                %v408 = vld [vmem:[%s152 + $0x7f0] sm:$0xff]
                %409 = vst [vmem:[%s153 + $0x3f8] sm:$0xff] %v408
                %v410 = vld [vmem:[%s152 + $0x800] sm:$0xff]
                %411 = vst [vmem:[%s153 + $0x400] sm:$0xff] %v410
                %v412 = vld [vmem:[%s152 + $0x810] sm:$0xff]
                %413 = vst [vmem:[%s153 + $0x408] sm:$0xff] %v412
                %v414 = vld [vmem:[%s152 + $0x820] sm:$0xff]
                %415 = vst [vmem:[%s153 + $0x410] sm:$0xff] %v414
                %v416 = vld [vmem:[%s152 + $0x830] sm:$0xff]
                %417 = vst [vmem:[%s153 + $0x418] sm:$0xff] %v416
                %v418 = vld [vmem:[%s152 + $0x840] sm:$0xff]
                %419 = vst [vmem:[%s153 + $0x420] sm:$0xff] %v418
                %v420 = vld [vmem:[%s152 + $0x850] sm:$0xff]
                %421 = vst [vmem:[%s153 + $0x428] sm:$0xff] %v420
                %v422 = vld [vmem:[%s152 + $0x860] sm:$0xff]
                %423 = vst [vmem:[%s153 + $0x430] sm:$0xff] %v422
                %v424 = vld [vmem:[%s152 + $0x870] sm:$0xff]
                %425 = vst [vmem:[%s153 + $0x438] sm:$0xff] %v424
                %v426 = vld [vmem:[%s152 + $0x880] sm:$0xff]
                %427 = vst [vmem:[%s153 + $0x440] sm:$0xff] %v426
                %v428 = vld [vmem:[%s152 + $0x890] sm:$0xff]
                %429 = vst [vmem:[%s153 + $0x448] sm:$0xff] %v428
                %v430 = vld [vmem:[%s152 + $0x8a0] sm:$0xff]
                %431 = vst [vmem:[%s153 + $0x450] sm:$0xff] %v430
                %v432 = vld [vmem:[%s152 + $0x8b0] sm:$0xff]
                %433 = vst [vmem:[%s153 + $0x458] sm:$0xff] %v432
                %v434 = vld [vmem:[%s152 + $0x8c0] sm:$0xff]
                %435 = vst [vmem:[%s153 + $0x460] sm:$0xff] %v434
                %v436 = vld [vmem:[%s152 + $0x8d0] sm:$0xff]
                %437 = vst [vmem:[%s153 + $0x468] sm:$0xff] %v436
                %v438 = vld [vmem:[%s152 + $0x8e0] sm:$0xff]
                %439 = vst [vmem:[%s153 + $0x470] sm:$0xff] %v438
                %v440 = vld [vmem:[%s152 + $0x8f0] sm:$0xff]
                %441 = vst [vmem:[%s153 + $0x478] sm:$0xff] %v440
                %v442 = vld [vmem:[%s152 + $0x900] sm:$0xff]
                %443 = vst [vmem:[%s153 + $0x480] sm:$0xff] %v442
                %v444 = vld [vmem:[%s152 + $0x910] sm:$0xff]
                %445 = vst [vmem:[%s153 + $0x488] sm:$0xff] %v444
                %v446 = vld [vmem:[%s152 + $0x920] sm:$0xff]
                %447 = vst [vmem:[%s153 + $0x490] sm:$0xff] %v446
                %v448 = vld [vmem:[%s152 + $0x930] sm:$0xff]
                %449 = vst [vmem:[%s153 + $0x498] sm:$0xff] %v448
                %v450 = vld [vmem:[%s152 + $0x940] sm:$0xff]
                %451 = vst [vmem:[%s153 + $0x4a0] sm:$0xff] %v450
                %v452 = vld [vmem:[%s152 + $0x950] sm:$0xff]
                %453 = vst [vmem:[%s153 + $0x4a8] sm:$0xff] %v452
                %v454 = vld [vmem:[%s152 + $0x960] sm:$0xff]
                %455 = vst [vmem:[%s153 + $0x4b0] sm:$0xff] %v454
                %v456 = vld [vmem:[%s152 + $0x970] sm:$0xff]
                %457 = vst [vmem:[%s153 + $0x4b8] sm:$0xff] %v456
                %v458 = vld [vmem:[%s152 + $0x980] sm:$0xff]
                %459 = vst [vmem:[%s153 + $0x4c0] sm:$0xff] %v458
                %v460 = vld [vmem:[%s152 + $0x990] sm:$0xff]
                %461 = vst [vmem:[%s153 + $0x4c8] sm:$0xff] %v460
                %v462 = vld [vmem:[%s152 + $0x9a0] sm:$0xff]
                %463 = vst [vmem:[%s153 + $0x4d0] sm:$0xff] %v462
                %v464 = vld [vmem:[%s152 + $0x9b0] sm:$0xff]
                %465 = vst [vmem:[%s153 + $0x4d8] sm:$0xff] %v464
                %v466 = vld [vmem:[%s152 + $0x9c0] sm:$0xff]
                %467 = vst [vmem:[%s153 + $0x4e0] sm:$0xff] %v466
                %v468 = vld [vmem:[%s152 + $0x9d0] sm:$0xff]
                %469 = vst [vmem:[%s153 + $0x4e8] sm:$0xff] %v468
                %v470 = vld [vmem:[%s152 + $0x9e0] sm:$0xff]
                %471 = vst [vmem:[%s153 + $0x4f0] sm:$0xff] %v470
                %v472 = vld [vmem:[%s152 + $0x9f0] sm:$0xff]
                %473 = vst [vmem:[%s153 + $0x4f8] sm:$0xff] %v472
                %v474 = vld [vmem:[%s152 + $0xa00] sm:$0xff]
                %475 = vst [vmem:[%s153 + $0x500] sm:$0xff] %v474
                %v476 = vld [vmem:[%s152 + $0xa10] sm:$0xff]
                %477 = vst [vmem:[%s153 + $0x508] sm:$0xff] %v476
                %v478 = vld [vmem:[%s152 + $0xa20] sm:$0xff]
                %479 = vst [vmem:[%s153 + $0x510] sm:$0xff] %v478
                %v480 = vld [vmem:[%s152 + $0xa30] sm:$0xff]
                %481 = vst [vmem:[%s153 + $0x518] sm:$0xff] %v480
                %v482 = vld [vmem:[%s152 + $0xa40] sm:$0xff]
                %483 = vst [vmem:[%s153 + $0x520] sm:$0xff] %v482
                %v484 = vld [vmem:[%s152 + $0xa50] sm:$0xff]
                %485 = vst [vmem:[%s153 + $0x528] sm:$0xff] %v484
                %v486 = vld [vmem:[%s152 + $0xa60] sm:$0xff]
                %487 = vst [vmem:[%s153 + $0x530] sm:$0xff] %v486
                %v488 = vld [vmem:[%s152 + $0xa70] sm:$0xff]
                %489 = vst [vmem:[%s153 + $0x538] sm:$0xff] %v488
                %v490 = vld [vmem:[%s152 + $0xa80] sm:$0xff]
                %491 = vst [vmem:[%s153 + $0x540] sm:$0xff] %v490
                %v492 = vld [vmem:[%s152 + $0xa90] sm:$0xff]
                %493 = vst [vmem:[%s153 + $0x548] sm:$0xff] %v492
                %v494 = vld [vmem:[%s152 + $0xaa0] sm:$0xff]
                %495 = vst [vmem:[%s153 + $0x550] sm:$0xff] %v494
                %v496 = vld [vmem:[%s152 + $0xab0] sm:$0xff]
                %497 = vst [vmem:[%s153 + $0x558] sm:$0xff] %v496
                %v498 = vld [vmem:[%s152 + $0xac0] sm:$0xff]
                %499 = vst [vmem:[%s153 + $0x560] sm:$0xff] %v498
                %v500 = vld [vmem:[%s152 + $0xad0] sm:$0xff]
                %501 = vst [vmem:[%s153 + $0x568] sm:$0xff] %v500
                %v502 = vld [vmem:[%s152 + $0xae0] sm:$0xff]
                %503 = vst [vmem:[%s153 + $0x570] sm:$0xff] %v502
                %v504 = vld [vmem:[%s152 + $0xaf0] sm:$0xff]
                %505 = vst [vmem:[%s153 + $0x578] sm:$0xff] %v504
                %v506 = vld [vmem:[%s152 + $0xb00] sm:$0xff]
                %507 = vst [vmem:[%s153 + $0x580] sm:$0xff] %v506
                %v508 = vld [vmem:[%s152 + $0xb10] sm:$0xff]
                %509 = vst [vmem:[%s153 + $0x588] sm:$0xff] %v508
                %v510 = vld [vmem:[%s152 + $0xb20] sm:$0xff]
                %511 = vst [vmem:[%s153 + $0x590] sm:$0xff] %v510
                %v512 = vld [vmem:[%s152 + $0xb30] sm:$0xff]
                %513 = vst [vmem:[%s153 + $0x598] sm:$0xff] %v512
                %v514 = vld [vmem:[%s152 + $0xb40] sm:$0xff]
                %515 = vst [vmem:[%s153 + $0x5a0] sm:$0xff] %v514
                %v516 = vld [vmem:[%s152 + $0xb50] sm:$0xff]
                %517 = vst [vmem:[%s153 + $0x5a8] sm:$0xff] %v516
                %v518 = vld [vmem:[%s152 + $0xb60] sm:$0xff]
                %519 = vst [vmem:[%s153 + $0x5b0] sm:$0xff] %v518
                %v520 = vld [vmem:[%s152 + $0xb70] sm:$0xff]
                %521 = vst [vmem:[%s153 + $0x5b8] sm:$0xff] %v520
                %v522 = vld [vmem:[%s152 + $0xb80] sm:$0xff]
                %523 = vst [vmem:[%s153 + $0x5c0] sm:$0xff] %v522
                %v524 = vld [vmem:[%s152 + $0xb90] sm:$0xff]
                %525 = vst [vmem:[%s153 + $0x5c8] sm:$0xff] %v524
                %v526 = vld [vmem:[%s152 + $0xba0] sm:$0xff]
                %527 = vst [vmem:[%s153 + $0x5d0] sm:$0xff] %v526
                %v528 = vld [vmem:[%s152 + $0xbb0] sm:$0xff]
                %529 = vst [vmem:[%s153 + $0x5d8] sm:$0xff] %v528
                %v530 = vld [vmem:[%s152 + $0xbc0] sm:$0xff]
                %531 = vst [vmem:[%s153 + $0x5e0] sm:$0xff] %v530
                %v532 = vld [vmem:[%s152 + $0xbd0] sm:$0xff]
                %533 = vst [vmem:[%s153 + $0x5e8] sm:$0xff] %v532
                %v534 = vld [vmem:[%s152 + $0xbe0] sm:$0xff]
                %535 = vst [vmem:[%s153 + $0x5f0] sm:$0xff] %v534
                %v536 = vld [vmem:[%s152 + $0xbf0] sm:$0xff]
                %537 = vst [vmem:[%s153 + $0x5f8] sm:$0xff] %v536
                %v538 = vld [vmem:[%s152 + $0xc00] sm:$0xff]
                %539 = vst [vmem:[%s153 + $0x600] sm:$0xff] %v538
                %v540 = vld [vmem:[%s152 + $0xc10] sm:$0xff]
                %541 = vst [vmem:[%s153 + $0x608] sm:$0xff] %v540
                %v542 = vld [vmem:[%s152 + $0xc20] sm:$0xff]
                %543 = vst [vmem:[%s153 + $0x610] sm:$0xff] %v542
                %v544 = vld [vmem:[%s152 + $0xc30] sm:$0xff]
                %545 = vst [vmem:[%s153 + $0x618] sm:$0xff] %v544
                %v546 = vld [vmem:[%s152 + $0xc40] sm:$0xff]
                %547 = vst [vmem:[%s153 + $0x620] sm:$0xff] %v546
                %v548 = vld [vmem:[%s152 + $0xc50] sm:$0xff]
                %549 = vst [vmem:[%s153 + $0x628] sm:$0xff] %v548
                %v550 = vld [vmem:[%s152 + $0xc60] sm:$0xff]
                %551 = vst [vmem:[%s153 + $0x630] sm:$0xff] %v550
                %v552 = vld [vmem:[%s152 + $0xc70] sm:$0xff]
                %553 = vst [vmem:[%s153 + $0x638] sm:$0xff] %v552
                %v554 = vld [vmem:[%s152 + $0xc80] sm:$0xff]
                %555 = vst [vmem:[%s153 + $0x640] sm:$0xff] %v554
                %v556 = vld [vmem:[%s152 + $0xc90] sm:$0xff]
                %557 = vst [vmem:[%s153 + $0x648] sm:$0xff] %v556
                %v558 = vld [vmem:[%s152 + $0xca0] sm:$0xff]
                %559 = vst [vmem:[%s153 + $0x650] sm:$0xff] %v558
                %v560 = vld [vmem:[%s152 + $0xcb0] sm:$0xff]
                %561 = vst [vmem:[%s153 + $0x658] sm:$0xff] %v560
                %v562 = vld [vmem:[%s152 + $0xcc0] sm:$0xff]
                %563 = vst [vmem:[%s153 + $0x660] sm:$0xff] %v562
                %v564 = vld [vmem:[%s152 + $0xcd0] sm:$0xff]
                %565 = vst [vmem:[%s153 + $0x668] sm:$0xff] %v564
                %v566 = vld [vmem:[%s152 + $0xce0] sm:$0xff]
                %567 = vst [vmem:[%s153 + $0x670] sm:$0xff] %v566
                %v568 = vld [vmem:[%s152 + $0xcf0] sm:$0xff]
                %569 = vst [vmem:[%s153 + $0x678] sm:$0xff] %v568
                %v570 = vld [vmem:[%s152 + $0xd00] sm:$0xff]
                %571 = vst [vmem:[%s153 + $0x680] sm:$0xff] %v570
                %v572 = vld [vmem:[%s152 + $0xd10] sm:$0xff]
                %573 = vst [vmem:[%s153 + $0x688] sm:$0xff] %v572
                %v574 = vld [vmem:[%s152 + $0xd20] sm:$0xff]
                %575 = vst [vmem:[%s153 + $0x690] sm:$0xff] %v574
                %v576 = vld [vmem:[%s152 + $0xd30] sm:$0xff]
                %577 = vst [vmem:[%s153 + $0x698] sm:$0xff] %v576
                %v578 = vld [vmem:[%s152 + $0xd40] sm:$0xff]
                %579 = vst [vmem:[%s153 + $0x6a0] sm:$0xff] %v578
                %v580 = vld [vmem:[%s152 + $0xd50] sm:$0xff]
                %581 = vst [vmem:[%s153 + $0x6a8] sm:$0xff] %v580
                %v582 = vld [vmem:[%s152 + $0xd60] sm:$0xff]
                %583 = vst [vmem:[%s153 + $0x6b0] sm:$0xff] %v582
                %v584 = vld [vmem:[%s152 + $0xd70] sm:$0xff]
                %585 = vst [vmem:[%s153 + $0x6b8] sm:$0xff] %v584
                %v586 = vld [vmem:[%s152 + $0xd80] sm:$0xff]
                %587 = vst [vmem:[%s153 + $0x6c0] sm:$0xff] %v586
                %v588 = vld [vmem:[%s152 + $0xd90] sm:$0xff]
                %589 = vst [vmem:[%s153 + $0x6c8] sm:$0xff] %v588
                %v590 = vld [vmem:[%s152 + $0xda0] sm:$0xff]
                %591 = vst [vmem:[%s153 + $0x6d0] sm:$0xff] %v590
                %v592 = vld [vmem:[%s152 + $0xdb0] sm:$0xff]
                %593 = vst [vmem:[%s153 + $0x6d8] sm:$0xff] %v592
                %v594 = vld [vmem:[%s152 + $0xdc0] sm:$0xff]
                %595 = vst [vmem:[%s153 + $0x6e0] sm:$0xff] %v594
                %v596 = vld [vmem:[%s152 + $0xdd0] sm:$0xff]
                %597 = vst [vmem:[%s153 + $0x6e8] sm:$0xff] %v596
                %v598 = vld [vmem:[%s152 + $0xde0] sm:$0xff]
                %599 = vst [vmem:[%s153 + $0x6f0] sm:$0xff] %v598
                %v600 = vld [vmem:[%s152 + $0xdf0] sm:$0xff]
                %601 = vst [vmem:[%s153 + $0x6f8] sm:$0xff] %v600
                %v602 = vld [vmem:[%s152 + $0xe00] sm:$0xff]
                %603 = vst [vmem:[%s153 + $0x700] sm:$0xff] %v602
                %v604 = vld [vmem:[%s152 + $0xe10] sm:$0xff]
                %605 = vst [vmem:[%s153 + $0x708] sm:$0xff] %v604
                %v606 = vld [vmem:[%s152 + $0xe20] sm:$0xff]
                %607 = vst [vmem:[%s153 + $0x710] sm:$0xff] %v606
                %v608 = vld [vmem:[%s152 + $0xe30] sm:$0xff]
                %609 = vst [vmem:[%s153 + $0x718] sm:$0xff] %v608
                %v610 = vld [vmem:[%s152 + $0xe40] sm:$0xff]
                %611 = vst [vmem:[%s153 + $0x720] sm:$0xff] %v610
                %v612 = vld [vmem:[%s152 + $0xe50] sm:$0xff]
                %613 = vst [vmem:[%s153 + $0x728] sm:$0xff] %v612
                %v614 = vld [vmem:[%s152 + $0xe60] sm:$0xff]
                %615 = vst [vmem:[%s153 + $0x730] sm:$0xff] %v614
                %v616 = vld [vmem:[%s152 + $0xe70] sm:$0xff]
                %617 = vst [vmem:[%s153 + $0x738] sm:$0xff] %v616
                %v618 = vld [vmem:[%s152 + $0xe80] sm:$0xff]
                %619 = vst [vmem:[%s153 + $0x740] sm:$0xff] %v618
                %v620 = vld [vmem:[%s152 + $0xe90] sm:$0xff]
                %621 = vst [vmem:[%s153 + $0x748] sm:$0xff] %v620
                %v622 = vld [vmem:[%s152 + $0xea0] sm:$0xff]
                %623 = vst [vmem:[%s153 + $0x750] sm:$0xff] %v622
                %v624 = vld [vmem:[%s152 + $0xeb0] sm:$0xff]
                %625 = vst [vmem:[%s153 + $0x758] sm:$0xff] %v624
                %v626 = vld [vmem:[%s152 + $0xec0] sm:$0xff]
                %627 = vst [vmem:[%s153 + $0x760] sm:$0xff] %v626
                %v628 = vld [vmem:[%s152 + $0xed0] sm:$0xff]
                %629 = vst [vmem:[%s153 + $0x768] sm:$0xff] %v628
                %v630 = vld [vmem:[%s152 + $0xee0] sm:$0xff]
                %631 = vst [vmem:[%s153 + $0x770] sm:$0xff] %v630
                %v632 = vld [vmem:[%s152 + $0xef0] sm:$0xff]
                %633 = vst [vmem:[%s153 + $0x778] sm:$0xff] %v632
                %v634 = vld [vmem:[%s152 + $0xf00] sm:$0xff]
                %635 = vst [vmem:[%s153 + $0x780] sm:$0xff] %v634
                %v636 = vld [vmem:[%s152 + $0xf10] sm:$0xff]
                %637 = vst [vmem:[%s153 + $0x788] sm:$0xff] %v636
                %v638 = vld [vmem:[%s152 + $0xf20] sm:$0xff]
                %639 = vst [vmem:[%s153 + $0x790] sm:$0xff] %v638
                %v640 = vld [vmem:[%s152 + $0xf30] sm:$0xff]
                %641 = vst [vmem:[%s153 + $0x798] sm:$0xff] %v640
                %v642 = vld [vmem:[%s152 + $0xf40] sm:$0xff]
                %643 = vst [vmem:[%s153 + $0x7a0] sm:$0xff] %v642
                %v644 = vld [vmem:[%s152 + $0xf50] sm:$0xff]
                %645 = vst [vmem:[%s153 + $0x7a8] sm:$0xff] %v644
                %v646 = vld [vmem:[%s152 + $0xf60] sm:$0xff]
                %647 = vst [vmem:[%s153 + $0x7b0] sm:$0xff] %v646
                %v648 = vld [vmem:[%s152 + $0xf70] sm:$0xff]
                %649 = vst [vmem:[%s153 + $0x7b8] sm:$0xff] %v648
                %v650 = vld [vmem:[%s152 + $0xf80] sm:$0xff]
                %651 = vst [vmem:[%s153 + $0x7c0] sm:$0xff] %v650
                %v652 = vld [vmem:[%s152 + $0xf90] sm:$0xff]
                %653 = vst [vmem:[%s153 + $0x7c8] sm:$0xff] %v652
                %v654 = vld [vmem:[%s152 + $0xfa0] sm:$0xff]
                %655 = vst [vmem:[%s153 + $0x7d0] sm:$0xff] %v654
                %v656 = vld [vmem:[%s152 + $0xfb0] sm:$0xff]
                %657 = vst [vmem:[%s153 + $0x7d8] sm:$0xff] %v656
                %v658 = vld [vmem:[%s152 + $0xfc0] sm:$0xff]
                %659 = vst [vmem:[%s153 + $0x7e0] sm:$0xff] %v658
                %v660 = vld [vmem:[%s152 + $0xfd0] sm:$0xff]
                %661 = vst [vmem:[%s153 + $0x7e8] sm:$0xff] %v660
                %v662 = vld [vmem:[%s152 + $0xfe0] sm:$0xff]
                %663 = vst [vmem:[%s153 + $0x7f0] sm:$0xff] %v662
                %v664 = vld [vmem:[%s152 + $0xff0] sm:$0xff]
                %665 = vst [vmem:[%s153 + $0x7f8] sm:$0xff] %v664
                %v666 = vld [vmem:[%s152 + $0x1000] sm:$0xff]
                %667 = vst [vmem:[%s153 + $0x800] sm:$0xff] %v666
                %v668 = vld [vmem:[%s152 + $0x1010] sm:$0xff]
                %669 = vst [vmem:[%s153 + $0x808] sm:$0xff] %v668
                %v670 = vld [vmem:[%s152 + $0x1020] sm:$0xff]
                %671 = vst [vmem:[%s153 + $0x810] sm:$0xff] %v670
                %v672 = vld [vmem:[%s152 + $0x1030] sm:$0xff]
                %673 = vst [vmem:[%s153 + $0x818] sm:$0xff] %v672
                %v674 = vld [vmem:[%s152 + $0x1040] sm:$0xff]
                %675 = vst [vmem:[%s153 + $0x820] sm:$0xff] %v674
                %v676 = vld [vmem:[%s152 + $0x1050] sm:$0xff]
                %677 = vst [vmem:[%s153 + $0x828] sm:$0xff] %v676
                %v678 = vld [vmem:[%s152 + $0x1060] sm:$0xff]
                %679 = vst [vmem:[%s153 + $0x830] sm:$0xff] %v678
                %v680 = vld [vmem:[%s152 + $0x1070] sm:$0xff]
                %681 = vst [vmem:[%s153 + $0x838] sm:$0xff] %v680
                %v682 = vld [vmem:[%s152 + $0x1080] sm:$0xff]
                %683 = vst [vmem:[%s153 + $0x840] sm:$0xff] %v682
                %v684 = vld [vmem:[%s152 + $0x1090] sm:$0xff]
                %685 = vst [vmem:[%s153 + $0x848] sm:$0xff] %v684
                %v686 = vld [vmem:[%s152 + $0x10a0] sm:$0xff]
                %687 = vst [vmem:[%s153 + $0x850] sm:$0xff] %v686
                %v688 = vld [vmem:[%s152 + $0x10b0] sm:$0xff]
                %689 = vst [vmem:[%s153 + $0x858] sm:$0xff] %v688
                %v690 = vld [vmem:[%s152 + $0x10c0] sm:$0xff]
                %691 = vst [vmem:[%s153 + $0x860] sm:$0xff] %v690
                %v692 = vld [vmem:[%s152 + $0x10d0] sm:$0xff]
                %693 = vst [vmem:[%s153 + $0x868] sm:$0xff] %v692
                %v694 = vld [vmem:[%s152 + $0x10e0] sm:$0xff]
                %695 = vst [vmem:[%s153 + $0x870] sm:$0xff] %v694
                %v696 = vld [vmem:[%s152 + $0x10f0] sm:$0xff]
                %697 = vst [vmem:[%s153 + $0x878] sm:$0xff] %v696
                %v698 = vld [vmem:[%s152 + $0x1100] sm:$0xff]
                %699 = vst [vmem:[%s153 + $0x880] sm:$0xff] %v698
                %v700 = vld [vmem:[%s152 + $0x1110] sm:$0xff]
                %701 = vst [vmem:[%s153 + $0x888] sm:$0xff] %v700
                %v702 = vld [vmem:[%s152 + $0x1120] sm:$0xff]
                %703 = vst [vmem:[%s153 + $0x890] sm:$0xff] %v702
                %v704 = vld [vmem:[%s152 + $0x1130] sm:$0xff]
                %705 = vst [vmem:[%s153 + $0x898] sm:$0xff] %v704
                %v706 = vld [vmem:[%s152 + $0x1140] sm:$0xff]
                %707 = vst [vmem:[%s153 + $0x8a0] sm:$0xff] %v706
                %v708 = vld [vmem:[%s152 + $0x1150] sm:$0xff]
                %709 = vst [vmem:[%s153 + $0x8a8] sm:$0xff] %v708
                %v710 = vld [vmem:[%s152 + $0x1160] sm:$0xff]
                %711 = vst [vmem:[%s153 + $0x8b0] sm:$0xff] %v710
                %v712 = vld [vmem:[%s152 + $0x1170] sm:$0xff]
                %713 = vst [vmem:[%s153 + $0x8b8] sm:$0xff] %v712
                %v714 = vld [vmem:[%s152 + $0x1180] sm:$0xff]
                %715 = vst [vmem:[%s153 + $0x8c0] sm:$0xff] %v714
                %v716 = vld [vmem:[%s152 + $0x1190] sm:$0xff]
                %717 = vst [vmem:[%s153 + $0x8c8] sm:$0xff] %v716
                %v718 = vld [vmem:[%s152 + $0x11a0] sm:$0xff]
                %719 = vst [vmem:[%s153 + $0x8d0] sm:$0xff] %v718
                %v720 = vld [vmem:[%s152 + $0x11b0] sm:$0xff]
                %721 = vst [vmem:[%s153 + $0x8d8] sm:$0xff] %v720
                %v722 = vld [vmem:[%s152 + $0x11c0] sm:$0xff]
                %723 = vst [vmem:[%s153 + $0x8e0] sm:$0xff] %v722
                %v724 = vld [vmem:[%s152 + $0x11d0] sm:$0xff]
                %725 = vst [vmem:[%s153 + $0x8e8] sm:$0xff] %v724
                %v726 = vld [vmem:[%s152 + $0x11e0] sm:$0xff]
                %727 = vst [vmem:[%s153 + $0x8f0] sm:$0xff] %v726
                %v728 = vld [vmem:[%s152 + $0x11f0] sm:$0xff]
                %729 = vst [vmem:[%s153 + $0x8f8] sm:$0xff] %v728
                %v730 = vld [vmem:[%s152 + $0x1200] sm:$0xff]
                %731 = vst [vmem:[%s153 + $0x900] sm:$0xff] %v730
                %v732 = vld [vmem:[%s152 + $0x1210] sm:$0xff]
                %733 = vst [vmem:[%s153 + $0x908] sm:$0xff] %v732
                %v734 = vld [vmem:[%s152 + $0x1220] sm:$0xff]
                %735 = vst [vmem:[%s153 + $0x910] sm:$0xff] %v734
                %v736 = vld [vmem:[%s152 + $0x1230] sm:$0xff]
                %737 = vst [vmem:[%s153 + $0x918] sm:$0xff] %v736
                %v738 = vld [vmem:[%s152 + $0x1240] sm:$0xff]
                %739 = vst [vmem:[%s153 + $0x920] sm:$0xff] %v738
                %v740 = vld [vmem:[%s152 + $0x1250] sm:$0xff]
                %741 = vst [vmem:[%s153 + $0x928] sm:$0xff] %v740
                %v742 = vld [vmem:[%s152 + $0x1260] sm:$0xff]
                %743 = vst [vmem:[%s153 + $0x930] sm:$0xff] %v742
                %v744 = vld [vmem:[%s152 + $0x1270] sm:$0xff]
                %745 = vst [vmem:[%s153 + $0x938] sm:$0xff] %v744
                %v746 = vld [vmem:[%s152 + $0x1280] sm:$0xff]
                %747 = vst [vmem:[%s153 + $0x940] sm:$0xff] %v746
                %v748 = vld [vmem:[%s152 + $0x1290] sm:$0xff]
                %749 = vst [vmem:[%s153 + $0x948] sm:$0xff] %v748
                %v750 = vld [vmem:[%s152 + $0x12a0] sm:$0xff]
                %751 = vst [vmem:[%s153 + $0x950] sm:$0xff] %v750
                %v752 = vld [vmem:[%s152 + $0x12b0] sm:$0xff]
                %753 = vst [vmem:[%s153 + $0x958] sm:$0xff] %v752
                %v754 = vld [vmem:[%s152 + $0x12c0] sm:$0xff]
                %755 = vst [vmem:[%s153 + $0x960] sm:$0xff] %v754
                %v756 = vld [vmem:[%s152 + $0x12d0] sm:$0xff]
                %757 = vst [vmem:[%s153 + $0x968] sm:$0xff] %v756
                %v758 = vld [vmem:[%s152 + $0x12e0] sm:$0xff]
                %759 = vst [vmem:[%s153 + $0x970] sm:$0xff] %v758
                %v760 = vld [vmem:[%s152 + $0x12f0] sm:$0xff]
                %761 = vst [vmem:[%s153 + $0x978] sm:$0xff] %v760
                %v762 = vld [vmem:[%s152 + $0x1300] sm:$0xff]
                %763 = vst [vmem:[%s153 + $0x980] sm:$0xff] %v762
                %v764 = vld [vmem:[%s152 + $0x1310] sm:$0xff]
                %765 = vst [vmem:[%s153 + $0x988] sm:$0xff] %v764
                %v766 = vld [vmem:[%s152 + $0x1320] sm:$0xff]
                %767 = vst [vmem:[%s153 + $0x990] sm:$0xff] %v766
                %v768 = vld [vmem:[%s152 + $0x1330] sm:$0xff]
                %769 = vst [vmem:[%s153 + $0x998] sm:$0xff] %v768
                %v770 = vld [vmem:[%s152 + $0x1340] sm:$0xff]
                %771 = vst [vmem:[%s153 + $0x9a0] sm:$0xff] %v770
                %v772 = vld [vmem:[%s152 + $0x1350] sm:$0xff]
                %773 = vst [vmem:[%s153 + $0x9a8] sm:$0xff] %v772
                %v774 = vld [vmem:[%s152 + $0x1360] sm:$0xff]
                %775 = vst [vmem:[%s153 + $0x9b0] sm:$0xff] %v774
                %v776 = vld [vmem:[%s152 + $0x1370] sm:$0xff]
                %777 = vst [vmem:[%s153 + $0x9b8] sm:$0xff] %v776
                %v778 = vld [vmem:[%s152 + $0x1380] sm:$0xff]
                %779 = vst [vmem:[%s153 + $0x9c0] sm:$0xff] %v778
                %v780 = vld [vmem:[%s152 + $0x1390] sm:$0xff]
                %781 = vst [vmem:[%s153 + $0x9c8] sm:$0xff] %v780
                %v782 = vld [vmem:[%s152 + $0x13a0] sm:$0xff]
                %783 = vst [vmem:[%s153 + $0x9d0] sm:$0xff] %v782
                %v784 = vld [vmem:[%s152 + $0x13b0] sm:$0xff]
                %785 = vst [vmem:[%s153 + $0x9d8] sm:$0xff] %v784
                %v786 = vld [vmem:[%s152 + $0x13c0] sm:$0xff]
                %787 = vst [vmem:[%s153 + $0x9e0] sm:$0xff] %v786
                %v788 = vld [vmem:[%s152 + $0x13d0] sm:$0xff]
                %789 = vst [vmem:[%s153 + $0x9e8] sm:$0xff] %v788
                %v790 = vld [vmem:[%s152 + $0x13e0] sm:$0xff]
                %791 = vst [vmem:[%s153 + $0x9f0] sm:$0xff] %v790
                %v792 = vld [vmem:[%s152 + $0x13f0] sm:$0xff]
                %793 = vst [vmem:[%s153 + $0x9f8] sm:$0xff] %v792
                %v794 = vld [vmem:[%s152 + $0x1400] sm:$0xff]
                %795 = vst [vmem:[%s153 + $0xa00] sm:$0xff] %v794
                %v796 = vld [vmem:[%s152 + $0x1410] sm:$0xff]
                %797 = vst [vmem:[%s153 + $0xa08] sm:$0xff] %v796
                %v798 = vld [vmem:[%s152 + $0x1420] sm:$0xff]
                %799 = vst [vmem:[%s153 + $0xa10] sm:$0xff] %v798
                %v800 = vld [vmem:[%s152 + $0x1430] sm:$0xff]
                %801 = vst [vmem:[%s153 + $0xa18] sm:$0xff] %v800
                %v802 = vld [vmem:[%s152 + $0x1440] sm:$0xff]
                %803 = vst [vmem:[%s153 + $0xa20] sm:$0xff] %v802
                %v804 = vld [vmem:[%s152 + $0x1450] sm:$0xff]
                %805 = vst [vmem:[%s153 + $0xa28] sm:$0xff] %v804
                %v806 = vld [vmem:[%s152 + $0x1460] sm:$0xff]
                %807 = vst [vmem:[%s153 + $0xa30] sm:$0xff] %v806
                %v808 = vld [vmem:[%s152 + $0x1470] sm:$0xff]
                %809 = vst [vmem:[%s153 + $0xa38] sm:$0xff] %v808
                %v810 = vld [vmem:[%s152 + $0x1480] sm:$0xff]
                %811 = vst [vmem:[%s153 + $0xa40] sm:$0xff] %v810
                %v812 = vld [vmem:[%s152 + $0x1490] sm:$0xff]
                %813 = vst [vmem:[%s153 + $0xa48] sm:$0xff] %v812
                %v814 = vld [vmem:[%s152 + $0x14a0] sm:$0xff]
                %815 = vst [vmem:[%s153 + $0xa50] sm:$0xff] %v814
                %v816 = vld [vmem:[%s152 + $0x14b0] sm:$0xff]
                %817 = vst [vmem:[%s153 + $0xa58] sm:$0xff] %v816
                %v818 = vld [vmem:[%s152 + $0x14c0] sm:$0xff]
                %819 = vst [vmem:[%s153 + $0xa60] sm:$0xff] %v818
                %v820 = vld [vmem:[%s152 + $0x14d0] sm:$0xff]
                %821 = vst [vmem:[%s153 + $0xa68] sm:$0xff] %v820
                %v822 = vld [vmem:[%s152 + $0x14e0] sm:$0xff]
                %823 = vst [vmem:[%s153 + $0xa70] sm:$0xff] %v822
                %v824 = vld [vmem:[%s152 + $0x14f0] sm:$0xff]
                %825 = vst [vmem:[%s153 + $0xa78] sm:$0xff] %v824
                %v826 = vld [vmem:[%s152 + $0x1500] sm:$0xff]
                %827 = vst [vmem:[%s153 + $0xa80] sm:$0xff] %v826
                %v828 = vld [vmem:[%s152 + $0x1510] sm:$0xff]
                %829 = vst [vmem:[%s153 + $0xa88] sm:$0xff] %v828
                %v830 = vld [vmem:[%s152 + $0x1520] sm:$0xff]
                %831 = vst [vmem:[%s153 + $0xa90] sm:$0xff] %v830
                %v832 = vld [vmem:[%s152 + $0x1530] sm:$0xff]
                %833 = vst [vmem:[%s153 + $0xa98] sm:$0xff] %v832
                %v834 = vld [vmem:[%s152 + $0x1540] sm:$0xff]
                %835 = vst [vmem:[%s153 + $0xaa0] sm:$0xff] %v834
                %v836 = vld [vmem:[%s152 + $0x1550] sm:$0xff]
                %837 = vst [vmem:[%s153 + $0xaa8] sm:$0xff] %v836
                %v838 = vld [vmem:[%s152 + $0x1560] sm:$0xff]
                %839 = vst [vmem:[%s153 + $0xab0] sm:$0xff] %v838
                %v840 = vld [vmem:[%s152 + $0x1570] sm:$0xff]
                %841 = vst [vmem:[%s153 + $0xab8] sm:$0xff] %v840
                %v842 = vld [vmem:[%s152 + $0x1580] sm:$0xff]
                %843 = vst [vmem:[%s153 + $0xac0] sm:$0xff] %v842
                %v844 = vld [vmem:[%s152 + $0x1590] sm:$0xff]
                %845 = vst [vmem:[%s153 + $0xac8] sm:$0xff] %v844
                %v846 = vld [vmem:[%s152 + $0x15a0] sm:$0xff]
                %847 = vst [vmem:[%s153 + $0xad0] sm:$0xff] %v846
                %v848 = vld [vmem:[%s152 + $0x15b0] sm:$0xff]
                %849 = vst [vmem:[%s153 + $0xad8] sm:$0xff] %v848
                %v850 = vld [vmem:[%s152 + $0x15c0] sm:$0xff]
                %851 = vst [vmem:[%s153 + $0xae0] sm:$0xff] %v850
                %v852 = vld [vmem:[%s152 + $0x15d0] sm:$0xff]
                %853 = vst [vmem:[%s153 + $0xae8] sm:$0xff] %v852
                %v854 = vld [vmem:[%s152 + $0x15e0] sm:$0xff]
                %855 = vst [vmem:[%s153 + $0xaf0] sm:$0xff] %v854
                %v856 = vld [vmem:[%s152 + $0x15f0] sm:$0xff]
                %857 = vst [vmem:[%s153 + $0xaf8] sm:$0xff] %v856
                %v858 = vld [vmem:[%s152 + $0x1600] sm:$0xff]
                %859 = vst [vmem:[%s153 + $0xb00] sm:$0xff] %v858
                %v860 = vld [vmem:[%s152 + $0x1610] sm:$0xff]
                %861 = vst [vmem:[%s153 + $0xb08] sm:$0xff] %v860
                %v862 = vld [vmem:[%s152 + $0x1620] sm:$0xff]
                %863 = vst [vmem:[%s153 + $0xb10] sm:$0xff] %v862
                %v864 = vld [vmem:[%s152 + $0x1630] sm:$0xff]
                %865 = vst [vmem:[%s153 + $0xb18] sm:$0xff] %v864
                %v866 = vld [vmem:[%s152 + $0x1640] sm:$0xff]
                %867 = vst [vmem:[%s153 + $0xb20] sm:$0xff] %v866
                %v868 = vld [vmem:[%s152 + $0x1650] sm:$0xff]
                %869 = vst [vmem:[%s153 + $0xb28] sm:$0xff] %v868
                %v870 = vld [vmem:[%s152 + $0x1660] sm:$0xff]
                %871 = vst [vmem:[%s153 + $0xb30] sm:$0xff] %v870
                %v872 = vld [vmem:[%s152 + $0x1670] sm:$0xff]
                %873 = vst [vmem:[%s153 + $0xb38] sm:$0xff] %v872
                %v874 = vld [vmem:[%s152 + $0x1680] sm:$0xff]
                %875 = vst [vmem:[%s153 + $0xb40] sm:$0xff] %v874
                %v876 = vld [vmem:[%s152 + $0x1690] sm:$0xff]
                %877 = vst [vmem:[%s153 + $0xb48] sm:$0xff] %v876
                %v878 = vld [vmem:[%s152 + $0x16a0] sm:$0xff]
                %879 = vst [vmem:[%s153 + $0xb50] sm:$0xff] %v878
                %v880 = vld [vmem:[%s152 + $0x16b0] sm:$0xff]
                %881 = vst [vmem:[%s153 + $0xb58] sm:$0xff] %v880
                %v882 = vld [vmem:[%s152 + $0x16c0] sm:$0xff]
                %883 = vst [vmem:[%s153 + $0xb60] sm:$0xff] %v882
                %v884 = vld [vmem:[%s152 + $0x16d0] sm:$0xff]
                %885 = vst [vmem:[%s153 + $0xb68] sm:$0xff] %v884
                %v886 = vld [vmem:[%s152 + $0x16e0] sm:$0xff]
                %887 = vst [vmem:[%s153 + $0xb70] sm:$0xff] %v886
                %v888 = vld [vmem:[%s152 + $0x16f0] sm:$0xff]
                %889 = vst [vmem:[%s153 + $0xb78] sm:$0xff] %v888
                %v890 = vld [vmem:[%s152 + $0x1700] sm:$0xff]
                %891 = vst [vmem:[%s153 + $0xb80] sm:$0xff] %v890
                %v892 = vld [vmem:[%s152 + $0x1710] sm:$0xff]
                %893 = vst [vmem:[%s153 + $0xb88] sm:$0xff] %v892
                %v894 = vld [vmem:[%s152 + $0x1720] sm:$0xff]
                %895 = vst [vmem:[%s153 + $0xb90] sm:$0xff] %v894
                %v896 = vld [vmem:[%s152 + $0x1730] sm:$0xff]
                %897 = vst [vmem:[%s153 + $0xb98] sm:$0xff] %v896
                %v898 = vld [vmem:[%s152 + $0x1740] sm:$0xff]
                %899 = vst [vmem:[%s153 + $0xba0] sm:$0xff] %v898
                %v900 = vld [vmem:[%s152 + $0x1750] sm:$0xff]
                %901 = vst [vmem:[%s153 + $0xba8] sm:$0xff] %v900
                %v902 = vld [vmem:[%s152 + $0x1760] sm:$0xff]
                %903 = vst [vmem:[%s153 + $0xbb0] sm:$0xff] %v902
                %v904 = vld [vmem:[%s152 + $0x1770] sm:$0xff]
                %905 = vst [vmem:[%s153 + $0xbb8] sm:$0xff] %v904
                %v906 = vld [vmem:[%s152 + $0x1780] sm:$0xff]
                %907 = vst [vmem:[%s153 + $0xbc0] sm:$0xff] %v906
                %v908 = vld [vmem:[%s152 + $0x1790] sm:$0xff]
                %909 = vst [vmem:[%s153 + $0xbc8] sm:$0xff] %v908
                %v910 = vld [vmem:[%s152 + $0x17a0] sm:$0xff]
                %911 = vst [vmem:[%s153 + $0xbd0] sm:$0xff] %v910
                %v912 = vld [vmem:[%s152 + $0x17b0] sm:$0xff]
                %913 = vst [vmem:[%s153 + $0xbd8] sm:$0xff] %v912
                %v914 = vld [vmem:[%s152 + $0x17c0] sm:$0xff]
                %915 = vst [vmem:[%s153 + $0xbe0] sm:$0xff] %v914
                %v916 = vld [vmem:[%s152 + $0x17d0] sm:$0xff]
                %917 = vst [vmem:[%s153 + $0xbe8] sm:$0xff] %v916
                %v918 = vld [vmem:[%s152 + $0x17e0] sm:$0xff]
                %919 = vst [vmem:[%s153 + $0xbf0] sm:$0xff] %v918
                %v920 = vld [vmem:[%s152 + $0x17f0] sm:$0xff]
                %921 = vst [vmem:[%s153 + $0xbf8] sm:$0xff] %v920
                %v922 = vld [vmem:[%s152 + $0x1800] sm:$0xff]
                %923 = vst [vmem:[%s153 + $0xc00] sm:$0xff] %v922
                %v924 = vld [vmem:[%s152 + $0x1810] sm:$0xff]
                %925 = vst [vmem:[%s153 + $0xc08] sm:$0xff] %v924
                %v926 = vld [vmem:[%s152 + $0x1820] sm:$0xff]
                %927 = vst [vmem:[%s153 + $0xc10] sm:$0xff] %v926
                %v928 = vld [vmem:[%s152 + $0x1830] sm:$0xff]
                %929 = vst [vmem:[%s153 + $0xc18] sm:$0xff] %v928
                %v930 = vld [vmem:[%s152 + $0x1840] sm:$0xff]
                %931 = vst [vmem:[%s153 + $0xc20] sm:$0xff] %v930
                %v932 = vld [vmem:[%s152 + $0x1850] sm:$0xff]
                %933 = vst [vmem:[%s153 + $0xc28] sm:$0xff] %v932
                %v934 = vld [vmem:[%s152 + $0x1860] sm:$0xff]
                %935 = vst [vmem:[%s153 + $0xc30] sm:$0xff] %v934
                %v936 = vld [vmem:[%s152 + $0x1870] sm:$0xff]
                %937 = vst [vmem:[%s153 + $0xc38] sm:$0xff] %v936
                %v938 = vld [vmem:[%s152 + $0x1880] sm:$0xff]
                %939 = vst [vmem:[%s153 + $0xc40] sm:$0xff] %v938
                %v940 = vld [vmem:[%s152 + $0x1890] sm:$0xff]
                %941 = vst [vmem:[%s153 + $0xc48] sm:$0xff] %v940
                %v942 = vld [vmem:[%s152 + $0x18a0] sm:$0xff]
                %943 = vst [vmem:[%s153 + $0xc50] sm:$0xff] %v942
                %v944 = vld [vmem:[%s152 + $0x18b0] sm:$0xff]
                %945 = vst [vmem:[%s153 + $0xc58] sm:$0xff] %v944
                %v946 = vld [vmem:[%s152 + $0x18c0] sm:$0xff]
                %947 = vst [vmem:[%s153 + $0xc60] sm:$0xff] %v946
                %v948 = vld [vmem:[%s152 + $0x18d0] sm:$0xff]
                %949 = vst [vmem:[%s153 + $0xc68] sm:$0xff] %v948
                %v950 = vld [vmem:[%s152 + $0x18e0] sm:$0xff]
                %951 = vst [vmem:[%s153 + $0xc70] sm:$0xff] %v950
                %v952 = vld [vmem:[%s152 + $0x18f0] sm:$0xff]
                %953 = vst [vmem:[%s153 + $0xc78] sm:$0xff] %v952
                %v954 = vld [vmem:[%s152 + $0x1900] sm:$0xff]
                %955 = vst [vmem:[%s153 + $0xc80] sm:$0xff] %v954
                %v956 = vld [vmem:[%s152 + $0x1910] sm:$0xff]
                %957 = vst [vmem:[%s153 + $0xc88] sm:$0xff] %v956
                %v958 = vld [vmem:[%s152 + $0x1920] sm:$0xff]
                %959 = vst [vmem:[%s153 + $0xc90] sm:$0xff] %v958
                %v960 = vld [vmem:[%s152 + $0x1930] sm:$0xff]
                %961 = vst [vmem:[%s153 + $0xc98] sm:$0xff] %v960
                %v962 = vld [vmem:[%s152 + $0x1940] sm:$0xff]
                %963 = vst [vmem:[%s153 + $0xca0] sm:$0xff] %v962
                %v964 = vld [vmem:[%s152 + $0x1950] sm:$0xff]
                %965 = vst [vmem:[%s153 + $0xca8] sm:$0xff] %v964
                %v966 = vld [vmem:[%s152 + $0x1960] sm:$0xff]
                %967 = vst [vmem:[%s153 + $0xcb0] sm:$0xff] %v966
                %v968 = vld [vmem:[%s152 + $0x1970] sm:$0xff]
                %969 = vst [vmem:[%s153 + $0xcb8] sm:$0xff] %v968
                %v970 = vld [vmem:[%s152 + $0x1980] sm:$0xff]
                %971 = vst [vmem:[%s153 + $0xcc0] sm:$0xff] %v970
                %v972 = vld [vmem:[%s152 + $0x1990] sm:$0xff]
                %973 = vst [vmem:[%s153 + $0xcc8] sm:$0xff] %v972
                %v974 = vld [vmem:[%s152 + $0x19a0] sm:$0xff]
                %975 = vst [vmem:[%s153 + $0xcd0] sm:$0xff] %v974
                %v976 = vld [vmem:[%s152 + $0x19b0] sm:$0xff]
                %977 = vst [vmem:[%s153 + $0xcd8] sm:$0xff] %v976
                %v978 = vld [vmem:[%s152 + $0x19c0] sm:$0xff]
                %979 = vst [vmem:[%s153 + $0xce0] sm:$0xff] %v978
                %v980 = vld [vmem:[%s152 + $0x19d0] sm:$0xff]
                %981 = vst [vmem:[%s153 + $0xce8] sm:$0xff] %v980
                %v982 = vld [vmem:[%s152 + $0x19e0] sm:$0xff]
                %983 = vst [vmem:[%s153 + $0xcf0] sm:$0xff] %v982
                %v984 = vld [vmem:[%s152 + $0x19f0] sm:$0xff]
                %985 = vst [vmem:[%s153 + $0xcf8] sm:$0xff] %v984
                %v986 = vld [vmem:[%s152 + $0x1a00] sm:$0xff]
                %987 = vst [vmem:[%s153 + $0xd00] sm:$0xff] %v986
                %v988 = vld [vmem:[%s152 + $0x1a10] sm:$0xff]
                %989 = vst [vmem:[%s153 + $0xd08] sm:$0xff] %v988
                %v990 = vld [vmem:[%s152 + $0x1a20] sm:$0xff]
                %991 = vst [vmem:[%s153 + $0xd10] sm:$0xff] %v990
                %v992 = vld [vmem:[%s152 + $0x1a30] sm:$0xff]
                %993 = vst [vmem:[%s153 + $0xd18] sm:$0xff] %v992
                %v994 = vld [vmem:[%s152 + $0x1a40] sm:$0xff]
                %995 = vst [vmem:[%s153 + $0xd20] sm:$0xff] %v994
                %v996 = vld [vmem:[%s152 + $0x1a50] sm:$0xff]
                %997 = vst [vmem:[%s153 + $0xd28] sm:$0xff] %v996
                %v998 = vld [vmem:[%s152 + $0x1a60] sm:$0xff]
                %999 = vst [vmem:[%s153 + $0xd30] sm:$0xff] %v998
                %v1000 = vld [vmem:[%s152 + $0x1a70] sm:$0xff]
                %1001 = vst [vmem:[%s153 + $0xd38] sm:$0xff] %v1000
                %v1002 = vld [vmem:[%s152 + $0x1a80] sm:$0xff]
                %1003 = vst [vmem:[%s153 + $0xd40] sm:$0xff] %v1002
                %v1004 = vld [vmem:[%s152 + $0x1a90] sm:$0xff]
                %1005 = vst [vmem:[%s153 + $0xd48] sm:$0xff] %v1004
                %v1006 = vld [vmem:[%s152 + $0x1aa0] sm:$0xff]
                %1007 = vst [vmem:[%s153 + $0xd50] sm:$0xff] %v1006
                %v1008 = vld [vmem:[%s152 + $0x1ab0] sm:$0xff]
                %1009 = vst [vmem:[%s153 + $0xd58] sm:$0xff] %v1008
                %v1010 = vld [vmem:[%s152 + $0x1ac0] sm:$0xff]
                %1011 = vst [vmem:[%s153 + $0xd60] sm:$0xff] %v1010
                %v1012 = vld [vmem:[%s152 + $0x1ad0] sm:$0xff]
                %1013 = vst [vmem:[%s153 + $0xd68] sm:$0xff] %v1012
                %v1014 = vld [vmem:[%s152 + $0x1ae0] sm:$0xff]
                %1015 = vst [vmem:[%s153 + $0xd70] sm:$0xff] %v1014
                %v1016 = vld [vmem:[%s152 + $0x1af0] sm:$0xff]
                %1017 = vst [vmem:[%s153 + $0xd78] sm:$0xff] %v1016
              $region41: #{sparse_resnet_encoder.9} parent=35 // loop_footer
                %s151 = sadd.s32 1, %s147
              $region42: #{sparse_resnet_encoder.9} parent=35 // loop_footer_branch
                %146 = sbr.rel target = $region38
              $region43: #{sparse_resnet_encoder.9} parent=35 // loop_exit
                _
            $region36: #{sparse_resnet_encoder.9} parent=27 // pred_fallthru
              _
          $region28: #{sparse_resnet_encoder.9} parent=23 // pred_fallthru
            _
          %1894 = vnop
        $region24: #{sparse_resnet_encoder.9} parent=19 // pred_fallthru
          _
      $region20: #{sparse_resnet_encoder.9} parent=5 // pred_fallthru
        _
      %p1895 = scmp.le.s32.totalorder 1, %s8
      %p1896 = scmp.lt.s32.totalorder %s8, 3
      %p1897 = pnand %p1895, %p1896
      %p1898 = pneg %p1897
      // Predicated region
      $region59: #{sparse_resnet_encoder.9} parent=5 // pred_check
        _
      $region60: #{sparse_resnet_encoder.9} parent=5 // pred_check_branch
        %1900 = sbr.rel (%p1897) target = $region62
      $region61: #{sparse_resnet_encoder.9} parent=5 // pred_region
        %s1901 = ssub.s32 %s8, 1
        %s1902 = sand.u32 %s59, 1
        %s1903 = sand.u32 %s59, 1
        %s1904 = smul.addr %s1903, 3456
        %s1905 = scalar_lea.vmem [#allocation2], %s1904
        // Predicated region
        $region63: #{sparse_resnet_encoder.9} parent=61 // pred_check
          %p1906 = pneg %p72
        $region64: #{sparse_resnet_encoder.9} parent=61 // pred_check_branch
          %1908 = sbr.rel (%p1906) target = $region66
        $region65: #{sparse_resnet_encoder.9} parent=61 // pred_region
          _
        $region66: #{sparse_resnet_encoder.9} parent=61 // pred_fallthru
          _
        %s1909 = smul.u32 2, %s17
        %p1910 = scmp.lt.s32.totalorder %s1909, 1
        %s1911 = scalar_select %p1910, %s1909, 1
        %s1912 = smul.addr %s1911, 27
        %s1913 = smul.addr %s1912, 4
        %s1914 = scalar_lea.vmem %s0, %s1913
        %p1915 = pneg %p46
        %p1916 = pneg %p43
        %s1917 = sand.u32 %s59, 1
        %s1918 = sand.u32 %s59, 1
        %s1919 = smul.addr %s1918, 3456
        %s1920 = scalar_lea.vmem [#allocation2], %s1919
        %p1921 = pneg %p72
        %p1922 = pneg %p69
        %p1923 = pneg %p100
        %p1924 = pneg %p97
        %s1925 = sand.u32 %s87, 1
        %s1926 = sand.u32 %s87, 1
        %s1927 = smul.addr %s1926, 32
        %s1928 = scalar_lea.vmem [#allocation3], %s1927
        %s1929 = smul.u32 2, %s17
        %p1930 = scmp.lt.s32.totalorder %s1929, 1
        %s1931 = scalar_select %p1930, %s1929, 1
        %s1932 = smul.addr %s1931, 27
        %s1933 = smul.addr %s1932, 4
        %s1934 = scalar_lea.vmem %s0, %s1933
        %s1935 = smul.u32 2, %s17
        %s1936 = smul.u32 2, %s18
        %s1937 = smul.u32 2, %s17
        %s1938 = smul.u32 2, %s18
        %v1940 = vld [vmem:[%s1934] sm:$0xff]
        %v1941 = vld [vmem:[%s1934 + $0x8] sm:$0xff]
        %v1942 = vld [vmem:[%s1934 + $0x10] sm:$0xff]
        %v1943 = vld [vmem:[%s1934 + $0x18] sm:$0xff]
        %v1944 = vld [vmem:[%s1934 + $0x20] sm:$0xff]
        %v1945 = vld [vmem:[%s1934 + $0x28] sm:$0xff]
        %v1946 = vld [vmem:[%s1934 + $0x30] sm:$0xff]
        %v1947 = vld [vmem:[%s1934 + $0x38] sm:$0xff]
        %v1948 = vld [vmem:[%s1934 + $0x40] sm:$0xff]
        %v1949 = vld [vmem:[%s1934 + $0x48] sm:$0xff]
        %v1950 = vld [vmem:[%s1934 + $0x50] sm:$0xff]
        %v1951 = vld [vmem:[%s1934 + $0x58] sm:$0xff]
        %v1952 = vld [vmem:[%s1934 + $0x60] sm:$0xff]
        %v1953 = vld [vmem:[%s1934 + $0x68] sm:$0xf]
        %v1954 = vld [vmem:[%s1934 + $0x6c] sm:$0xff]
        %v1955 = vld [vmem:[%s1934 + $0x74] sm:$0xff]
        %v1956 = vld [vmem:[%s1934 + $0x7c] sm:$0xff]
        %v1957 = vld [vmem:[%s1934 + $0x84] sm:$0xff]
        %v1958 = vld [vmem:[%s1934 + $0x8c] sm:$0xff]
        %v1959 = vld [vmem:[%s1934 + $0x94] sm:$0xff]
        %v1960 = vld [vmem:[%s1934 + $0x9c] sm:$0xff]
        %v1961 = vld [vmem:[%s1934 + $0xa4] sm:$0xff]
        %v1962 = vld [vmem:[%s1934 + $0xac] sm:$0xff]
        %v1963 = vld [vmem:[%s1934 + $0xb4] sm:$0xff]
        %v1964 = vld [vmem:[%s1934 + $0xbc] sm:$0xff]
        %v1965 = vld [vmem:[%s1934 + $0xc4] sm:$0xff]
        %v1966 = vld [vmem:[%s1934 + $0xcc] sm:$0xff]
        %v1967 = vld [vmem:[%s1934 + $0xd4] sm:$0xf]
        %v1968 = vld [vmem:[%s1905] sm:$0xff]
        %v1969 = vld [vmem:[%s1905 + $0x8] sm:$0xff]
        %v1970 = vld [vmem:[%s1905 + $0x10] sm:$0xff]
        %v1971 = vld [vmem:[%s1905 + $0x18] sm:$0xff]
        %v1972 = vld [vmem:[%s1905 + $0x20] sm:$0xff]
        %v1973 = vld [vmem:[%s1905 + $0x28] sm:$0xff]
        %v1974 = vld [vmem:[%s1905 + $0x30] sm:$0xff]
        %v1975 = vld [vmem:[%s1905 + $0x38] sm:$0xff]
        %v1976 = vld [vmem:[%s1905 + $0x40] sm:$0xff]
        %v1977 = vld [vmem:[%s1905 + $0x48] sm:$0xff]
        %v1978 = vld [vmem:[%s1905 + $0x50] sm:$0xff]
        %v1979 = vld [vmem:[%s1905 + $0x58] sm:$0xff]
        %v1980 = vld [vmem:[%s1905 + $0x60] sm:$0xff]
        %v1981 = vld [vmem:[%s1905 + $0x68] sm:$0xff]
        %v1982 = vld [vmem:[%s1905 + $0x70] sm:$0xff]
        %v1983 = vld [vmem:[%s1905 + $0x78] sm:$0xff]
        %v1984 = vld [vmem:[%s1905 + $0x80] sm:$0xff]
        %v1985 = vld [vmem:[%s1905 + $0x88] sm:$0xff]
        %v1986 = vld [vmem:[%s1905 + $0x90] sm:$0xff]
        %v1987 = vld [vmem:[%s1905 + $0x98] sm:$0xff]
        %v1988 = vld [vmem:[%s1905 + $0xa0] sm:$0xff]
        %v1989 = vld [vmem:[%s1905 + $0xa8] sm:$0xff]
        %v1990 = vld [vmem:[%s1905 + $0xb0] sm:$0xff]
        %v1991 = vld [vmem:[%s1905 + $0xb8] sm:$0xff]
        %v1992 = vld [vmem:[%s1905 + $0xc0] sm:$0xff]
        %v1993 = vld [vmem:[%s1905 + $0xc8] sm:$0xff]
        %v1994 = vld [vmem:[%s1905 + $0xd0] sm:$0xff]
        %v1995 = vld [vmem:[%s1905 + $0xd8] sm:$0xff]
        %v1996 = vld [vmem:[%s1905 + $0xe0] sm:$0xff]
        %v1997 = vld [vmem:[%s1905 + $0xe8] sm:$0xff]
        %v1998 = vld [vmem:[%s1905 + $0xf0] sm:$0xff]
        %v1999 = vld [vmem:[%s1905 + $0xf8] sm:$0xff]
        %v2000 = vld [vmem:[%s1905 + $0x100] sm:$0xff]
        %v2001 = vld [vmem:[%s1905 + $0x108] sm:$0xff]
        %v2002 = vld [vmem:[%s1905 + $0x110] sm:$0xff]
        %v2003 = vld [vmem:[%s1905 + $0x118] sm:$0xff]
        %v2004 = vld [vmem:[%s1905 + $0x120] sm:$0xff]
        %v2005 = vld [vmem:[%s1905 + $0x128] sm:$0xff]
        %v2006 = vld [vmem:[%s1905 + $0x130] sm:$0xff]
        %v2007 = vld [vmem:[%s1905 + $0x138] sm:$0xff]
        %v2008 = vld [vmem:[%s1905 + $0x140] sm:$0xff]
        %v2009 = vld [vmem:[%s1905 + $0x148] sm:$0xff]
        %v2010 = vld [vmem:[%s1905 + $0x150] sm:$0xff]
        %v2011 = vld [vmem:[%s1905 + $0x158] sm:$0xff]
        %v2012 = vld [vmem:[%s1905 + $0x160] sm:$0xff]
        %v2013 = vld [vmem:[%s1905 + $0x168] sm:$0xff]
        %v2014 = vld [vmem:[%s1905 + $0x170] sm:$0xff]
        %v2015 = vld [vmem:[%s1905 + $0x178] sm:$0xff]
        %v2016 = vld [vmem:[%s1905 + $0x180] sm:$0xff]
        %v2017 = vld [vmem:[%s1905 + $0x188] sm:$0xff]
        %v2018 = vld [vmem:[%s1905 + $0x190] sm:$0xff]
        %v2019 = vld [vmem:[%s1905 + $0x198] sm:$0xff]
        %v2020 = vld [vmem:[%s1905 + $0x1a0] sm:$0xff]
        %v2021 = vld [vmem:[%s1905 + $0x1a8] sm:$0xff]
        %v2022 = vld [vmem:[%s1905 + $0x1b0] sm:$0xff]
        %v2023 = vld [vmem:[%s1905 + $0x1b8] sm:$0xff]
        %v2024 = vld [vmem:[%s1905 + $0x1c0] sm:$0xff]
        %v2025 = vld [vmem:[%s1905 + $0x1c8] sm:$0xff]
        %v2026 = vld [vmem:[%s1905 + $0x1d0] sm:$0xff]
        %v2027 = vld [vmem:[%s1905 + $0x1d8] sm:$0xff]
        %v2028 = vld [vmem:[%s1905 + $0x1e0] sm:$0xff]
        %v2029 = vld [vmem:[%s1905 + $0x1e8] sm:$0xff]
        %v2030 = vld [vmem:[%s1905 + $0x1f0] sm:$0xff]
        %v2031 = vld [vmem:[%s1905 + $0x1f8] sm:$0xff]
        %v2032 = vld [vmem:[%s1905 + $0x200] sm:$0xff]
        %v2033 = vld [vmem:[%s1905 + $0x208] sm:$0xff]
        %v2034 = vld [vmem:[%s1905 + $0x210] sm:$0xff]
        %v2035 = vld [vmem:[%s1905 + $0x218] sm:$0xff]
        %v2036 = vld [vmem:[%s1905 + $0x220] sm:$0xff]
        %v2037 = vld [vmem:[%s1905 + $0x228] sm:$0xff]
        %v2038 = vld [vmem:[%s1905 + $0x230] sm:$0xff]
        %v2039 = vld [vmem:[%s1905 + $0x238] sm:$0xff]
        %v2040 = vld [vmem:[%s1905 + $0x240] sm:$0xff]
        %v2041 = vld [vmem:[%s1905 + $0x248] sm:$0xff]
        %v2042 = vld [vmem:[%s1905 + $0x250] sm:$0xff]
        %v2043 = vld [vmem:[%s1905 + $0x258] sm:$0xff]
        %v2044 = vld [vmem:[%s1905 + $0x260] sm:$0xff]
        %v2045 = vld [vmem:[%s1905 + $0x268] sm:$0xff]
        %v2046 = vld [vmem:[%s1905 + $0x270] sm:$0xff]
        %v2047 = vld [vmem:[%s1905 + $0x278] sm:$0xff]
        %v2048 = vld [vmem:[%s1905 + $0x280] sm:$0xff]
        %v2049 = vld [vmem:[%s1905 + $0x288] sm:$0xff]
        %v2050 = vld [vmem:[%s1905 + $0x290] sm:$0xff]
        %v2051 = vld [vmem:[%s1905 + $0x298] sm:$0xff]
        %v2052 = vld [vmem:[%s1905 + $0x2a0] sm:$0xff]
        %v2053 = vld [vmem:[%s1905 + $0x2a8] sm:$0xff]
        %v2054 = vld [vmem:[%s1905 + $0x2b0] sm:$0xff]
        %v2055 = vld [vmem:[%s1905 + $0x2b8] sm:$0xff]
        %v2056 = vld [vmem:[%s1905 + $0x2c0] sm:$0xff]
        %v2057 = vld [vmem:[%s1905 + $0x2c8] sm:$0xff]
        %v2058 = vld [vmem:[%s1905 + $0x2d0] sm:$0xff]
        %v2059 = vld [vmem:[%s1905 + $0x2d8] sm:$0xff]
        %v2060 = vld [vmem:[%s1905 + $0x2e0] sm:$0xff]
        %v2061 = vld [vmem:[%s1905 + $0x2e8] sm:$0xff]
        %v2062 = vld [vmem:[%s1905 + $0x2f0] sm:$0xff]
        %v2063 = vld [vmem:[%s1905 + $0x2f8] sm:$0xff]
        %v2064 = vld [vmem:[%s1905 + $0x300] sm:$0xff]
        %v2065 = vld [vmem:[%s1905 + $0x308] sm:$0xff]
        %v2066 = vld [vmem:[%s1905 + $0x310] sm:$0xff]
        %v2067 = vld [vmem:[%s1905 + $0x318] sm:$0xff]
        %v2068 = vld [vmem:[%s1905 + $0x320] sm:$0xff]
        %v2069 = vld [vmem:[%s1905 + $0x328] sm:$0xff]
        %v2070 = vld [vmem:[%s1905 + $0x330] sm:$0xff]
        %v2071 = vld [vmem:[%s1905 + $0x338] sm:$0xff]
        %v2072 = vld [vmem:[%s1905 + $0x340] sm:$0xff]
        %v2073 = vld [vmem:[%s1905 + $0x348] sm:$0xff]
        %v2074 = vld [vmem:[%s1905 + $0x350] sm:$0xff]
        %v2075 = vld [vmem:[%s1905 + $0x358] sm:$0xff]
        %v2076 = vld [vmem:[%s1905 + $0x360] sm:$0xff]
        %v2077 = vld [vmem:[%s1905 + $0x368] sm:$0xff]
        %v2078 = vld [vmem:[%s1905 + $0x370] sm:$0xff]
        %v2079 = vld [vmem:[%s1905 + $0x378] sm:$0xff]
        %v2080 = vld [vmem:[%s1905 + $0x380] sm:$0xff]
        %v2081 = vld [vmem:[%s1905 + $0x388] sm:$0xff]
        %v2082 = vld [vmem:[%s1905 + $0x390] sm:$0xff]
        %v2083 = vld [vmem:[%s1905 + $0x398] sm:$0xff]
        %v2084 = vld [vmem:[%s1905 + $0x3a0] sm:$0xff]
        %v2085 = vld [vmem:[%s1905 + $0x3a8] sm:$0xff]
        %v2086 = vld [vmem:[%s1905 + $0x3b0] sm:$0xff]
        %v2087 = vld [vmem:[%s1905 + $0x3b8] sm:$0xff]
        %v2088 = vld [vmem:[%s1905 + $0x3c0] sm:$0xff]
        %v2089 = vld [vmem:[%s1905 + $0x3c8] sm:$0xff]
        %v2090 = vld [vmem:[%s1905 + $0x3d0] sm:$0xff]
        %v2091 = vld [vmem:[%s1905 + $0x3d8] sm:$0xff]
        %v2092 = vld [vmem:[%s1905 + $0x3e0] sm:$0xff]
        %v2093 = vld [vmem:[%s1905 + $0x3e8] sm:$0xff]
        %v2094 = vld [vmem:[%s1905 + $0x3f0] sm:$0xff]
        %v2095 = vld [vmem:[%s1905 + $0x3f8] sm:$0xff]
        %v2096 = vld [vmem:[%s1905 + $0x400] sm:$0xff]
        %v2097 = vld [vmem:[%s1905 + $0x408] sm:$0xff]
        %v2098 = vld [vmem:[%s1905 + $0x410] sm:$0xff]
        %v2099 = vld [vmem:[%s1905 + $0x418] sm:$0xff]
        %v2100 = vld [vmem:[%s1905 + $0x420] sm:$0xff]
        %v2101 = vld [vmem:[%s1905 + $0x428] sm:$0xff]
        %v2102 = vld [vmem:[%s1905 + $0x430] sm:$0xff]
        %v2103 = vld [vmem:[%s1905 + $0x438] sm:$0xff]
        %v2104 = vld [vmem:[%s1905 + $0x440] sm:$0xff]
        %v2105 = vld [vmem:[%s1905 + $0x448] sm:$0xff]
        %v2106 = vld [vmem:[%s1905 + $0x450] sm:$0xff]
        %v2107 = vld [vmem:[%s1905 + $0x458] sm:$0xff]
        %v2108 = vld [vmem:[%s1905 + $0x460] sm:$0xff]
        %v2109 = vld [vmem:[%s1905 + $0x468] sm:$0xff]
        %v2110 = vld [vmem:[%s1905 + $0x470] sm:$0xff]
        %v2111 = vld [vmem:[%s1905 + $0x478] sm:$0xff]
        %v2112 = vld [vmem:[%s1905 + $0x480] sm:$0xff]
        %v2113 = vld [vmem:[%s1905 + $0x488] sm:$0xff]
        %v2114 = vld [vmem:[%s1905 + $0x490] sm:$0xff]
        %v2115 = vld [vmem:[%s1905 + $0x498] sm:$0xff]
        %v2116 = vld [vmem:[%s1905 + $0x4a0] sm:$0xff]
        %v2117 = vld [vmem:[%s1905 + $0x4a8] sm:$0xff]
        %v2118 = vld [vmem:[%s1905 + $0x4b0] sm:$0xff]
        %v2119 = vld [vmem:[%s1905 + $0x4b8] sm:$0xff]
        %v2120 = vld [vmem:[%s1905 + $0x4c0] sm:$0xff]
        %v2121 = vld [vmem:[%s1905 + $0x4c8] sm:$0xff]
        %v2122 = vld [vmem:[%s1905 + $0x4d0] sm:$0xff]
        %v2123 = vld [vmem:[%s1905 + $0x4d8] sm:$0xff]
        %v2124 = vld [vmem:[%s1905 + $0x4e0] sm:$0xff]
        %v2125 = vld [vmem:[%s1905 + $0x4e8] sm:$0xff]
        %v2126 = vld [vmem:[%s1905 + $0x4f0] sm:$0xff]
        %v2127 = vld [vmem:[%s1905 + $0x4f8] sm:$0xff]
        %v2128 = vld [vmem:[%s1905 + $0x500] sm:$0xff]
        %v2129 = vld [vmem:[%s1905 + $0x508] sm:$0xff]
        %v2130 = vld [vmem:[%s1905 + $0x510] sm:$0xff]
        %v2131 = vld [vmem:[%s1905 + $0x518] sm:$0xff]
        %v2132 = vld [vmem:[%s1905 + $0x520] sm:$0xff]
        %v2133 = vld [vmem:[%s1905 + $0x528] sm:$0xff]
        %v2134 = vld [vmem:[%s1905 + $0x530] sm:$0xff]
        %v2135 = vld [vmem:[%s1905 + $0x538] sm:$0xff]
        %v2136 = vld [vmem:[%s1905 + $0x540] sm:$0xff]
        %v2137 = vld [vmem:[%s1905 + $0x548] sm:$0xff]
        %v2138 = vld [vmem:[%s1905 + $0x550] sm:$0xff]
        %v2139 = vld [vmem:[%s1905 + $0x558] sm:$0xff]
        %v2140 = vld [vmem:[%s1905 + $0x560] sm:$0xff]
        %v2141 = vld [vmem:[%s1905 + $0x568] sm:$0xff]
        %v2142 = vld [vmem:[%s1905 + $0x570] sm:$0xff]
        %v2143 = vld [vmem:[%s1905 + $0x578] sm:$0xff]
        %v2144 = vld [vmem:[%s1905 + $0x580] sm:$0xff]
        %v2145 = vld [vmem:[%s1905 + $0x588] sm:$0xff]
        %v2146 = vld [vmem:[%s1905 + $0x590] sm:$0xff]
        %v2147 = vld [vmem:[%s1905 + $0x598] sm:$0xff]
        %v2148 = vld [vmem:[%s1905 + $0x5a0] sm:$0xff]
        %v2149 = vld [vmem:[%s1905 + $0x5a8] sm:$0xff]
        %v2150 = vld [vmem:[%s1905 + $0x5b0] sm:$0xff]
        %v2151 = vld [vmem:[%s1905 + $0x5b8] sm:$0xff]
        %v2152 = vld [vmem:[%s1905 + $0x5c0] sm:$0xff]
        %v2153 = vld [vmem:[%s1905 + $0x5c8] sm:$0xff]
        %v2154 = vld [vmem:[%s1905 + $0x5d0] sm:$0xff]
        %v2155 = vld [vmem:[%s1905 + $0x5d8] sm:$0xff]
        %v2156 = vld [vmem:[%s1905 + $0x5e0] sm:$0xff]
        %v2157 = vld [vmem:[%s1905 + $0x5e8] sm:$0xff]
        %v2158 = vld [vmem:[%s1905 + $0x5f0] sm:$0xff]
        %v2159 = vld [vmem:[%s1905 + $0x5f8] sm:$0xff]
        %v2160 = vld [vmem:[%s1905 + $0x600] sm:$0xff]
        %v2161 = vld [vmem:[%s1905 + $0x608] sm:$0xff]
        %v2162 = vld [vmem:[%s1905 + $0x610] sm:$0xff]
        %v2163 = vld [vmem:[%s1905 + $0x618] sm:$0xff]
        %v2164 = vld [vmem:[%s1905 + $0x620] sm:$0xff]
        %v2165 = vld [vmem:[%s1905 + $0x628] sm:$0xff]
        %v2166 = vld [vmem:[%s1905 + $0x630] sm:$0xff]
        %v2167 = vld [vmem:[%s1905 + $0x638] sm:$0xff]
        %v2168 = vld [vmem:[%s1905 + $0x640] sm:$0xff]
        %v2169 = vld [vmem:[%s1905 + $0x648] sm:$0xff]
        %v2170 = vld [vmem:[%s1905 + $0x650] sm:$0xff]
        %v2171 = vld [vmem:[%s1905 + $0x658] sm:$0xff]
        %v2172 = vld [vmem:[%s1905 + $0x660] sm:$0xff]
        %v2173 = vld [vmem:[%s1905 + $0x668] sm:$0xff]
        %v2174 = vld [vmem:[%s1905 + $0x670] sm:$0xff]
        %v2175 = vld [vmem:[%s1905 + $0x678] sm:$0xff]
        %v2176 = vld [vmem:[%s1905 + $0x680] sm:$0xff]
        %v2177 = vld [vmem:[%s1905 + $0x688] sm:$0xff]
        %v2178 = vld [vmem:[%s1905 + $0x690] sm:$0xff]
        %v2179 = vld [vmem:[%s1905 + $0x698] sm:$0xff]
        %v2180 = vld [vmem:[%s1905 + $0x6a0] sm:$0xff]
        %v2181 = vld [vmem:[%s1905 + $0x6a8] sm:$0xff]
        %v2182 = vld [vmem:[%s1905 + $0x6b0] sm:$0xff]
        %v2183 = vld [vmem:[%s1905 + $0x6b8] sm:$0xff]
        %v2184 = vld [vmem:[%s1905 + $0x6c0] sm:$0xff]
        %v2185 = vld [vmem:[%s1905 + $0x6c8] sm:$0xff]
        %v2186 = vld [vmem:[%s1905 + $0x6d0] sm:$0xff]
        %v2187 = vld [vmem:[%s1905 + $0x6d8] sm:$0xff]
        %v2188 = vld [vmem:[%s1905 + $0x6e0] sm:$0xff]
        %v2189 = vld [vmem:[%s1905 + $0x6e8] sm:$0xff]
        %v2190 = vld [vmem:[%s1905 + $0x6f0] sm:$0xff]
        %v2191 = vld [vmem:[%s1905 + $0x6f8] sm:$0xff]
        %v2192 = vld [vmem:[%s1905 + $0x700] sm:$0xff]
        %v2193 = vld [vmem:[%s1905 + $0x708] sm:$0xff]
        %v2194 = vld [vmem:[%s1905 + $0x710] sm:$0xff]
        %v2195 = vld [vmem:[%s1905 + $0x718] sm:$0xff]
        %v2196 = vld [vmem:[%s1905 + $0x720] sm:$0xff]
        %v2197 = vld [vmem:[%s1905 + $0x728] sm:$0xff]
        %v2198 = vld [vmem:[%s1905 + $0x730] sm:$0xff]
        %v2199 = vld [vmem:[%s1905 + $0x738] sm:$0xff]
        %v2200 = vld [vmem:[%s1905 + $0x740] sm:$0xff]
        %v2201 = vld [vmem:[%s1905 + $0x748] sm:$0xff]
        %v2202 = vld [vmem:[%s1905 + $0x750] sm:$0xff]
        %v2203 = vld [vmem:[%s1905 + $0x758] sm:$0xff]
        %v2204 = vld [vmem:[%s1905 + $0x760] sm:$0xff]
        %v2205 = vld [vmem:[%s1905 + $0x768] sm:$0xff]
        %v2206 = vld [vmem:[%s1905 + $0x770] sm:$0xff]
        %v2207 = vld [vmem:[%s1905 + $0x778] sm:$0xff]
        %v2208 = vld [vmem:[%s1905 + $0x780] sm:$0xff]
        %v2209 = vld [vmem:[%s1905 + $0x788] sm:$0xff]
        %v2210 = vld [vmem:[%s1905 + $0x790] sm:$0xff]
        %v2211 = vld [vmem:[%s1905 + $0x798] sm:$0xff]
        %v2212 = vld [vmem:[%s1905 + $0x7a0] sm:$0xff]
        %v2213 = vld [vmem:[%s1905 + $0x7a8] sm:$0xff]
        %v2214 = vld [vmem:[%s1905 + $0x7b0] sm:$0xff]
        %v2215 = vld [vmem:[%s1905 + $0x7b8] sm:$0xff]
        %v2216 = vld [vmem:[%s1905 + $0x7c0] sm:$0xff]
        %v2217 = vld [vmem:[%s1905 + $0x7c8] sm:$0xff]
        %v2218 = vld [vmem:[%s1905 + $0x7d0] sm:$0xff]
        %v2219 = vld [vmem:[%s1905 + $0x7d8] sm:$0xff]
        %v2220 = vld [vmem:[%s1905 + $0x7e0] sm:$0xff]
        %v2221 = vld [vmem:[%s1905 + $0x7e8] sm:$0xff]
        %v2222 = vld [vmem:[%s1905 + $0x7f0] sm:$0xff]
        %v2223 = vld [vmem:[%s1905 + $0x7f8] sm:$0xff]
        %v2224 = vld [vmem:[%s1905 + $0x800] sm:$0xff]
        %v2225 = vld [vmem:[%s1905 + $0x808] sm:$0xff]
        %v2226 = vld [vmem:[%s1905 + $0x810] sm:$0xff]
        %v2227 = vld [vmem:[%s1905 + $0x818] sm:$0xff]
        %v2228 = vld [vmem:[%s1905 + $0x820] sm:$0xff]
        %v2229 = vld [vmem:[%s1905 + $0x828] sm:$0xff]
        %v2230 = vld [vmem:[%s1905 + $0x830] sm:$0xff]
        %v2231 = vld [vmem:[%s1905 + $0x838] sm:$0xff]
        %v2232 = vld [vmem:[%s1905 + $0x840] sm:$0xff]
        %v2233 = vld [vmem:[%s1905 + $0x848] sm:$0xff]
        %v2234 = vld [vmem:[%s1905 + $0x850] sm:$0xff]
        %v2235 = vld [vmem:[%s1905 + $0x858] sm:$0xff]
        %v2236 = vld [vmem:[%s1905 + $0x860] sm:$0xff]
        %v2237 = vld [vmem:[%s1905 + $0x868] sm:$0xff]
        %v2238 = vld [vmem:[%s1905 + $0x870] sm:$0xff]
        %v2239 = vld [vmem:[%s1905 + $0x878] sm:$0xff]
        %v2240 = vld [vmem:[%s1905 + $0x880] sm:$0xff]
        %v2241 = vld [vmem:[%s1905 + $0x888] sm:$0xff]
        %v2242 = vld [vmem:[%s1905 + $0x890] sm:$0xff]
        %v2243 = vld [vmem:[%s1905 + $0x898] sm:$0xff]
        %v2244 = vld [vmem:[%s1905 + $0x8a0] sm:$0xff]
        %v2245 = vld [vmem:[%s1905 + $0x8a8] sm:$0xff]
        %v2246 = vld [vmem:[%s1905 + $0x8b0] sm:$0xff]
        %v2247 = vld [vmem:[%s1905 + $0x8b8] sm:$0xff]
        %v2248 = vld [vmem:[%s1905 + $0x8c0] sm:$0xff]
        %v2249 = vld [vmem:[%s1905 + $0x8c8] sm:$0xff]
        %v2250 = vld [vmem:[%s1905 + $0x8d0] sm:$0xff]
        %v2251 = vld [vmem:[%s1905 + $0x8d8] sm:$0xff]
        %v2252 = vld [vmem:[%s1905 + $0x8e0] sm:$0xff]
        %v2253 = vld [vmem:[%s1905 + $0x8e8] sm:$0xff]
        %v2254 = vld [vmem:[%s1905 + $0x8f0] sm:$0xff]
        %v2255 = vld [vmem:[%s1905 + $0x8f8] sm:$0xff]
        %v2256 = vld [vmem:[%s1905 + $0x900] sm:$0xff]
        %v2257 = vld [vmem:[%s1905 + $0x908] sm:$0xff]
        %v2258 = vld [vmem:[%s1905 + $0x910] sm:$0xff]
        %v2259 = vld [vmem:[%s1905 + $0x918] sm:$0xff]
        %v2260 = vld [vmem:[%s1905 + $0x920] sm:$0xff]
        %v2261 = vld [vmem:[%s1905 + $0x928] sm:$0xff]
        %v2262 = vld [vmem:[%s1905 + $0x930] sm:$0xff]
        %v2263 = vld [vmem:[%s1905 + $0x938] sm:$0xff]
        %v2264 = vld [vmem:[%s1905 + $0x940] sm:$0xff]
        %v2265 = vld [vmem:[%s1905 + $0x948] sm:$0xff]
        %v2266 = vld [vmem:[%s1905 + $0x950] sm:$0xff]
        %v2267 = vld [vmem:[%s1905 + $0x958] sm:$0xff]
        %v2268 = vld [vmem:[%s1905 + $0x960] sm:$0xff]
        %v2269 = vld [vmem:[%s1905 + $0x968] sm:$0xff]
        %v2270 = vld [vmem:[%s1905 + $0x970] sm:$0xff]
        %v2271 = vld [vmem:[%s1905 + $0x978] sm:$0xff]
        %v2272 = vld [vmem:[%s1905 + $0x980] sm:$0xff]
        %v2273 = vld [vmem:[%s1905 + $0x988] sm:$0xff]
        %v2274 = vld [vmem:[%s1905 + $0x990] sm:$0xff]
        %v2275 = vld [vmem:[%s1905 + $0x998] sm:$0xff]
        %v2276 = vld [vmem:[%s1905 + $0x9a0] sm:$0xff]
        %v2277 = vld [vmem:[%s1905 + $0x9a8] sm:$0xff]
        %v2278 = vld [vmem:[%s1905 + $0x9b0] sm:$0xff]
        %v2279 = vld [vmem:[%s1905 + $0x9b8] sm:$0xff]
        %v2280 = vld [vmem:[%s1905 + $0x9c0] sm:$0xff]
        %v2281 = vld [vmem:[%s1905 + $0x9c8] sm:$0xff]
        %v2282 = vld [vmem:[%s1905 + $0x9d0] sm:$0xff]
        %v2283 = vld [vmem:[%s1905 + $0x9d8] sm:$0xff]
        %v2284 = vld [vmem:[%s1905 + $0x9e0] sm:$0xff]
        %v2285 = vld [vmem:[%s1905 + $0x9e8] sm:$0xff]
        %v2286 = vld [vmem:[%s1905 + $0x9f0] sm:$0xff]
        %v2287 = vld [vmem:[%s1905 + $0x9f8] sm:$0xff]
        %v2288 = vld [vmem:[%s1905 + $0xa00] sm:$0xff]
        %v2289 = vld [vmem:[%s1905 + $0xa08] sm:$0xff]
        %v2290 = vld [vmem:[%s1905 + $0xa10] sm:$0xff]
        %v2291 = vld [vmem:[%s1905 + $0xa18] sm:$0xff]
        %v2292 = vld [vmem:[%s1905 + $0xa20] sm:$0xff]
        %v2293 = vld [vmem:[%s1905 + $0xa28] sm:$0xff]
        %v2294 = vld [vmem:[%s1905 + $0xa30] sm:$0xff]
        %v2295 = vld [vmem:[%s1905 + $0xa38] sm:$0xff]
        %v2296 = vld [vmem:[%s1905 + $0xa40] sm:$0xff]
        %v2297 = vld [vmem:[%s1905 + $0xa48] sm:$0xff]
        %v2298 = vld [vmem:[%s1905 + $0xa50] sm:$0xff]
        %v2299 = vld [vmem:[%s1905 + $0xa58] sm:$0xff]
        %v2300 = vld [vmem:[%s1905 + $0xa60] sm:$0xff]
        %v2301 = vld [vmem:[%s1905 + $0xa68] sm:$0xff]
        %v2302 = vld [vmem:[%s1905 + $0xa70] sm:$0xff]
        %v2303 = vld [vmem:[%s1905 + $0xa78] sm:$0xff]
        %v2304 = vld [vmem:[%s1905 + $0xa80] sm:$0xff]
        %v2305 = vld [vmem:[%s1905 + $0xa88] sm:$0xff]
        %v2306 = vld [vmem:[%s1905 + $0xa90] sm:$0xff]
        %v2307 = vld [vmem:[%s1905 + $0xa98] sm:$0xff]
        %v2308 = vld [vmem:[%s1905 + $0xaa0] sm:$0xff]
        %v2309 = vld [vmem:[%s1905 + $0xaa8] sm:$0xff]
        %v2310 = vld [vmem:[%s1905 + $0xab0] sm:$0xff]
        %v2311 = vld [vmem:[%s1905 + $0xab8] sm:$0xff]
        %v2312 = vld [vmem:[%s1905 + $0xac0] sm:$0xff]
        %v2313 = vld [vmem:[%s1905 + $0xac8] sm:$0xff]
        %v2314 = vld [vmem:[%s1905 + $0xad0] sm:$0xff]
        %v2315 = vld [vmem:[%s1905 + $0xad8] sm:$0xff]
        %v2316 = vld [vmem:[%s1905 + $0xae0] sm:$0xff]
        %v2317 = vld [vmem:[%s1905 + $0xae8] sm:$0xff]
        %v2318 = vld [vmem:[%s1905 + $0xaf0] sm:$0xff]
        %v2319 = vld [vmem:[%s1905 + $0xaf8] sm:$0xff]
        %v2320 = vld [vmem:[%s1905 + $0xb00] sm:$0xff]
        %v2321 = vld [vmem:[%s1905 + $0xb08] sm:$0xff]
        %v2322 = vld [vmem:[%s1905 + $0xb10] sm:$0xff]
        %v2323 = vld [vmem:[%s1905 + $0xb18] sm:$0xff]
        %v2324 = vld [vmem:[%s1905 + $0xb20] sm:$0xff]
        %v2325 = vld [vmem:[%s1905 + $0xb28] sm:$0xff]
        %v2326 = vld [vmem:[%s1905 + $0xb30] sm:$0xff]
        %v2327 = vld [vmem:[%s1905 + $0xb38] sm:$0xff]
        %v2328 = vld [vmem:[%s1905 + $0xb40] sm:$0xff]
        %v2329 = vld [vmem:[%s1905 + $0xb48] sm:$0xff]
        %v2330 = vld [vmem:[%s1905 + $0xb50] sm:$0xff]
        %v2331 = vld [vmem:[%s1905 + $0xb58] sm:$0xff]
        %v2332 = vld [vmem:[%s1905 + $0xb60] sm:$0xff]
        %v2333 = vld [vmem:[%s1905 + $0xb68] sm:$0xff]
        %v2334 = vld [vmem:[%s1905 + $0xb70] sm:$0xff]
        %v2335 = vld [vmem:[%s1905 + $0xb78] sm:$0xff]
        %v2336 = vld [vmem:[%s1905 + $0xb80] sm:$0xff]
        %v2337 = vld [vmem:[%s1905 + $0xb88] sm:$0xff]
        %v2338 = vld [vmem:[%s1905 + $0xb90] sm:$0xff]
        %v2339 = vld [vmem:[%s1905 + $0xb98] sm:$0xff]
        %v2340 = vld [vmem:[%s1905 + $0xba0] sm:$0xff]
        %v2341 = vld [vmem:[%s1905 + $0xba8] sm:$0xff]
        %v2342 = vld [vmem:[%s1905 + $0xbb0] sm:$0xff]
        %v2343 = vld [vmem:[%s1905 + $0xbb8] sm:$0xff]
        %v2344 = vld [vmem:[%s1905 + $0xbc0] sm:$0xff]
        %v2345 = vld [vmem:[%s1905 + $0xbc8] sm:$0xff]
        %v2346 = vld [vmem:[%s1905 + $0xbd0] sm:$0xff]
        %v2347 = vld [vmem:[%s1905 + $0xbd8] sm:$0xff]
        %v2348 = vld [vmem:[%s1905 + $0xbe0] sm:$0xff]
        %v2349 = vld [vmem:[%s1905 + $0xbe8] sm:$0xff]
        %v2350 = vld [vmem:[%s1905 + $0xbf0] sm:$0xff]
        %v2351 = vld [vmem:[%s1905 + $0xbf8] sm:$0xff]
        %v2352 = vld [vmem:[%s1905 + $0xc00] sm:$0xff]
        %v2353 = vld [vmem:[%s1905 + $0xc08] sm:$0xff]
        %v2354 = vld [vmem:[%s1905 + $0xc10] sm:$0xff]
        %v2355 = vld [vmem:[%s1905 + $0xc18] sm:$0xff]
        %v2356 = vld [vmem:[%s1905 + $0xc20] sm:$0xff]
        %v2357 = vld [vmem:[%s1905 + $0xc28] sm:$0xff]
        %v2358 = vld [vmem:[%s1905 + $0xc30] sm:$0xff]
        %v2359 = vld [vmem:[%s1905 + $0xc38] sm:$0xff]
        %v2360 = vld [vmem:[%s1905 + $0xc40] sm:$0xff]
        %v2361 = vld [vmem:[%s1905 + $0xc48] sm:$0xff]
        %v2362 = vld [vmem:[%s1905 + $0xc50] sm:$0xff]
        %v2363 = vld [vmem:[%s1905 + $0xc58] sm:$0xff]
        %v2364 = vld [vmem:[%s1905 + $0xc60] sm:$0xff]
        %v2365 = vld [vmem:[%s1905 + $0xc68] sm:$0xff]
        %v2366 = vld [vmem:[%s1905 + $0xc70] sm:$0xff]
        %v2367 = vld [vmem:[%s1905 + $0xc78] sm:$0xff]
        %v2368 = vld [vmem:[%s1905 + $0xc80] sm:$0xff]
        %v2369 = vld [vmem:[%s1905 + $0xc88] sm:$0xff]
        %v2370 = vld [vmem:[%s1905 + $0xc90] sm:$0xff]
        %v2371 = vld [vmem:[%s1905 + $0xc98] sm:$0xff]
        %v2372 = vld [vmem:[%s1905 + $0xca0] sm:$0xff]
        %v2373 = vld [vmem:[%s1905 + $0xca8] sm:$0xff]
        %v2374 = vld [vmem:[%s1905 + $0xcb0] sm:$0xff]
        %v2375 = vld [vmem:[%s1905 + $0xcb8] sm:$0xff]
        %v2376 = vld [vmem:[%s1905 + $0xcc0] sm:$0xff]
        %v2377 = vld [vmem:[%s1905 + $0xcc8] sm:$0xff]
        %v2378 = vld [vmem:[%s1905 + $0xcd0] sm:$0xff]
        %v2379 = vld [vmem:[%s1905 + $0xcd8] sm:$0xff]
        %v2380 = vld [vmem:[%s1905 + $0xce0] sm:$0xff]
        %v2381 = vld [vmem:[%s1905 + $0xce8] sm:$0xff]
        %v2382 = vld [vmem:[%s1905 + $0xcf0] sm:$0xff]
        %v2383 = vld [vmem:[%s1905 + $0xcf8] sm:$0xff]
        %v2384 = vld [vmem:[%s1905 + $0xd00] sm:$0xff]
        %v2385 = vld [vmem:[%s1905 + $0xd08] sm:$0xff]
        %v2386 = vld [vmem:[%s1905 + $0xd10] sm:$0xff]
        %v2387 = vld [vmem:[%s1905 + $0xd18] sm:$0xff]
        %v2388 = vld [vmem:[%s1905 + $0xd20] sm:$0xff]
        %v2389 = vld [vmem:[%s1905 + $0xd28] sm:$0xff]
        %v2390 = vld [vmem:[%s1905 + $0xd30] sm:$0xff]
        %v2391 = vld [vmem:[%s1905 + $0xd38] sm:$0xff]
        %v2392 = vld [vmem:[%s1905 + $0xd40] sm:$0xff]
        %v2393 = vld [vmem:[%s1905 + $0xd48] sm:$0xff]
        %v2394 = vld [vmem:[%s1905 + $0xd50] sm:$0xff]
        %v2395 = vld [vmem:[%s1905 + $0xd58] sm:$0xff]
        %v2396 = vld [vmem:[%s1905 + $0xd60] sm:$0xff]
        %v2397 = vld [vmem:[%s1905 + $0xd68] sm:$0xff]
        %v2398 = vld [vmem:[%s1905 + $0xd70] sm:$0xff]
        %v2399 = vld [vmem:[%s1905 + $0xd78] sm:$0xff]
        %v2428 = vunpack.c.l.b16 %v1940
        %v2429 = vunpack.c.h.b16 %v1940
        %v2430 = vunpack.c.l.b16 %v1941
        %v2431 = vunpack.c.h.b16 %v1941
        %v2432 = vunpack.c.l.b16 %v1942
        %v2433 = vunpack.c.h.b16 %v1942
        %v2434 = vunpack.c.l.b16 %v1943
        %v2435 = vunpack.c.h.b16 %v1943
        %v2436 = vunpack.c.l.b16 %v1944
        %v2437 = vunpack.c.h.b16 %v1944
        %v2438 = vunpack.c.l.b16 %v1945
        %v2439 = vunpack.c.h.b16 %v1945
        %v2440 = vunpack.c.l.b16 %v1946
        %v2441 = vunpack.c.h.b16 %v1946
        %v2442 = vunpack.c.l.b16 %v1947
        %v2443 = vunpack.c.h.b16 %v1947
        %v2444 = vunpack.c.l.b16 %v1948
        %v2445 = vunpack.c.h.b16 %v1948
        %v2446 = vunpack.c.l.b16 %v1949
        %v2447 = vunpack.c.h.b16 %v1949
        %v2448 = vunpack.c.l.b16 %v1950
        %v2449 = vunpack.c.h.b16 %v1950
        %v2450 = vunpack.c.l.b16 %v1951
        %v2451 = vunpack.c.h.b16 %v1951
        %v2452 = vunpack.c.l.b16 %v1952
        %v2453 = vunpack.c.h.b16 %v1952
        %v2454 = vunpack.c.l.b16 %v1953
        %v2455 = vunpack.c.l.b16 %v1954
        %v2456 = vunpack.c.h.b16 %v1954
        %v2457 = vunpack.c.l.b16 %v1955
        %v2458 = vunpack.c.h.b16 %v1955
        %v2459 = vunpack.c.l.b16 %v1956
        %v2460 = vunpack.c.h.b16 %v1956
        %v2461 = vunpack.c.l.b16 %v1957
        %v2462 = vunpack.c.h.b16 %v1957
        %v2463 = vunpack.c.l.b16 %v1958
        %v2464 = vunpack.c.h.b16 %v1958
        %v2465 = vunpack.c.l.b16 %v1959
        %v2466 = vunpack.c.h.b16 %v1959
        %v2467 = vunpack.c.l.b16 %v1960
        %v2468 = vunpack.c.h.b16 %v1960
        %v2469 = vunpack.c.l.b16 %v1961
        %v2470 = vunpack.c.h.b16 %v1961
        %v2471 = vunpack.c.l.b16 %v1962
        %v2472 = vunpack.c.h.b16 %v1962
        %v2473 = vunpack.c.l.b16 %v1963
        %v2474 = vunpack.c.h.b16 %v1963
        %v2475 = vunpack.c.l.b16 %v1964
        %v2476 = vunpack.c.h.b16 %v1964
        %v2477 = vunpack.c.l.b16 %v1965
        %v2478 = vunpack.c.h.b16 %v1965
        %v2479 = vunpack.c.l.b16 %v1966
        %v2480 = vunpack.c.h.b16 %v1966
        %v2481 = vunpack.c.l.b16 %v1967
        %v2482 = vpack.c.b16 %v2455, %v2428
        %v2483 = vpack.c.b16 %v2456, %v2429
        %v2484 = vpack.c.b16 %v2457, %v2430
        %v2485 = vpack.c.b16 %v2458, %v2431
        %v2486 = vpack.c.b16 %v2459, %v2432
        %v2487 = vpack.c.b16 %v2460, %v2433
        %v2488 = vpack.c.b16 %v2461, %v2434
        %v2489 = vpack.c.b16 %v2462, %v2435
        %v2490 = vpack.c.b16 %v2463, %v2436
        %v2491 = vpack.c.b16 %v2464, %v2437
        %v2492 = vpack.c.b16 %v2465, %v2438
        %v2493 = vpack.c.b16 %v2466, %v2439
        %v2494 = vpack.c.b16 %v2467, %v2440
        %v2495 = vpack.c.b16 %v2468, %v2441
        %v2496 = vpack.c.b16 %v2469, %v2442
        %v2497 = vpack.c.b16 %v2470, %v2443
        %v2498 = vpack.c.b16 %v2471, %v2444
        %v2499 = vpack.c.b16 %v2472, %v2445
        %v2500 = vpack.c.b16 %v2473, %v2446
        %v2501 = vpack.c.b16 %v2474, %v2447
        %v2502 = vpack.c.b16 %v2475, %v2448
        %v2503 = vpack.c.b16 %v2476, %v2449
        %v2504 = vpack.c.b16 %v2477, %v2450
        %v2505 = vpack.c.b16 %v2478, %v2451
        %v2506 = vpack.c.b16 %v2479, %v2452
        %v2507 = vpack.c.b16 %v2480, %v2453
        %v2508 = vpack.c.b16 %v2481, %v2454
        %v2968 = vunpack.c.l.b16 %v1968
        %v2969 = vunpack.c.h.b16 %v1968
        %v2970 = vunpack.c.l.b16 %v1969
        %v2971 = vunpack.c.h.b16 %v1969
        %v2972 = vunpack.c.l.b16 %v1970
        %v2973 = vunpack.c.h.b16 %v1970
        %v2974 = vunpack.c.l.b16 %v1971
        %v2975 = vunpack.c.h.b16 %v1971
        %v2976 = vunpack.c.l.b16 %v1972
        %v2977 = vunpack.c.h.b16 %v1972
        %v2978 = vunpack.c.l.b16 %v1973
        %v2979 = vunpack.c.h.b16 %v1973
        %v2980 = vunpack.c.l.b16 %v1974
        %v2981 = vunpack.c.h.b16 %v1974
        %v2982 = vunpack.c.l.b16 %v1975
        %v2983 = vunpack.c.h.b16 %v1975
        %v2984 = vunpack.c.l.b16 %v1976
        %v2985 = vunpack.c.h.b16 %v1976
        %v2986 = vunpack.c.l.b16 %v1977
        %v2987 = vunpack.c.h.b16 %v1977
        %v2988 = vunpack.c.l.b16 %v1978
        %v2989 = vunpack.c.h.b16 %v1978
        %v2990 = vunpack.c.l.b16 %v1979
        %v2991 = vunpack.c.h.b16 %v1979
        %v2992 = vunpack.c.l.b16 %v1980
        %v2993 = vunpack.c.h.b16 %v1980
        %v2994 = vunpack.c.l.b16 %v1981
        %v2995 = vunpack.c.h.b16 %v1981
        %v2996 = vunpack.c.l.b16 %v1982
        %v2997 = vunpack.c.h.b16 %v1982
        %v2998 = vunpack.c.l.b16 %v1983
        %v2999 = vunpack.c.h.b16 %v1983
        %v3000 = vunpack.c.l.b16 %v1984
        %v3001 = vunpack.c.h.b16 %v1984
        %v3002 = vunpack.c.l.b16 %v1985
        %v3003 = vunpack.c.h.b16 %v1985
        %v3004 = vunpack.c.l.b16 %v1986
        %v3005 = vunpack.c.h.b16 %v1986
        %v3006 = vunpack.c.l.b16 %v1987
        %v3007 = vunpack.c.h.b16 %v1987
        %v3008 = vunpack.c.l.b16 %v1988
        %v3009 = vunpack.c.h.b16 %v1988
        %v3010 = vunpack.c.l.b16 %v1989
        %v3011 = vunpack.c.h.b16 %v1989
        %v3012 = vunpack.c.l.b16 %v1990
        %v3013 = vunpack.c.h.b16 %v1990
        %v3014 = vunpack.c.l.b16 %v1991
        %v3015 = vunpack.c.h.b16 %v1991
        %v3016 = vunpack.c.l.b16 %v1992
        %v3017 = vunpack.c.h.b16 %v1992
        %v3018 = vunpack.c.l.b16 %v1993
        %v3019 = vunpack.c.h.b16 %v1993
        %v3020 = vunpack.c.l.b16 %v1994
        %v3021 = vunpack.c.h.b16 %v1994
        %v3022 = vunpack.c.l.b16 %v1995
        %v3023 = vunpack.c.h.b16 %v1995
        %v3024 = vunpack.c.l.b16 %v1996
        %v3025 = vunpack.c.h.b16 %v1996
        %v3026 = vunpack.c.l.b16 %v1997
        %v3027 = vunpack.c.h.b16 %v1997
        %v3028 = vunpack.c.l.b16 %v1998
        %v3029 = vunpack.c.h.b16 %v1998
        %v3030 = vunpack.c.l.b16 %v1999
        %v3031 = vunpack.c.h.b16 %v1999
        %v3032 = vunpack.c.l.b16 %v2000
        %v3033 = vunpack.c.h.b16 %v2000
        %v3034 = vunpack.c.l.b16 %v2001
        %v3035 = vunpack.c.h.b16 %v2001
        %v3036 = vunpack.c.l.b16 %v2002
        %v3037 = vunpack.c.h.b16 %v2002
        %v3038 = vunpack.c.l.b16 %v2003
        %v3039 = vunpack.c.h.b16 %v2003
        %v3040 = vunpack.c.l.b16 %v2004
        %v3041 = vunpack.c.h.b16 %v2004
        %v3042 = vunpack.c.l.b16 %v2005
        %v3043 = vunpack.c.h.b16 %v2005
        %v3044 = vunpack.c.l.b16 %v2006
        %v3045 = vunpack.c.h.b16 %v2006
        %v3046 = vunpack.c.l.b16 %v2007
        %v3047 = vunpack.c.h.b16 %v2007
        %v3048 = vunpack.c.l.b16 %v2008
        %v3049 = vunpack.c.h.b16 %v2008
        %v3050 = vunpack.c.l.b16 %v2009
        %v3051 = vunpack.c.h.b16 %v2009
        %v3052 = vunpack.c.l.b16 %v2010
        %v3053 = vunpack.c.h.b16 %v2010
        %v3054 = vunpack.c.l.b16 %v2011
        %v3055 = vunpack.c.h.b16 %v2011
        %v3056 = vunpack.c.l.b16 %v2012
        %v3057 = vunpack.c.h.b16 %v2012
        %v3058 = vunpack.c.l.b16 %v2013
        %v3059 = vunpack.c.h.b16 %v2013
        %v3060 = vunpack.c.l.b16 %v2014
        %v3061 = vunpack.c.h.b16 %v2014
        %v3062 = vunpack.c.l.b16 %v2015
        %v3063 = vunpack.c.h.b16 %v2015
        %v3064 = vunpack.c.l.b16 %v2016
        %v3065 = vunpack.c.h.b16 %v2016
        %v3066 = vunpack.c.l.b16 %v2017
        %v3067 = vunpack.c.h.b16 %v2017
        %v3068 = vunpack.c.l.b16 %v2018
        %v3069 = vunpack.c.h.b16 %v2018
        %v3070 = vunpack.c.l.b16 %v2019
        %v3071 = vunpack.c.h.b16 %v2019
        %v3072 = vunpack.c.l.b16 %v2020
        %v3073 = vunpack.c.h.b16 %v2020
        %v3074 = vunpack.c.l.b16 %v2021
        %v3075 = vunpack.c.h.b16 %v2021
        %v3076 = vunpack.c.l.b16 %v2022
        %v3077 = vunpack.c.h.b16 %v2022
        %v3078 = vunpack.c.l.b16 %v2023
        %v3079 = vunpack.c.h.b16 %v2023
        %v3080 = vunpack.c.l.b16 %v2024
        %v3081 = vunpack.c.h.b16 %v2024
        %v3082 = vunpack.c.l.b16 %v2025
        %v3083 = vunpack.c.h.b16 %v2025
        %v3084 = vunpack.c.l.b16 %v2026
        %v3085 = vunpack.c.h.b16 %v2026
        %v3086 = vunpack.c.l.b16 %v2027
        %v3087 = vunpack.c.h.b16 %v2027
        %v3088 = vunpack.c.l.b16 %v2028
        %v3089 = vunpack.c.h.b16 %v2028
        %v3090 = vunpack.c.l.b16 %v2029
        %v3091 = vunpack.c.h.b16 %v2029
        %v3092 = vunpack.c.l.b16 %v2030
        %v3093 = vunpack.c.h.b16 %v2030
        %v3094 = vunpack.c.l.b16 %v2031
        %v3095 = vunpack.c.h.b16 %v2031
        %v3096 = vunpack.c.l.b16 %v2032
        %v3097 = vunpack.c.h.b16 %v2032
        %v3098 = vunpack.c.l.b16 %v2033
        %v3099 = vunpack.c.h.b16 %v2033
        %v3100 = vunpack.c.l.b16 %v2034
        %v3101 = vunpack.c.h.b16 %v2034
        %v3102 = vunpack.c.l.b16 %v2035
        %v3103 = vunpack.c.h.b16 %v2035
        %v3104 = vunpack.c.l.b16 %v2036
        %v3105 = vunpack.c.h.b16 %v2036
        %v3106 = vunpack.c.l.b16 %v2037
        %v3107 = vunpack.c.h.b16 %v2037
        %v3108 = vunpack.c.l.b16 %v2038
        %v3109 = vunpack.c.h.b16 %v2038
        %v3110 = vunpack.c.l.b16 %v2039
        %v3111 = vunpack.c.h.b16 %v2039
        %v3112 = vunpack.c.l.b16 %v2040
        %v3113 = vunpack.c.h.b16 %v2040
        %v3114 = vunpack.c.l.b16 %v2041
        %v3115 = vunpack.c.h.b16 %v2041
        %v3116 = vunpack.c.l.b16 %v2042
        %v3117 = vunpack.c.h.b16 %v2042
        %v3118 = vunpack.c.l.b16 %v2043
        %v3119 = vunpack.c.h.b16 %v2043
        %v3120 = vunpack.c.l.b16 %v2044
        %v3121 = vunpack.c.h.b16 %v2044
        %v3122 = vunpack.c.l.b16 %v2045
        %v3123 = vunpack.c.h.b16 %v2045
        %v3124 = vunpack.c.l.b16 %v2046
        %v3125 = vunpack.c.h.b16 %v2046
        %v3126 = vunpack.c.l.b16 %v2047
        %v3127 = vunpack.c.h.b16 %v2047
        %v3128 = vunpack.c.l.b16 %v2048
        %v3129 = vunpack.c.h.b16 %v2048
        %v3130 = vunpack.c.l.b16 %v2049
        %v3131 = vunpack.c.h.b16 %v2049
        %v3132 = vunpack.c.l.b16 %v2050
        %v3133 = vunpack.c.h.b16 %v2050
        %v3134 = vunpack.c.l.b16 %v2051
        %v3135 = vunpack.c.h.b16 %v2051
        %v3136 = vunpack.c.l.b16 %v2052
        %v3137 = vunpack.c.h.b16 %v2052
        %v3138 = vunpack.c.l.b16 %v2053
        %v3139 = vunpack.c.h.b16 %v2053
        %v3140 = vunpack.c.l.b16 %v2054
        %v3141 = vunpack.c.h.b16 %v2054
        %v3142 = vunpack.c.l.b16 %v2055
        %v3143 = vunpack.c.h.b16 %v2055
        %v3144 = vunpack.c.l.b16 %v2056
        %v3145 = vunpack.c.h.b16 %v2056
        %v3146 = vunpack.c.l.b16 %v2057
        %v3147 = vunpack.c.h.b16 %v2057
        %v3148 = vunpack.c.l.b16 %v2058
        %v3149 = vunpack.c.h.b16 %v2058
        %v3150 = vunpack.c.l.b16 %v2059
        %v3151 = vunpack.c.h.b16 %v2059
        %v3152 = vunpack.c.l.b16 %v2060
        %v3153 = vunpack.c.h.b16 %v2060
        %v3154 = vunpack.c.l.b16 %v2061
        %v3155 = vunpack.c.h.b16 %v2061
        %v3156 = vunpack.c.l.b16 %v2062
        %v3157 = vunpack.c.h.b16 %v2062
        %v3158 = vunpack.c.l.b16 %v2063
        %v3159 = vunpack.c.h.b16 %v2063
        %v3160 = vunpack.c.l.b16 %v2064
        %v3161 = vunpack.c.h.b16 %v2064
        %v3162 = vunpack.c.l.b16 %v2065
        %v3163 = vunpack.c.h.b16 %v2065
        %v3164 = vunpack.c.l.b16 %v2066
        %v3165 = vunpack.c.h.b16 %v2066
        %v3166 = vunpack.c.l.b16 %v2067
        %v3167 = vunpack.c.h.b16 %v2067
        %v3168 = vunpack.c.l.b16 %v2068
        %v3169 = vunpack.c.h.b16 %v2068
        %v3170 = vunpack.c.l.b16 %v2069
        %v3171 = vunpack.c.h.b16 %v2069
        %v3172 = vunpack.c.l.b16 %v2070
        %v3173 = vunpack.c.h.b16 %v2070
        %v3174 = vunpack.c.l.b16 %v2071
        %v3175 = vunpack.c.h.b16 %v2071
        %v3176 = vunpack.c.l.b16 %v2072
        %v3177 = vunpack.c.h.b16 %v2072
        %v3178 = vunpack.c.l.b16 %v2073
        %v3179 = vunpack.c.h.b16 %v2073
        %v3180 = vunpack.c.l.b16 %v2074
        %v3181 = vunpack.c.h.b16 %v2074
        %v3182 = vunpack.c.l.b16 %v2075
        %v3183 = vunpack.c.h.b16 %v2075
        %v3184 = vunpack.c.l.b16 %v2076
        %v3185 = vunpack.c.h.b16 %v2076
        %v3186 = vunpack.c.l.b16 %v2077
        %v3187 = vunpack.c.h.b16 %v2077
        %v3188 = vunpack.c.l.b16 %v2078
        %v3189 = vunpack.c.h.b16 %v2078
        %v3190 = vunpack.c.l.b16 %v2079
        %v3191 = vunpack.c.h.b16 %v2079
        %v3192 = vunpack.c.l.b16 %v2080
        %v3193 = vunpack.c.h.b16 %v2080
        %v3194 = vunpack.c.l.b16 %v2081
        %v3195 = vunpack.c.h.b16 %v2081
        %v3196 = vunpack.c.l.b16 %v2082
        %v3197 = vunpack.c.h.b16 %v2082
        %v3198 = vunpack.c.l.b16 %v2083
        %v3199 = vunpack.c.h.b16 %v2083
        %v3200 = vunpack.c.l.b16 %v2084
        %v3201 = vunpack.c.h.b16 %v2084
        %v3202 = vunpack.c.l.b16 %v2085
        %v3203 = vunpack.c.h.b16 %v2085
        %v3204 = vunpack.c.l.b16 %v2086
        %v3205 = vunpack.c.h.b16 %v2086
        %v3206 = vunpack.c.l.b16 %v2087
        %v3207 = vunpack.c.h.b16 %v2087
        %v3208 = vunpack.c.l.b16 %v2088
        %v3209 = vunpack.c.h.b16 %v2088
        %v3210 = vunpack.c.l.b16 %v2089
        %v3211 = vunpack.c.h.b16 %v2089
        %v3212 = vunpack.c.l.b16 %v2090
        %v3213 = vunpack.c.h.b16 %v2090
        %v3214 = vunpack.c.l.b16 %v2091
        %v3215 = vunpack.c.h.b16 %v2091
        %v3216 = vunpack.c.l.b16 %v2092
        %v3217 = vunpack.c.h.b16 %v2092
        %v3218 = vunpack.c.l.b16 %v2093
        %v3219 = vunpack.c.h.b16 %v2093
        %v3220 = vunpack.c.l.b16 %v2094
        %v3221 = vunpack.c.h.b16 %v2094
        %v3222 = vunpack.c.l.b16 %v2095
        %v3223 = vunpack.c.h.b16 %v2095
        %v3224 = vunpack.c.l.b16 %v2096
        %v3225 = vunpack.c.h.b16 %v2096
        %v3226 = vunpack.c.l.b16 %v2097
        %v3227 = vunpack.c.h.b16 %v2097
        %v3228 = vunpack.c.l.b16 %v2098
        %v3229 = vunpack.c.h.b16 %v2098
        %v3230 = vunpack.c.l.b16 %v2099
        %v3231 = vunpack.c.h.b16 %v2099
        %v3232 = vunpack.c.l.b16 %v2100
        %v3233 = vunpack.c.h.b16 %v2100
        %v3234 = vunpack.c.l.b16 %v2101
        %v3235 = vunpack.c.h.b16 %v2101
        %v3236 = vunpack.c.l.b16 %v2102
        %v3237 = vunpack.c.h.b16 %v2102
        %v3238 = vunpack.c.l.b16 %v2103
        %v3239 = vunpack.c.h.b16 %v2103
        %v3240 = vunpack.c.l.b16 %v2104
        %v3241 = vunpack.c.h.b16 %v2104
        %v3242 = vunpack.c.l.b16 %v2105
        %v3243 = vunpack.c.h.b16 %v2105
        %v3244 = vunpack.c.l.b16 %v2106
        %v3245 = vunpack.c.h.b16 %v2106
        %v3246 = vunpack.c.l.b16 %v2107
        %v3247 = vunpack.c.h.b16 %v2107
        %v3248 = vunpack.c.l.b16 %v2108
        %v3249 = vunpack.c.h.b16 %v2108
        %v3250 = vunpack.c.l.b16 %v2109
        %v3251 = vunpack.c.h.b16 %v2109
        %v3252 = vunpack.c.l.b16 %v2110
        %v3253 = vunpack.c.h.b16 %v2110
        %v3254 = vunpack.c.l.b16 %v2111
        %v3255 = vunpack.c.h.b16 %v2111
        %v3256 = vunpack.c.l.b16 %v2112
        %v3257 = vunpack.c.h.b16 %v2112
        %v3258 = vunpack.c.l.b16 %v2113
        %v3259 = vunpack.c.h.b16 %v2113
        %v3260 = vunpack.c.l.b16 %v2114
        %v3261 = vunpack.c.h.b16 %v2114
        %v3262 = vunpack.c.l.b16 %v2115
        %v3263 = vunpack.c.h.b16 %v2115
        %v3264 = vunpack.c.l.b16 %v2116
        %v3265 = vunpack.c.h.b16 %v2116
        %v3266 = vunpack.c.l.b16 %v2117
        %v3267 = vunpack.c.h.b16 %v2117
        %v3268 = vunpack.c.l.b16 %v2118
        %v3269 = vunpack.c.h.b16 %v2118
        %v3270 = vunpack.c.l.b16 %v2119
        %v3271 = vunpack.c.h.b16 %v2119
        %v3272 = vunpack.c.l.b16 %v2120
        %v3273 = vunpack.c.h.b16 %v2120
        %v3274 = vunpack.c.l.b16 %v2121
        %v3275 = vunpack.c.h.b16 %v2121
        %v3276 = vunpack.c.l.b16 %v2122
        %v3277 = vunpack.c.h.b16 %v2122
        %v3278 = vunpack.c.l.b16 %v2123
        %v3279 = vunpack.c.h.b16 %v2123
        %v3280 = vunpack.c.l.b16 %v2124
        %v3281 = vunpack.c.h.b16 %v2124
        %v3282 = vunpack.c.l.b16 %v2125
        %v3283 = vunpack.c.h.b16 %v2125
        %v3284 = vunpack.c.l.b16 %v2126
        %v3285 = vunpack.c.h.b16 %v2126
        %v3286 = vunpack.c.l.b16 %v2127
        %v3287 = vunpack.c.h.b16 %v2127
        %v3288 = vunpack.c.l.b16 %v2128
        %v3289 = vunpack.c.h.b16 %v2128
        %v3290 = vunpack.c.l.b16 %v2129
        %v3291 = vunpack.c.h.b16 %v2129
        %v3292 = vunpack.c.l.b16 %v2130
        %v3293 = vunpack.c.h.b16 %v2130
        %v3294 = vunpack.c.l.b16 %v2131
        %v3295 = vunpack.c.h.b16 %v2131
        %v3296 = vunpack.c.l.b16 %v2132
        %v3297 = vunpack.c.h.b16 %v2132
        %v3298 = vunpack.c.l.b16 %v2133
        %v3299 = vunpack.c.h.b16 %v2133
        %v3300 = vunpack.c.l.b16 %v2134
        %v3301 = vunpack.c.h.b16 %v2134
        %v3302 = vunpack.c.l.b16 %v2135
        %v3303 = vunpack.c.h.b16 %v2135
        %v3304 = vunpack.c.l.b16 %v2136
        %v3305 = vunpack.c.h.b16 %v2136
        %v3306 = vunpack.c.l.b16 %v2137
        %v3307 = vunpack.c.h.b16 %v2137
        %v3308 = vunpack.c.l.b16 %v2138
        %v3309 = vunpack.c.h.b16 %v2138
        %v3310 = vunpack.c.l.b16 %v2139
        %v3311 = vunpack.c.h.b16 %v2139
        %v3312 = vunpack.c.l.b16 %v2140
        %v3313 = vunpack.c.h.b16 %v2140
        %v3314 = vunpack.c.l.b16 %v2141
        %v3315 = vunpack.c.h.b16 %v2141
        %v3316 = vunpack.c.l.b16 %v2142
        %v3317 = vunpack.c.h.b16 %v2142
        %v3318 = vunpack.c.l.b16 %v2143
        %v3319 = vunpack.c.h.b16 %v2143
        %v3320 = vunpack.c.l.b16 %v2144
        %v3321 = vunpack.c.h.b16 %v2144
        %v3322 = vunpack.c.l.b16 %v2145
        %v3323 = vunpack.c.h.b16 %v2145
        %v3324 = vunpack.c.l.b16 %v2146
        %v3325 = vunpack.c.h.b16 %v2146
        %v3326 = vunpack.c.l.b16 %v2147
        %v3327 = vunpack.c.h.b16 %v2147
        %v3328 = vunpack.c.l.b16 %v2148
        %v3329 = vunpack.c.h.b16 %v2148
        %v3330 = vunpack.c.l.b16 %v2149
        %v3331 = vunpack.c.h.b16 %v2149
        %v3332 = vunpack.c.l.b16 %v2150
        %v3333 = vunpack.c.h.b16 %v2150
        %v3334 = vunpack.c.l.b16 %v2151
        %v3335 = vunpack.c.h.b16 %v2151
        %v3336 = vunpack.c.l.b16 %v2152
        %v3337 = vunpack.c.h.b16 %v2152
        %v3338 = vunpack.c.l.b16 %v2153
        %v3339 = vunpack.c.h.b16 %v2153
        %v3340 = vunpack.c.l.b16 %v2154
        %v3341 = vunpack.c.h.b16 %v2154
        %v3342 = vunpack.c.l.b16 %v2155
        %v3343 = vunpack.c.h.b16 %v2155
        %v3344 = vunpack.c.l.b16 %v2156
        %v3345 = vunpack.c.h.b16 %v2156
        %v3346 = vunpack.c.l.b16 %v2157
        %v3347 = vunpack.c.h.b16 %v2157
        %v3348 = vunpack.c.l.b16 %v2158
        %v3349 = vunpack.c.h.b16 %v2158
        %v3350 = vunpack.c.l.b16 %v2159
        %v3351 = vunpack.c.h.b16 %v2159
        %v3352 = vunpack.c.l.b16 %v2160
        %v3353 = vunpack.c.h.b16 %v2160
        %v3354 = vunpack.c.l.b16 %v2161
        %v3355 = vunpack.c.h.b16 %v2161
        %v3356 = vunpack.c.l.b16 %v2162
        %v3357 = vunpack.c.h.b16 %v2162
        %v3358 = vunpack.c.l.b16 %v2163
        %v3359 = vunpack.c.h.b16 %v2163
        %v3360 = vunpack.c.l.b16 %v2164
        %v3361 = vunpack.c.h.b16 %v2164
        %v3362 = vunpack.c.l.b16 %v2165
        %v3363 = vunpack.c.h.b16 %v2165
        %v3364 = vunpack.c.l.b16 %v2166
        %v3365 = vunpack.c.h.b16 %v2166
        %v3366 = vunpack.c.l.b16 %v2167
        %v3367 = vunpack.c.h.b16 %v2167
        %v3368 = vunpack.c.l.b16 %v2168
        %v3369 = vunpack.c.h.b16 %v2168
        %v3370 = vunpack.c.l.b16 %v2169
        %v3371 = vunpack.c.h.b16 %v2169
        %v3372 = vunpack.c.l.b16 %v2170
        %v3373 = vunpack.c.h.b16 %v2170
        %v3374 = vunpack.c.l.b16 %v2171
        %v3375 = vunpack.c.h.b16 %v2171
        %v3376 = vunpack.c.l.b16 %v2172
        %v3377 = vunpack.c.h.b16 %v2172
        %v3378 = vunpack.c.l.b16 %v2173
        %v3379 = vunpack.c.h.b16 %v2173
        %v3380 = vunpack.c.l.b16 %v2174
        %v3381 = vunpack.c.h.b16 %v2174
        %v3382 = vunpack.c.l.b16 %v2175
        %v3383 = vunpack.c.h.b16 %v2175
        %v3384 = vunpack.c.l.b16 %v2176
        %v3385 = vunpack.c.h.b16 %v2176
        %v3386 = vunpack.c.l.b16 %v2177
        %v3387 = vunpack.c.h.b16 %v2177
        %v3388 = vunpack.c.l.b16 %v2178
        %v3389 = vunpack.c.h.b16 %v2178
        %v3390 = vunpack.c.l.b16 %v2179
        %v3391 = vunpack.c.h.b16 %v2179
        %v3392 = vunpack.c.l.b16 %v2180
        %v3393 = vunpack.c.h.b16 %v2180
        %v3394 = vunpack.c.l.b16 %v2181
        %v3395 = vunpack.c.h.b16 %v2181
        %v3396 = vunpack.c.l.b16 %v2182
        %v3397 = vunpack.c.h.b16 %v2182
        %v3398 = vunpack.c.l.b16 %v2183
        %v3399 = vunpack.c.h.b16 %v2183
        %v3400 = vunpack.c.l.b16 %v2184
        %v3401 = vunpack.c.h.b16 %v2184
        %v3402 = vunpack.c.l.b16 %v2185
        %v3403 = vunpack.c.h.b16 %v2185
        %v3404 = vunpack.c.l.b16 %v2186
        %v3405 = vunpack.c.h.b16 %v2186
        %v3406 = vunpack.c.l.b16 %v2187
        %v3407 = vunpack.c.h.b16 %v2187
        %v3408 = vunpack.c.l.b16 %v2188
        %v3409 = vunpack.c.h.b16 %v2188
        %v3410 = vunpack.c.l.b16 %v2189
        %v3411 = vunpack.c.h.b16 %v2189
        %v3412 = vunpack.c.l.b16 %v2190
        %v3413 = vunpack.c.h.b16 %v2190
        %v3414 = vunpack.c.l.b16 %v2191
        %v3415 = vunpack.c.h.b16 %v2191
        %v3416 = vunpack.c.l.b16 %v2192
        %v3417 = vunpack.c.h.b16 %v2192
        %v3418 = vunpack.c.l.b16 %v2193
        %v3419 = vunpack.c.h.b16 %v2193
        %v3420 = vunpack.c.l.b16 %v2194
        %v3421 = vunpack.c.h.b16 %v2194
        %v3422 = vunpack.c.l.b16 %v2195
        %v3423 = vunpack.c.h.b16 %v2195
        %v3424 = vunpack.c.l.b16 %v2196
        %v3425 = vunpack.c.h.b16 %v2196
        %v3426 = vunpack.c.l.b16 %v2197
        %v3427 = vunpack.c.h.b16 %v2197
        %v3428 = vunpack.c.l.b16 %v2198
        %v3429 = vunpack.c.h.b16 %v2198
        %v3430 = vunpack.c.l.b16 %v2199
        %v3431 = vunpack.c.h.b16 %v2199
        %v3432 = vunpack.c.l.b16 %v2200
        %v3433 = vunpack.c.h.b16 %v2200
        %v3434 = vunpack.c.l.b16 %v2201
        %v3435 = vunpack.c.h.b16 %v2201
        %v3436 = vunpack.c.l.b16 %v2202
        %v3437 = vunpack.c.h.b16 %v2202
        %v3438 = vunpack.c.l.b16 %v2203
        %v3439 = vunpack.c.h.b16 %v2203
        %v3440 = vunpack.c.l.b16 %v2204
        %v3441 = vunpack.c.h.b16 %v2204
        %v3442 = vunpack.c.l.b16 %v2205
        %v3443 = vunpack.c.h.b16 %v2205
        %v3444 = vunpack.c.l.b16 %v2206
        %v3445 = vunpack.c.h.b16 %v2206
        %v3446 = vunpack.c.l.b16 %v2207
        %v3447 = vunpack.c.h.b16 %v2207
        %v3448 = vunpack.c.l.b16 %v2208
        %v3449 = vunpack.c.h.b16 %v2208
        %v3450 = vunpack.c.l.b16 %v2209
        %v3451 = vunpack.c.h.b16 %v2209
        %v3452 = vunpack.c.l.b16 %v2210
        %v3453 = vunpack.c.h.b16 %v2210
        %v3454 = vunpack.c.l.b16 %v2211
        %v3455 = vunpack.c.h.b16 %v2211
        %v3456 = vunpack.c.l.b16 %v2212
        %v3457 = vunpack.c.h.b16 %v2212
        %v3458 = vunpack.c.l.b16 %v2213
        %v3459 = vunpack.c.h.b16 %v2213
        %v3460 = vunpack.c.l.b16 %v2214
        %v3461 = vunpack.c.h.b16 %v2214
        %v3462 = vunpack.c.l.b16 %v2215
        %v3463 = vunpack.c.h.b16 %v2215
        %v3464 = vunpack.c.l.b16 %v2216
        %v3465 = vunpack.c.h.b16 %v2216
        %v3466 = vunpack.c.l.b16 %v2217
        %v3467 = vunpack.c.h.b16 %v2217
        %v3468 = vunpack.c.l.b16 %v2218
        %v3469 = vunpack.c.h.b16 %v2218
        %v3470 = vunpack.c.l.b16 %v2219
        %v3471 = vunpack.c.h.b16 %v2219
        %v3472 = vunpack.c.l.b16 %v2220
        %v3473 = vunpack.c.h.b16 %v2220
        %v3474 = vunpack.c.l.b16 %v2221
        %v3475 = vunpack.c.h.b16 %v2221
        %v3476 = vunpack.c.l.b16 %v2222
        %v3477 = vunpack.c.h.b16 %v2222
        %v3478 = vunpack.c.l.b16 %v2223
        %v3479 = vunpack.c.h.b16 %v2223
        %v3480 = vunpack.c.l.b16 %v2224
        %v3481 = vunpack.c.h.b16 %v2224
        %v3482 = vunpack.c.l.b16 %v2225
        %v3483 = vunpack.c.h.b16 %v2225
        %v3484 = vunpack.c.l.b16 %v2226
        %v3485 = vunpack.c.h.b16 %v2226
        %v3486 = vunpack.c.l.b16 %v2227
        %v3487 = vunpack.c.h.b16 %v2227
        %v3488 = vunpack.c.l.b16 %v2228
        %v3489 = vunpack.c.h.b16 %v2228
        %v3490 = vunpack.c.l.b16 %v2229
        %v3491 = vunpack.c.h.b16 %v2229
        %v3492 = vunpack.c.l.b16 %v2230
        %v3493 = vunpack.c.h.b16 %v2230
        %v3494 = vunpack.c.l.b16 %v2231
        %v3495 = vunpack.c.h.b16 %v2231
        %v3496 = vunpack.c.l.b16 %v2232
        %v3497 = vunpack.c.h.b16 %v2232
        %v3498 = vunpack.c.l.b16 %v2233
        %v3499 = vunpack.c.h.b16 %v2233
        %v3500 = vunpack.c.l.b16 %v2234
        %v3501 = vunpack.c.h.b16 %v2234
        %v3502 = vunpack.c.l.b16 %v2235
        %v3503 = vunpack.c.h.b16 %v2235
        %v3504 = vunpack.c.l.b16 %v2236
        %v3505 = vunpack.c.h.b16 %v2236
        %v3506 = vunpack.c.l.b16 %v2237
        %v3507 = vunpack.c.h.b16 %v2237
        %v3508 = vunpack.c.l.b16 %v2238
        %v3509 = vunpack.c.h.b16 %v2238
        %v3510 = vunpack.c.l.b16 %v2239
        %v3511 = vunpack.c.h.b16 %v2239
        %v3512 = vunpack.c.l.b16 %v2240
        %v3513 = vunpack.c.h.b16 %v2240
        %v3514 = vunpack.c.l.b16 %v2241
        %v3515 = vunpack.c.h.b16 %v2241
        %v3516 = vunpack.c.l.b16 %v2242
        %v3517 = vunpack.c.h.b16 %v2242
        %v3518 = vunpack.c.l.b16 %v2243
        %v3519 = vunpack.c.h.b16 %v2243
        %v3520 = vunpack.c.l.b16 %v2244
        %v3521 = vunpack.c.h.b16 %v2244
        %v3522 = vunpack.c.l.b16 %v2245
        %v3523 = vunpack.c.h.b16 %v2245
        %v3524 = vunpack.c.l.b16 %v2246
        %v3525 = vunpack.c.h.b16 %v2246
        %v3526 = vunpack.c.l.b16 %v2247
        %v3527 = vunpack.c.h.b16 %v2247
        %v3528 = vunpack.c.l.b16 %v2248
        %v3529 = vunpack.c.h.b16 %v2248
        %v3530 = vunpack.c.l.b16 %v2249
        %v3531 = vunpack.c.h.b16 %v2249
        %v3532 = vunpack.c.l.b16 %v2250
        %v3533 = vunpack.c.h.b16 %v2250
        %v3534 = vunpack.c.l.b16 %v2251
        %v3535 = vunpack.c.h.b16 %v2251
        %v3536 = vunpack.c.l.b16 %v2252
        %v3537 = vunpack.c.h.b16 %v2252
        %v3538 = vunpack.c.l.b16 %v2253
        %v3539 = vunpack.c.h.b16 %v2253
        %v3540 = vunpack.c.l.b16 %v2254
        %v3541 = vunpack.c.h.b16 %v2254
        %v3542 = vunpack.c.l.b16 %v2255
        %v3543 = vunpack.c.h.b16 %v2255
        %v3544 = vunpack.c.l.b16 %v2256
        %v3545 = vunpack.c.h.b16 %v2256
        %v3546 = vunpack.c.l.b16 %v2257
        %v3547 = vunpack.c.h.b16 %v2257
        %v3548 = vunpack.c.l.b16 %v2258
        %v3549 = vunpack.c.h.b16 %v2258
        %v3550 = vunpack.c.l.b16 %v2259
        %v3551 = vunpack.c.h.b16 %v2259
        %v3552 = vunpack.c.l.b16 %v2260
        %v3553 = vunpack.c.h.b16 %v2260
        %v3554 = vunpack.c.l.b16 %v2261
        %v3555 = vunpack.c.h.b16 %v2261
        %v3556 = vunpack.c.l.b16 %v2262
        %v3557 = vunpack.c.h.b16 %v2262
        %v3558 = vunpack.c.l.b16 %v2263
        %v3559 = vunpack.c.h.b16 %v2263
        %v3560 = vunpack.c.l.b16 %v2264
        %v3561 = vunpack.c.h.b16 %v2264
        %v3562 = vunpack.c.l.b16 %v2265
        %v3563 = vunpack.c.h.b16 %v2265
        %v3564 = vunpack.c.l.b16 %v2266
        %v3565 = vunpack.c.h.b16 %v2266
        %v3566 = vunpack.c.l.b16 %v2267
        %v3567 = vunpack.c.h.b16 %v2267
        %v3568 = vunpack.c.l.b16 %v2268
        %v3569 = vunpack.c.h.b16 %v2268
        %v3570 = vunpack.c.l.b16 %v2269
        %v3571 = vunpack.c.h.b16 %v2269
        %v3572 = vunpack.c.l.b16 %v2270
        %v3573 = vunpack.c.h.b16 %v2270
        %v3574 = vunpack.c.l.b16 %v2271
        %v3575 = vunpack.c.h.b16 %v2271
        %v3576 = vunpack.c.l.b16 %v2272
        %v3577 = vunpack.c.h.b16 %v2272
        %v3578 = vunpack.c.l.b16 %v2273
        %v3579 = vunpack.c.h.b16 %v2273
        %v3580 = vunpack.c.l.b16 %v2274
        %v3581 = vunpack.c.h.b16 %v2274
        %v3582 = vunpack.c.l.b16 %v2275
        %v3583 = vunpack.c.h.b16 %v2275
        %v3584 = vunpack.c.l.b16 %v2276
        %v3585 = vunpack.c.h.b16 %v2276
        %v3586 = vunpack.c.l.b16 %v2277
        %v3587 = vunpack.c.h.b16 %v2277
        %v3588 = vunpack.c.l.b16 %v2278
        %v3589 = vunpack.c.h.b16 %v2278
        %v3590 = vunpack.c.l.b16 %v2279
        %v3591 = vunpack.c.h.b16 %v2279
        %v3592 = vunpack.c.l.b16 %v2280
        %v3593 = vunpack.c.h.b16 %v2280
        %v3594 = vunpack.c.l.b16 %v2281
        %v3595 = vunpack.c.h.b16 %v2281
        %v3596 = vunpack.c.l.b16 %v2282
        %v3597 = vunpack.c.h.b16 %v2282
        %v3598 = vunpack.c.l.b16 %v2283
        %v3599 = vunpack.c.h.b16 %v2283
        %v3600 = vunpack.c.l.b16 %v2284
        %v3601 = vunpack.c.h.b16 %v2284
        %v3602 = vunpack.c.l.b16 %v2285
        %v3603 = vunpack.c.h.b16 %v2285
        %v3604 = vunpack.c.l.b16 %v2286
        %v3605 = vunpack.c.h.b16 %v2286
        %v3606 = vunpack.c.l.b16 %v2287
        %v3607 = vunpack.c.h.b16 %v2287
        %v3608 = vunpack.c.l.b16 %v2288
        %v3609 = vunpack.c.h.b16 %v2288
        %v3610 = vunpack.c.l.b16 %v2289
        %v3611 = vunpack.c.h.b16 %v2289
        %v3612 = vunpack.c.l.b16 %v2290
        %v3613 = vunpack.c.h.b16 %v2290
        %v3614 = vunpack.c.l.b16 %v2291
        %v3615 = vunpack.c.h.b16 %v2291
        %v3616 = vunpack.c.l.b16 %v2292
        %v3617 = vunpack.c.h.b16 %v2292
        %v3618 = vunpack.c.l.b16 %v2293
        %v3619 = vunpack.c.h.b16 %v2293
        %v3620 = vunpack.c.l.b16 %v2294
        %v3621 = vunpack.c.h.b16 %v2294
        %v3622 = vunpack.c.l.b16 %v2295
        %v3623 = vunpack.c.h.b16 %v2295
        %v3624 = vunpack.c.l.b16 %v2296
        %v3625 = vunpack.c.h.b16 %v2296
        %v3626 = vunpack.c.l.b16 %v2297
        %v3627 = vunpack.c.h.b16 %v2297
        %v3628 = vunpack.c.l.b16 %v2298
        %v3629 = vunpack.c.h.b16 %v2298
        %v3630 = vunpack.c.l.b16 %v2299
        %v3631 = vunpack.c.h.b16 %v2299
        %v3632 = vunpack.c.l.b16 %v2300
        %v3633 = vunpack.c.h.b16 %v2300
        %v3634 = vunpack.c.l.b16 %v2301
        %v3635 = vunpack.c.h.b16 %v2301
        %v3636 = vunpack.c.l.b16 %v2302
        %v3637 = vunpack.c.h.b16 %v2302
        %v3638 = vunpack.c.l.b16 %v2303
        %v3639 = vunpack.c.h.b16 %v2303
        %v3640 = vunpack.c.l.b16 %v2304
        %v3641 = vunpack.c.h.b16 %v2304
        %v3642 = vunpack.c.l.b16 %v2305
        %v3643 = vunpack.c.h.b16 %v2305
        %v3644 = vunpack.c.l.b16 %v2306
        %v3645 = vunpack.c.h.b16 %v2306
        %v3646 = vunpack.c.l.b16 %v2307
        %v3647 = vunpack.c.h.b16 %v2307
        %v3648 = vunpack.c.l.b16 %v2308
        %v3649 = vunpack.c.h.b16 %v2308
        %v3650 = vunpack.c.l.b16 %v2309
        %v3651 = vunpack.c.h.b16 %v2309
        %v3652 = vunpack.c.l.b16 %v2310
        %v3653 = vunpack.c.h.b16 %v2310
        %v3654 = vunpack.c.l.b16 %v2311
        %v3655 = vunpack.c.h.b16 %v2311
        %v3656 = vunpack.c.l.b16 %v2312
        %v3657 = vunpack.c.h.b16 %v2312
        %v3658 = vunpack.c.l.b16 %v2313
        %v3659 = vunpack.c.h.b16 %v2313
        %v3660 = vunpack.c.l.b16 %v2314
        %v3661 = vunpack.c.h.b16 %v2314
        %v3662 = vunpack.c.l.b16 %v2315
        %v3663 = vunpack.c.h.b16 %v2315
        %v3664 = vunpack.c.l.b16 %v2316
        %v3665 = vunpack.c.h.b16 %v2316
        %v3666 = vunpack.c.l.b16 %v2317
        %v3667 = vunpack.c.h.b16 %v2317
        %v3668 = vunpack.c.l.b16 %v2318
        %v3669 = vunpack.c.h.b16 %v2318
        %v3670 = vunpack.c.l.b16 %v2319
        %v3671 = vunpack.c.h.b16 %v2319
        %v3672 = vunpack.c.l.b16 %v2320
        %v3673 = vunpack.c.h.b16 %v2320
        %v3674 = vunpack.c.l.b16 %v2321
        %v3675 = vunpack.c.h.b16 %v2321
        %v3676 = vunpack.c.l.b16 %v2322
        %v3677 = vunpack.c.h.b16 %v2322
        %v3678 = vunpack.c.l.b16 %v2323
        %v3679 = vunpack.c.h.b16 %v2323
        %v3680 = vunpack.c.l.b16 %v2324
        %v3681 = vunpack.c.h.b16 %v2324
        %v3682 = vunpack.c.l.b16 %v2325
        %v3683 = vunpack.c.h.b16 %v2325
        %v3684 = vunpack.c.l.b16 %v2326
        %v3685 = vunpack.c.h.b16 %v2326
        %v3686 = vunpack.c.l.b16 %v2327
        %v3687 = vunpack.c.h.b16 %v2327
        %v3688 = vunpack.c.l.b16 %v2328
        %v3689 = vunpack.c.h.b16 %v2328
        %v3690 = vunpack.c.l.b16 %v2329
        %v3691 = vunpack.c.h.b16 %v2329
        %v3692 = vunpack.c.l.b16 %v2330
        %v3693 = vunpack.c.h.b16 %v2330
        %v3694 = vunpack.c.l.b16 %v2331
        %v3695 = vunpack.c.h.b16 %v2331
        %v3696 = vunpack.c.l.b16 %v2332
        %v3697 = vunpack.c.h.b16 %v2332
        %v3698 = vunpack.c.l.b16 %v2333
        %v3699 = vunpack.c.h.b16 %v2333
        %v3700 = vunpack.c.l.b16 %v2334
        %v3701 = vunpack.c.h.b16 %v2334
        %v3702 = vunpack.c.l.b16 %v2335
        %v3703 = vunpack.c.h.b16 %v2335
        %v3704 = vunpack.c.l.b16 %v2336
        %v3705 = vunpack.c.h.b16 %v2336
        %v3706 = vunpack.c.l.b16 %v2337
        %v3707 = vunpack.c.h.b16 %v2337
        %v3708 = vunpack.c.l.b16 %v2338
        %v3709 = vunpack.c.h.b16 %v2338
        %v3710 = vunpack.c.l.b16 %v2339
        %v3711 = vunpack.c.h.b16 %v2339
        %v3712 = vunpack.c.l.b16 %v2340
        %v3713 = vunpack.c.h.b16 %v2340
        %v3714 = vunpack.c.l.b16 %v2341
        %v3715 = vunpack.c.h.b16 %v2341
        %v3716 = vunpack.c.l.b16 %v2342
        %v3717 = vunpack.c.h.b16 %v2342
        %v3718 = vunpack.c.l.b16 %v2343
        %v3719 = vunpack.c.h.b16 %v2343
        %v3720 = vunpack.c.l.b16 %v2344
        %v3721 = vunpack.c.h.b16 %v2344
        %v3722 = vunpack.c.l.b16 %v2345
        %v3723 = vunpack.c.h.b16 %v2345
        %v3724 = vunpack.c.l.b16 %v2346
        %v3725 = vunpack.c.h.b16 %v2346
        %v3726 = vunpack.c.l.b16 %v2347
        %v3727 = vunpack.c.h.b16 %v2347
        %v3728 = vunpack.c.l.b16 %v2348
        %v3729 = vunpack.c.h.b16 %v2348
        %v3730 = vunpack.c.l.b16 %v2349
        %v3731 = vunpack.c.h.b16 %v2349
        %v3732 = vunpack.c.l.b16 %v2350
        %v3733 = vunpack.c.h.b16 %v2350
        %v3734 = vunpack.c.l.b16 %v2351
        %v3735 = vunpack.c.h.b16 %v2351
        %v3736 = vunpack.c.l.b16 %v2352
        %v3737 = vunpack.c.h.b16 %v2352
        %v3738 = vunpack.c.l.b16 %v2353
        %v3739 = vunpack.c.h.b16 %v2353
        %v3740 = vunpack.c.l.b16 %v2354
        %v3741 = vunpack.c.h.b16 %v2354
        %v3742 = vunpack.c.l.b16 %v2355
        %v3743 = vunpack.c.h.b16 %v2355
        %v3744 = vunpack.c.l.b16 %v2356
        %v3745 = vunpack.c.h.b16 %v2356
        %v3746 = vunpack.c.l.b16 %v2357
        %v3747 = vunpack.c.h.b16 %v2357
        %v3748 = vunpack.c.l.b16 %v2358
        %v3749 = vunpack.c.h.b16 %v2358
        %v3750 = vunpack.c.l.b16 %v2359
        %v3751 = vunpack.c.h.b16 %v2359
        %v3752 = vunpack.c.l.b16 %v2360
        %v3753 = vunpack.c.h.b16 %v2360
        %v3754 = vunpack.c.l.b16 %v2361
        %v3755 = vunpack.c.h.b16 %v2361
        %v3756 = vunpack.c.l.b16 %v2362
        %v3757 = vunpack.c.h.b16 %v2362
        %v3758 = vunpack.c.l.b16 %v2363
        %v3759 = vunpack.c.h.b16 %v2363
        %v3760 = vunpack.c.l.b16 %v2364
        %v3761 = vunpack.c.h.b16 %v2364
        %v3762 = vunpack.c.l.b16 %v2365
        %v3763 = vunpack.c.h.b16 %v2365
        %v3764 = vunpack.c.l.b16 %v2366
        %v3765 = vunpack.c.h.b16 %v2366
        %v3766 = vunpack.c.l.b16 %v2367
        %v3767 = vunpack.c.h.b16 %v2367
        %v3768 = vunpack.c.l.b16 %v2368
        %v3769 = vunpack.c.h.b16 %v2368
        %v3770 = vunpack.c.l.b16 %v2369
        %v3771 = vunpack.c.h.b16 %v2369
        %v3772 = vunpack.c.l.b16 %v2370
        %v3773 = vunpack.c.h.b16 %v2370
        %v3774 = vunpack.c.l.b16 %v2371
        %v3775 = vunpack.c.h.b16 %v2371
        %v3776 = vunpack.c.l.b16 %v2372
        %v3777 = vunpack.c.h.b16 %v2372
        %v3778 = vunpack.c.l.b16 %v2373
        %v3779 = vunpack.c.h.b16 %v2373
        %v3780 = vunpack.c.l.b16 %v2374
        %v3781 = vunpack.c.h.b16 %v2374
        %v3782 = vunpack.c.l.b16 %v2375
        %v3783 = vunpack.c.h.b16 %v2375
        %v3784 = vunpack.c.l.b16 %v2376
        %v3785 = vunpack.c.h.b16 %v2376
        %v3786 = vunpack.c.l.b16 %v2377
        %v3787 = vunpack.c.h.b16 %v2377
        %v3788 = vunpack.c.l.b16 %v2378
        %v3789 = vunpack.c.h.b16 %v2378
        %v3790 = vunpack.c.l.b16 %v2379
        %v3791 = vunpack.c.h.b16 %v2379
        %v3792 = vunpack.c.l.b16 %v2380
        %v3793 = vunpack.c.h.b16 %v2380
        %v3794 = vunpack.c.l.b16 %v2381
        %v3795 = vunpack.c.h.b16 %v2381
        %v3796 = vunpack.c.l.b16 %v2382
        %v3797 = vunpack.c.h.b16 %v2382
        %v3798 = vunpack.c.l.b16 %v2383
        %v3799 = vunpack.c.h.b16 %v2383
        %v3800 = vunpack.c.l.b16 %v2384
        %v3801 = vunpack.c.h.b16 %v2384
        %v3802 = vunpack.c.l.b16 %v2385
        %v3803 = vunpack.c.h.b16 %v2385
        %v3804 = vunpack.c.l.b16 %v2386
        %v3805 = vunpack.c.h.b16 %v2386
        %v3806 = vunpack.c.l.b16 %v2387
        %v3807 = vunpack.c.h.b16 %v2387
        %v3808 = vunpack.c.l.b16 %v2388
        %v3809 = vunpack.c.h.b16 %v2388
        %v3810 = vunpack.c.l.b16 %v2389
        %v3811 = vunpack.c.h.b16 %v2389
        %v3812 = vunpack.c.l.b16 %v2390
        %v3813 = vunpack.c.h.b16 %v2390
        %v3814 = vunpack.c.l.b16 %v2391
        %v3815 = vunpack.c.h.b16 %v2391
        %v3816 = vunpack.c.l.b16 %v2392
        %v3817 = vunpack.c.h.b16 %v2392
        %v3818 = vunpack.c.l.b16 %v2393
        %v3819 = vunpack.c.h.b16 %v2393
        %v3820 = vunpack.c.l.b16 %v2394
        %v3821 = vunpack.c.h.b16 %v2394
        %v3822 = vunpack.c.l.b16 %v2395
        %v3823 = vunpack.c.h.b16 %v2395
        %v3824 = vunpack.c.l.b16 %v2396
        %v3825 = vunpack.c.h.b16 %v2396
        %v3826 = vunpack.c.l.b16 %v2397
        %v3827 = vunpack.c.h.b16 %v2397
        %v3828 = vunpack.c.l.b16 %v2398
        %v3829 = vunpack.c.h.b16 %v2398
        %v3830 = vunpack.c.l.b16 %v2399
        %v3831 = vunpack.c.h.b16 %v2399
        %v3832 = vpack.c.b16 %v2970, %v2968
        %v3833 = vpack.c.b16 %v2971, %v2969
        %v3834 = vpack.c.b16 %v2974, %v2972
        %v3835 = vpack.c.b16 %v2975, %v2973
        %v3836 = vpack.c.b16 %v2978, %v2976
        %v3837 = vpack.c.b16 %v2979, %v2977
        %v3838 = vpack.c.b16 %v2982, %v2980
        %v3839 = vpack.c.b16 %v2983, %v2981
        %v3840 = vpack.c.b16 %v2986, %v2984
        %v3841 = vpack.c.b16 %v2987, %v2985
        %v3842 = vpack.c.b16 %v2990, %v2988
        %v3843 = vpack.c.b16 %v2991, %v2989
        %v3844 = vpack.c.b16 %v2994, %v2992
        %v3845 = vpack.c.b16 %v2995, %v2993
        %v3846 = vpack.c.b16 %v2998, %v2996
        %v3847 = vpack.c.b16 %v2999, %v2997
        %v3848 = vpack.c.b16 %v3002, %v3000
        %v3849 = vpack.c.b16 %v3003, %v3001
        %v3850 = vpack.c.b16 %v3006, %v3004
        %v3851 = vpack.c.b16 %v3007, %v3005
        %v3852 = vpack.c.b16 %v3010, %v3008
        %v3853 = vpack.c.b16 %v3011, %v3009
        %v3854 = vpack.c.b16 %v3014, %v3012
        %v3855 = vpack.c.b16 %v3015, %v3013
        %v3856 = vpack.c.b16 %v3018, %v3016
        %v3857 = vpack.c.b16 %v3019, %v3017
        %v3858 = vpack.c.b16 %v3022, %v3020
        %v3859 = vpack.c.b16 %v3023, %v3021
        %v3860 = vpack.c.b16 %v3026, %v3024
        %v3861 = vpack.c.b16 %v3027, %v3025
        %v3862 = vpack.c.b16 %v3030, %v3028
        %v3863 = vpack.c.b16 %v3031, %v3029
        %v3864 = vpack.c.b16 %v3034, %v3032
        %v3865 = vpack.c.b16 %v3035, %v3033
        %v3866 = vpack.c.b16 %v3038, %v3036
        %v3867 = vpack.c.b16 %v3039, %v3037
        %v3868 = vpack.c.b16 %v3042, %v3040
        %v3869 = vpack.c.b16 %v3043, %v3041
        %v3870 = vpack.c.b16 %v3046, %v3044
        %v3871 = vpack.c.b16 %v3047, %v3045
        %v3872 = vpack.c.b16 %v3050, %v3048
        %v3873 = vpack.c.b16 %v3051, %v3049
        %v3874 = vpack.c.b16 %v3054, %v3052
        %v3875 = vpack.c.b16 %v3055, %v3053
        %v3876 = vpack.c.b16 %v3058, %v3056
        %v3877 = vpack.c.b16 %v3059, %v3057
        %v3878 = vpack.c.b16 %v3062, %v3060
        %v3879 = vpack.c.b16 %v3063, %v3061
        %v3880 = vpack.c.b16 %v3066, %v3064
        %v3881 = vpack.c.b16 %v3067, %v3065
        %v3882 = vpack.c.b16 %v3070, %v3068
        %v3883 = vpack.c.b16 %v3071, %v3069
        %v3884 = vpack.c.b16 %v3074, %v3072
        %v3885 = vpack.c.b16 %v3075, %v3073
        %v3886 = vpack.c.b16 %v3078, %v3076
        %v3887 = vpack.c.b16 %v3079, %v3077
        %v3888 = vpack.c.b16 %v3082, %v3080
        %v3889 = vpack.c.b16 %v3083, %v3081
        %v3890 = vpack.c.b16 %v3086, %v3084
        %v3891 = vpack.c.b16 %v3087, %v3085
        %v3892 = vpack.c.b16 %v3090, %v3088
        %v3893 = vpack.c.b16 %v3091, %v3089
        %v3894 = vpack.c.b16 %v3094, %v3092
        %v3895 = vpack.c.b16 %v3095, %v3093
        %v3896 = vpack.c.b16 %v3098, %v3096
        %v3897 = vpack.c.b16 %v3099, %v3097
        %v3898 = vpack.c.b16 %v3102, %v3100
        %v3899 = vpack.c.b16 %v3103, %v3101
        %v3900 = vpack.c.b16 %v3106, %v3104
        %v3901 = vpack.c.b16 %v3107, %v3105
        %v3902 = vpack.c.b16 %v3110, %v3108
        %v3903 = vpack.c.b16 %v3111, %v3109
        %v3904 = vpack.c.b16 %v3114, %v3112
        %v3905 = vpack.c.b16 %v3115, %v3113
        %v3906 = vpack.c.b16 %v3118, %v3116
        %v3907 = vpack.c.b16 %v3119, %v3117
        %v3908 = vpack.c.b16 %v3122, %v3120
        %v3909 = vpack.c.b16 %v3123, %v3121
        %v3910 = vpack.c.b16 %v3126, %v3124
        %v3911 = vpack.c.b16 %v3127, %v3125
        %v3912 = vpack.c.b16 %v3130, %v3128
        %v3913 = vpack.c.b16 %v3131, %v3129
        %v3914 = vpack.c.b16 %v3134, %v3132
        %v3915 = vpack.c.b16 %v3135, %v3133
        %v3916 = vpack.c.b16 %v3138, %v3136
        %v3917 = vpack.c.b16 %v3139, %v3137
        %v3918 = vpack.c.b16 %v3142, %v3140
        %v3919 = vpack.c.b16 %v3143, %v3141
        %v3920 = vpack.c.b16 %v3146, %v3144
        %v3921 = vpack.c.b16 %v3147, %v3145
        %v3922 = vpack.c.b16 %v3150, %v3148
        %v3923 = vpack.c.b16 %v3151, %v3149
        %v3924 = vpack.c.b16 %v3154, %v3152
        %v3925 = vpack.c.b16 %v3155, %v3153
        %v3926 = vpack.c.b16 %v3158, %v3156
        %v3927 = vpack.c.b16 %v3159, %v3157
        %v3928 = vpack.c.b16 %v3162, %v3160
        %v3929 = vpack.c.b16 %v3163, %v3161
        %v3930 = vpack.c.b16 %v3166, %v3164
        %v3931 = vpack.c.b16 %v3167, %v3165
        %v3932 = vpack.c.b16 %v3170, %v3168
        %v3933 = vpack.c.b16 %v3171, %v3169
        %v3934 = vpack.c.b16 %v3174, %v3172
        %v3935 = vpack.c.b16 %v3175, %v3173
        %v3936 = vpack.c.b16 %v3178, %v3176
        %v3937 = vpack.c.b16 %v3179, %v3177
        %v3938 = vpack.c.b16 %v3182, %v3180
        %v3939 = vpack.c.b16 %v3183, %v3181
        %v3940 = vpack.c.b16 %v3186, %v3184
        %v3941 = vpack.c.b16 %v3187, %v3185
        %v3942 = vpack.c.b16 %v3190, %v3188
        %v3943 = vpack.c.b16 %v3191, %v3189
        %v3944 = vpack.c.b16 %v3194, %v3192
        %v3945 = vpack.c.b16 %v3195, %v3193
        %v3946 = vpack.c.b16 %v3198, %v3196
        %v3947 = vpack.c.b16 %v3199, %v3197
        %v3948 = vpack.c.b16 %v3202, %v3200
        %v3949 = vpack.c.b16 %v3203, %v3201
        %v3950 = vpack.c.b16 %v3206, %v3204
        %v3951 = vpack.c.b16 %v3207, %v3205
        %v3952 = vpack.c.b16 %v3210, %v3208
        %v3953 = vpack.c.b16 %v3211, %v3209
        %v3954 = vpack.c.b16 %v3214, %v3212
        %v3955 = vpack.c.b16 %v3215, %v3213
        %v3956 = vpack.c.b16 %v3218, %v3216
        %v3957 = vpack.c.b16 %v3219, %v3217
        %v3958 = vpack.c.b16 %v3222, %v3220
        %v3959 = vpack.c.b16 %v3223, %v3221
        %v3960 = vpack.c.b16 %v3226, %v3224
        %v3961 = vpack.c.b16 %v3227, %v3225
        %v3962 = vpack.c.b16 %v3230, %v3228
        %v3963 = vpack.c.b16 %v3231, %v3229
        %v3964 = vpack.c.b16 %v3234, %v3232
        %v3965 = vpack.c.b16 %v3235, %v3233
        %v3966 = vpack.c.b16 %v3238, %v3236
        %v3967 = vpack.c.b16 %v3239, %v3237
        %v3968 = vpack.c.b16 %v3242, %v3240
        %v3969 = vpack.c.b16 %v3243, %v3241
        %v3970 = vpack.c.b16 %v3246, %v3244
        %v3971 = vpack.c.b16 %v3247, %v3245
        %v3972 = vpack.c.b16 %v3250, %v3248
        %v3973 = vpack.c.b16 %v3251, %v3249
        %v3974 = vpack.c.b16 %v3254, %v3252
        %v3975 = vpack.c.b16 %v3255, %v3253
        %v3976 = vpack.c.b16 %v3258, %v3256
        %v3977 = vpack.c.b16 %v3259, %v3257
        %v3978 = vpack.c.b16 %v3262, %v3260
        %v3979 = vpack.c.b16 %v3263, %v3261
        %v3980 = vpack.c.b16 %v3266, %v3264
        %v3981 = vpack.c.b16 %v3267, %v3265
        %v3982 = vpack.c.b16 %v3270, %v3268
        %v3983 = vpack.c.b16 %v3271, %v3269
        %v3984 = vpack.c.b16 %v3274, %v3272
        %v3985 = vpack.c.b16 %v3275, %v3273
        %v3986 = vpack.c.b16 %v3278, %v3276
        %v3987 = vpack.c.b16 %v3279, %v3277
        %v3988 = vpack.c.b16 %v3282, %v3280
        %v3989 = vpack.c.b16 %v3283, %v3281
        %v3990 = vpack.c.b16 %v3286, %v3284
        %v3991 = vpack.c.b16 %v3287, %v3285
        %v3992 = vpack.c.b16 %v3290, %v3288
        %v3993 = vpack.c.b16 %v3291, %v3289
        %v3994 = vpack.c.b16 %v3294, %v3292
        %v3995 = vpack.c.b16 %v3295, %v3293
        %v3996 = vpack.c.b16 %v3298, %v3296
        %v3997 = vpack.c.b16 %v3299, %v3297
        %v3998 = vpack.c.b16 %v3302, %v3300
        %v3999 = vpack.c.b16 %v3303, %v3301
        %v4000 = vpack.c.b16 %v3306, %v3304
        %v4001 = vpack.c.b16 %v3307, %v3305
        %v4002 = vpack.c.b16 %v3310, %v3308
        %v4003 = vpack.c.b16 %v3311, %v3309
        %v4004 = vpack.c.b16 %v3314, %v3312
        %v4005 = vpack.c.b16 %v3315, %v3313
        %v4006 = vpack.c.b16 %v3318, %v3316
        %v4007 = vpack.c.b16 %v3319, %v3317
        %v4008 = vpack.c.b16 %v3322, %v3320
        %v4009 = vpack.c.b16 %v3323, %v3321
        %v4010 = vpack.c.b16 %v3326, %v3324
        %v4011 = vpack.c.b16 %v3327, %v3325
        %v4012 = vpack.c.b16 %v3330, %v3328
        %v4013 = vpack.c.b16 %v3331, %v3329
        %v4014 = vpack.c.b16 %v3334, %v3332
        %v4015 = vpack.c.b16 %v3335, %v3333
        %v4016 = vpack.c.b16 %v3338, %v3336
        %v4017 = vpack.c.b16 %v3339, %v3337
        %v4018 = vpack.c.b16 %v3342, %v3340
        %v4019 = vpack.c.b16 %v3343, %v3341
        %v4020 = vpack.c.b16 %v3346, %v3344
        %v4021 = vpack.c.b16 %v3347, %v3345
        %v4022 = vpack.c.b16 %v3350, %v3348
        %v4023 = vpack.c.b16 %v3351, %v3349
        %v4024 = vpack.c.b16 %v3354, %v3352
        %v4025 = vpack.c.b16 %v3355, %v3353
        %v4026 = vpack.c.b16 %v3358, %v3356
        %v4027 = vpack.c.b16 %v3359, %v3357
        %v4028 = vpack.c.b16 %v3362, %v3360
        %v4029 = vpack.c.b16 %v3363, %v3361
        %v4030 = vpack.c.b16 %v3366, %v3364
        %v4031 = vpack.c.b16 %v3367, %v3365
        %v4032 = vpack.c.b16 %v3370, %v3368
        %v4033 = vpack.c.b16 %v3371, %v3369
        %v4034 = vpack.c.b16 %v3374, %v3372
        %v4035 = vpack.c.b16 %v3375, %v3373
        %v4036 = vpack.c.b16 %v3378, %v3376
        %v4037 = vpack.c.b16 %v3379, %v3377
        %v4038 = vpack.c.b16 %v3382, %v3380
        %v4039 = vpack.c.b16 %v3383, %v3381
        %v4040 = vpack.c.b16 %v3386, %v3384
        %v4041 = vpack.c.b16 %v3387, %v3385
        %v4042 = vpack.c.b16 %v3390, %v3388
        %v4043 = vpack.c.b16 %v3391, %v3389
        %v4044 = vpack.c.b16 %v3394, %v3392
        %v4045 = vpack.c.b16 %v3395, %v3393
        %v4046 = vpack.c.b16 %v3398, %v3396
        %v4047 = vpack.c.b16 %v3399, %v3397
        %v4048 = vpack.c.b16 %v3402, %v3400
        %v4049 = vpack.c.b16 %v3403, %v3401
        %v4050 = vpack.c.b16 %v3406, %v3404
        %v4051 = vpack.c.b16 %v3407, %v3405
        %v4052 = vpack.c.b16 %v3410, %v3408
        %v4053 = vpack.c.b16 %v3411, %v3409
        %v4054 = vpack.c.b16 %v3414, %v3412
        %v4055 = vpack.c.b16 %v3415, %v3413
        %v4056 = vpack.c.b16 %v3418, %v3416
        %v4057 = vpack.c.b16 %v3419, %v3417
        %v4058 = vpack.c.b16 %v3422, %v3420
        %v4059 = vpack.c.b16 %v3423, %v3421
        %v4060 = vpack.c.b16 %v3426, %v3424
        %v4061 = vpack.c.b16 %v3427, %v3425
        %v4062 = vpack.c.b16 %v3430, %v3428
        %v4063 = vpack.c.b16 %v3431, %v3429
        %v4064 = vpack.c.b16 %v3434, %v3432
        %v4065 = vpack.c.b16 %v3435, %v3433
        %v4066 = vpack.c.b16 %v3438, %v3436
        %v4067 = vpack.c.b16 %v3439, %v3437
        %v4068 = vpack.c.b16 %v3442, %v3440
        %v4069 = vpack.c.b16 %v3443, %v3441
        %v4070 = vpack.c.b16 %v3446, %v3444
        %v4071 = vpack.c.b16 %v3447, %v3445
        %v4072 = vpack.c.b16 %v3450, %v3448
        %v4073 = vpack.c.b16 %v3451, %v3449
        %v4074 = vpack.c.b16 %v3454, %v3452
        %v4075 = vpack.c.b16 %v3455, %v3453
        %v4076 = vpack.c.b16 %v3458, %v3456
        %v4077 = vpack.c.b16 %v3459, %v3457
        %v4078 = vpack.c.b16 %v3462, %v3460
        %v4079 = vpack.c.b16 %v3463, %v3461
        %v4080 = vpack.c.b16 %v3466, %v3464
        %v4081 = vpack.c.b16 %v3467, %v3465
        %v4082 = vpack.c.b16 %v3470, %v3468
        %v4083 = vpack.c.b16 %v3471, %v3469
        %v4084 = vpack.c.b16 %v3474, %v3472
        %v4085 = vpack.c.b16 %v3475, %v3473
        %v4086 = vpack.c.b16 %v3478, %v3476
        %v4087 = vpack.c.b16 %v3479, %v3477
        %v4088 = vpack.c.b16 %v3482, %v3480
        %v4089 = vpack.c.b16 %v3483, %v3481
        %v4090 = vpack.c.b16 %v3486, %v3484
        %v4091 = vpack.c.b16 %v3487, %v3485
        %v4092 = vpack.c.b16 %v3490, %v3488
        %v4093 = vpack.c.b16 %v3491, %v3489
        %v4094 = vpack.c.b16 %v3494, %v3492
        %v4095 = vpack.c.b16 %v3495, %v3493
        %v4096 = vpack.c.b16 %v3498, %v3496
        %v4097 = vpack.c.b16 %v3499, %v3497
        %v4098 = vpack.c.b16 %v3502, %v3500
        %v4099 = vpack.c.b16 %v3503, %v3501
        %v4100 = vpack.c.b16 %v3506, %v3504
        %v4101 = vpack.c.b16 %v3507, %v3505
        %v4102 = vpack.c.b16 %v3510, %v3508
        %v4103 = vpack.c.b16 %v3511, %v3509
        %v4104 = vpack.c.b16 %v3514, %v3512
        %v4105 = vpack.c.b16 %v3515, %v3513
        %v4106 = vpack.c.b16 %v3518, %v3516
        %v4107 = vpack.c.b16 %v3519, %v3517
        %v4108 = vpack.c.b16 %v3522, %v3520
        %v4109 = vpack.c.b16 %v3523, %v3521
        %v4110 = vpack.c.b16 %v3526, %v3524
        %v4111 = vpack.c.b16 %v3527, %v3525
        %v4112 = vpack.c.b16 %v3530, %v3528
        %v4113 = vpack.c.b16 %v3531, %v3529
        %v4114 = vpack.c.b16 %v3534, %v3532
        %v4115 = vpack.c.b16 %v3535, %v3533
        %v4116 = vpack.c.b16 %v3538, %v3536
        %v4117 = vpack.c.b16 %v3539, %v3537
        %v4118 = vpack.c.b16 %v3542, %v3540
        %v4119 = vpack.c.b16 %v3543, %v3541
        %v4120 = vpack.c.b16 %v3546, %v3544
        %v4121 = vpack.c.b16 %v3547, %v3545
        %v4122 = vpack.c.b16 %v3550, %v3548
        %v4123 = vpack.c.b16 %v3551, %v3549
        %v4124 = vpack.c.b16 %v3554, %v3552
        %v4125 = vpack.c.b16 %v3555, %v3553
        %v4126 = vpack.c.b16 %v3558, %v3556
        %v4127 = vpack.c.b16 %v3559, %v3557
        %v4128 = vpack.c.b16 %v3562, %v3560
        %v4129 = vpack.c.b16 %v3563, %v3561
        %v4130 = vpack.c.b16 %v3566, %v3564
        %v4131 = vpack.c.b16 %v3567, %v3565
        %v4132 = vpack.c.b16 %v3570, %v3568
        %v4133 = vpack.c.b16 %v3571, %v3569
        %v4134 = vpack.c.b16 %v3574, %v3572
        %v4135 = vpack.c.b16 %v3575, %v3573
        %v4136 = vpack.c.b16 %v3578, %v3576
        %v4137 = vpack.c.b16 %v3579, %v3577
        %v4138 = vpack.c.b16 %v3582, %v3580
        %v4139 = vpack.c.b16 %v3583, %v3581
        %v4140 = vpack.c.b16 %v3586, %v3584
        %v4141 = vpack.c.b16 %v3587, %v3585
        %v4142 = vpack.c.b16 %v3590, %v3588
        %v4143 = vpack.c.b16 %v3591, %v3589
        %v4144 = vpack.c.b16 %v3594, %v3592
        %v4145 = vpack.c.b16 %v3595, %v3593
        %v4146 = vpack.c.b16 %v3598, %v3596
        %v4147 = vpack.c.b16 %v3599, %v3597
        %v4148 = vpack.c.b16 %v3602, %v3600
        %v4149 = vpack.c.b16 %v3603, %v3601
        %v4150 = vpack.c.b16 %v3606, %v3604
        %v4151 = vpack.c.b16 %v3607, %v3605
        %v4152 = vpack.c.b16 %v3610, %v3608
        %v4153 = vpack.c.b16 %v3611, %v3609
        %v4154 = vpack.c.b16 %v3614, %v3612
        %v4155 = vpack.c.b16 %v3615, %v3613
        %v4156 = vpack.c.b16 %v3618, %v3616
        %v4157 = vpack.c.b16 %v3619, %v3617
        %v4158 = vpack.c.b16 %v3622, %v3620
        %v4159 = vpack.c.b16 %v3623, %v3621
        %v4160 = vpack.c.b16 %v3626, %v3624
        %v4161 = vpack.c.b16 %v3627, %v3625
        %v4162 = vpack.c.b16 %v3630, %v3628
        %v4163 = vpack.c.b16 %v3631, %v3629
        %v4164 = vpack.c.b16 %v3634, %v3632
        %v4165 = vpack.c.b16 %v3635, %v3633
        %v4166 = vpack.c.b16 %v3638, %v3636
        %v4167 = vpack.c.b16 %v3639, %v3637
        %v4168 = vpack.c.b16 %v3642, %v3640
        %v4169 = vpack.c.b16 %v3643, %v3641
        %v4170 = vpack.c.b16 %v3646, %v3644
        %v4171 = vpack.c.b16 %v3647, %v3645
        %v4172 = vpack.c.b16 %v3650, %v3648
        %v4173 = vpack.c.b16 %v3651, %v3649
        %v4174 = vpack.c.b16 %v3654, %v3652
        %v4175 = vpack.c.b16 %v3655, %v3653
        %v4176 = vpack.c.b16 %v3658, %v3656
        %v4177 = vpack.c.b16 %v3659, %v3657
        %v4178 = vpack.c.b16 %v3662, %v3660
        %v4179 = vpack.c.b16 %v3663, %v3661
        %v4180 = vpack.c.b16 %v3666, %v3664
        %v4181 = vpack.c.b16 %v3667, %v3665
        %v4182 = vpack.c.b16 %v3670, %v3668
        %v4183 = vpack.c.b16 %v3671, %v3669
        %v4184 = vpack.c.b16 %v3674, %v3672
        %v4185 = vpack.c.b16 %v3675, %v3673
        %v4186 = vpack.c.b16 %v3678, %v3676
        %v4187 = vpack.c.b16 %v3679, %v3677
        %v4188 = vpack.c.b16 %v3682, %v3680
        %v4189 = vpack.c.b16 %v3683, %v3681
        %v4190 = vpack.c.b16 %v3686, %v3684
        %v4191 = vpack.c.b16 %v3687, %v3685
        %v4192 = vpack.c.b16 %v3690, %v3688
        %v4193 = vpack.c.b16 %v3691, %v3689
        %v4194 = vpack.c.b16 %v3694, %v3692
        %v4195 = vpack.c.b16 %v3695, %v3693
        %v4196 = vpack.c.b16 %v3698, %v3696
        %v4197 = vpack.c.b16 %v3699, %v3697
        %v4198 = vpack.c.b16 %v3702, %v3700
        %v4199 = vpack.c.b16 %v3703, %v3701
        %v4200 = vpack.c.b16 %v3706, %v3704
        %v4201 = vpack.c.b16 %v3707, %v3705
        %v4202 = vpack.c.b16 %v3710, %v3708
        %v4203 = vpack.c.b16 %v3711, %v3709
        %v4204 = vpack.c.b16 %v3714, %v3712
        %v4205 = vpack.c.b16 %v3715, %v3713
        %v4206 = vpack.c.b16 %v3718, %v3716
        %v4207 = vpack.c.b16 %v3719, %v3717
        %v4208 = vpack.c.b16 %v3722, %v3720
        %v4209 = vpack.c.b16 %v3723, %v3721
        %v4210 = vpack.c.b16 %v3726, %v3724
        %v4211 = vpack.c.b16 %v3727, %v3725
        %v4212 = vpack.c.b16 %v3730, %v3728
        %v4213 = vpack.c.b16 %v3731, %v3729
        %v4214 = vpack.c.b16 %v3734, %v3732
        %v4215 = vpack.c.b16 %v3735, %v3733
        %v4216 = vpack.c.b16 %v3738, %v3736
        %v4217 = vpack.c.b16 %v3739, %v3737
        %v4218 = vpack.c.b16 %v3742, %v3740
        %v4219 = vpack.c.b16 %v3743, %v3741
        %v4220 = vpack.c.b16 %v3746, %v3744
        %v4221 = vpack.c.b16 %v3747, %v3745
        %v4222 = vpack.c.b16 %v3750, %v3748
        %v4223 = vpack.c.b16 %v3751, %v3749
        %v4224 = vpack.c.b16 %v3754, %v3752
        %v4225 = vpack.c.b16 %v3755, %v3753
        %v4226 = vpack.c.b16 %v3758, %v3756
        %v4227 = vpack.c.b16 %v3759, %v3757
        %v4228 = vpack.c.b16 %v3762, %v3760
        %v4229 = vpack.c.b16 %v3763, %v3761
        %v4230 = vpack.c.b16 %v3766, %v3764
        %v4231 = vpack.c.b16 %v3767, %v3765
        %v4232 = vpack.c.b16 %v3770, %v3768
        %v4233 = vpack.c.b16 %v3771, %v3769
        %v4234 = vpack.c.b16 %v3774, %v3772
        %v4235 = vpack.c.b16 %v3775, %v3773
        %v4236 = vpack.c.b16 %v3778, %v3776
        %v4237 = vpack.c.b16 %v3779, %v3777
        %v4238 = vpack.c.b16 %v3782, %v3780
        %v4239 = vpack.c.b16 %v3783, %v3781
        %v4240 = vpack.c.b16 %v3786, %v3784
        %v4241 = vpack.c.b16 %v3787, %v3785
        %v4242 = vpack.c.b16 %v3790, %v3788
        %v4243 = vpack.c.b16 %v3791, %v3789
        %v4244 = vpack.c.b16 %v3794, %v3792
        %v4245 = vpack.c.b16 %v3795, %v3793
        %v4246 = vpack.c.b16 %v3798, %v3796
        %v4247 = vpack.c.b16 %v3799, %v3797
        %v4248 = vpack.c.b16 %v3802, %v3800
        %v4249 = vpack.c.b16 %v3803, %v3801
        %v4250 = vpack.c.b16 %v3806, %v3804
        %v4251 = vpack.c.b16 %v3807, %v3805
        %v4252 = vpack.c.b16 %v3810, %v3808
        %v4253 = vpack.c.b16 %v3811, %v3809
        %v4254 = vpack.c.b16 %v3814, %v3812
        %v4255 = vpack.c.b16 %v3815, %v3813
        %v4256 = vpack.c.b16 %v3818, %v3816
        %v4257 = vpack.c.b16 %v3819, %v3817
        %v4258 = vpack.c.b16 %v3822, %v3820
        %v4259 = vpack.c.b16 %v3823, %v3821
        %v4260 = vpack.c.b16 %v3826, %v3824
        %v4261 = vpack.c.b16 %v3827, %v3825
        %v4262 = vpack.c.b16 %v3830, %v3828
        %v4263 = vpack.c.b16 %v3831, %v3829
        %4696 = vmatprep.subr.bf16.mxu0 %v3833
        %4697 = vmatpush1.bf16.msra.mxu0 %v3832
        %4698 = vmatprep.subr.bf16.mxu0 %v3835
        %4699 = vmatpush1.bf16.msra.mxu0 %v3834
        %4700 = vmatprep.subr.bf16.mxu0 %v3837
        %4701 = vmatpush1.bf16.msra.mxu0 %v3836
        %4702 = vmatprep.subr.bf16.mxu0 %v3839
        %4703 = vmatpush1.bf16.msra.mxu0 %v3838
        %4704 = vmatprep.subr.bf16.mxu0 %v3841
        %4705 = vmatpush1.bf16.msra.mxu0 %v3840
        %4706 = vmatprep.subr.bf16.mxu0 %v3843
        %4707 = vmatpush1.bf16.msra.mxu0 %v3842
        %4708 = vmatprep.subr.bf16.mxu0 %v3845
        %4709 = vmatpush1.bf16.msra.mxu0 %v3844
        %4710 = vmatprep.subr.bf16.mxu0 %v3847
        %4711 = vmatpush1.bf16.msra.mxu0 %v3846
        %4712 = vmatprep.subr.bf16.mxu0 %v3849
        %4713 = vmatpush1.bf16.msra.mxu0 %v3848
        %4714 = vmatprep.subr.bf16.mxu0 %v3851
        %4715 = vmatpush1.bf16.msra.mxu0 %v3850
        %4716 = vmatprep.subr.bf16.mxu0 %v3853
        %4717 = vmatpush1.bf16.msra.mxu0 %v3852
        %4718 = vmatprep.subr.bf16.mxu0 %v3855
        %4719 = vmatpush1.bf16.msra.mxu0 %v3854
        %4720 = vmatprep.subr.bf16.mxu0 %v3857
        %4721 = vmatpush1.bf16.msra.mxu0 %v3856
        %4722 = vmatprep.subr.bf16.mxu0 %v3859
        %4723 = vmatpush1.bf16.msra.mxu0 %v3858
        %4724 = vmatprep.subr.bf16.mxu0 %v3861
        %4725 = vmatpush1.bf16.msra.mxu0 %v3860
        %4726 = vmatprep.subr.bf16.mxu0 %v3863
        %4727 = vmatpush1.bf16.msra.mxu0 %v3862
        %4728 = vmatprep.mubr.bf16.mxu0 %v2483
        %4729 = vmatmul.mubr.bf16.gmra.mrb[0].mxu0 %v2482
        %v4730 = vpop.f32.mrb[0].mxu0
        %v4731 = vadd.f32 0.0, %v4730
        %v4732 = vpop.f32.mrb[0].mxu0
        %v4733 = vadd.f32 0.0, %v4732
        %v4734 = vpop.f32.mrb[0].mxu0
        %v4735 = vadd.f32 0.0, %v4734
        %v4736 = vpop.f32.mrb[0].mxu0
        %v4737 = vadd.f32 0.0, %v4736
        %4738 = vdwg.mxu0
        %4739 = vmatprep.subr.bf16.mxu0 %v3865
        %4740 = vmatpush1.bf16.msra.mxu0 %v3864
        %4741 = vmatprep.subr.bf16.mxu0 %v3867
        %4742 = vmatpush1.bf16.msra.mxu0 %v3866
        %4743 = vmatprep.subr.bf16.mxu0 %v3869
        %4744 = vmatpush1.bf16.msra.mxu0 %v3868
        %4745 = vmatprep.subr.bf16.mxu0 %v3871
        %4746 = vmatpush1.bf16.msra.mxu0 %v3870
        %4747 = vmatprep.subr.bf16.mxu0 %v3873
        %4748 = vmatpush1.bf16.msra.mxu0 %v3872
        %4749 = vmatprep.subr.bf16.mxu0 %v3875
        %4750 = vmatpush1.bf16.msra.mxu0 %v3874
        %4751 = vmatprep.subr.bf16.mxu0 %v3877
        %4752 = vmatpush1.bf16.msra.mxu0 %v3876
        %4753 = vmatprep.subr.bf16.mxu0 %v3879
        %4754 = vmatpush1.bf16.msra.mxu0 %v3878
        %4755 = vmatprep.subr.bf16.mxu0 %v3881
        %4756 = vmatpush1.bf16.msra.mxu0 %v3880
        %4757 = vmatprep.subr.bf16.mxu0 %v3883
        %4758 = vmatpush1.bf16.msra.mxu0 %v3882
        %4759 = vmatprep.subr.bf16.mxu0 %v3885
        %4760 = vmatpush1.bf16.msra.mxu0 %v3884
        %4761 = vmatprep.subr.bf16.mxu0 %v3887
        %4762 = vmatpush1.bf16.msra.mxu0 %v3886
        %4763 = vmatprep.subr.bf16.mxu0 %v3889
        %4764 = vmatpush1.bf16.msra.mxu0 %v3888
        %4765 = vmatprep.subr.bf16.mxu0 %v3891
        %4766 = vmatpush1.bf16.msra.mxu0 %v3890
        %4767 = vmatprep.subr.bf16.mxu0 %v3893
        %4768 = vmatpush1.bf16.msra.mxu0 %v3892
        %4769 = vmatprep.subr.bf16.mxu0 %v3895
        %4770 = vmatpush1.bf16.msra.mxu0 %v3894
        %4771 = vmatprep.mubr.bf16.mxu0 %v2485
        %4772 = vmatmul.mubr.bf16.gmra.mrb[0].mxu0 %v2484
        %v4773 = vpop.f32.mrb[0].mxu0
        %v4774 = vadd.f32 %v4731, %v4773
        %v4775 = vpop.f32.mrb[0].mxu0
        %v4776 = vadd.f32 %v4733, %v4775
        %v4777 = vpop.f32.mrb[0].mxu0
        %v4778 = vadd.f32 %v4735, %v4777
        %v4779 = vpop.f32.mrb[0].mxu0
        %v4780 = vadd.f32 %v4737, %v4779
        %4781 = vdwg.mxu0
        %4782 = vmatprep.subr.bf16.mxu0 %v3897
        %4783 = vmatpush1.bf16.msra.mxu0 %v3896
        %4784 = vmatprep.subr.bf16.mxu0 %v3899
        %4785 = vmatpush1.bf16.msra.mxu0 %v3898
        %4786 = vmatprep.subr.bf16.mxu0 %v3901
        %4787 = vmatpush1.bf16.msra.mxu0 %v3900
        %4788 = vmatprep.subr.bf16.mxu0 %v3903
        %4789 = vmatpush1.bf16.msra.mxu0 %v3902
        %4790 = vmatprep.subr.bf16.mxu0 %v3905
        %4791 = vmatpush1.bf16.msra.mxu0 %v3904
        %4792 = vmatprep.subr.bf16.mxu0 %v3907
        %4793 = vmatpush1.bf16.msra.mxu0 %v3906
        %4794 = vmatprep.subr.bf16.mxu0 %v3909
        %4795 = vmatpush1.bf16.msra.mxu0 %v3908
        %4796 = vmatprep.subr.bf16.mxu0 %v3911
        %4797 = vmatpush1.bf16.msra.mxu0 %v3910
        %4798 = vmatprep.subr.bf16.mxu0 %v3913
        %4799 = vmatpush1.bf16.msra.mxu0 %v3912
        %4800 = vmatprep.subr.bf16.mxu0 %v3915
        %4801 = vmatpush1.bf16.msra.mxu0 %v3914
        %4802 = vmatprep.subr.bf16.mxu0 %v3917
        %4803 = vmatpush1.bf16.msra.mxu0 %v3916
        %4804 = vmatprep.subr.bf16.mxu0 %v3919
        %4805 = vmatpush1.bf16.msra.mxu0 %v3918
        %4806 = vmatprep.subr.bf16.mxu0 %v3921
        %4807 = vmatpush1.bf16.msra.mxu0 %v3920
        %4808 = vmatprep.subr.bf16.mxu0 %v3923
        %4809 = vmatpush1.bf16.msra.mxu0 %v3922
        %4810 = vmatprep.subr.bf16.mxu0 %v3925
        %4811 = vmatpush1.bf16.msra.mxu0 %v3924
        %4812 = vmatprep.subr.bf16.mxu0 %v3927
        %4813 = vmatpush1.bf16.msra.mxu0 %v3926
        %4814 = vmatprep.mubr.bf16.mxu0 %v2487
        %4815 = vmatmul.mubr.bf16.gmra.mrb[0].mxu0 %v2486
        %v4816 = vpop.f32.mrb[0].mxu0
        %v4817 = vadd.f32 %v4774, %v4816
        %v4818 = vpop.f32.mrb[0].mxu0
        %v4819 = vadd.f32 %v4776, %v4818
        %v4820 = vpop.f32.mrb[0].mxu0
        %v4821 = vadd.f32 %v4778, %v4820
        %v4822 = vpop.f32.mrb[0].mxu0
        %v4823 = vadd.f32 %v4780, %v4822
        %4824 = vdwg.mxu0
        %4825 = vmatprep.subr.bf16.mxu0 %v3929
        %4826 = vmatpush1.bf16.msra.mxu0 %v3928
        %4827 = vmatprep.subr.bf16.mxu0 %v3931
        %4828 = vmatpush1.bf16.msra.mxu0 %v3930
        %4829 = vmatprep.subr.bf16.mxu0 %v3933
        %4830 = vmatpush1.bf16.msra.mxu0 %v3932
        %4831 = vmatprep.subr.bf16.mxu0 %v3935
        %4832 = vmatpush1.bf16.msra.mxu0 %v3934
        %4833 = vmatprep.subr.bf16.mxu0 %v3937
        %4834 = vmatpush1.bf16.msra.mxu0 %v3936
        %4835 = vmatprep.subr.bf16.mxu0 %v3939
        %4836 = vmatpush1.bf16.msra.mxu0 %v3938
        %4837 = vmatprep.subr.bf16.mxu0 %v3941
        %4838 = vmatpush1.bf16.msra.mxu0 %v3940
        %4839 = vmatprep.subr.bf16.mxu0 %v3943
        %4840 = vmatpush1.bf16.msra.mxu0 %v3942
        %4841 = vmatprep.subr.bf16.mxu0 %v3945
        %4842 = vmatpush1.bf16.msra.mxu0 %v3944
        %4843 = vmatprep.subr.bf16.mxu0 %v3947
        %4844 = vmatpush1.bf16.msra.mxu0 %v3946
        %4845 = vmatprep.subr.bf16.mxu0 %v3949
        %4846 = vmatpush1.bf16.msra.mxu0 %v3948
        %4847 = vmatprep.subr.bf16.mxu0 %v3951
        %4848 = vmatpush1.bf16.msra.mxu0 %v3950
        %4849 = vmatprep.subr.bf16.mxu0 %v3953
        %4850 = vmatpush1.bf16.msra.mxu0 %v3952
        %4851 = vmatprep.subr.bf16.mxu0 %v3955
        %4852 = vmatpush1.bf16.msra.mxu0 %v3954
        %4853 = vmatprep.subr.bf16.mxu0 %v3957
        %4854 = vmatpush1.bf16.msra.mxu0 %v3956
        %4855 = vmatprep.subr.bf16.mxu0 %v3959
        %4856 = vmatpush1.bf16.msra.mxu0 %v3958
        %4857 = vmatprep.mubr.bf16.mxu0 %v2489
        %4858 = vmatmul.mubr.bf16.gmra.mrb[0].mxu0 %v2488
        %v4859 = vpop.f32.mrb[0].mxu0
        %v4860 = vadd.f32 %v4817, %v4859
        %v4861 = vpop.f32.mrb[0].mxu0
        %v4862 = vadd.f32 %v4819, %v4861
        %v4863 = vpop.f32.mrb[0].mxu0
        %v4864 = vadd.f32 %v4821, %v4863
        %v4865 = vpop.f32.mrb[0].mxu0
        %v4866 = vadd.f32 %v4823, %v4865
        %4867 = vdwg.mxu0
        %4868 = vmatprep.subr.bf16.mxu0 %v3961
        %4869 = vmatpush1.bf16.msra.mxu0 %v3960
        %4870 = vmatprep.subr.bf16.mxu0 %v3963
        %4871 = vmatpush1.bf16.msra.mxu0 %v3962
        %4872 = vmatprep.subr.bf16.mxu0 %v3965
        %4873 = vmatpush1.bf16.msra.mxu0 %v3964
        %4874 = vmatprep.subr.bf16.mxu0 %v3967
        %4875 = vmatpush1.bf16.msra.mxu0 %v3966
        %4876 = vmatprep.subr.bf16.mxu0 %v3969
        %4877 = vmatpush1.bf16.msra.mxu0 %v3968
        %4878 = vmatprep.subr.bf16.mxu0 %v3971
        %4879 = vmatpush1.bf16.msra.mxu0 %v3970
        %4880 = vmatprep.subr.bf16.mxu0 %v3973
        %4881 = vmatpush1.bf16.msra.mxu0 %v3972
        %4882 = vmatprep.subr.bf16.mxu0 %v3975
        %4883 = vmatpush1.bf16.msra.mxu0 %v3974
        %4884 = vmatprep.subr.bf16.mxu0 %v3977
        %4885 = vmatpush1.bf16.msra.mxu0 %v3976
        %4886 = vmatprep.subr.bf16.mxu0 %v3979
        %4887 = vmatpush1.bf16.msra.mxu0 %v3978
        %4888 = vmatprep.subr.bf16.mxu0 %v3981
        %4889 = vmatpush1.bf16.msra.mxu0 %v3980
        %4890 = vmatprep.subr.bf16.mxu0 %v3983
        %4891 = vmatpush1.bf16.msra.mxu0 %v3982
        %4892 = vmatprep.subr.bf16.mxu0 %v3985
        %4893 = vmatpush1.bf16.msra.mxu0 %v3984
        %4894 = vmatprep.subr.bf16.mxu0 %v3987
        %4895 = vmatpush1.bf16.msra.mxu0 %v3986
        %4896 = vmatprep.subr.bf16.mxu0 %v3989
        %4897 = vmatpush1.bf16.msra.mxu0 %v3988
        %4898 = vmatprep.subr.bf16.mxu0 %v3991
        %4899 = vmatpush1.bf16.msra.mxu0 %v3990
        %4900 = vmatprep.mubr.bf16.mxu0 %v2491
        %4901 = vmatmul.mubr.bf16.gmra.mrb[0].mxu0 %v2490
        %v4902 = vpop.f32.mrb[0].mxu0
        %v4903 = vadd.f32 %v4860, %v4902
        %v4904 = vpop.f32.mrb[0].mxu0
        %v4905 = vadd.f32 %v4862, %v4904
        %v4906 = vpop.f32.mrb[0].mxu0
        %v4907 = vadd.f32 %v4864, %v4906
        %v4908 = vpop.f32.mrb[0].mxu0
        %v4909 = vadd.f32 %v4866, %v4908
        %4910 = vdwg.mxu0
        %4911 = vmatprep.subr.bf16.mxu0 %v3993
        %4912 = vmatpush1.bf16.msra.mxu0 %v3992
        %4913 = vmatprep.subr.bf16.mxu0 %v3995
        %4914 = vmatpush1.bf16.msra.mxu0 %v3994
        %4915 = vmatprep.subr.bf16.mxu0 %v3997
        %4916 = vmatpush1.bf16.msra.mxu0 %v3996
        %4917 = vmatprep.subr.bf16.mxu0 %v3999
        %4918 = vmatpush1.bf16.msra.mxu0 %v3998
        %4919 = vmatprep.subr.bf16.mxu0 %v4001
        %4920 = vmatpush1.bf16.msra.mxu0 %v4000
        %4921 = vmatprep.subr.bf16.mxu0 %v4003
        %4922 = vmatpush1.bf16.msra.mxu0 %v4002
        %4923 = vmatprep.subr.bf16.mxu0 %v4005
        %4924 = vmatpush1.bf16.msra.mxu0 %v4004
        %4925 = vmatprep.subr.bf16.mxu0 %v4007
        %4926 = vmatpush1.bf16.msra.mxu0 %v4006
        %4927 = vmatprep.subr.bf16.mxu0 %v4009
        %4928 = vmatpush1.bf16.msra.mxu0 %v4008
        %4929 = vmatprep.subr.bf16.mxu0 %v4011
        %4930 = vmatpush1.bf16.msra.mxu0 %v4010
        %4931 = vmatprep.subr.bf16.mxu0 %v4013
        %4932 = vmatpush1.bf16.msra.mxu0 %v4012
        %4933 = vmatprep.subr.bf16.mxu0 %v4015
        %4934 = vmatpush1.bf16.msra.mxu0 %v4014
        %4935 = vmatprep.subr.bf16.mxu0 %v4017
        %4936 = vmatpush1.bf16.msra.mxu0 %v4016
        %4937 = vmatprep.subr.bf16.mxu0 %v4019
        %4938 = vmatpush1.bf16.msra.mxu0 %v4018
        %4939 = vmatprep.subr.bf16.mxu0 %v4021
        %4940 = vmatpush1.bf16.msra.mxu0 %v4020
        %4941 = vmatprep.subr.bf16.mxu0 %v4023
        %4942 = vmatpush1.bf16.msra.mxu0 %v4022
        %4943 = vmatprep.mubr.bf16.mxu0 %v2493
        %4944 = vmatmul.mubr.bf16.gmra.mrb[0].mxu0 %v2492
        %v4945 = vpop.f32.mrb[0].mxu0
        %v4946 = vadd.f32 %v4903, %v4945
        %v4947 = vpop.f32.mrb[0].mxu0
        %v4948 = vadd.f32 %v4905, %v4947
        %v4949 = vpop.f32.mrb[0].mxu0
        %v4950 = vadd.f32 %v4907, %v4949
        %v4951 = vpop.f32.mrb[0].mxu0
        %v4952 = vadd.f32 %v4909, %v4951
        %4953 = vdwg.mxu0
        %4954 = vmatprep.subr.bf16.mxu0 %v4025
        %4955 = vmatpush1.bf16.msra.mxu0 %v4024
        %4956 = vmatprep.subr.bf16.mxu0 %v4027
        %4957 = vmatpush1.bf16.msra.mxu0 %v4026
        %4958 = vmatprep.subr.bf16.mxu0 %v4029
        %4959 = vmatpush1.bf16.msra.mxu0 %v4028
        %4960 = vmatprep.subr.bf16.mxu0 %v4031
        %4961 = vmatpush1.bf16.msra.mxu0 %v4030
        %4962 = vmatprep.subr.bf16.mxu0 %v4033
        %4963 = vmatpush1.bf16.msra.mxu0 %v4032
        %4964 = vmatprep.subr.bf16.mxu0 %v4035
        %4965 = vmatpush1.bf16.msra.mxu0 %v4034
        %4966 = vmatprep.subr.bf16.mxu0 %v4037
        %4967 = vmatpush1.bf16.msra.mxu0 %v4036
        %4968 = vmatprep.subr.bf16.mxu0 %v4039
        %4969 = vmatpush1.bf16.msra.mxu0 %v4038
        %4970 = vmatprep.subr.bf16.mxu0 %v4041
        %4971 = vmatpush1.bf16.msra.mxu0 %v4040
        %4972 = vmatprep.subr.bf16.mxu0 %v4043
        %4973 = vmatpush1.bf16.msra.mxu0 %v4042
        %4974 = vmatprep.subr.bf16.mxu0 %v4045
        %4975 = vmatpush1.bf16.msra.mxu0 %v4044
        %4976 = vmatprep.subr.bf16.mxu0 %v4047
        %4977 = vmatpush1.bf16.msra.mxu0 %v4046
        %4978 = vmatprep.subr.bf16.mxu0 %v4049
        %4979 = vmatpush1.bf16.msra.mxu0 %v4048
        %4980 = vmatprep.subr.bf16.mxu0 %v4051
        %4981 = vmatpush1.bf16.msra.mxu0 %v4050
        %4982 = vmatprep.subr.bf16.mxu0 %v4053
        %4983 = vmatpush1.bf16.msra.mxu0 %v4052
        %4984 = vmatprep.subr.bf16.mxu0 %v4055
        %4985 = vmatpush1.bf16.msra.mxu0 %v4054
        %4986 = vmatprep.mubr.bf16.mxu0 %v2495
        %4987 = vmatmul.mubr.bf16.gmra.mrb[0].mxu0 %v2494
        %v4988 = vpop.f32.mrb[0].mxu0
        %v4989 = vadd.f32 %v4946, %v4988
        %v4990 = vpop.f32.mrb[0].mxu0
        %v4991 = vadd.f32 %v4948, %v4990
        %v4992 = vpop.f32.mrb[0].mxu0
        %v4993 = vadd.f32 %v4950, %v4992
        %v4994 = vpop.f32.mrb[0].mxu0
        %v4995 = vadd.f32 %v4952, %v4994
        %4996 = vdwg.mxu0
        %4997 = vmatprep.subr.bf16.mxu0 %v4057
        %4998 = vmatpush1.bf16.msra.mxu0 %v4056
        %4999 = vmatprep.subr.bf16.mxu0 %v4059
        %5000 = vmatpush1.bf16.msra.mxu0 %v4058
        %5001 = vmatprep.subr.bf16.mxu0 %v4061
        %5002 = vmatpush1.bf16.msra.mxu0 %v4060
        %5003 = vmatprep.subr.bf16.mxu0 %v4063
        %5004 = vmatpush1.bf16.msra.mxu0 %v4062
        %5005 = vmatprep.subr.bf16.mxu0 %v4065
        %5006 = vmatpush1.bf16.msra.mxu0 %v4064
        %5007 = vmatprep.subr.bf16.mxu0 %v4067
        %5008 = vmatpush1.bf16.msra.mxu0 %v4066
        %5009 = vmatprep.subr.bf16.mxu0 %v4069
        %5010 = vmatpush1.bf16.msra.mxu0 %v4068
        %5011 = vmatprep.subr.bf16.mxu0 %v4071
        %5012 = vmatpush1.bf16.msra.mxu0 %v4070
        %5013 = vmatprep.subr.bf16.mxu0 %v4073
        %5014 = vmatpush1.bf16.msra.mxu0 %v4072
        %5015 = vmatprep.subr.bf16.mxu0 %v4075
        %5016 = vmatpush1.bf16.msra.mxu0 %v4074
        %5017 = vmatprep.subr.bf16.mxu0 %v4077
        %5018 = vmatpush1.bf16.msra.mxu0 %v4076
        %5019 = vmatprep.subr.bf16.mxu0 %v4079
        %5020 = vmatpush1.bf16.msra.mxu0 %v4078
        %5021 = vmatprep.subr.bf16.mxu0 %v4081
        %5022 = vmatpush1.bf16.msra.mxu0 %v4080
        %5023 = vmatprep.subr.bf16.mxu0 %v4083
        %5024 = vmatpush1.bf16.msra.mxu0 %v4082
        %5025 = vmatprep.subr.bf16.mxu0 %v4085
        %5026 = vmatpush1.bf16.msra.mxu0 %v4084
        %5027 = vmatprep.subr.bf16.mxu0 %v4087
        %5028 = vmatpush1.bf16.msra.mxu0 %v4086
        %5029 = vmatprep.mubr.bf16.mxu0 %v2497
        %5030 = vmatmul.mubr.bf16.gmra.mrb[0].mxu0 %v2496
        %v5031 = vpop.f32.mrb[0].mxu0
        %v5032 = vadd.f32 %v4989, %v5031
        %v5033 = vpop.f32.mrb[0].mxu0
        %v5034 = vadd.f32 %v4991, %v5033
        %v5035 = vpop.f32.mrb[0].mxu0
        %v5036 = vadd.f32 %v4993, %v5035
        %v5037 = vpop.f32.mrb[0].mxu0
        %v5038 = vadd.f32 %v4995, %v5037
        %5039 = vdwg.mxu0
        %5040 = vmatprep.subr.bf16.mxu0 %v4089
        %5041 = vmatpush1.bf16.msra.mxu0 %v4088
        %5042 = vmatprep.subr.bf16.mxu0 %v4091
        %5043 = vmatpush1.bf16.msra.mxu0 %v4090
        %5044 = vmatprep.subr.bf16.mxu0 %v4093
        %5045 = vmatpush1.bf16.msra.mxu0 %v4092
        %5046 = vmatprep.subr.bf16.mxu0 %v4095
        %5047 = vmatpush1.bf16.msra.mxu0 %v4094
        %5048 = vmatprep.subr.bf16.mxu0 %v4097
        %5049 = vmatpush1.bf16.msra.mxu0 %v4096
        %5050 = vmatprep.subr.bf16.mxu0 %v4099
        %5051 = vmatpush1.bf16.msra.mxu0 %v4098
        %5052 = vmatprep.subr.bf16.mxu0 %v4101
        %5053 = vmatpush1.bf16.msra.mxu0 %v4100
        %5054 = vmatprep.subr.bf16.mxu0 %v4103
        %5055 = vmatpush1.bf16.msra.mxu0 %v4102
        %5056 = vmatprep.subr.bf16.mxu0 %v4105
        %5057 = vmatpush1.bf16.msra.mxu0 %v4104
        %5058 = vmatprep.subr.bf16.mxu0 %v4107
        %5059 = vmatpush1.bf16.msra.mxu0 %v4106
        %5060 = vmatprep.subr.bf16.mxu0 %v4109
        %5061 = vmatpush1.bf16.msra.mxu0 %v4108
        %5062 = vmatprep.subr.bf16.mxu0 %v4111
        %5063 = vmatpush1.bf16.msra.mxu0 %v4110
        %5064 = vmatprep.subr.bf16.mxu0 %v4113
        %5065 = vmatpush1.bf16.msra.mxu0 %v4112
        %5066 = vmatprep.subr.bf16.mxu0 %v4115
        %5067 = vmatpush1.bf16.msra.mxu0 %v4114
        %5068 = vmatprep.subr.bf16.mxu0 %v4117
        %5069 = vmatpush1.bf16.msra.mxu0 %v4116
        %5070 = vmatprep.subr.bf16.mxu0 %v4119
        %5071 = vmatpush1.bf16.msra.mxu0 %v4118
        %5072 = vmatprep.mubr.bf16.mxu0 %v2499
        %5073 = vmatmul.mubr.bf16.gmra.mrb[0].mxu0 %v2498
        %v5074 = vpop.f32.mrb[0].mxu0
        %v5075 = vadd.f32 %v5032, %v5074
        %v5076 = vpop.f32.mrb[0].mxu0
        %v5077 = vadd.f32 %v5034, %v5076
        %v5078 = vpop.f32.mrb[0].mxu0
        %v5079 = vadd.f32 %v5036, %v5078
        %v5080 = vpop.f32.mrb[0].mxu0
        %v5081 = vadd.f32 %v5038, %v5080
        %5082 = vdwg.mxu0
        %5083 = vmatprep.subr.bf16.mxu0 %v4121
        %5084 = vmatpush1.bf16.msra.mxu0 %v4120
        %5085 = vmatprep.subr.bf16.mxu0 %v4123
        %5086 = vmatpush1.bf16.msra.mxu0 %v4122
        %5087 = vmatprep.subr.bf16.mxu0 %v4125
        %5088 = vmatpush1.bf16.msra.mxu0 %v4124
        %5089 = vmatprep.subr.bf16.mxu0 %v4127
        %5090 = vmatpush1.bf16.msra.mxu0 %v4126
        %5091 = vmatprep.subr.bf16.mxu0 %v4129
        %5092 = vmatpush1.bf16.msra.mxu0 %v4128
        %5093 = vmatprep.subr.bf16.mxu0 %v4131
        %5094 = vmatpush1.bf16.msra.mxu0 %v4130
        %5095 = vmatprep.subr.bf16.mxu0 %v4133
        %5096 = vmatpush1.bf16.msra.mxu0 %v4132
        %5097 = vmatprep.subr.bf16.mxu0 %v4135
        %5098 = vmatpush1.bf16.msra.mxu0 %v4134
        %5099 = vmatprep.subr.bf16.mxu0 %v4137
        %5100 = vmatpush1.bf16.msra.mxu0 %v4136
        %5101 = vmatprep.subr.bf16.mxu0 %v4139
        %5102 = vmatpush1.bf16.msra.mxu0 %v4138
        %5103 = vmatprep.subr.bf16.mxu0 %v4141
        %5104 = vmatpush1.bf16.msra.mxu0 %v4140
        %5105 = vmatprep.subr.bf16.mxu0 %v4143
        %5106 = vmatpush1.bf16.msra.mxu0 %v4142
        %5107 = vmatprep.subr.bf16.mxu0 %v4145
        %5108 = vmatpush1.bf16.msra.mxu0 %v4144
        %5109 = vmatprep.subr.bf16.mxu0 %v4147
        %5110 = vmatpush1.bf16.msra.mxu0 %v4146
        %5111 = vmatprep.subr.bf16.mxu0 %v4149
        %5112 = vmatpush1.bf16.msra.mxu0 %v4148
        %5113 = vmatprep.subr.bf16.mxu0 %v4151
        %5114 = vmatpush1.bf16.msra.mxu0 %v4150
        %5115 = vmatprep.mubr.bf16.mxu0 %v2501
        %5116 = vmatmul.mubr.bf16.gmra.mrb[0].mxu0 %v2500
        %v5117 = vpop.f32.mrb[0].mxu0
        %v5118 = vadd.f32 %v5075, %v5117
        %v5119 = vpop.f32.mrb[0].mxu0
        %v5120 = vadd.f32 %v5077, %v5119
        %v5121 = vpop.f32.mrb[0].mxu0
        %v5122 = vadd.f32 %v5079, %v5121
        %v5123 = vpop.f32.mrb[0].mxu0
        %v5124 = vadd.f32 %v5081, %v5123
        %5125 = vdwg.mxu0
        %5126 = vmatprep.subr.bf16.mxu0 %v4153
        %5127 = vmatpush1.bf16.msra.mxu0 %v4152
        %5128 = vmatprep.subr.bf16.mxu0 %v4155
        %5129 = vmatpush1.bf16.msra.mxu0 %v4154
        %5130 = vmatprep.subr.bf16.mxu0 %v4157
        %5131 = vmatpush1.bf16.msra.mxu0 %v4156
        %5132 = vmatprep.subr.bf16.mxu0 %v4159
        %5133 = vmatpush1.bf16.msra.mxu0 %v4158
        %5134 = vmatprep.subr.bf16.mxu0 %v4161
        %5135 = vmatpush1.bf16.msra.mxu0 %v4160
        %5136 = vmatprep.subr.bf16.mxu0 %v4163
        %5137 = vmatpush1.bf16.msra.mxu0 %v4162
        %5138 = vmatprep.subr.bf16.mxu0 %v4165
        %5139 = vmatpush1.bf16.msra.mxu0 %v4164
        %5140 = vmatprep.subr.bf16.mxu0 %v4167
        %5141 = vmatpush1.bf16.msra.mxu0 %v4166
        %5142 = vmatprep.subr.bf16.mxu0 %v4169
        %5143 = vmatpush1.bf16.msra.mxu0 %v4168
        %5144 = vmatprep.subr.bf16.mxu0 %v4171
        %5145 = vmatpush1.bf16.msra.mxu0 %v4170
        %5146 = vmatprep.subr.bf16.mxu0 %v4173
        %5147 = vmatpush1.bf16.msra.mxu0 %v4172
        %5148 = vmatprep.subr.bf16.mxu0 %v4175
        %5149 = vmatpush1.bf16.msra.mxu0 %v4174
        %5150 = vmatprep.subr.bf16.mxu0 %v4177
        %5151 = vmatpush1.bf16.msra.mxu0 %v4176
        %5152 = vmatprep.subr.bf16.mxu0 %v4179
        %5153 = vmatpush1.bf16.msra.mxu0 %v4178
        %5154 = vmatprep.subr.bf16.mxu0 %v4181
        %5155 = vmatpush1.bf16.msra.mxu0 %v4180
        %5156 = vmatprep.subr.bf16.mxu0 %v4183
        %5157 = vmatpush1.bf16.msra.mxu0 %v4182
        %5158 = vmatprep.mubr.bf16.mxu0 %v2503
        %5159 = vmatmul.mubr.bf16.gmra.mrb[0].mxu0 %v2502
        %v5160 = vpop.f32.mrb[0].mxu0
        %v5161 = vadd.f32 %v5118, %v5160
        %v5162 = vpop.f32.mrb[0].mxu0
        %v5163 = vadd.f32 %v5120, %v5162
        %v5164 = vpop.f32.mrb[0].mxu0
        %v5165 = vadd.f32 %v5122, %v5164
        %v5166 = vpop.f32.mrb[0].mxu0
        %v5167 = vadd.f32 %v5124, %v5166
        %5168 = vdwg.mxu0
        %5169 = vmatprep.subr.bf16.mxu0 %v4185
        %5170 = vmatpush1.bf16.msra.mxu0 %v4184
        %5171 = vmatprep.subr.bf16.mxu0 %v4187
        %5172 = vmatpush1.bf16.msra.mxu0 %v4186
        %5173 = vmatprep.subr.bf16.mxu0 %v4189
        %5174 = vmatpush1.bf16.msra.mxu0 %v4188
        %5175 = vmatprep.subr.bf16.mxu0 %v4191
        %5176 = vmatpush1.bf16.msra.mxu0 %v4190
        %5177 = vmatprep.subr.bf16.mxu0 %v4193
        %5178 = vmatpush1.bf16.msra.mxu0 %v4192
        %5179 = vmatprep.subr.bf16.mxu0 %v4195
        %5180 = vmatpush1.bf16.msra.mxu0 %v4194
        %5181 = vmatprep.subr.bf16.mxu0 %v4197
        %5182 = vmatpush1.bf16.msra.mxu0 %v4196
        %5183 = vmatprep.subr.bf16.mxu0 %v4199
        %5184 = vmatpush1.bf16.msra.mxu0 %v4198
        %5185 = vmatprep.subr.bf16.mxu0 %v4201
        %5186 = vmatpush1.bf16.msra.mxu0 %v4200
        %5187 = vmatprep.subr.bf16.mxu0 %v4203
        %5188 = vmatpush1.bf16.msra.mxu0 %v4202
        %5189 = vmatprep.subr.bf16.mxu0 %v4205
        %5190 = vmatpush1.bf16.msra.mxu0 %v4204
        %5191 = vmatprep.subr.bf16.mxu0 %v4207
        %5192 = vmatpush1.bf16.msra.mxu0 %v4206
        %5193 = vmatprep.subr.bf16.mxu0 %v4209
        %5194 = vmatpush1.bf16.msra.mxu0 %v4208
        %5195 = vmatprep.subr.bf16.mxu0 %v4211
        %5196 = vmatpush1.bf16.msra.mxu0 %v4210
        %5197 = vmatprep.subr.bf16.mxu0 %v4213
        %5198 = vmatpush1.bf16.msra.mxu0 %v4212
        %5199 = vmatprep.subr.bf16.mxu0 %v4215
        %5200 = vmatpush1.bf16.msra.mxu0 %v4214
        %5201 = vmatprep.mubr.bf16.mxu0 %v2505
        %5202 = vmatmul.mubr.bf16.gmra.mrb[0].mxu0 %v2504
        %v5203 = vpop.f32.mrb[0].mxu0
        %v5204 = vadd.f32 %v5161, %v5203
        %v5205 = vpop.f32.mrb[0].mxu0
        %v5206 = vadd.f32 %v5163, %v5205
        %v5207 = vpop.f32.mrb[0].mxu0
        %v5208 = vadd.f32 %v5165, %v5207
        %v5209 = vpop.f32.mrb[0].mxu0
        %v5210 = vadd.f32 %v5167, %v5209
        %5211 = vdwg.mxu0
        %5212 = vmatprep.subr.bf16.mxu0 %v4217
        %5213 = vmatpush1.bf16.msra.mxu0 %v4216
        %5214 = vmatprep.subr.bf16.mxu0 %v4219
        %5215 = vmatpush1.bf16.msra.mxu0 %v4218
        %5216 = vmatprep.subr.bf16.mxu0 %v4221
        %5217 = vmatpush1.bf16.msra.mxu0 %v4220
        %5218 = vmatprep.subr.bf16.mxu0 %v4223
        %5219 = vmatpush1.bf16.msra.mxu0 %v4222
        %5220 = vmatprep.subr.bf16.mxu0 %v4225
        %5221 = vmatpush1.bf16.msra.mxu0 %v4224
        %5222 = vmatprep.subr.bf16.mxu0 %v4227
        %5223 = vmatpush1.bf16.msra.mxu0 %v4226
        %5224 = vmatprep.subr.bf16.mxu0 %v4229
        %5225 = vmatpush1.bf16.msra.mxu0 %v4228
        %5226 = vmatprep.subr.bf16.mxu0 %v4231
        %5227 = vmatpush1.bf16.msra.mxu0 %v4230
        %5228 = vmatprep.subr.bf16.mxu0 %v4233
        %5229 = vmatpush1.bf16.msra.mxu0 %v4232
        %5230 = vmatprep.subr.bf16.mxu0 %v4235
        %5231 = vmatpush1.bf16.msra.mxu0 %v4234
        %5232 = vmatprep.subr.bf16.mxu0 %v4237
        %5233 = vmatpush1.bf16.msra.mxu0 %v4236
        %5234 = vmatprep.subr.bf16.mxu0 %v4239
        %5235 = vmatpush1.bf16.msra.mxu0 %v4238
        %5236 = vmatprep.subr.bf16.mxu0 %v4241
        %5237 = vmatpush1.bf16.msra.mxu0 %v4240
        %5238 = vmatprep.subr.bf16.mxu0 %v4243
        %5239 = vmatpush1.bf16.msra.mxu0 %v4242
        %5240 = vmatprep.subr.bf16.mxu0 %v4245
        %5241 = vmatpush1.bf16.msra.mxu0 %v4244
        %5242 = vmatprep.subr.bf16.mxu0 %v4247
        %5243 = vmatpush1.bf16.msra.mxu0 %v4246
        %5244 = vmatprep.mubr.bf16.mxu0 %v2507
        %5245 = vmatmul.mubr.bf16.gmra.mrb[0].mxu0 %v2506
        %v5246 = vpop.f32.mrb[0].mxu0
        %v5247 = vadd.f32 %v5204, %v5246
        %v5248 = vpop.f32.mrb[0].mxu0
        %v5249 = vadd.f32 %v5206, %v5248
        %v5250 = vpop.f32.mrb[0].mxu0
        %v5251 = vadd.f32 %v5208, %v5250
        %v5252 = vpop.f32.mrb[0].mxu0
        %v5253 = vadd.f32 %v5210, %v5252
        %5254 = vdwg.mxu0
        %5255 = vmatprep.subr.bf16.mxu0 %v4249
        %5256 = vmatpush1.bf16.msra.mxu0 %v4248
        %5257 = vmatprep.subr.bf16.mxu0 %v4251
        %5258 = vmatpush1.bf16.msra.mxu0 %v4250
        %5259 = vmatprep.subr.bf16.mxu0 %v4253
        %5260 = vmatpush1.bf16.msra.mxu0 %v4252
        %5261 = vmatprep.subr.bf16.mxu0 %v4255
        %5262 = vmatpush1.bf16.msra.mxu0 %v4254
        %5263 = vmatprep.subr.bf16.mxu0 %v4257
        %5264 = vmatpush1.bf16.msra.mxu0 %v4256
        %5265 = vmatprep.subr.bf16.mxu0 %v4259
        %5266 = vmatpush1.bf16.msra.mxu0 %v4258
        %5267 = vmatprep.subr.bf16.mxu0 %v4261
        %5268 = vmatpush1.bf16.msra.mxu0 %v4260
        %5269 = vmatprep.subr.bf16.mxu0 %v4263
        %5270 = vmatpush1.bf16.msra.mxu0 %v4262
        %5271 = vmatprep.subr.bf16.mxu0 0
        %5272 = vmatpush1.bf16.msra.mxu0 0
        %5273 = vmatprep.subr.bf16.mxu0 0
        %5274 = vmatpush1.bf16.msra.mxu0 0
        %5275 = vmatprep.subr.bf16.mxu0 0
        %5276 = vmatpush1.bf16.msra.mxu0 0
        %5277 = vmatprep.subr.bf16.mxu0 0
        %5278 = vmatpush1.bf16.msra.mxu0 0
        %5279 = vmatprep.subr.bf16.mxu0 0
        %5280 = vmatpush1.bf16.msra.mxu0 0
        %5281 = vmatprep.subr.bf16.mxu0 0
        %5282 = vmatpush1.bf16.msra.mxu0 0
        %5283 = vmatprep.subr.bf16.mxu0 0
        %5284 = vmatpush1.bf16.msra.mxu0 0
        %5285 = vmatprep.subr.bf16.mxu0 0
        %5286 = vmatpush1.bf16.msra.mxu0 0
        %5287 = vmatprep.mubr.bf16.mxu0 0
        %5288 = vmatmul.mubr.bf16.gmra.mrb[0].mxu0 %v2508
        %v5289 = vpop.f32.mrb[0].mxu0
        %v5290 = vadd.f32 %v5247, %v5289
        %v5291 = vpop.f32.mrb[0].mxu0
        %v5292 = vadd.f32 %v5249, %v5291
        %v5293 = vpop.f32.mrb[0].mxu0
        %v5294 = vadd.f32 %v5251, %v5293
        %v5295 = vpop.f32.mrb[0].mxu0
        %v5296 = vadd.f32 %v5253, %v5295
        %5297 = vdwg.mxu0
        %5298 = vst [vmem:[%s1928] sm:$0xff] %v5290
        %5299 = vst [vmem:[%s1928 + $0x8] sm:$0xff] %v5292
        %5300 = vst [vmem:[%s1928 + $0x10] sm:$0xff] %v5294
        %5301 = vst [vmem:[%s1928 + $0x18] sm:$0xff] %v5296
        %s5302 = sand.u32 %s87, 1
        %s5303 = sand.u32 %s87, 1
        %s5304 = smul.addr %s5303, 32
        %s5305 = scalar_lea.vmem [#allocation3], %s5304
        // Predicated region
        $region67: #{sparse_resnet_encoder.9} parent=61 // pred_check
          %p5306 = pneg %p97
        $region68: #{sparse_resnet_encoder.9} parent=61 // pred_check_branch
          %5308 = sbr.rel (%p5306) target = $region70
        $region69: #{sparse_resnet_encoder.9} parent=61 // pred_region
          %s5309 = smul.u32 2, %s17
          %s5310 = smul.u32 2, %s18
          %s5311 = smul.addr %s5309, 4
          %s5312 = sadd.s32 %s5310, %s5311
          %s5313 = smul.addr %s5312, 8
          %s5314 = scalar_lea.vmem %s2, %s5313
          // Predicated region
          $region71: #{sparse_resnet_encoder.9} parent=69 // pred_check
            _
          $region72: #{sparse_resnet_encoder.9} parent=69 // pred_check_branch
            %5316 = sbr.rel (0) target = $region74
          $region73: #{sparse_resnet_encoder.9} parent=69 // pred_region
            // Predicated region
            $region75: #{sparse_resnet_encoder.9} parent=73 // pred_check
              _
            $region76: #{sparse_resnet_encoder.9} parent=73 // pred_check_branch
              %5318 = sbr.rel (0) target = $region78
            $region77: #{sparse_resnet_encoder.9} parent=73 // pred_region
              loop: start=0, step=1, limit=1
              $region79: #{sparse_resnet_encoder.9} parent=77 // loop_pre_header
                _
              $region80: #{sparse_resnet_encoder.9} parent=77 // loop_header
                %s5320 = sphi 0, %s5324
                %p5321 = scmp.ge.s32.totalorder %s5320, 1
                %s5325 = sphi %s5305, %s5305
                %s5326 = sphi %s5314, %s5314
              $region81: #{sparse_resnet_encoder.9} parent=77 // loop_header_branch
                %5323 = sbr.rel (%p5321) target = $region85
              $region82: #{sparse_resnet_encoder.9} parent=77 // loop_body
                %v5327 = vld [vmem:[%s5325] sm:$0xff]
                %5328 = vst [vmem:[%s5326] sm:$0xff] %v5327
                %v5329 = vld [vmem:[%s5325 + $0x8] sm:$0xff]
                %5330 = vst [vmem:[%s5326 + $0x8] sm:$0xff] %v5329
                %v5331 = vld [vmem:[%s5325 + $0x10] sm:$0xff]
                %5332 = vst [vmem:[%s5326 + $0x20] sm:$0xff] %v5331
                %v5333 = vld [vmem:[%s5325 + $0x18] sm:$0xff]
                %5334 = vst [vmem:[%s5326 + $0x28] sm:$0xff] %v5333
              $region83: #{sparse_resnet_encoder.9} parent=77 // loop_footer
                %s5324 = sadd.s32 1, %s5320
              $region84: #{sparse_resnet_encoder.9} parent=77 // loop_footer_branch
                %5319 = sbr.rel target = $region80
              $region85: #{sparse_resnet_encoder.9} parent=77 // loop_exit
                _
            $region78: #{sparse_resnet_encoder.9} parent=73 // pred_fallthru
              _
            // Predicated region
            $region86: #{sparse_resnet_encoder.9} parent=73 // pred_check
              _
            $region87: #{sparse_resnet_encoder.9} parent=73 // pred_check_branch
              %5336 = sbr.rel target = $region89
            $region88: #{sparse_resnet_encoder.9} parent=73 // pred_region
              _
            $region89: #{sparse_resnet_encoder.9} parent=73 // pred_fallthru
              _
          $region74: #{sparse_resnet_encoder.9} parent=69 // pred_fallthru
            _
          %5337 = vnop
        $region70: #{sparse_resnet_encoder.9} parent=61 // pred_fallthru
          _
      $region62: #{sparse_resnet_encoder.9} parent=5 // pred_fallthru
        _
      %p5338 = scmp.le.s32.totalorder 2, %s8
      // Predicated region
      $region90: #{sparse_resnet_encoder.9} parent=5 // pred_check
        %p5339 = pneg %p5338
      $region91: #{sparse_resnet_encoder.9} parent=5 // pred_check_branch
        %5341 = sbr.rel (%p5339) target = $region93
      $region92: #{sparse_resnet_encoder.9} parent=5 // pred_region
        %s5342 = ssub.s32 %s8, 2
        // Predicated region
        $region94: #{sparse_resnet_encoder.9} parent=92 // pred_check
          %p5343 = pneg %p103
        $region95: #{sparse_resnet_encoder.9} parent=92 // pred_check_branch
          %5345 = sbr.rel (%p5343) target = $region97
        $region96: #{sparse_resnet_encoder.9} parent=92 // pred_region
          %s5346 = sand.u32 %s88, 1
          %s5347 = sand.u32 %s88, 1
          %s5348 = smul.addr %s5347, 32
          %s5349 = scalar_lea.vmem [#allocation3], %s5348
        $region97: #{sparse_resnet_encoder.9} parent=92 // pred_fallthru
          _
      $region93: #{sparse_resnet_encoder.9} parent=5 // pred_fallthru
        _
    $region6: #{sparse_resnet_encoder.9} parent=1 // loop_footer
      %s12 = sadd.s32 1, %s8
    $region7: #{sparse_resnet_encoder.9} parent=1 // loop_footer_branch
      %7 = sbr.rel target = $region3
    $region8: #{sparse_resnet_encoder.9} parent=1 // loop_exit
      _

</llo_original>
